<compile_context>
chip_gen: v6e
topology: v6e:2x2x1
jax: 0.10.0
libtpu: 0.0.40
codegen_flags: <defaults>
</compile_context>

<pallas_src>
import functools

import jax
import jax.numpy as jnp
from jax.experimental import pallas as pl
from jax.experimental.pallas import tpu as pltpu

LEAKY_SLOPE = 0.2
BN_EPS = 1e-5
LANE = 128

# Whole-problem single-block VMEM budget for the fused conv+BN+leaky kernel
# (kept far below the smallest scoped-VMEM default; v7x has 64 MiB physical).
_FUSED_BN_VMEM_BUDGET = 12 * 1024 * 1024
_VMEM_LIMIT = 32 * 1024 * 1024


def _round_up(x, m):
    return (x + m - 1) // m * m


def _pick_tm(m):
    """Largest convenient M tile: divides m, multiple of 8, keeps >=2 blocks
    on mid/large problems so the 'parallel' M axis can shard across cores."""
    if m % 8 != 0:
        return m  # tiny; one block == full dim (bypasses (8,128) rule)
    target = 1024 if m >= 2048 else max(8, m // 2)
    tm = min(target, m)
    tm -= tm % 8
    while m % tm != 0:
        tm -= 8
    return tm


# ----------------------------------------------------------------------------
# Pallas kernels
# ----------------------------------------------------------------------------
def matmul_affine_kernel(a_ref, b_ref, scale_ref, shift_ref, o_ref, *,
                         apply_leaky):
    """Single-shot MXU matmul (full K in one block) + fused affine (+leaky)."""
    y = jnp.dot(a_ref[...], b_ref[...], preferred_element_type=jnp.float32)
    y = y * scale_ref[...] + shift_ref[...]
    if apply_leaky:
        y = jnp.where(y >= 0, y, LEAKY_SLOPE * y)
    o_ref[...] = y.astype(o_ref.dtype)


def conv_bn_leaky_kernel(a_ref, b_ref, gamma_ref, beta_ref, o_ref, *, inv_m):
    """Fused conv-as-matmul + BatchNorm (training batch stats) + LeakyReLU.

    The whole (M, Np) conv output lives in VMEM, so the per-channel mean/var
    reduction, normalization and activation happen without any extra HBM pass.
    """
    y = jnp.dot(a_ref[...], b_ref[...], preferred_element_type=jnp.float32)
    mean = jnp.sum(y, axis=0, keepdims=True) * inv_m
    var = jnp.sum(y * y, axis=0, keepdims=True) * inv_m - mean * mean
    var = jnp.maximum(var, 0.0)  # guard E[x^2]-E[x]^2 cancellation in f32
    scale = gamma_ref[...] * jax.lax.rsqrt(var + BN_EPS)
    shift = beta_ref[...] - mean * scale
    z = y * scale + shift
    z = jnp.where(z >= 0, z, LEAKY_SLOPE * z)
    o_ref[...] = z.astype(o_ref.dtype)


def bn_leaky_kernel(y_ref, scale_ref, shift_ref, o_ref):
    """Elementwise affine + LeakyReLU (fallback path for very large layers)."""
    z = y_ref[...] * scale_ref[...] + shift_ref[...]
    o_ref[...] = jnp.where(z >= 0, z, LEAKY_SLOPE * z).astype(o_ref.dtype)


def final_conv_kernel(a_ref, w_ref, b_ref, o_ref):
    """Cout == 1 conv: per-row dot product via VPU multiply + lane reduce.

    Avoids padding the single output channel up to a 128-wide MXU tile (which
    would waste 127/128 of the B DMA and MXU columns).
    """
    a = a_ref[...].astype(jnp.float32)
    w = w_ref[...].astype(jnp.float32)
    o_ref[...] = jnp.sum(a * w, axis=-1, keepdims=True) + b_ref[...]


# ----------------------------------------------------------------------------
# Pallas wrappers
# ----------------------------------------------------------------------------
def pallas_matmul_affine(a, b, scale, shift, apply_leaky,
                         out_dtype=jnp.bfloat16):
    """out = leaky?(A @ B * scale + shift). A:(M,K), B:(K,N), scale/shift:(N,)."""
    M, K = a.shape
    _, N = b.shape
    Np = _round_up(N, LANE)
    TM = _pick_tm(M)

    a = a.astype(jnp.bfloat16)  # bf16 MXU inputs, f32 accumulation
    b_p = jnp.pad(b.astype(jnp.bfloat16), ((0, 0), (0, Np - N)))
    scale_p = jnp.pad(scale.astype(jnp.float32).reshape(1, -1),
                      ((0, 0), (0, Np - N)))
    shift_p = jnp.pad(shift.astype(jnp.float32).reshape(1, -1),
                      ((0, 0), (0, Np - N)))

    out = pl.pallas_call(
        functools.partial(matmul_affine_kernel, apply_leaky=apply_leaky),
        out_shape=jax.ShapeDtypeStruct((M, Np), out_dtype),
        grid=(M // TM,),
        in_specs=[
            pl.BlockSpec((TM, K), lambda i: (i, 0)),   # A: full K, no padding
            pl.BlockSpec((K, Np), lambda i: (0, 0)),   # B: resident across i
            pl.BlockSpec((1, Np), lambda i: (0, 0)),
            pl.BlockSpec((1, Np), lambda i: (0, 0)),
        ],
        out_specs=pl.BlockSpec((TM, Np), lambda i: (i, 0)),
        compiler_params=pltpu.CompilerParams(
            dimension_semantics=("parallel",),
            vmem_limit_bytes=_VMEM_LIMIT),
    )(a, b_p, scale_p, shift_p)
    return out[:, :N]


def pallas_conv_bn_leaky_fused(a, b, gamma, beta, out_dtype=jnp.bfloat16):
    """Single-block fused conv + BatchNorm(batch stats) + LeakyReLU."""
    M, K = a.shape
    _, N = b.shape
    Np = _round_up(N, LANE)

    a = a.astype(jnp.bfloat16)
    b_p = jnp.pad(b.astype(jnp.bfloat16), ((0, 0), (0, Np - N)))
    gamma_p = jnp.pad(gamma.astype(jnp.float32).reshape(1, -1),
                      ((0, 0), (0, Np - N)))
    beta_p = jnp.pad(beta.astype(jnp.float32).reshape(1, -1),
                     ((0, 0), (0, Np - N)))

    out = pl.pallas_call(
        functools.partial(conv_bn_leaky_kernel, inv_m=1.0 / M),
        out_shape=jax.ShapeDtypeStruct((M, Np), out_dtype),
        grid=(1,),
        in_specs=[
            pl.BlockSpec((M, K), lambda i: (0, 0)),
            pl.BlockSpec((K, Np), lambda i: (0, 0)),
            pl.BlockSpec((1, Np), lambda i: (0, 0)),
            pl.BlockSpec((1, Np), lambda i: (0, 0)),
        ],
        out_specs=pl.BlockSpec((M, Np), lambda i: (0, 0)),
        compiler_params=pltpu.CompilerParams(
            dimension_semantics=("arbitrary",),
            vmem_limit_bytes=_VMEM_LIMIT),
    )(a, b_p, gamma_p, beta_p)
    return out[:, :N]


def pallas_bn_leaky(y, scale, shift, out_dtype=jnp.bfloat16):
    """out = leaky(y * scale + shift), per-column scale/shift (fallback path)."""
    M, N = y.shape
    Np = _round_up(N, LANE)
    TM = _pick_tm(M)

    y_p = jnp.pad(y.astype(jnp.float32), ((0, 0), (0, Np - N)))
    scale_p = jnp.pad(scale.astype(jnp.float32).reshape(1, -1),
                      ((0, 0), (0, Np - N)))
    shift_p = jnp.pad(shift.astype(jnp.float32).reshape(1, -1),
                      ((0, 0), (0, Np - N)))

    out = pl.pallas_call(
        bn_leaky_kernel,
        out_shape=jax.ShapeDtypeStruct((M, Np), out_dtype),
        grid=(M // TM,),
        in_specs=[
            pl.BlockSpec((TM, Np), lambda i: (i, 0)),
            pl.BlockSpec((1, Np), lambda i: (0, 0)),
            pl.BlockSpec((1, Np), lambda i: (0, 0)),
        ],
        out_specs=pl.BlockSpec((TM, Np), lambda i: (i, 0)),
        compiler_params=pltpu.CompilerParams(
            dimension_semantics=("parallel",),
            vmem_limit_bytes=_VMEM_LIMIT),
    )(y_p, scale_p, shift_p)
    return out[:, :N]


def pallas_final_conv(a, w_row, bias):
    """Final conv (Cout=1): out[m] = sum_k a[m,k]*w[k] + bias."""
    M, K = a.shape
    a = a.astype(jnp.bfloat16)
    w_row = w_row.astype(jnp.bfloat16)                     # (1, K)
    b = jnp.asarray(bias, jnp.float32).reshape(1, 1)

    return pl.pallas_call(
        final_conv_kernel,
        out_shape=jax.ShapeDtypeStruct((M, 1), jnp.float32),
        grid=(1,),
        in_specs=[
            pl.BlockSpec((M, K), lambda i: (0, 0)),
            pl.BlockSpec((1, K), lambda i: (0, 0)),
            pl.BlockSpec((1, 1), lambda i: (0, 0)),
        ],
        out_specs=pl.BlockSpec((M, 1), lambda i: (0, 0)),
        compiler_params=pltpu.CompilerParams(
            dimension_semantics=("arbitrary",)),
    )(a, w_row, b)


# ----------------------------------------------------------------------------
# im2col for 3D conv (kernel=3, pad=1 reflect, arbitrary stride) — JAX glue
# ----------------------------------------------------------------------------
def im2col_3d(x, stride):
    # x: (N, D, H, W, C), already in the compute dtype (bf16 halves the traffic)
    N, D, H, W, C = x.shape
    sd, sh, sw = stride
    xp = jnp.pad(x, ((0, 0), (1, 1), (1, 1), (1, 1), (0, 0)), mode="reflect")
    Do = (D + 2 - 3) // sd + 1
    Ho = (H + 2 - 3) // sh + 1
    Wo = (W + 2 - 3) // sw + 1
    cols = []
    for kd in range(3):
        for kh in range(3):
            for kw in range(3):
                cols.append(xp[:,
                               kd:kd + sd * (Do - 1) + 1:sd,
                               kh:kh + sh * (Ho - 1) + 1:sh,
                               kw:kw + sw * (Wo - 1) + 1:sw,
                               :])
    col = jnp.stack(cols, axis=4)               # (N, Do, Ho, Wo, 27, C)
    A = col.reshape(N * Do * Ho * Wo, 27 * C)   # cols ordered (kd,kh,kw,ci)
    return A, (N, Do, Ho, Wo)


def _weight_to_matrix(w):
    # w: (Cout, Cin, 3, 3, 3) -> (27*Cin, Cout), rows ordered (kd,kh,kw,ci)
    cout, cin = w.shape[0], w.shape[1]
    return jnp.transpose(w, (2, 3, 4, 1, 0)).reshape(27 * cin, cout)


# ----------------------------------------------------------------------------
# Layers
# ----------------------------------------------------------------------------
def conv3d_bias_leaky(x, w, b, stride, leaky):
    """Conv3d(k=3, pad=1 reflect) + bias (+ LeakyReLU), fused in the matmul."""
    A, (n, Do, Ho, Wo) = im2col_3d(x.astype(jnp.bfloat16), stride)
    B = _weight_to_matrix(w)
    cout = w.shape[0]
    scale = jnp.ones((cout,), jnp.float32)
    y = pallas_matmul_affine(A, B, scale, b, apply_leaky=leaky)
    return y.reshape(n, Do, Ho, Wo, cout)


def conv3d_bn_leaky(x, w, gamma, beta, stride):
    """Conv3d(no bias) + BatchNorm3d(training batch stats) + LeakyReLU."""
    A, (n, Do, Ho, Wo) = im2col_3d(x.astype(jnp.bfloat16), stride)
    B = _weight_to_matrix(w)
    cout = w.shape[0]
    M, K = A.shape
    Np = _round_up(cout, LANE)

    # rough single-block VMEM footprint: bf16 A/B (x2 buffers) + f32 y live
    fused_bytes = 2 * (2 * M * K + 2 * K * Np) + 8 * M * Np
    if fused_bytes <= _FUSED_BN_VMEM_BUDGET:
        y = pallas_conv_bn_leaky_fused(A, B, gamma, beta)
    else:
        # TODO(synk): for very large activations, fold BN partial sums into a
        # tiled matmul epilogue instead of re-reading y with XLA reductions.
        ones = jnp.ones((cout,), jnp.float32)
        zeros = jnp.zeros((cout,), jnp.float32)
        y32 = pallas_matmul_affine(A, B, ones, zeros, apply_leaky=False,
                                   out_dtype=jnp.float32)
        mean = jnp.mean(y32, axis=0)
        var = jnp.mean(jnp.square(y32 - mean), axis=0)  # biased, like PT BN fwd
        scale = gamma * jax.lax.rsqrt(var + BN_EPS)
        shift = beta - mean * scale
        y = pallas_bn_leaky(y32, scale, shift)
    return y.reshape(n, Do, Ho, Wo, cout)


def conv3d_out(x, w, b, stride):
    """Final Conv3d (Cout=1) + bias, special-cased single-block kernel."""
    A, (n, Do, Ho, Wo) = im2col_3d(x.astype(jnp.bfloat16), stride)
    w_row = _weight_to_matrix(w).reshape(1, -1)   # (1, 27*Cin)
    y = pallas_final_conv(A, w_row, b)
    return y.reshape(n, Do, Ho, Wo, 1)


# ----------------------------------------------------------------------------
# Discriminator
# ----------------------------------------------------------------------------
def init_params(key, in_channels=1, features=16):
    ks = jax.random.split(key, 8)
    f = features
    p = {}
    p["w0"] = 0.05 * jax.random.normal(ks[0], (f, in_channels * 2, 3, 3, 3), jnp.float32)
    p["b0"] = 0.05 * jax.random.normal(ks[1], (f,), jnp.float32)
    p["w1"] = 0.05 * jax.random.normal(ks[2], (2 * f, f, 3, 3, 3), jnp.float32)
    p["g1"], p["be1"] = jnp.ones((2 * f,), jnp.float32), jnp.zeros((2 * f,), jnp.float32)
    p["w2"] = 0.05 * jax.random.normal(ks[3], (4 * f, 2 * f, 3, 3, 3), jnp.float32)
    p["g2"], p["be2"] = jnp.ones((4 * f,), jnp.float32), jnp.zeros((4 * f,), jnp.float32)
    p["w3"] = 0.05 * jax.random.normal(ks[4], (8 * f, 4 * f, 3, 3, 3), jnp.float32)
    p["g3"], p["be3"] = jnp.ones((8 * f,), jnp.float32), jnp.zeros((8 * f,), jnp.float32)
    p["w4"] = 0.05 * jax.random.normal(ks[5], (1, 8 * f, 3, 3, 3), jnp.float32)
    p["b4"] = 0.05 * jax.random.normal(ks[6], (1,), jnp.float32)
    return p


@jax.jit
def discriminator_forward(params, x, y):
    # x, y: (N, C, D, H, W)  (PyTorch NCDHW)
    h = jnp.concatenate([x, y], axis=1)            # (N, 2C, D, H, W)
    h = jnp.transpose(h, (0, 2, 3, 4, 1))          # -> NDHWC

    h = conv3d_bias_leaky(h, params["w0"], params["b0"], (2, 2, 2), leaky=True)
    h = conv3d_bn_leaky(h, params["w1"], params["g1"], params["be1"], (2, 2, 2))
    h = conv3d_bn_leaky(h, params["w2"], params["g2"], params["be2"], (2, 2, 2))
    h = conv3d_bn_leaky(h, params["w3"], params["g3"], params["be3"], (2, 2, 2))
    h = conv3d_out(h, params["w4"], params["b4"], (1, 2, 2))

    return jnp.transpose(h, (0, 4, 1, 2, 3)).astype(jnp.float32)   # NCDHW


if __name__ == "__main__":
    key = jax.random.PRNGKey(0)
    kp, kx, ky = jax.random.split(key, 3)

    # Spatial size 32 so every reflect-pad sees dims >= 2 (with 16 the final
    # conv's input would be 1^3 and reflect padding would be ill-defined).
    N, C, D, H, W = 2, 1, 32, 32, 32
    x = jax.random.normal(kx, (N, C, D, H, W), jnp.float32)
    y = jax.random.normal(ky, (N, C, D, H, W), jnp.float32)

    params = init_params(kp, in_channels=C, features=16)

    out = discriminator_forward(params, x, y)
    out = jax.block_until_ready(out)

    expected_shape = (N, 1, 2, 1, 1)
    assert out.shape == expected_shape, (out.shape, expected_shape)
    assert bool(jnp.all(jnp.isfinite(out)))
    print("KERNEL_OK")
</pallas_src>

<mosaic_0001>
module attributes {stable_mosaic.version = 11 : i64} {
  func.func @matmul_affine_kernel(%arg0: i32, %arg1: memref<1024x54xbf16, #tpu.memory_space<vmem>>, %arg2: memref<54x128xbf16, #tpu.memory_space<vmem>>, %arg3: memref<1x128xf32, #tpu.memory_space<vmem>>, %arg4: memref<1x128xf32, #tpu.memory_space<vmem>>, %arg5: memref<1024x128xbf16, #tpu.memory_space<vmem>>) attributes {dimension_semantics = [#tpu.dimension_semantics<parallel>], iteration_bounds = array<i64: 8>, scalar_prefetch = 0 : i64, scratch_operands = 0 : i64, tpu.core_type = #tpu.core_type<tc>, window_params = [{transform_indices = @transform_0, window_bounds = array<i64: 1024, 54>}, {pipeline_mode = #tpu.pipeline_mode<synchronous>, transform_indices = @transform_1, window_bounds = array<i64: 54, 128>}, {pipeline_mode = #tpu.pipeline_mode<synchronous>, transform_indices = @transform_2, window_bounds = array<i64: 1, 128>}, {pipeline_mode = #tpu.pipeline_mode<synchronous>, transform_indices = @transform_3, window_bounds = array<i64: 1, 128>}, {transform_indices = @transform_4, window_bounds = array<i64: 1024, 128>}]} {
    %c0 = arith.constant 0 : index
    %c0_0 = arith.constant 0 : index
    %0 = vector.load %arg1[%c0, %c0_0] : memref<1024x54xbf16, #tpu.memory_space<vmem>>, vector<1024x54xbf16>
    %c0_1 = arith.constant 0 : index
    %c0_2 = arith.constant 0 : index
    %1 = vector.load %arg2[%c0_1, %c0_2] : memref<54x128xbf16, #tpu.memory_space<vmem>>, vector<54x128xbf16>
    %cst = arith.constant dense<0.000000e+00> : vector<1024x128xf32>
    %2 = tpu.matmul %0, %1, %cst {dimension_numbers = #tpu.dot_dimension_numbers<[1], [0], [0], [1], [0, 0, 1, 1], [], []>} : vector<1024x54xbf16>, vector<54x128xbf16>, vector<1024x128xf32> -> vector<1024x128xf32>
    %c0_3 = arith.constant 0 : index
    %c0_4 = arith.constant 0 : index
    %3 = vector.load %arg3[%c0_3, %c0_4] : memref<1x128xf32, #tpu.memory_space<vmem>>, vector<1x128xf32>
    %4 = vector.broadcast %3 : vector<1x128xf32> to vector<1024x128xf32>
    %5 = arith.mulf %2, %4 : vector<1024x128xf32>
    %c0_5 = arith.constant 0 : index
    %c0_6 = arith.constant 0 : index
    %6 = vector.load %arg4[%c0_5, %c0_6] : memref<1x128xf32, #tpu.memory_space<vmem>>, vector<1x128xf32>
    %7 = vector.broadcast %6 : vector<1x128xf32> to vector<1024x128xf32>
    %8 = arith.addf %5, %7 : vector<1024x128xf32>
    %cst_7 = arith.constant 0.000000e+00 : f32
    %9 = vector.broadcast %cst_7 : f32 to vector<1024x128xf32>
    %10 = arith.cmpf oge, %8, %9 : vector<1024x128xf32>
    %cst_8 = arith.constant 2.000000e-01 : f32
    %11 = vector.broadcast %cst_8 : f32 to vector<1024x128xf32>
    %12 = arith.mulf %11, %8 : vector<1024x128xf32>
    %13 = arith.select %10, %8, %12 : vector<1024x128xi1>, vector<1024x128xf32>
    %14 = arith.truncf %13 : vector<1024x128xf32> to vector<1024x128xbf16>
    %c0_9 = arith.constant 0 : index
    %c0_10 = arith.constant 0 : index
    %15 = vector.load %arg5[%c0_9, %c0_10] : memref<1024x128xbf16, #tpu.memory_space<vmem>>, vector<1024x128xbf16>
    tpu.vector_store %arg5[%c0_9, %c0_10], %14 {strides = array<i32>} : memref<1024x128xbf16, #tpu.memory_space<vmem>>, vector<1024x128xbf16>,
    return
  }
  func.func @transform_0(%arg0: i32) -> (i32, i32) {
    %c0_i32 = arith.constant 0 : i32
    %c0_i32_0 = arith.constant 0 : i32
    return %arg0, %c0_i32 : i32, i32
  }
  func.func @transform_1(%arg0: i32) -> (i32, i32) {
    %c0_i32 = arith.constant 0 : i32
    %c0_i32_0 = arith.constant 0 : i32
    %c0_i32_1 = arith.constant 0 : i32
    return %c0_i32, %c0_i32_0 : i32, i32
  }
  func.func @transform_2(%arg0: i32) -> (i32, i32) {
    %c0_i32 = arith.constant 0 : i32
    %c0_i32_0 = arith.constant 0 : i32
    %c0_i32_1 = arith.constant 0 : i32
    return %c0_i32, %c0_i32_0 : i32, i32
  }
  func.func @transform_3(%arg0: i32) -> (i32, i32) {
    %c0_i32 = arith.constant 0 : i32
    %c0_i32_0 = arith.constant 0 : i32
    %c0_i32_1 = arith.constant 0 : i32
    return %c0_i32, %c0_i32_0 : i32, i32
  }
  func.func @transform_4(%arg0: i32) -> (i32, i32) {
    %c0_i32 = arith.constant 0 : i32
    %c0_i32_0 = arith.constant 0 : i32
    return %arg0, %c0_i32 : i32, i32
  }
}

module attributes {stable_mosaic.version = 11 : i64} {
  func.func @conv_bn_leaky_kernel(%arg0: i32, %arg1: memref<1024x432xbf16, #tpu.memory_space<vmem>>, %arg2: memref<432x128xbf16, #tpu.memory_space<vmem>>, %arg3: memref<1x128xf32, #tpu.memory_space<vmem>>, %arg4: memref<1x128xf32, #tpu.memory_space<vmem>>, %arg5: memref<1024x128xbf16, #tpu.memory_space<vmem>>) attributes {dimension_semantics = [#tpu.dimension_semantics<arbitrary>], iteration_bounds = array<i64: 1>, scalar_prefetch = 0 : i64, scratch_operands = 0 : i64, tpu.core_type = #tpu.core_type<tc>, window_params = [{pipeline_mode = #tpu.pipeline_mode<synchronous>, transform_indices = @transform_0, window_bounds = array<i64: 1024, 432>}, {pipeline_mode = #tpu.pipeline_mode<synchronous>, transform_indices = @transform_1, window_bounds = array<i64: 432, 128>}, {pipeline_mode = #tpu.pipeline_mode<synchronous>, transform_indices = @transform_2, window_bounds = array<i64: 1, 128>}, {pipeline_mode = #tpu.pipeline_mode<synchronous>, transform_indices = @transform_3, window_bounds = array<i64: 1, 128>}, {pipeline_mode = #tpu.pipeline_mode<synchronous>, transform_indices = @transform_4, window_bounds = array<i64: 1024, 128>}]} {
    %c0 = arith.constant 0 : index
    %c0_0 = arith.constant 0 : index
    %0 = vector.load %arg1[%c0, %c0_0] : memref<1024x432xbf16, #tpu.memory_space<vmem>>, vector<1024x432xbf16>
    %c0_1 = arith.constant 0 : index
    %c0_2 = arith.constant 0 : index
    %1 = vector.load %arg2[%c0_1, %c0_2] : memref<432x128xbf16, #tpu.memory_space<vmem>>, vector<432x128xbf16>
    %cst = arith.constant dense<0.000000e+00> : vector<1024x128xf32>
    %2 = tpu.matmul %0, %1, %cst {dimension_numbers = #tpu.dot_dimension_numbers<[1], [0], [0], [1], [0, 0, 1, 1], [], []>} : vector<1024x432xbf16>, vector<432x128xbf16>, vector<1024x128xf32> -> vector<1024x128xf32>
    %cst_3 = arith.constant dense<0.000000e+00> : vector<128xf32>
    %3 = vector.multi_reduction <add>, %2, %cst_3 [0] : vector<1024x128xf32> to vector<128xf32>
    %4 = vector.shape_cast %3 : vector<128xf32> to vector<1x128xf32>
    %cst_4 = arith.constant 9.765625E-4 : f32
    %5 = vector.broadcast %cst_4 : f32 to vector<1x128xf32>
    %6 = arith.mulf %4, %5 : vector<1x128xf32>
    %7 = arith.mulf %2, %2 : vector<1024x128xf32>
    %cst_5 = arith.constant dense<0.000000e+00> : vector<128xf32>
    %8 = vector.multi_reduction <add>, %7, %cst_5 [0] : vector<1024x128xf32> to vector<128xf32>
    %9 = vector.shape_cast %8 : vector<128xf32> to vector<1x128xf32>
    %cst_6 = arith.constant 9.765625E-4 : f32
    %10 = vector.broadcast %cst_6 : f32 to vector<1x128xf32>
    %11 = arith.mulf %9, %10 : vector<1x128xf32>
    %12 = arith.mulf %6, %6 : vector<1x128xf32>
    %13 = arith.subf %11, %12 : vector<1x128xf32>
    %cst_7 = arith.constant 0.000000e+00 : f32
    %14 = vector.broadcast %cst_7 : f32 to vector<1x128xf32>
    %15 = arith.maximumf %13, %14 : vector<1x128xf32>
    %c0_8 = arith.constant 0 : index
    %c0_9 = arith.constant 0 : index
    %16 = vector.load %arg3[%c0_8, %c0_9] : memref<1x128xf32, #tpu.memory_space<vmem>>, vector<1x128xf32>
    %cst_10 = arith.constant 9.99999974E-6 : f32
    %17 = vector.broadcast %cst_10 : f32 to vector<1x128xf32>
    %18 = arith.addf %15, %17 : vector<1x128xf32>
    %19 = math.rsqrt %18 : vector<1x128xf32>
    %20 = arith.mulf %16, %19 : vector<1x128xf32>
    %c0_11 = arith.constant 0 : index
    %c0_12 = arith.constant 0 : index
    %21 = vector.load %arg4[%c0_11, %c0_12] : memref<1x128xf32, #tpu.memory_space<vmem>>, vector<1x128xf32>
    %22 = arith.mulf %6, %20 : vector<1x128xf32>
    %23 = arith.subf %21, %22 : vector<1x128xf32>
    %24 = vector.broadcast %20 : vector<1x128xf32> to vector<1024x128xf32>
    %25 = arith.mulf %2, %24 : vector<1024x128xf32>
    %26 = vector.broadcast %23 : vector<1x128xf32> to vector<1024x128xf32>
    %27 = arith.addf %25, %26 : vector<1024x128xf32>
    %cst_13 = arith.constant 0.000000e+00 : f32
    %28 = vector.broadcast %cst_13 : f32 to vector<1024x128xf32>
    %29 = arith.cmpf oge, %27, %28 : vector<1024x128xf32>
    %cst_14 = arith.constant 2.000000e-01 : f32
    %30 = vector.broadcast %cst_14 : f32 to vector<1024x128xf32>
    %31 = arith.mulf %30, %27 : vector<1024x128xf32>
    %32 = arith.select %29, %27, %31 : vector<1024x128xi1>, vector<1024x128xf32>
    %33 = arith.truncf %32 : vector<1024x128xf32> to vector<1024x128xbf16>
    %c0_15 = arith.constant 0 : index
    %c0_16 = arith.constant 0 : index
    %34 = vector.load %arg5[%c0_15, %c0_16] : memref<1024x128xbf16, #tpu.memory_space<vmem>>, vector<1024x128xbf16>
    tpu.vector_store %arg5[%c0_15, %c0_16], %33 {strides = array<i32>} : memref<1024x128xbf16, #tpu.memory_space<vmem>>, vector<1024x128xbf16>,
    return
  }
  func.func @transform_0(%arg0: i32) -> (i32, i32) {
    %c0_i32 = arith.constant 0 : i32
    %c0_i32_0 = arith.constant 0 : i32
    %c0_i32_1 = arith.constant 0 : i32
    return %c0_i32, %c0_i32_0 : i32, i32
  }
  func.func @transform_1(%arg0: i32) -> (i32, i32) {
    %c0_i32 = arith.constant 0 : i32
    %c0_i32_0 = arith.constant 0 : i32
    %c0_i32_1 = arith.constant 0 : i32
    return %c0_i32, %c0_i32_0 : i32, i32
  }
  func.func @transform_2(%arg0: i32) -> (i32, i32) {
    %c0_i32 = arith.constant 0 : i32
    %c0_i32_0 = arith.constant 0 : i32
    %c0_i32_1 = arith.constant 0 : i32
    return %c0_i32, %c0_i32_0 : i32, i32
  }
  func.func @transform_3(%arg0: i32) -> (i32, i32) {
    %c0_i32 = arith.constant 0 : i32
    %c0_i32_0 = arith.constant 0 : i32
    %c0_i32_1 = arith.constant 0 : i32
    return %c0_i32, %c0_i32_0 : i32, i32
  }
  func.func @transform_4(%arg0: i32) -> (i32, i32) {
    %c0_i32 = arith.constant 0 : i32
    %c0_i32_0 = arith.constant 0 : i32
    %c0_i32_1 = arith.constant 0 : i32
    return %c0_i32, %c0_i32_0 : i32, i32
  }
}

module attributes {stable_mosaic.version = 11 : i64} {
  func.func @conv_bn_leaky_kernel(%arg0: i32, %arg1: memref<128x864xbf16, #tpu.memory_space<vmem>>, %arg2: memref<864x128xbf16, #tpu.memory_space<vmem>>, %arg3: memref<1x128xf32, #tpu.memory_space<vmem>>, %arg4: memref<1x128xf32, #tpu.memory_space<vmem>>, %arg5: memref<128x128xbf16, #tpu.memory_space<vmem>>) attributes {dimension_semantics = [#tpu.dimension_semantics<arbitrary>], iteration_bounds = array<i64: 1>, scalar_prefetch = 0 : i64, scratch_operands = 0 : i64, tpu.core_type = #tpu.core_type<tc>, window_params = [{pipeline_mode = #tpu.pipeline_mode<synchronous>, transform_indices = @transform_0, window_bounds = array<i64: 128, 864>}, {pipeline_mode = #tpu.pipeline_mode<synchronous>, transform_indices = @transform_1, window_bounds = array<i64: 864, 128>}, {pipeline_mode = #tpu.pipeline_mode<synchronous>, transform_indices = @transform_2, window_bounds = array<i64: 1, 128>}, {pipeline_mode = #tpu.pipeline_mode<synchronous>, transform_indices = @transform_3, window_bounds = array<i64: 1, 128>}, {pipeline_mode = #tpu.pipeline_mode<synchronous>, transform_indices = @transform_4, window_bounds = array<i64: 128, 128>}]} {
    %c0 = arith.constant 0 : index
    %c0_0 = arith.constant 0 : index
    %0 = vector.load %arg1[%c0, %c0_0] : memref<128x864xbf16, #tpu.memory_space<vmem>>, vector<128x864xbf16>
    %c0_1 = arith.constant 0 : index
    %c0_2 = arith.constant 0 : index
    %1 = vector.load %arg2[%c0_1, %c0_2] : memref<864x128xbf16, #tpu.memory_space<vmem>>, vector<864x128xbf16>
    %cst = arith.constant dense<0.000000e+00> : vector<128x128xf32>
    %2 = tpu.matmul %0, %1, %cst {dimension_numbers = #tpu.dot_dimension_numbers<[1], [0], [0], [1], [0, 0, 1, 1], [], []>} : vector<128x864xbf16>, vector<864x128xbf16>, vector<128x128xf32> -> vector<128x128xf32>
    %cst_3 = arith.constant dense<0.000000e+00> : vector<128xf32>
    %3 = vector.multi_reduction <add>, %2, %cst_3 [0] : vector<128x128xf32> to vector<128xf32>
    %4 = vector.shape_cast %3 : vector<128xf32> to vector<1x128xf32>
    %cst_4 = arith.constant 7.812500e-03 : f32
    %5 = vector.broadcast %cst_4 : f32 to vector<1x128xf32>
    %6 = arith.mulf %4, %5 : vector<1x128xf32>
    %7 = arith.mulf %2, %2 : vector<128x128xf32>
    %cst_5 = arith.constant dense<0.000000e+00> : vector<128xf32>
    %8 = vector.multi_reduction <add>, %7, %cst_5 [0] : vector<128x128xf32> to vector<128xf32>
    %9 = vector.shape_cast %8 : vector<128xf32> to vector<1x128xf32>
    %cst_6 = arith.constant 7.812500e-03 : f32
    %10 = vector.broadcast %cst_6 : f32 to vector<1x128xf32>
    %11 = arith.mulf %9, %10 : vector<1x128xf32>
    %12 = arith.mulf %6, %6 : vector<1x128xf32>
    %13 = arith.subf %11, %12 : vector<1x128xf32>
    %cst_7 = arith.constant 0.000000e+00 : f32
    %14 = vector.broadcast %cst_7 : f32 to vector<1x128xf32>
    %15 = arith.maximumf %13, %14 : vector<1x128xf32>
    %c0_8 = arith.constant 0 : index
    %c0_9 = arith.constant 0 : index
    %16 = vector.load %arg3[%c0_8, %c0_9] : memref<1x128xf32, #tpu.memory_space<vmem>>, vector<1x128xf32>
    %cst_10 = arith.constant 9.99999974E-6 : f32
    %17 = vector.broadcast %cst_10 : f32 to vector<1x128xf32>
    %18 = arith.addf %15, %17 : vector<1x128xf32>
    %19 = math.rsqrt %18 : vector<1x128xf32>
    %20 = arith.mulf %16, %19 : vector<1x128xf32>
    %c0_11 = arith.constant 0 : index
    %c0_12 = arith.constant 0 : index
    %21 = vector.load %arg4[%c0_11, %c0_12] : memref<1x128xf32, #tpu.memory_space<vmem>>, vector<1x128xf32>
    %22 = arith.mulf %6, %20 : vector<1x128xf32>
    %23 = arith.subf %21, %22 : vector<1x128xf32>
    %24 = vector.broadcast %20 : vector<1x128xf32> to vector<128x128xf32>
    %25 = arith.mulf %2, %24 : vector<128x128xf32>
    %26 = vector.broadcast %23 : vector<1x128xf32> to vector<128x128xf32>
    %27 = arith.addf %25, %26 : vector<128x128xf32>
    %cst_13 = arith.constant 0.000000e+00 : f32
    %28 = vector.broadcast %cst_13 : f32 to vector<128x128xf32>
    %29 = arith.cmpf oge, %27, %28 : vector<128x128xf32>
    %cst_14 = arith.constant 2.000000e-01 : f32
    %30 = vector.broadcast %cst_14 : f32 to vector<128x128xf32>
    %31 = arith.mulf %30, %27 : vector<128x128xf32>
    %32 = arith.select %29, %27, %31 : vector<128x128xi1>, vector<128x128xf32>
    %33 = arith.truncf %32 : vector<128x128xf32> to vector<128x128xbf16>
    %c0_15 = arith.constant 0 : index
    %c0_16 = arith.constant 0 : index
    %34 = vector.load %arg5[%c0_15, %c0_16] : memref<128x128xbf16, #tpu.memory_space<vmem>>, vector<128x128xbf16>
    tpu.vector_store %arg5[%c0_15, %c0_16], %33 {strides = array<i32>} : memref<128x128xbf16, #tpu.memory_space<vmem>>, vector<128x128xbf16>,
    return
  }
  func.func @transform_0(%arg0: i32) -> (i32, i32) {
    %c0_i32 = arith.constant 0 : i32
    %c0_i32_0 = arith.constant 0 : i32
    %c0_i32_1 = arith.constant 0 : i32
    return %c0_i32, %c0_i32_0 : i32, i32
  }
  func.func @transform_1(%arg0: i32) -> (i32, i32) {
    %c0_i32 = arith.constant 0 : i32
    %c0_i32_0 = arith.constant 0 : i32
    %c0_i32_1 = arith.constant 0 : i32
    return %c0_i32, %c0_i32_0 : i32, i32
  }
  func.func @transform_2(%arg0: i32) -> (i32, i32) {
    %c0_i32 = arith.constant 0 : i32
    %c0_i32_0 = arith.constant 0 : i32
    %c0_i32_1 = arith.constant 0 : i32
    return %c0_i32, %c0_i32_0 : i32, i32
  }
  func.func @transform_3(%arg0: i32) -> (i32, i32) {
    %c0_i32 = arith.constant 0 : i32
    %c0_i32_0 = arith.constant 0 : i32
    %c0_i32_1 = arith.constant 0 : i32
    return %c0_i32, %c0_i32_0 : i32, i32
  }
  func.func @transform_4(%arg0: i32) -> (i32, i32) {
    %c0_i32 = arith.constant 0 : i32
    %c0_i32_0 = arith.constant 0 : i32
    %c0_i32_1 = arith.constant 0 : i32
    return %c0_i32, %c0_i32_0 : i32, i32
  }
}

module attributes {stable_mosaic.version = 11 : i64} {
  func.func @conv_bn_leaky_kernel(%arg0: i32, %arg1: memref<16x1728xbf16, #tpu.memory_space<vmem>>, %arg2: memref<1728x128xbf16, #tpu.memory_space<vmem>>, %arg3: memref<1x128xf32, #tpu.memory_space<vmem>>, %arg4: memref<1x128xf32, #tpu.memory_space<vmem>>, %arg5: memref<16x128xbf16, #tpu.memory_space<vmem>>) attributes {dimension_semantics = [#tpu.dimension_semantics<arbitrary>], iteration_bounds = array<i64: 1>, scalar_prefetch = 0 : i64, scratch_operands = 0 : i64, tpu.core_type = #tpu.core_type<tc>, window_params = [{pipeline_mode = #tpu.pipeline_mode<synchronous>, transform_indices = @transform_0, window_bounds = array<i64: 16, 1728>}, {pipeline_mode = #tpu.pipeline_mode<synchronous>, transform_indices = @transform_1, window_bounds = array<i64: 1728, 128>}, {pipeline_mode = #tpu.pipeline_mode<synchronous>, transform_indices = @transform_2, window_bounds = array<i64: 1, 128>}, {pipeline_mode = #tpu.pipeline_mode<synchronous>, transform_indices = @transform_3, window_bounds = array<i64: 1, 128>}, {pipeline_mode = #tpu.pipeline_mode<synchronous>, transform_indices = @transform_4, window_bounds = array<i64: 16, 128>}]} {
    %c0 = arith.constant 0 : index
    %c0_0 = arith.constant 0 : index
    %0 = vector.load %arg1[%c0, %c0_0] : memref<16x1728xbf16, #tpu.memory_space<vmem>>, vector<16x1728xbf16>
    %c0_1 = arith.constant 0 : index
    %c0_2 = arith.constant 0 : index
    %1 = vector.load %arg2[%c0_1, %c0_2] : memref<1728x128xbf16, #tpu.memory_space<vmem>>, vector<1728x128xbf16>
    %cst = arith.constant dense<0.000000e+00> : vector<16x128xf32>
    %2 = tpu.matmul %0, %1, %cst {dimension_numbers = #tpu.dot_dimension_numbers<[1], [0], [0], [1], [0, 0, 1, 1], [], []>} : vector<16x1728xbf16>, vector<1728x128xbf16>, vector<16x128xf32> -> vector<16x128xf32>
    %cst_3 = arith.constant dense<0.000000e+00> : vector<128xf32>
    %3 = vector.multi_reduction <add>, %2, %cst_3 [0] : vector<16x128xf32> to vector<128xf32>
    %4 = vector.shape_cast %3 : vector<128xf32> to vector<1x128xf32>
    %cst_4 = arith.constant 6.250000e-02 : f32
    %5 = vector.broadcast %cst_4 : f32 to vector<1x128xf32>
    %6 = arith.mulf %4, %5 : vector<1x128xf32>
    %7 = arith.mulf %2, %2 : vector<16x128xf32>
    %cst_5 = arith.constant dense<0.000000e+00> : vector<128xf32>
    %8 = vector.multi_reduction <add>, %7, %cst_5 [0] : vector<16x128xf32> to vector<128xf32>
    %9 = vector.shape_cast %8 : vector<128xf32> to vector<1x128xf32>
    %cst_6 = arith.constant 6.250000e-02 : f32
    %10 = vector.broadcast %cst_6 : f32 to vector<1x128xf32>
    %11 = arith.mulf %9, %10 : vector<1x128xf32>
    %12 = arith.mulf %6, %6 : vector<1x128xf32>
    %13 = arith.subf %11, %12 : vector<1x128xf32>
    %cst_7 = arith.constant 0.000000e+00 : f32
    %14 = vector.broadcast %cst_7 : f32 to vector<1x128xf32>
    %15 = arith.maximumf %13, %14 : vector<1x128xf32>
    %c0_8 = arith.constant 0 : index
    %c0_9 = arith.constant 0 : index
    %16 = vector.load %arg3[%c0_8, %c0_9] : memref<1x128xf32, #tpu.memory_space<vmem>>, vector<1x128xf32>
    %cst_10 = arith.constant 9.99999974E-6 : f32
    %17 = vector.broadcast %cst_10 : f32 to vector<1x128xf32>
    %18 = arith.addf %15, %17 : vector<1x128xf32>
    %19 = math.rsqrt %18 : vector<1x128xf32>
    %20 = arith.mulf %16, %19 : vector<1x128xf32>
    %c0_11 = arith.constant 0 : index
    %c0_12 = arith.constant 0 : index
    %21 = vector.load %arg4[%c0_11, %c0_12] : memref<1x128xf32, #tpu.memory_space<vmem>>, vector<1x128xf32>
    %22 = arith.mulf %6, %20 : vector<1x128xf32>
    %23 = arith.subf %21, %22 : vector<1x128xf32>
    %24 = vector.broadcast %20 : vector<1x128xf32> to vector<16x128xf32>
    %25 = arith.mulf %2, %24 : vector<16x128xf32>
    %26 = vector.broadcast %23 : vector<1x128xf32> to vector<16x128xf32>
    %27 = arith.addf %25, %26 : vector<16x128xf32>
    %cst_13 = arith.constant 0.000000e+00 : f32
    %28 = vector.broadcast %cst_13 : f32 to vector<16x128xf32>
    %29 = arith.cmpf oge, %27, %28 : vector<16x128xf32>
    %cst_14 = arith.constant 2.000000e-01 : f32
    %30 = vector.broadcast %cst_14 : f32 to vector<16x128xf32>
    %31 = arith.mulf %30, %27 : vector<16x128xf32>
    %32 = arith.select %29, %27, %31 : vector<16x128xi1>, vector<16x128xf32>
    %33 = arith.truncf %32 : vector<16x128xf32> to vector<16x128xbf16>
    %c0_15 = arith.constant 0 : index
    %c0_16 = arith.constant 0 : index
    %34 = vector.load %arg5[%c0_15, %c0_16] : memref<16x128xbf16, #tpu.memory_space<vmem>>, vector<16x128xbf16>
    tpu.vector_store %arg5[%c0_15, %c0_16], %33 {strides = array<i32>} : memref<16x128xbf16, #tpu.memory_space<vmem>>, vector<16x128xbf16>,
    return
  }
  func.func @transform_0(%arg0: i32) -> (i32, i32) {
    %c0_i32 = arith.constant 0 : i32
    %c0_i32_0 = arith.constant 0 : i32
    %c0_i32_1 = arith.constant 0 : i32
    return %c0_i32, %c0_i32_0 : i32, i32
  }
  func.func @transform_1(%arg0: i32) -> (i32, i32) {
    %c0_i32 = arith.constant 0 : i32
    %c0_i32_0 = arith.constant 0 : i32
    %c0_i32_1 = arith.constant 0 : i32
    return %c0_i32, %c0_i32_0 : i32, i32
  }
  func.func @transform_2(%arg0: i32) -> (i32, i32) {
    %c0_i32 = arith.constant 0 : i32
    %c0_i32_0 = arith.constant 0 : i32
    %c0_i32_1 = arith.constant 0 : i32
    return %c0_i32, %c0_i32_0 : i32, i32
  }
  func.func @transform_3(%arg0: i32) -> (i32, i32) {
    %c0_i32 = arith.constant 0 : i32
    %c0_i32_0 = arith.constant 0 : i32
    %c0_i32_1 = arith.constant 0 : i32
    return %c0_i32, %c0_i32_0 : i32, i32
  }
  func.func @transform_4(%arg0: i32) -> (i32, i32) {
    %c0_i32 = arith.constant 0 : i32
    %c0_i32_0 = arith.constant 0 : i32
    %c0_i32_1 = arith.constant 0 : i32
    return %c0_i32, %c0_i32_0 : i32, i32
  }
}

module attributes {stable_mosaic.version = 11 : i64} {
  func.func @final_conv_kernel(%arg0: i32, %arg1: memref<4x3456xbf16, #tpu.memory_space<vmem>>, %arg2: memref<1x3456xbf16, #tpu.memory_space<vmem>>, %arg3: memref<1x1xf32, #tpu.memory_space<vmem>>, %arg4: memref<4x1xf32, #tpu.memory_space<vmem>>) attributes {dimension_semantics = [#tpu.dimension_semantics<arbitrary>], iteration_bounds = array<i64: 1>, scalar_prefetch = 0 : i64, scratch_operands = 0 : i64, tpu.core_type = #tpu.core_type<tc>, window_params = [{pipeline_mode = #tpu.pipeline_mode<synchronous>, transform_indices = @transform_0, window_bounds = array<i64: 4, 3456>}, {pipeline_mode = #tpu.pipeline_mode<synchronous>, transform_indices = @transform_1, window_bounds = array<i64: 1, 3456>}, {pipeline_mode = #tpu.pipeline_mode<synchronous>, transform_indices = @transform_2, window_bounds = array<i64: 1, 1>}, {pipeline_mode = #tpu.pipeline_mode<synchronous>, transform_indices = @transform_3, window_bounds = array<i64: 4, 1>}]} {
    %c0 = arith.constant 0 : index
    %c0_0 = arith.constant 0 : index
    %0 = vector.load %arg1[%c0, %c0_0] : memref<4x3456xbf16, #tpu.memory_space<vmem>>, vector<4x3456xbf16>
    %1 = arith.extf %0 : vector<4x3456xbf16> to vector<4x3456xf32>
    %c0_1 = arith.constant 0 : index
    %c0_2 = arith.constant 0 : index
    %2 = vector.load %arg2[%c0_1, %c0_2] : memref<1x3456xbf16, #tpu.memory_space<vmem>>, vector<1x3456xbf16>
    %3 = arith.extf %2 : vector<1x3456xbf16> to vector<1x3456xf32>
    %4 = vector.broadcast %3 : vector<1x3456xf32> to vector<4x3456xf32>
    %5 = arith.mulf %1, %4 : vector<4x3456xf32>
    %cst = arith.constant dense<0.000000e+00> : vector<4xf32>
    %6 = vector.multi_reduction <add>, %5, %cst [1] : vector<4x3456xf32> to vector<4xf32>
    %7 = vector.shape_cast %6 : vector<4xf32> to vector<4x1xf32>
    %c0_3 = arith.constant 0 : index
    %c0_4 = arith.constant 0 : index
    %8 = vector.load %arg3[%c0_3, %c0_4] : memref<1x1xf32, #tpu.memory_space<vmem>>, vector<1x1xf32>
    %9 = vector.broadcast %8 : vector<1x1xf32> to vector<4x1xf32>
    %10 = arith.addf %7, %9 : vector<4x1xf32>
    %c0_5 = arith.constant 0 : index
    %c0_6 = arith.constant 0 : index
    %11 = vector.load %arg4[%c0_5, %c0_6] : memref<4x1xf32, #tpu.memory_space<vmem>>, vector<4x1xf32>
    tpu.vector_store %arg4[%c0_5, %c0_6], %10 {strides = array<i32>} : memref<4x1xf32, #tpu.memory_space<vmem>>, vector<4x1xf32>,
    return
  }
  func.func @transform_0(%arg0: i32) -> (i32, i32) {
    %c0_i32 = arith.constant 0 : i32
    %c0_i32_0 = arith.constant 0 : i32
    %c0_i32_1 = arith.constant 0 : i32
    return %c0_i32, %c0_i32_0 : i32, i32
  }
  func.func @transform_1(%arg0: i32) -> (i32, i32) {
    %c0_i32 = arith.constant 0 : i32
    %c0_i32_0 = arith.constant 0 : i32
    %c0_i32_1 = arith.constant 0 : i32
    return %c0_i32, %c0_i32_0 : i32, i32
  }
  func.func @transform_2(%arg0: i32) -> (i32, i32) {
    %c0_i32 = arith.constant 0 : i32
    %c0_i32_0 = arith.constant 0 : i32
    %c0_i32_1 = arith.constant 0 : i32
    return %c0_i32, %c0_i32_0 : i32, i32
  }
  func.func @transform_3(%arg0: i32) -> (i32, i32) {
    %c0_i32 = arith.constant 0 : i32
    %c0_i32_0 = arith.constant 0 : i32
    %c0_i32_1 = arith.constant 0 : i32
    return %c0_i32, %c0_i32_0 : i32, i32
  }
}

</mosaic_0001>

<llo_original>
// kernel: discriminator_forward.5
$region0: #{discriminator_forward.5}
  #allocation0 [shape = 'u32[]', space=smem, size = 0x4, offset = 0x4, fixed_abs, tag = 'smem constant byte address 0x4 - core index']
  #allocation1 [shape = 'u32[144,128]{1,0:T(1,128)}', space=vmem, size = 0x12000, scoped, tag = 'internal scratch']
  %s0 = inlined_call_operand.vmem [shape: bf16[8192,54], index: 0, kind: input, shape index: {}]
  %s1 = inlined_call_operand.vmem [shape: bf16[54,128], index: 1, kind: input, shape index: {}]
  %s2 = inlined_call_operand.vmem [shape: f32[1,128], index: 2, kind: input, shape index: {}]
  %s3 = inlined_call_operand.vmem [shape: f32[1,128], index: 3, kind: input, shape index: {}]
  %s4 = inlined_call_operand.vmem [shape: bf16[8192,128], index: 4, kind: output, shape index: {}]
  %s5 = sld [smem:[#allocation0]]
  $region49: #{discriminator_forward.5} parent=0
    _
  %s7 = ssub.s32 1, %s5
  %s8 = scalar_select 0, %s7, %s5
  loop: start=0, step=1, limit=10
  $region2: #{discriminator_forward.5} parent=0 // loop_pre_header
    _
  $region3: #{discriminator_forward.5} parent=0 // loop_header
    %s10 = sphi 0, %s14
    %p11 = scmp.ge.s32.totalorder %s10, 10
    %s20 = sphi 0, %s22
    %s23 = sphi 0, %s20
    %s24 = sphi 0, %s23
    %s40 = sphi 0, %s24
    %s44 = sphi 0, %s44
    %s46 = sphi 0, %s44
    %s47 = sphi 0, %s46
    %s61 = sphi 0, %s47
    %s65 = sphi 0, %s65
    %s67 = sphi 0, %s65
    %s68 = sphi 0, %s67
    %s82 = sphi 0, %s68
    %s86 = sphi 0, %s86
    %s88 = sphi 0, %s86
    %s89 = sphi 0, %s88
    %s103 = sphi 0, %s89
    %s109 = sphi 0, %s111
    %s112 = sphi 0, %s109
    %s113 = sphi 0, %s112
    %s129 = sphi 0, %s113
  $region4: #{discriminator_forward.5} parent=0 // loop_header_branch
    %13 = sbr.rel (%p11) target = $region8
  $region5: #{discriminator_forward.5} parent=0 // loop_body
    %s15 = ssub.s32 %s10, 1
    %s16 = ssub.s32 %s10, 2
    %s17 = sadd.s32 %s10, 1
    %s18 = ssub.s32 %s10, %s17
    %p19 = scmp.eq.s32.totalorder %s18, 0
    %s21 = sadd.s32 %s20, 1
    %s22 = scalar_select %p19, %s20, %s21
    %p25 = pneg %p19
    %p26 = scmp.eq.s32.totalorder %s10, 7
    %p27 = por %p25, %p26
    %p28 = scmp.ne.s32.totalorder %s20, %s23
    %p29 = scmp.eq.s32.totalorder %s10, 0
    %p30 = por %p28, %p29
    %p31 = scmp.ne.s32.totalorder %s20, %s23
    %p32 = scmp.eq.s32.totalorder %s15, 7
    %p33 = por %p31, %p32
    %p34 = scmp.ne.s32.totalorder %s23, %s24
    %p35 = scmp.eq.s32.totalorder %s15, 0
    %p36 = por %p34, %p35
    %p37 = scmp.ne.s32.totalorder %s23, %s24
    %p38 = scmp.eq.s32.totalorder %s16, 7
    %p39 = por %p37, %p38
    %p41 = scmp.ne.s32.totalorder %s24, %s40
    %p42 = scmp.eq.s32.totalorder %s16, 0
    %p43 = por %p41, %p42
    %s45 = sadd.s32 %s44, 1
    %p48 = scmp.eq.s32.totalorder %s10, 7
    %p49 = scmp.ne.s32.totalorder %s44, %s46
    %p50 = scmp.eq.s32.totalorder %s10, 0
    %p51 = por %p49, %p50
    %p52 = scmp.ne.s32.totalorder %s44, %s46
    %p53 = scmp.eq.s32.totalorder %s15, 7
    %p54 = por %p52, %p53
    %p55 = scmp.ne.s32.totalorder %s46, %s47
    %p56 = scmp.eq.s32.totalorder %s15, 0
    %p57 = por %p55, %p56
    %p58 = scmp.ne.s32.totalorder %s46, %s47
    %p59 = scmp.eq.s32.totalorder %s16, 7
    %p60 = por %p58, %p59
    %p62 = scmp.ne.s32.totalorder %s47, %s61
    %p63 = scmp.eq.s32.totalorder %s16, 0
    %p64 = por %p62, %p63
    %s66 = sadd.s32 %s65, 1
    %p69 = scmp.eq.s32.totalorder %s10, 7
    %p70 = scmp.ne.s32.totalorder %s65, %s67
    %p71 = scmp.eq.s32.totalorder %s10, 0
    %p72 = por %p70, %p71
    %p73 = scmp.ne.s32.totalorder %s65, %s67
    %p74 = scmp.eq.s32.totalorder %s15, 7
    %p75 = por %p73, %p74
    %p76 = scmp.ne.s32.totalorder %s67, %s68
    %p77 = scmp.eq.s32.totalorder %s15, 0
    %p78 = por %p76, %p77
    %p79 = scmp.ne.s32.totalorder %s67, %s68
    %p80 = scmp.eq.s32.totalorder %s16, 7
    %p81 = por %p79, %p80
    %p83 = scmp.ne.s32.totalorder %s68, %s82
    %p84 = scmp.eq.s32.totalorder %s16, 0
    %p85 = por %p83, %p84
    %s87 = sadd.s32 %s86, 1
    %p90 = scmp.eq.s32.totalorder %s10, 7
    %p91 = scmp.ne.s32.totalorder %s86, %s88
    %p92 = scmp.eq.s32.totalorder %s10, 0
    %p93 = por %p91, %p92
    %p94 = scmp.ne.s32.totalorder %s86, %s88
    %p95 = scmp.eq.s32.totalorder %s15, 7
    %p96 = por %p94, %p95
    %p97 = scmp.ne.s32.totalorder %s88, %s89
    %p98 = scmp.eq.s32.totalorder %s15, 0
    %p99 = por %p97, %p98
    %p100 = scmp.ne.s32.totalorder %s88, %s89
    %p101 = scmp.eq.s32.totalorder %s16, 7
    %p102 = por %p100, %p101
    %p104 = scmp.ne.s32.totalorder %s89, %s103
    %p105 = scmp.eq.s32.totalorder %s16, 0
    %p106 = por %p104, %p105
    %s107 = ssub.s32 %s10, %s17
    %p108 = scmp.eq.s32.totalorder %s107, 0
    %s110 = sadd.s32 %s109, 1
    %s111 = scalar_select %p108, %s109, %s110
    %p114 = pneg %p108
    %p115 = scmp.eq.s32.totalorder %s10, 7
    %p116 = por %p114, %p115
    %p117 = scmp.ne.s32.totalorder %s109, %s112
    %p118 = scmp.eq.s32.totalorder %s10, 0
    %p119 = por %p117, %p118
    %p120 = scmp.ne.s32.totalorder %s109, %s112
    %p121 = scmp.eq.s32.totalorder %s15, 7
    %p122 = por %p120, %p121
    %p123 = scmp.ne.s32.totalorder %s112, %s113
    %p124 = scmp.eq.s32.totalorder %s15, 0
    %p125 = por %p123, %p124
    %p126 = scmp.ne.s32.totalorder %s112, %s113
    %p127 = scmp.eq.s32.totalorder %s16, 7
    %p128 = por %p126, %p127
    %p130 = scmp.ne.s32.totalorder %s113, %s129
    %p131 = scmp.eq.s32.totalorder %s16, 0
    %p132 = por %p130, %p131
    %p133 = scmp.le.s32.totalorder 1, %s10
    %p134 = scmp.lt.s32.totalorder %s10, 9
    %p135 = pnand %p133, %p134
    %p136 = pneg %p135
    // Predicated region
    $region9: #{discriminator_forward.5} parent=5 // pred_check
      _
    $region10: #{discriminator_forward.5} parent=5 // pred_check_branch
      %138 = sbr.rel (%p135) target = $region12
    $region11: #{discriminator_forward.5} parent=5 // pred_region
      %s139 = ssub.s32 %s10, 1
      // Predicated region
      $region13: #{discriminator_forward.5} parent=11 // pred_check
        %p140 = pneg %p57
      $region14: #{discriminator_forward.5} parent=11 // pred_check_branch
        %142 = sbr.rel (%p140) target = $region16
      $region15: #{discriminator_forward.5} parent=11 // pred_region
        _
      $region16: #{discriminator_forward.5} parent=11 // pred_fallthru
        _
      // Predicated region
      $region17: #{discriminator_forward.5} parent=11 // pred_check
        %p143 = pneg %p78
      $region18: #{discriminator_forward.5} parent=11 // pred_check_branch
        %145 = sbr.rel (%p143) target = $region20
      $region19: #{discriminator_forward.5} parent=11 // pred_region
        _
      $region20: #{discriminator_forward.5} parent=11 // pred_fallthru
        _
      // Predicated region
      $region21: #{discriminator_forward.5} parent=11 // pred_check
        %p146 = pneg %p99
      $region22: #{discriminator_forward.5} parent=11 // pred_check_branch
        %148 = sbr.rel (%p146) target = $region24
      $region23: #{discriminator_forward.5} parent=11 // pred_region
        _
      $region24: #{discriminator_forward.5} parent=11 // pred_fallthru
        _
    $region12: #{discriminator_forward.5} parent=5 // pred_fallthru
      _
    %p149 = scmp.lt.s32.totalorder %s10, 8
    // Predicated region
    $region25: #{discriminator_forward.5} parent=5 // pred_check
      %p150 = pneg %p149
    $region26: #{discriminator_forward.5} parent=5 // pred_check_branch
      %152 = sbr.rel (%p150) target = $region28
    $region27: #{discriminator_forward.5} parent=5 // pred_region
      // Predicated region
      $region29: #{discriminator_forward.5} parent=27 // pred_check
        %p153 = pneg %p30
      $region30: #{discriminator_forward.5} parent=27 // pred_check_branch
        %155 = sbr.rel (%p153) target = $region32
      $region31: #{discriminator_forward.5} parent=27 // pred_region
        %s156 = smul.u32 128, %s10
        %p157 = scmp.lt.s32.totalorder %s156, 1023
        %s158 = scalar_select %p157, %s156, 1023
        %s159 = smul.addr %s158, 4
        %s160 = scalar_lea.vmem %s0, %s159
        %s161 = smul.u32 128, %s10
      $region32: #{discriminator_forward.5} parent=27 // pred_fallthru
        _
    $region28: #{discriminator_forward.5} parent=5 // pred_fallthru
      _
    %p162 = scmp.le.s32.totalorder 1, %s10
    %p163 = scmp.lt.s32.totalorder %s10, 9
    %p164 = pnand %p162, %p163
    %p165 = pneg %p164
    // Predicated region
    $region33: #{discriminator_forward.5} parent=5 // pred_check
      _
    $region34: #{discriminator_forward.5} parent=5 // pred_check_branch
      %167 = sbr.rel (%p164) target = $region36
    $region35: #{discriminator_forward.5} parent=5 // pred_region
      %s168 = ssub.s32 %s10, 1
      %s169 = smul.u32 128, %s15
      %p170 = scmp.lt.s32.totalorder %s169, 1023
      %s171 = scalar_select %p170, %s169, 1023
      %s172 = smul.addr %s171, 4
      %s173 = scalar_lea.vmem %s0, %s172
      %p174 = pneg %p36
      %p175 = pneg %p33
      %p176 = pneg %p57
      %p177 = pneg %p54
      %p178 = pneg %p78
      %p179 = pneg %p75
      %p180 = pneg %p99
      %p181 = pneg %p96
      %p182 = pneg %p125
      %p183 = pneg %p122
      %s184 = smul.u32 128, %s15
      %p185 = scmp.lt.s32.totalorder %s184, 1023
      %s186 = scalar_select %p185, %s184, 1023
      %s187 = smul.addr %s186, 4
      %s188 = scalar_lea.vmem %s4, %s187
      %s189 = smul.u32 128, %s15
      %p190 = scmp.lt.s32.totalorder %s189, 1023
      %s191 = scalar_select %p190, %s189, 1023
      %s192 = smul.addr %s191, 4
      %s193 = scalar_lea.vmem %s0, %s192
      %s194 = smul.u32 128, %s15
      %s195 = smul.u32 128, %s15
      %p196 = scmp.lt.s32.totalorder %s195, 1023
      %s197 = scalar_select %p196, %s195, 1023
      %s198 = smul.addr %s197, 4
      %s199 = scalar_lea.vmem %s4, %s198
      %s200 = smul.u32 128, %s15
      %v202 = vld [vmem:[%s193] sm:$0xf]
      %v203 = vld [vmem:[%s193 + $0x4] sm:$0xf]
      %v204 = vld [vmem:[%s193 + $0x8] sm:$0xf]
      %v205 = vld [vmem:[%s193 + $0xc] sm:$0xf]
      %v206 = vld [vmem:[%s193 + $0x10] sm:$0xf]
      %v207 = vld [vmem:[%s193 + $0x14] sm:$0xf]
      %v208 = vld [vmem:[%s193 + $0x18] sm:$0xf]
      %v209 = vld [vmem:[%s193 + $0x1c] sm:$0xf]
      %v210 = vld [vmem:[%s193 + $0x20] sm:$0xf]
      %v211 = vld [vmem:[%s193 + $0x24] sm:$0xf]
      %v212 = vld [vmem:[%s193 + $0x28] sm:$0xf]
      %v213 = vld [vmem:[%s193 + $0x2c] sm:$0xf]
      %v214 = vld [vmem:[%s193 + $0x30] sm:$0xf]
      %v215 = vld [vmem:[%s193 + $0x34] sm:$0xf]
      %v216 = vld [vmem:[%s193 + $0x38] sm:$0xf]
      %v217 = vld [vmem:[%s193 + $0x3c] sm:$0xf]
      %v218 = vld [vmem:[%s193 + $0x40] sm:$0xf]
      %v219 = vld [vmem:[%s193 + $0x44] sm:$0xf]
      %v220 = vld [vmem:[%s193 + $0x48] sm:$0xf]
      %v221 = vld [vmem:[%s193 + $0x4c] sm:$0xf]
      %v222 = vld [vmem:[%s193 + $0x50] sm:$0xf]
      %v223 = vld [vmem:[%s193 + $0x54] sm:$0xf]
      %v224 = vld [vmem:[%s193 + $0x58] sm:$0xf]
      %v225 = vld [vmem:[%s193 + $0x5c] sm:$0xf]
      %v226 = vld [vmem:[%s193 + $0x60] sm:$0xf]
      %v227 = vld [vmem:[%s193 + $0x64] sm:$0xf]
      %v228 = vld [vmem:[%s193 + $0x68] sm:$0xf]
      %v229 = vld [vmem:[%s193 + $0x6c] sm:$0xf]
      %v230 = vld [vmem:[%s193 + $0x70] sm:$0xf]
      %v231 = vld [vmem:[%s193 + $0x74] sm:$0xf]
      %v232 = vld [vmem:[%s193 + $0x78] sm:$0xf]
      %v233 = vld [vmem:[%s193 + $0x7c] sm:$0xf]
      %v234 = vld [vmem:[%s193 + $0x80] sm:$0xf]
      %v235 = vld [vmem:[%s193 + $0x84] sm:$0xf]
      %v236 = vld [vmem:[%s193 + $0x88] sm:$0xf]
      %v237 = vld [vmem:[%s193 + $0x8c] sm:$0xf]
      %v238 = vld [vmem:[%s193 + $0x90] sm:$0xf]
      %v239 = vld [vmem:[%s193 + $0x94] sm:$0xf]
      %v240 = vld [vmem:[%s193 + $0x98] sm:$0xf]
      %v241 = vld [vmem:[%s193 + $0x9c] sm:$0xf]
      %v242 = vld [vmem:[%s193 + $0xa0] sm:$0xf]
      %v243 = vld [vmem:[%s193 + $0xa4] sm:$0xf]
      %v244 = vld [vmem:[%s193 + $0xa8] sm:$0xf]
      %v245 = vld [vmem:[%s193 + $0xac] sm:$0xf]
      %v246 = vld [vmem:[%s193 + $0xb0] sm:$0xf]
      %v247 = vld [vmem:[%s193 + $0xb4] sm:$0xf]
      %v248 = vld [vmem:[%s193 + $0xb8] sm:$0xf]
      %v249 = vld [vmem:[%s193 + $0xbc] sm:$0xf]
      %v250 = vld [vmem:[%s193 + $0xc0] sm:$0xf]
      %v251 = vld [vmem:[%s193 + $0xc4] sm:$0xf]
      %v252 = vld [vmem:[%s193 + $0xc8] sm:$0xf]
      %v253 = vld [vmem:[%s193 + $0xcc] sm:$0xf]
      %v254 = vld [vmem:[%s193 + $0xd0] sm:$0xf]
      %v255 = vld [vmem:[%s193 + $0xd4] sm:$0xf]
      %v256 = vld [vmem:[%s193 + $0xd8] sm:$0xf]
      %v257 = vld [vmem:[%s193 + $0xdc] sm:$0xf]
      %v258 = vld [vmem:[%s193 + $0xe0] sm:$0xf]
      %v259 = vld [vmem:[%s193 + $0xe4] sm:$0xf]
      %v260 = vld [vmem:[%s193 + $0xe8] sm:$0xf]
      %v261 = vld [vmem:[%s193 + $0xec] sm:$0xf]
      %v262 = vld [vmem:[%s193 + $0xf0] sm:$0xf]
      %v263 = vld [vmem:[%s193 + $0xf4] sm:$0xf]
      %v264 = vld [vmem:[%s193 + $0xf8] sm:$0xf]
      %v265 = vld [vmem:[%s193 + $0xfc] sm:$0xf]
      %v266 = vld [vmem:[%s193 + $0x100] sm:$0xf]
      %v267 = vld [vmem:[%s193 + $0x104] sm:$0xf]
      %v268 = vld [vmem:[%s193 + $0x108] sm:$0xf]
      %v269 = vld [vmem:[%s193 + $0x10c] sm:$0xf]
      %v270 = vld [vmem:[%s193 + $0x110] sm:$0xf]
      %v271 = vld [vmem:[%s193 + $0x114] sm:$0xf]
      %v272 = vld [vmem:[%s193 + $0x118] sm:$0xf]
      %v273 = vld [vmem:[%s193 + $0x11c] sm:$0xf]
      %v274 = vld [vmem:[%s193 + $0x120] sm:$0xf]
      %v275 = vld [vmem:[%s193 + $0x124] sm:$0xf]
      %v276 = vld [vmem:[%s193 + $0x128] sm:$0xf]
      %v277 = vld [vmem:[%s193 + $0x12c] sm:$0xf]
      %v278 = vld [vmem:[%s193 + $0x130] sm:$0xf]
      %v279 = vld [vmem:[%s193 + $0x134] sm:$0xf]
      %v280 = vld [vmem:[%s193 + $0x138] sm:$0xf]
      %v281 = vld [vmem:[%s193 + $0x13c] sm:$0xf]
      %v282 = vld [vmem:[%s193 + $0x140] sm:$0xf]
      %v283 = vld [vmem:[%s193 + $0x144] sm:$0xf]
      %v284 = vld [vmem:[%s193 + $0x148] sm:$0xf]
      %v285 = vld [vmem:[%s193 + $0x14c] sm:$0xf]
      %v286 = vld [vmem:[%s193 + $0x150] sm:$0xf]
      %v287 = vld [vmem:[%s193 + $0x154] sm:$0xf]
      %v288 = vld [vmem:[%s193 + $0x158] sm:$0xf]
      %v289 = vld [vmem:[%s193 + $0x15c] sm:$0xf]
      %v290 = vld [vmem:[%s193 + $0x160] sm:$0xf]
      %v291 = vld [vmem:[%s193 + $0x164] sm:$0xf]
      %v292 = vld [vmem:[%s193 + $0x168] sm:$0xf]
      %v293 = vld [vmem:[%s193 + $0x16c] sm:$0xf]
      %v294 = vld [vmem:[%s193 + $0x170] sm:$0xf]
      %v295 = vld [vmem:[%s193 + $0x174] sm:$0xf]
      %v296 = vld [vmem:[%s193 + $0x178] sm:$0xf]
      %v297 = vld [vmem:[%s193 + $0x17c] sm:$0xf]
      %v298 = vld [vmem:[%s193 + $0x180] sm:$0xf]
      %v299 = vld [vmem:[%s193 + $0x184] sm:$0xf]
      %v300 = vld [vmem:[%s193 + $0x188] sm:$0xf]
      %v301 = vld [vmem:[%s193 + $0x18c] sm:$0xf]
      %v302 = vld [vmem:[%s193 + $0x190] sm:$0xf]
      %v303 = vld [vmem:[%s193 + $0x194] sm:$0xf]
      %v304 = vld [vmem:[%s193 + $0x198] sm:$0xf]
      %v305 = vld [vmem:[%s193 + $0x19c] sm:$0xf]
      %v306 = vld [vmem:[%s193 + $0x1a0] sm:$0xf]
      %v307 = vld [vmem:[%s193 + $0x1a4] sm:$0xf]
      %v308 = vld [vmem:[%s193 + $0x1a8] sm:$0xf]
      %v309 = vld [vmem:[%s193 + $0x1ac] sm:$0xf]
      %v310 = vld [vmem:[%s193 + $0x1b0] sm:$0xf]
      %v311 = vld [vmem:[%s193 + $0x1b4] sm:$0xf]
      %v312 = vld [vmem:[%s193 + $0x1b8] sm:$0xf]
      %v313 = vld [vmem:[%s193 + $0x1bc] sm:$0xf]
      %v314 = vld [vmem:[%s193 + $0x1c0] sm:$0xf]
      %v315 = vld [vmem:[%s193 + $0x1c4] sm:$0xf]
      %v316 = vld [vmem:[%s193 + $0x1c8] sm:$0xf]
      %v317 = vld [vmem:[%s193 + $0x1cc] sm:$0xf]
      %v318 = vld [vmem:[%s193 + $0x1d0] sm:$0xf]
      %v319 = vld [vmem:[%s193 + $0x1d4] sm:$0xf]
      %v320 = vld [vmem:[%s193 + $0x1d8] sm:$0xf]
      %v321 = vld [vmem:[%s193 + $0x1dc] sm:$0xf]
      %v322 = vld [vmem:[%s193 + $0x1e0] sm:$0xf]
      %v323 = vld [vmem:[%s193 + $0x1e4] sm:$0xf]
      %v324 = vld [vmem:[%s193 + $0x1e8] sm:$0xf]
      %v325 = vld [vmem:[%s193 + $0x1ec] sm:$0xf]
      %v326 = vld [vmem:[%s193 + $0x1f0] sm:$0xf]
      %v327 = vld [vmem:[%s193 + $0x1f4] sm:$0xf]
      %v328 = vld [vmem:[%s193 + $0x1f8] sm:$0xf]
      %v329 = vld [vmem:[%s193 + $0x1fc] sm:$0xf]
      %v330 = vld [vmem:[%s1] sm:$0xf]
      %v331 = vld [vmem:[%s1 + $0x4] sm:$0xf]
      %v332 = vld [vmem:[%s1 + $0x8] sm:$0xf]
      %v333 = vld [vmem:[%s1 + $0xc] sm:$0xf]
      %v334 = vld [vmem:[%s1 + $0x10] sm:$0xf]
      %v335 = vld [vmem:[%s1 + $0x14] sm:$0xf]
      %v336 = vld [vmem:[%s1 + $0x18] sm:$0x7]
      %v465 = vunpack.c.l.b16 %v202
      %v466 = vunpack.c.l.b16 %v203
      %v467 = vunpack.c.l.b16 %v204
      %v468 = vunpack.c.l.b16 %v205
      %v469 = vunpack.c.l.b16 %v206
      %v470 = vunpack.c.l.b16 %v207
      %v471 = vunpack.c.l.b16 %v208
      %v472 = vunpack.c.l.b16 %v209
      %v473 = vunpack.c.l.b16 %v210
      %v474 = vunpack.c.l.b16 %v211
      %v475 = vunpack.c.l.b16 %v212
      %v476 = vunpack.c.l.b16 %v213
      %v477 = vunpack.c.l.b16 %v214
      %v478 = vunpack.c.l.b16 %v215
      %v479 = vunpack.c.l.b16 %v216
      %v480 = vunpack.c.l.b16 %v217
      %v481 = vunpack.c.l.b16 %v218
      %v482 = vunpack.c.l.b16 %v219
      %v483 = vunpack.c.l.b16 %v220
      %v484 = vunpack.c.l.b16 %v221
      %v485 = vunpack.c.l.b16 %v222
      %v486 = vunpack.c.l.b16 %v223
      %v487 = vunpack.c.l.b16 %v224
      %v488 = vunpack.c.l.b16 %v225
      %v489 = vunpack.c.l.b16 %v226
      %v490 = vunpack.c.l.b16 %v227
      %v491 = vunpack.c.l.b16 %v228
      %v492 = vunpack.c.l.b16 %v229
      %v493 = vunpack.c.l.b16 %v230
      %v494 = vunpack.c.l.b16 %v231
      %v495 = vunpack.c.l.b16 %v232
      %v496 = vunpack.c.l.b16 %v233
      %v497 = vunpack.c.l.b16 %v234
      %v498 = vunpack.c.l.b16 %v235
      %v499 = vunpack.c.l.b16 %v236
      %v500 = vunpack.c.l.b16 %v237
      %v501 = vunpack.c.l.b16 %v238
      %v502 = vunpack.c.l.b16 %v239
      %v503 = vunpack.c.l.b16 %v240
      %v504 = vunpack.c.l.b16 %v241
      %v505 = vunpack.c.l.b16 %v242
      %v506 = vunpack.c.l.b16 %v243
      %v507 = vunpack.c.l.b16 %v244
      %v508 = vunpack.c.l.b16 %v245
      %v509 = vunpack.c.l.b16 %v246
      %v510 = vunpack.c.l.b16 %v247
      %v511 = vunpack.c.l.b16 %v248
      %v512 = vunpack.c.l.b16 %v249
      %v513 = vunpack.c.l.b16 %v250
      %v514 = vunpack.c.l.b16 %v251
      %v515 = vunpack.c.l.b16 %v252
      %v516 = vunpack.c.l.b16 %v253
      %v517 = vunpack.c.l.b16 %v254
      %v518 = vunpack.c.l.b16 %v255
      %v519 = vunpack.c.l.b16 %v256
      %v520 = vunpack.c.l.b16 %v257
      %v521 = vunpack.c.l.b16 %v258
      %v522 = vunpack.c.l.b16 %v259
      %v523 = vunpack.c.l.b16 %v260
      %v524 = vunpack.c.l.b16 %v261
      %v525 = vunpack.c.l.b16 %v262
      %v526 = vunpack.c.l.b16 %v263
      %v527 = vunpack.c.l.b16 %v264
      %v528 = vunpack.c.l.b16 %v265
      %v529 = vunpack.c.l.b16 %v266
      %v530 = vunpack.c.l.b16 %v267
      %v531 = vunpack.c.l.b16 %v268
      %v532 = vunpack.c.l.b16 %v269
      %v533 = vunpack.c.l.b16 %v270
      %v534 = vunpack.c.l.b16 %v271
      %v535 = vunpack.c.l.b16 %v272
      %v536 = vunpack.c.l.b16 %v273
      %v537 = vunpack.c.l.b16 %v274
      %v538 = vunpack.c.l.b16 %v275
      %v539 = vunpack.c.l.b16 %v276
      %v540 = vunpack.c.l.b16 %v277
      %v541 = vunpack.c.l.b16 %v278
      %v542 = vunpack.c.l.b16 %v279
      %v543 = vunpack.c.l.b16 %v280
      %v544 = vunpack.c.l.b16 %v281
      %v545 = vunpack.c.l.b16 %v282
      %v546 = vunpack.c.l.b16 %v283
      %v547 = vunpack.c.l.b16 %v284
      %v548 = vunpack.c.l.b16 %v285
      %v549 = vunpack.c.l.b16 %v286
      %v550 = vunpack.c.l.b16 %v287
      %v551 = vunpack.c.l.b16 %v288
      %v552 = vunpack.c.l.b16 %v289
      %v553 = vunpack.c.l.b16 %v290
      %v554 = vunpack.c.l.b16 %v291
      %v555 = vunpack.c.l.b16 %v292
      %v556 = vunpack.c.l.b16 %v293
      %v557 = vunpack.c.l.b16 %v294
      %v558 = vunpack.c.l.b16 %v295
      %v559 = vunpack.c.l.b16 %v296
      %v560 = vunpack.c.l.b16 %v297
      %v561 = vunpack.c.l.b16 %v298
      %v562 = vunpack.c.l.b16 %v299
      %v563 = vunpack.c.l.b16 %v300
      %v564 = vunpack.c.l.b16 %v301
      %v565 = vunpack.c.l.b16 %v302
      %v566 = vunpack.c.l.b16 %v303
      %v567 = vunpack.c.l.b16 %v304
      %v568 = vunpack.c.l.b16 %v305
      %v569 = vunpack.c.l.b16 %v306
      %v570 = vunpack.c.l.b16 %v307
      %v571 = vunpack.c.l.b16 %v308
      %v572 = vunpack.c.l.b16 %v309
      %v573 = vunpack.c.l.b16 %v310
      %v574 = vunpack.c.l.b16 %v311
      %v575 = vunpack.c.l.b16 %v312
      %v576 = vunpack.c.l.b16 %v313
      %v577 = vunpack.c.l.b16 %v314
      %v578 = vunpack.c.l.b16 %v315
      %v579 = vunpack.c.l.b16 %v316
      %v580 = vunpack.c.l.b16 %v317
      %v581 = vunpack.c.l.b16 %v318
      %v582 = vunpack.c.l.b16 %v319
      %v583 = vunpack.c.l.b16 %v320
      %v584 = vunpack.c.l.b16 %v321
      %v585 = vunpack.c.l.b16 %v322
      %v586 = vunpack.c.l.b16 %v323
      %v587 = vunpack.c.l.b16 %v324
      %v588 = vunpack.c.l.b16 %v325
      %v589 = vunpack.c.l.b16 %v326
      %v590 = vunpack.c.l.b16 %v327
      %v591 = vunpack.c.l.b16 %v328
      %v592 = vunpack.c.l.b16 %v329
      %v593 = vpack.c.b16 %v466, %v465
      %v594 = vpack.c.b16 %v468, %v467
      %v595 = vpack.c.b16 %v470, %v469
      %v596 = vpack.c.b16 %v472, %v471
      %v597 = vpack.c.b16 %v474, %v473
      %v598 = vpack.c.b16 %v476, %v475
      %v599 = vpack.c.b16 %v478, %v477
      %v600 = vpack.c.b16 %v480, %v479
      %v601 = vpack.c.b16 %v482, %v481
      %v602 = vpack.c.b16 %v484, %v483
      %v603 = vpack.c.b16 %v486, %v485
      %v604 = vpack.c.b16 %v488, %v487
      %v605 = vpack.c.b16 %v490, %v489
      %v606 = vpack.c.b16 %v492, %v491
      %v607 = vpack.c.b16 %v494, %v493
      %v608 = vpack.c.b16 %v496, %v495
      %v609 = vpack.c.b16 %v498, %v497
      %v610 = vpack.c.b16 %v500, %v499
      %v611 = vpack.c.b16 %v502, %v501
      %v612 = vpack.c.b16 %v504, %v503
      %v613 = vpack.c.b16 %v506, %v505
      %v614 = vpack.c.b16 %v508, %v507
      %v615 = vpack.c.b16 %v510, %v509
      %v616 = vpack.c.b16 %v512, %v511
      %v617 = vpack.c.b16 %v514, %v513
      %v618 = vpack.c.b16 %v516, %v515
      %v619 = vpack.c.b16 %v518, %v517
      %v620 = vpack.c.b16 %v520, %v519
      %v621 = vpack.c.b16 %v522, %v521
      %v622 = vpack.c.b16 %v524, %v523
      %v623 = vpack.c.b16 %v526, %v525
      %v624 = vpack.c.b16 %v528, %v527
      %v625 = vpack.c.b16 %v530, %v529
      %v626 = vpack.c.b16 %v532, %v531
      %v627 = vpack.c.b16 %v534, %v533
      %v628 = vpack.c.b16 %v536, %v535
      %v629 = vpack.c.b16 %v538, %v537
      %v630 = vpack.c.b16 %v540, %v539
      %v631 = vpack.c.b16 %v542, %v541
      %v632 = vpack.c.b16 %v544, %v543
      %v633 = vpack.c.b16 %v546, %v545
      %v634 = vpack.c.b16 %v548, %v547
      %v635 = vpack.c.b16 %v550, %v549
      %v636 = vpack.c.b16 %v552, %v551
      %v637 = vpack.c.b16 %v554, %v553
      %v638 = vpack.c.b16 %v556, %v555
      %v639 = vpack.c.b16 %v558, %v557
      %v640 = vpack.c.b16 %v560, %v559
      %v641 = vpack.c.b16 %v562, %v561
      %v642 = vpack.c.b16 %v564, %v563
      %v643 = vpack.c.b16 %v566, %v565
      %v644 = vpack.c.b16 %v568, %v567
      %v645 = vpack.c.b16 %v570, %v569
      %v646 = vpack.c.b16 %v572, %v571
      %v647 = vpack.c.b16 %v574, %v573
      %v648 = vpack.c.b16 %v576, %v575
      %v649 = vpack.c.b16 %v578, %v577
      %v650 = vpack.c.b16 %v580, %v579
      %v651 = vpack.c.b16 %v582, %v581
      %v652 = vpack.c.b16 %v584, %v583
      %v653 = vpack.c.b16 %v586, %v585
      %v654 = vpack.c.b16 %v588, %v587
      %v655 = vpack.c.b16 %v590, %v589
      %v656 = vpack.c.b16 %v592, %v591
      %v664 = vunpack.c.l.b16 %v330
      %v665 = vunpack.c.l.b16 %v331
      %v666 = vunpack.c.l.b16 %v332
      %v667 = vunpack.c.l.b16 %v333
      %v668 = vunpack.c.l.b16 %v334
      %v669 = vunpack.c.l.b16 %v335
      %v670 = vunpack.c.l.b16 %v336
      %v671 = vpack.c.b16 %v665, %v664
      %v672 = vpack.c.b16 %v667, %v666
      %v673 = vpack.c.b16 %v669, %v668
      %v674 = vpack.c.b16 %v670, %v670
      %vm678 = vcmask 441344
      %v680 = vsel %vm678, %v593, 0
      %v683 = vsel %vm678, %v594, 0
      %v686 = vsel %vm678, %v595, 0
      %v689 = vsel %vm678, %v596, 0
      %v692 = vsel %vm678, %v597, 0
      %v695 = vsel %vm678, %v598, 0
      %v698 = vsel %vm678, %v599, 0
      %v701 = vsel %vm678, %v600, 0
      %v704 = vsel %vm678, %v601, 0
      %v707 = vsel %vm678, %v602, 0
      %v710 = vsel %vm678, %v603, 0
      %v713 = vsel %vm678, %v604, 0
      %v716 = vsel %vm678, %v605, 0
      %v719 = vsel %vm678, %v606, 0
      %v722 = vsel %vm678, %v607, 0
      %v725 = vsel %vm678, %v608, 0
      %v728 = vsel %vm678, %v609, 0
      %v731 = vsel %vm678, %v610, 0
      %v734 = vsel %vm678, %v611, 0
      %v737 = vsel %vm678, %v612, 0
      %v740 = vsel %vm678, %v613, 0
      %v743 = vsel %vm678, %v614, 0
      %v746 = vsel %vm678, %v615, 0
      %v749 = vsel %vm678, %v616, 0
      %v752 = vsel %vm678, %v617, 0
      %v755 = vsel %vm678, %v618, 0
      %v758 = vsel %vm678, %v619, 0
      %v761 = vsel %vm678, %v620, 0
      %v764 = vsel %vm678, %v621, 0
      %v767 = vsel %vm678, %v622, 0
      %v770 = vsel %vm678, %v623, 0
      %v773 = vsel %vm678, %v624, 0
      %v776 = vsel %vm678, %v625, 0
      %v779 = vsel %vm678, %v626, 0
      %v782 = vsel %vm678, %v627, 0
      %v785 = vsel %vm678, %v628, 0
      %v788 = vsel %vm678, %v629, 0
      %v791 = vsel %vm678, %v630, 0
      %v794 = vsel %vm678, %v631, 0
      %v797 = vsel %vm678, %v632, 0
      %v800 = vsel %vm678, %v633, 0
      %v803 = vsel %vm678, %v634, 0
      %v806 = vsel %vm678, %v635, 0
      %v809 = vsel %vm678, %v636, 0
      %v812 = vsel %vm678, %v637, 0
      %v815 = vsel %vm678, %v638, 0
      %v818 = vsel %vm678, %v639, 0
      %v821 = vsel %vm678, %v640, 0
      %v824 = vsel %vm678, %v641, 0
      %v827 = vsel %vm678, %v642, 0
      %v830 = vsel %vm678, %v643, 0
      %v833 = vsel %vm678, %v644, 0
      %v836 = vsel %vm678, %v645, 0
      %v839 = vsel %vm678, %v646, 0
      %v842 = vsel %vm678, %v647, 0
      %v845 = vsel %vm678, %v648, 0
      %v848 = vsel %vm678, %v649, 0
      %v851 = vsel %vm678, %v650, 0
      %v854 = vsel %vm678, %v651, 0
      %v857 = vsel %vm678, %v652, 0
      %v860 = vsel %vm678, %v653, 0
      %v863 = vsel %vm678, %v654, 0
      %v866 = vsel %vm678, %v655, 0
      %v869 = vsel %vm678, %v656, 0
      %vm871 = vcmask 1042432
      %v873 = vsel %vm871, %v674, 0
      %875 = vmatprep.subr.bf16.mxu0 0
      %876 = vmatpush1.bf16.msra.mxu0 0
      %877 = vmatprep.subr.bf16.mxu0 0
      %878 = vmatpush1.bf16.msra.mxu0 0
      %879 = vmatprep.subr.bf16.mxu0 0
      %880 = vmatpush1.bf16.msra.mxu0 0
      %881 = vmatprep.subr.bf16.mxu0 0
      %882 = vmatpush1.bf16.msra.mxu0 0
      %883 = vmatprep.subr.bf16.mxu0 0
      %884 = vmatpush1.bf16.msra.mxu0 %v873
      %885 = vmatprep.subr.bf16.mxu0 0
      %886 = vmatpush1.bf16.msra.mxu0 %v673
      %887 = vmatprep.subr.bf16.mxu0 0
      %888 = vmatpush1.bf16.msra.mxu0 %v672
      %889 = vmatprep.subr.bf16.mxu0 0
      %890 = vmatpush1.bf16.msra.mxu0 %v671
      %891 = vmatprep.subr.bf16.mxu0 0
      %892 = vmatpush2.bf16.msra.mxu0 0
      %893 = vmatprep.subr.bf16.mxu0 0
      %894 = vmatpush2.bf16.msra.mxu0 0
      %895 = vmatprep.subr.bf16.mxu0 0
      %896 = vmatpush2.bf16.msra.mxu0 0
      %897 = vmatprep.subr.bf16.mxu0 0
      %898 = vmatpush2.bf16.msra.mxu0 0
      %899 = vmatprep.subr.bf16.mxu0 0
      %900 = vmatpush2.bf16.msra.mxu0 0
      %901 = vmatprep.subr.bf16.mxu0 0
      %902 = vmatpush2.bf16.msra.mxu0 0
      %903 = vmatprep.subr.bf16.mxu0 0
      %904 = vmatpush2.bf16.msra.mxu0 0
      %905 = vmatprep.subr.bf16.mxu0 0
      %906 = vmatpush2.bf16.msra.mxu0 0
      %907 = vmatprep.mubr.bf16.mxu0 0
      %908 = vmatmul.mubr.bf16.gmra.mxu0 %v680
      %v909 = vpop.f32.mrf.mxu0
      %v910 = vadd.f32 0.0, %v909
      %v911 = vpop.f32.mrf.mxu0
      %v912 = vpop.f32.mrf.mxu0
      %v913 = vadd.f32 0.0, %v912
      %v914 = vpop.f32.mrf.mxu0
      %915 = vmatprep.mubr.bf16.mxu0 0
      %916 = vmatmul.mubr.bf16.gmra.mxu0 %v683
      %v917 = vpop.f32.mrf.mxu0
      %v918 = vadd.f32 0.0, %v917
      %v919 = vpop.f32.mrf.mxu0
      %v920 = vpop.f32.mrf.mxu0
      %v921 = vadd.f32 0.0, %v920
      %v922 = vpop.f32.mrf.mxu0
      %923 = vmatprep.mubr.bf16.mxu0 0
      %924 = vmatmul.mubr.bf16.gmra.mxu0 %v686
      %v925 = vpop.f32.mrf.mxu0
      %v926 = vadd.f32 0.0, %v925
      %v927 = vpop.f32.mrf.mxu0
      %v928 = vpop.f32.mrf.mxu0
      %v929 = vadd.f32 0.0, %v928
      %v930 = vpop.f32.mrf.mxu0
      %931 = vmatprep.mubr.bf16.mxu0 0
      %932 = vmatmul.mubr.bf16.gmra.mxu0 %v689
      %v933 = vpop.f32.mrf.mxu0
      %v934 = vadd.f32 0.0, %v933
      %v935 = vpop.f32.mrf.mxu0
      %v936 = vpop.f32.mrf.mxu0
      %v937 = vadd.f32 0.0, %v936
      %v938 = vpop.f32.mrf.mxu0
      %939 = vmatprep.mubr.bf16.mxu0 0
      %940 = vmatmul.mubr.bf16.gmra.mxu0 %v692
      %v941 = vpop.f32.mrf.mxu0
      %v942 = vadd.f32 0.0, %v941
      %v943 = vpop.f32.mrf.mxu0
      %v944 = vpop.f32.mrf.mxu0
      %v945 = vadd.f32 0.0, %v944
      %v946 = vpop.f32.mrf.mxu0
      %947 = vmatprep.mubr.bf16.mxu0 0
      %948 = vmatmul.mubr.bf16.gmra.mxu0 %v695
      %v949 = vpop.f32.mrf.mxu0
      %v950 = vadd.f32 0.0, %v949
      %v951 = vpop.f32.mrf.mxu0
      %v952 = vpop.f32.mrf.mxu0
      %v953 = vadd.f32 0.0, %v952
      %v954 = vpop.f32.mrf.mxu0
      %955 = vmatprep.mubr.bf16.mxu0 0
      %956 = vmatmul.mubr.bf16.gmra.mxu0 %v698
      %v957 = vpop.f32.mrf.mxu0
      %v958 = vadd.f32 0.0, %v957
      %v959 = vpop.f32.mrf.mxu0
      %v960 = vpop.f32.mrf.mxu0
      %v961 = vadd.f32 0.0, %v960
      %v962 = vpop.f32.mrf.mxu0
      %963 = vmatprep.mubr.bf16.mxu0 0
      %964 = vmatmul.mubr.bf16.gmra.mxu0 %v701
      %v965 = vpop.f32.mrf.mxu0
      %v966 = vadd.f32 0.0, %v965
      %v967 = vpop.f32.mrf.mxu0
      %v968 = vpop.f32.mrf.mxu0
      %v969 = vadd.f32 0.0, %v968
      %v970 = vpop.f32.mrf.mxu0
      %971 = vmatprep.mubr.bf16.mxu0 0
      %972 = vmatmul.mubr.bf16.gmra.mxu0 %v704
      %v973 = vpop.f32.mrf.mxu0
      %v974 = vadd.f32 0.0, %v973
      %v975 = vpop.f32.mrf.mxu0
      %v976 = vpop.f32.mrf.mxu0
      %v977 = vadd.f32 0.0, %v976
      %v978 = vpop.f32.mrf.mxu0
      %979 = vmatprep.mubr.bf16.mxu0 0
      %980 = vmatmul.mubr.bf16.gmra.mxu0 %v707
      %v981 = vpop.f32.mrf.mxu0
      %v982 = vadd.f32 0.0, %v981
      %v983 = vpop.f32.mrf.mxu0
      %v984 = vpop.f32.mrf.mxu0
      %v985 = vadd.f32 0.0, %v984
      %v986 = vpop.f32.mrf.mxu0
      %987 = vmatprep.mubr.bf16.mxu0 0
      %988 = vmatmul.mubr.bf16.gmra.mxu0 %v710
      %v989 = vpop.f32.mrf.mxu0
      %v990 = vadd.f32 0.0, %v989
      %v991 = vpop.f32.mrf.mxu0
      %v992 = vpop.f32.mrf.mxu0
      %v993 = vadd.f32 0.0, %v992
      %v994 = vpop.f32.mrf.mxu0
      %995 = vmatprep.mubr.bf16.mxu0 0
      %996 = vmatmul.mubr.bf16.gmra.mxu0 %v713
      %v997 = vpop.f32.mrf.mxu0
      %v998 = vadd.f32 0.0, %v997
      %v999 = vpop.f32.mrf.mxu0
      %v1000 = vpop.f32.mrf.mxu0
      %v1001 = vadd.f32 0.0, %v1000
      %v1002 = vpop.f32.mrf.mxu0
      %1003 = vmatprep.mubr.bf16.mxu0 0
      %1004 = vmatmul.mubr.bf16.gmra.mxu0 %v716
      %v1005 = vpop.f32.mrf.mxu0
      %v1006 = vadd.f32 0.0, %v1005
      %v1007 = vpop.f32.mrf.mxu0
      %v1008 = vpop.f32.mrf.mxu0
      %v1009 = vadd.f32 0.0, %v1008
      %v1010 = vpop.f32.mrf.mxu0
      %1011 = vmatprep.mubr.bf16.mxu0 0
      %1012 = vmatmul.mubr.bf16.gmra.mxu0 %v719
      %v1013 = vpop.f32.mrf.mxu0
      %v1014 = vadd.f32 0.0, %v1013
      %v1015 = vpop.f32.mrf.mxu0
      %v1016 = vpop.f32.mrf.mxu0
      %v1017 = vadd.f32 0.0, %v1016
      %v1018 = vpop.f32.mrf.mxu0
      %1019 = vmatprep.mubr.bf16.mxu0 0
      %1020 = vmatmul.mubr.bf16.gmra.mxu0 %v722
      %v1021 = vpop.f32.mrf.mxu0
      %v1022 = vadd.f32 0.0, %v1021
      %v1023 = vpop.f32.mrf.mxu0
      %v1024 = vpop.f32.mrf.mxu0
      %v1025 = vadd.f32 0.0, %v1024
      %v1026 = vpop.f32.mrf.mxu0
      %1027 = vmatprep.mubr.bf16.mxu0 0
      %1028 = vmatmul.mubr.bf16.gmra.mxu0 %v725
      %v1029 = vpop.f32.mrf.mxu0
      %v1030 = vadd.f32 0.0, %v1029
      %v1031 = vpop.f32.mrf.mxu0
      %v1032 = vpop.f32.mrf.mxu0
      %v1033 = vadd.f32 0.0, %v1032
      %v1034 = vpop.f32.mrf.mxu0
      %1035 = vmatprep.mubr.bf16.mxu0 0
      %1036 = vmatmul.mubr.bf16.gmra.mxu0 %v728
      %v1037 = vpop.f32.mrf.mxu0
      %v1038 = vadd.f32 0.0, %v1037
      %v1039 = vpop.f32.mrf.mxu0
      %v1040 = vpop.f32.mrf.mxu0
      %v1041 = vadd.f32 0.0, %v1040
      %v1042 = vpop.f32.mrf.mxu0
      %1043 = vmatprep.mubr.bf16.mxu0 0
      %1044 = vmatmul.mubr.bf16.gmra.mxu0 %v731
      %v1045 = vpop.f32.mrf.mxu0
      %v1046 = vadd.f32 0.0, %v1045
      %v1047 = vpop.f32.mrf.mxu0
      %v1048 = vpop.f32.mrf.mxu0
      %v1049 = vadd.f32 0.0, %v1048
      %v1050 = vpop.f32.mrf.mxu0
      %1051 = vmatprep.mubr.bf16.mxu0 0
      %1052 = vmatmul.mubr.bf16.gmra.mxu0 %v734
      %v1053 = vpop.f32.mrf.mxu0
      %v1054 = vadd.f32 0.0, %v1053
      %v1055 = vpop.f32.mrf.mxu0
      %v1056 = vpop.f32.mrf.mxu0
      %v1057 = vadd.f32 0.0, %v1056
      %v1058 = vpop.f32.mrf.mxu0
      %1059 = vmatprep.mubr.bf16.mxu0 0
      %1060 = vmatmul.mubr.bf16.gmra.mxu0 %v737
      %v1061 = vpop.f32.mrf.mxu0
      %v1062 = vadd.f32 0.0, %v1061
      %v1063 = vpop.f32.mrf.mxu0
      %v1064 = vpop.f32.mrf.mxu0
      %v1065 = vadd.f32 0.0, %v1064
      %v1066 = vpop.f32.mrf.mxu0
      %1067 = vmatprep.mubr.bf16.mxu0 0
      %1068 = vmatmul.mubr.bf16.gmra.mxu0 %v740
      %v1069 = vpop.f32.mrf.mxu0
      %v1070 = vadd.f32 0.0, %v1069
      %v1071 = vpop.f32.mrf.mxu0
      %v1072 = vpop.f32.mrf.mxu0
      %v1073 = vadd.f32 0.0, %v1072
      %v1074 = vpop.f32.mrf.mxu0
      %1075 = vmatprep.mubr.bf16.mxu0 0
      %1076 = vmatmul.mubr.bf16.gmra.mxu0 %v743
      %v1077 = vpop.f32.mrf.mxu0
      %v1078 = vadd.f32 0.0, %v1077
      %v1079 = vpop.f32.mrf.mxu0
      %v1080 = vpop.f32.mrf.mxu0
      %v1081 = vadd.f32 0.0, %v1080
      %v1082 = vpop.f32.mrf.mxu0
      %1083 = vmatprep.mubr.bf16.mxu0 0
      %1084 = vmatmul.mubr.bf16.gmra.mxu0 %v746
      %v1085 = vpop.f32.mrf.mxu0
      %v1086 = vadd.f32 0.0, %v1085
      %v1087 = vpop.f32.mrf.mxu0
      %v1088 = vpop.f32.mrf.mxu0
      %v1089 = vadd.f32 0.0, %v1088
      %v1090 = vpop.f32.mrf.mxu0
      %1091 = vmatprep.mubr.bf16.mxu0 0
      %1092 = vmatmul.mubr.bf16.gmra.mxu0 %v749
      %v1093 = vpop.f32.mrf.mxu0
      %v1094 = vadd.f32 0.0, %v1093
      %v1095 = vpop.f32.mrf.mxu0
      %v1096 = vpop.f32.mrf.mxu0
      %v1097 = vadd.f32 0.0, %v1096
      %v1098 = vpop.f32.mrf.mxu0
      %1099 = vmatprep.mubr.bf16.mxu0 0
      %1100 = vmatmul.mubr.bf16.gmra.mxu0 %v752
      %v1101 = vpop.f32.mrf.mxu0
      %v1102 = vadd.f32 0.0, %v1101
      %v1103 = vpop.f32.mrf.mxu0
      %v1104 = vpop.f32.mrf.mxu0
      %v1105 = vadd.f32 0.0, %v1104
      %v1106 = vpop.f32.mrf.mxu0
      %1107 = vmatprep.mubr.bf16.mxu0 0
      %1108 = vmatmul.mubr.bf16.gmra.mxu0 %v755
      %v1109 = vpop.f32.mrf.mxu0
      %v1110 = vadd.f32 0.0, %v1109
      %v1111 = vpop.f32.mrf.mxu0
      %v1112 = vpop.f32.mrf.mxu0
      %v1113 = vadd.f32 0.0, %v1112
      %v1114 = vpop.f32.mrf.mxu0
      %1115 = vmatprep.mubr.bf16.mxu0 0
      %1116 = vmatmul.mubr.bf16.gmra.mxu0 %v758
      %v1117 = vpop.f32.mrf.mxu0
      %v1118 = vadd.f32 0.0, %v1117
      %v1119 = vpop.f32.mrf.mxu0
      %v1120 = vpop.f32.mrf.mxu0
      %v1121 = vadd.f32 0.0, %v1120
      %v1122 = vpop.f32.mrf.mxu0
      %1123 = vmatprep.mubr.bf16.mxu0 0
      %1124 = vmatmul.mubr.bf16.gmra.mxu0 %v761
      %v1125 = vpop.f32.mrf.mxu0
      %v1126 = vadd.f32 0.0, %v1125
      %v1127 = vpop.f32.mrf.mxu0
      %v1128 = vpop.f32.mrf.mxu0
      %v1129 = vadd.f32 0.0, %v1128
      %v1130 = vpop.f32.mrf.mxu0
      %1131 = vmatprep.mubr.bf16.mxu0 0
      %1132 = vmatmul.mubr.bf16.gmra.mxu0 %v764
      %v1133 = vpop.f32.mrf.mxu0
      %v1134 = vadd.f32 0.0, %v1133
      %v1135 = vpop.f32.mrf.mxu0
      %v1136 = vpop.f32.mrf.mxu0
      %v1137 = vadd.f32 0.0, %v1136
      %v1138 = vpop.f32.mrf.mxu0
      %1139 = vmatprep.mubr.bf16.mxu0 0
      %1140 = vmatmul.mubr.bf16.gmra.mxu0 %v767
      %v1141 = vpop.f32.mrf.mxu0
      %v1142 = vadd.f32 0.0, %v1141
      %v1143 = vpop.f32.mrf.mxu0
      %v1144 = vpop.f32.mrf.mxu0
      %v1145 = vadd.f32 0.0, %v1144
      %v1146 = vpop.f32.mrf.mxu0
      %1147 = vmatprep.mubr.bf16.mxu0 0
      %1148 = vmatmul.mubr.bf16.gmra.mxu0 %v770
      %v1149 = vpop.f32.mrf.mxu0
      %v1150 = vadd.f32 0.0, %v1149
      %v1151 = vpop.f32.mrf.mxu0
      %v1152 = vpop.f32.mrf.mxu0
      %v1153 = vadd.f32 0.0, %v1152
      %v1154 = vpop.f32.mrf.mxu0
      %1155 = vmatprep.mubr.bf16.mxu0 0
      %1156 = vmatmul.mubr.bf16.gmra.mxu0 %v773
      %v1157 = vpop.f32.mrf.mxu0
      %v1158 = vadd.f32 0.0, %v1157
      %v1159 = vpop.f32.mrf.mxu0
      %v1160 = vpop.f32.mrf.mxu0
      %v1161 = vadd.f32 0.0, %v1160
      %v1162 = vpop.f32.mrf.mxu0
      %1163 = vmatprep.mubr.bf16.mxu0 0
      %1164 = vmatmul.mubr.bf16.gmra.mxu0 %v776
      %v1165 = vpop.f32.mrf.mxu0
      %v1166 = vadd.f32 0.0, %v1165
      %v1167 = vpop.f32.mrf.mxu0
      %v1168 = vpop.f32.mrf.mxu0
      %v1169 = vadd.f32 0.0, %v1168
      %v1170 = vpop.f32.mrf.mxu0
      %1171 = vmatprep.mubr.bf16.mxu0 0
      %1172 = vmatmul.mubr.bf16.gmra.mxu0 %v779
      %v1173 = vpop.f32.mrf.mxu0
      %v1174 = vadd.f32 0.0, %v1173
      %v1175 = vpop.f32.mrf.mxu0
      %v1176 = vpop.f32.mrf.mxu0
      %v1177 = vadd.f32 0.0, %v1176
      %v1178 = vpop.f32.mrf.mxu0
      %1179 = vmatprep.mubr.bf16.mxu0 0
      %1180 = vmatmul.mubr.bf16.gmra.mxu0 %v782
      %v1181 = vpop.f32.mrf.mxu0
      %v1182 = vadd.f32 0.0, %v1181
      %v1183 = vpop.f32.mrf.mxu0
      %v1184 = vpop.f32.mrf.mxu0
      %v1185 = vadd.f32 0.0, %v1184
      %v1186 = vpop.f32.mrf.mxu0
      %1187 = vmatprep.mubr.bf16.mxu0 0
      %1188 = vmatmul.mubr.bf16.gmra.mxu0 %v785
      %v1189 = vpop.f32.mrf.mxu0
      %v1190 = vadd.f32 0.0, %v1189
      %v1191 = vpop.f32.mrf.mxu0
      %v1192 = vpop.f32.mrf.mxu0
      %v1193 = vadd.f32 0.0, %v1192
      %v1194 = vpop.f32.mrf.mxu0
      %1195 = vmatprep.mubr.bf16.mxu0 0
      %1196 = vmatmul.mubr.bf16.gmra.mxu0 %v788
      %v1197 = vpop.f32.mrf.mxu0
      %v1198 = vadd.f32 0.0, %v1197
      %v1199 = vpop.f32.mrf.mxu0
      %v1200 = vpop.f32.mrf.mxu0
      %v1201 = vadd.f32 0.0, %v1200
      %v1202 = vpop.f32.mrf.mxu0
      %1203 = vmatprep.mubr.bf16.mxu0 0
      %1204 = vmatmul.mubr.bf16.gmra.mxu0 %v791
      %v1205 = vpop.f32.mrf.mxu0
      %v1206 = vadd.f32 0.0, %v1205
      %v1207 = vpop.f32.mrf.mxu0
      %v1208 = vpop.f32.mrf.mxu0
      %v1209 = vadd.f32 0.0, %v1208
      %v1210 = vpop.f32.mrf.mxu0
      %1211 = vmatprep.mubr.bf16.mxu0 0
      %1212 = vmatmul.mubr.bf16.gmra.mxu0 %v794
      %v1213 = vpop.f32.mrf.mxu0
      %v1214 = vadd.f32 0.0, %v1213
      %v1215 = vpop.f32.mrf.mxu0
      %v1216 = vpop.f32.mrf.mxu0
      %v1217 = vadd.f32 0.0, %v1216
      %v1218 = vpop.f32.mrf.mxu0
      %1219 = vmatprep.mubr.bf16.mxu0 0
      %1220 = vmatmul.mubr.bf16.gmra.mxu0 %v797
      %v1221 = vpop.f32.mrf.mxu0
      %v1222 = vadd.f32 0.0, %v1221
      %v1223 = vpop.f32.mrf.mxu0
      %v1224 = vpop.f32.mrf.mxu0
      %v1225 = vadd.f32 0.0, %v1224
      %v1226 = vpop.f32.mrf.mxu0
      %1227 = vmatprep.mubr.bf16.mxu0 0
      %1228 = vmatmul.mubr.bf16.gmra.mxu0 %v800
      %v1229 = vpop.f32.mrf.mxu0
      %v1230 = vadd.f32 0.0, %v1229
      %v1231 = vpop.f32.mrf.mxu0
      %v1232 = vpop.f32.mrf.mxu0
      %v1233 = vadd.f32 0.0, %v1232
      %v1234 = vpop.f32.mrf.mxu0
      %1235 = vmatprep.mubr.bf16.mxu0 0
      %1236 = vmatmul.mubr.bf16.gmra.mxu0 %v803
      %v1237 = vpop.f32.mrf.mxu0
      %v1238 = vadd.f32 0.0, %v1237
      %v1239 = vpop.f32.mrf.mxu0
      %v1240 = vpop.f32.mrf.mxu0
      %v1241 = vadd.f32 0.0, %v1240
      %v1242 = vpop.f32.mrf.mxu0
      %1243 = vmatprep.mubr.bf16.mxu0 0
      %1244 = vmatmul.mubr.bf16.gmra.mxu0 %v806
      %v1245 = vpop.f32.mrf.mxu0
      %v1246 = vadd.f32 0.0, %v1245
      %v1247 = vpop.f32.mrf.mxu0
      %v1248 = vpop.f32.mrf.mxu0
      %v1249 = vadd.f32 0.0, %v1248
      %v1250 = vpop.f32.mrf.mxu0
      %1251 = vmatprep.mubr.bf16.mxu0 0
      %1252 = vmatmul.mubr.bf16.gmra.mxu0 %v809
      %v1253 = vpop.f32.mrf.mxu0
      %v1254 = vadd.f32 0.0, %v1253
      %v1255 = vpop.f32.mrf.mxu0
      %v1256 = vpop.f32.mrf.mxu0
      %v1257 = vadd.f32 0.0, %v1256
      %v1258 = vpop.f32.mrf.mxu0
      %1259 = vmatprep.mubr.bf16.mxu0 0
      %1260 = vmatmul.mubr.bf16.gmra.mxu0 %v812
      %v1261 = vpop.f32.mrf.mxu0
      %v1262 = vadd.f32 0.0, %v1261
      %v1263 = vpop.f32.mrf.mxu0
      %v1264 = vpop.f32.mrf.mxu0
      %v1265 = vadd.f32 0.0, %v1264
      %v1266 = vpop.f32.mrf.mxu0
      %1267 = vmatprep.mubr.bf16.mxu0 0
      %1268 = vmatmul.mubr.bf16.gmra.mxu0 %v815
      %v1269 = vpop.f32.mrf.mxu0
      %v1270 = vadd.f32 0.0, %v1269
      %v1271 = vpop.f32.mrf.mxu0
      %v1272 = vpop.f32.mrf.mxu0
      %v1273 = vadd.f32 0.0, %v1272
      %v1274 = vpop.f32.mrf.mxu0
      %1275 = vmatprep.mubr.bf16.mxu0 0
      %1276 = vmatmul.mubr.bf16.gmra.mxu0 %v818
      %v1277 = vpop.f32.mrf.mxu0
      %v1278 = vadd.f32 0.0, %v1277
      %v1279 = vpop.f32.mrf.mxu0
      %v1280 = vpop.f32.mrf.mxu0
      %v1281 = vadd.f32 0.0, %v1280
      %v1282 = vpop.f32.mrf.mxu0
      %1283 = vmatprep.mubr.bf16.mxu0 0
      %1284 = vmatmul.mubr.bf16.gmra.mxu0 %v821
      %v1285 = vpop.f32.mrf.mxu0
      %v1286 = vadd.f32 0.0, %v1285
      %v1287 = vpop.f32.mrf.mxu0
      %v1288 = vpop.f32.mrf.mxu0
      %v1289 = vadd.f32 0.0, %v1288
      %v1290 = vpop.f32.mrf.mxu0
      %1291 = vmatprep.mubr.bf16.mxu0 0
      %1292 = vmatmul.mubr.bf16.gmra.mxu0 %v824
      %v1293 = vpop.f32.mrf.mxu0
      %v1294 = vadd.f32 0.0, %v1293
      %v1295 = vpop.f32.mrf.mxu0
      %v1296 = vpop.f32.mrf.mxu0
      %v1297 = vadd.f32 0.0, %v1296
      %v1298 = vpop.f32.mrf.mxu0
      %1299 = vmatprep.mubr.bf16.mxu0 0
      %1300 = vmatmul.mubr.bf16.gmra.mxu0 %v827
      %v1301 = vpop.f32.mrf.mxu0
      %v1302 = vadd.f32 0.0, %v1301
      %v1303 = vpop.f32.mrf.mxu0
      %v1304 = vpop.f32.mrf.mxu0
      %v1305 = vadd.f32 0.0, %v1304
      %v1306 = vpop.f32.mrf.mxu0
      %1307 = vmatprep.mubr.bf16.mxu0 0
      %1308 = vmatmul.mubr.bf16.gmra.mxu0 %v830
      %v1309 = vpop.f32.mrf.mxu0
      %v1310 = vadd.f32 0.0, %v1309
      %v1311 = vpop.f32.mrf.mxu0
      %v1312 = vpop.f32.mrf.mxu0
      %v1313 = vadd.f32 0.0, %v1312
      %v1314 = vpop.f32.mrf.mxu0
      %1315 = vmatprep.mubr.bf16.mxu0 0
      %1316 = vmatmul.mubr.bf16.gmra.mxu0 %v833
      %v1317 = vpop.f32.mrf.mxu0
      %v1318 = vadd.f32 0.0, %v1317
      %v1319 = vpop.f32.mrf.mxu0
      %v1320 = vpop.f32.mrf.mxu0
      %v1321 = vadd.f32 0.0, %v1320
      %v1322 = vpop.f32.mrf.mxu0
      %1323 = vmatprep.mubr.bf16.mxu0 0
      %1324 = vmatmul.mubr.bf16.gmra.mxu0 %v836
      %v1325 = vpop.f32.mrf.mxu0
      %v1326 = vadd.f32 0.0, %v1325
      %v1327 = vpop.f32.mrf.mxu0
      %v1328 = vpop.f32.mrf.mxu0
      %v1329 = vadd.f32 0.0, %v1328
      %v1330 = vpop.f32.mrf.mxu0
      %1331 = vmatprep.mubr.bf16.mxu0 0
      %1332 = vmatmul.mubr.bf16.gmra.mxu0 %v839
      %v1333 = vpop.f32.mrf.mxu0
      %v1334 = vadd.f32 0.0, %v1333
      %v1335 = vpop.f32.mrf.mxu0
      %v1336 = vpop.f32.mrf.mxu0
      %v1337 = vadd.f32 0.0, %v1336
      %v1338 = vpop.f32.mrf.mxu0
      %1339 = vmatprep.mubr.bf16.mxu0 0
      %1340 = vmatmul.mubr.bf16.gmra.mxu0 %v842
      %v1341 = vpop.f32.mrf.mxu0
      %v1342 = vadd.f32 0.0, %v1341
      %v1343 = vpop.f32.mrf.mxu0
      %v1344 = vpop.f32.mrf.mxu0
      %v1345 = vadd.f32 0.0, %v1344
      %v1346 = vpop.f32.mrf.mxu0
      %1347 = vmatprep.mubr.bf16.mxu0 0
      %1348 = vmatmul.mubr.bf16.gmra.mxu0 %v845
      %v1349 = vpop.f32.mrf.mxu0
      %v1350 = vadd.f32 0.0, %v1349
      %v1351 = vpop.f32.mrf.mxu0
      %v1352 = vpop.f32.mrf.mxu0
      %v1353 = vadd.f32 0.0, %v1352
      %v1354 = vpop.f32.mrf.mxu0
      %1355 = vmatprep.mubr.bf16.mxu0 0
      %1356 = vmatmul.mubr.bf16.gmra.mxu0 %v848
      %v1357 = vpop.f32.mrf.mxu0
      %v1358 = vadd.f32 0.0, %v1357
      %v1359 = vpop.f32.mrf.mxu0
      %v1360 = vpop.f32.mrf.mxu0
      %v1361 = vadd.f32 0.0, %v1360
      %v1362 = vpop.f32.mrf.mxu0
      %1363 = vmatprep.mubr.bf16.mxu0 0
      %1364 = vmatmul.mubr.bf16.gmra.mxu0 %v851
      %v1365 = vpop.f32.mrf.mxu0
      %v1366 = vadd.f32 0.0, %v1365
      %v1367 = vpop.f32.mrf.mxu0
      %v1368 = vpop.f32.mrf.mxu0
      %v1369 = vadd.f32 0.0, %v1368
      %v1370 = vpop.f32.mrf.mxu0
      %1371 = vmatprep.mubr.bf16.mxu0 0
      %1372 = vmatmul.mubr.bf16.gmra.mxu0 %v854
      %v1373 = vpop.f32.mrf.mxu0
      %v1374 = vadd.f32 0.0, %v1373
      %v1375 = vpop.f32.mrf.mxu0
      %v1376 = vpop.f32.mrf.mxu0
      %v1377 = vadd.f32 0.0, %v1376
      %v1378 = vpop.f32.mrf.mxu0
      %1379 = vmatprep.mubr.bf16.mxu0 0
      %1380 = vmatmul.mubr.bf16.gmra.mxu0 %v857
      %v1381 = vpop.f32.mrf.mxu0
      %v1382 = vadd.f32 0.0, %v1381
      %v1383 = vpop.f32.mrf.mxu0
      %v1384 = vpop.f32.mrf.mxu0
      %v1385 = vadd.f32 0.0, %v1384
      %v1386 = vpop.f32.mrf.mxu0
      %1387 = vmatprep.mubr.bf16.mxu0 0
      %1388 = vmatmul.mubr.bf16.gmra.mxu0 %v860
      %v1389 = vpop.f32.mrf.mxu0
      %v1390 = vadd.f32 0.0, %v1389
      %v1391 = vpop.f32.mrf.mxu0
      %v1392 = vpop.f32.mrf.mxu0
      %v1393 = vadd.f32 0.0, %v1392
      %v1394 = vpop.f32.mrf.mxu0
      %1395 = vmatprep.mubr.bf16.mxu0 0
      %1396 = vmatmul.mubr.bf16.gmra.mxu0 %v863
      %v1397 = vpop.f32.mrf.mxu0
      %v1398 = vadd.f32 0.0, %v1397
      %v1399 = vpop.f32.mrf.mxu0
      %v1400 = vpop.f32.mrf.mxu0
      %v1401 = vadd.f32 0.0, %v1400
      %v1402 = vpop.f32.mrf.mxu0
      %1403 = vmatprep.mubr.bf16.mxu0 0
      %1404 = vmatmul.mubr.bf16.gmra.mxu0 %v866
      %v1405 = vpop.f32.mrf.mxu0
      %v1406 = vadd.f32 0.0, %v1405
      %v1407 = vpop.f32.mrf.mxu0
      %v1408 = vpop.f32.mrf.mxu0
      %v1409 = vadd.f32 0.0, %v1408
      %v1410 = vpop.f32.mrf.mxu0
      %1411 = vmatprep.mubr.bf16.mxu0 0
      %1412 = vmatmul.mubr.bf16.gmra.mxu0 %v869
      %v1413 = vpop.f32.mrf.mxu0
      %v1414 = vadd.f32 0.0, %v1413
      %v1415 = vpop.f32.mrf.mxu0
      %v1416 = vpop.f32.mrf.mxu0
      %v1417 = vadd.f32 0.0, %v1416
      %v1418 = vpop.f32.mrf.mxu0
      %1419 = vdwg.mxu0
      %v1420 = vld [vmem:[%s2] sm:$0x1]
      %v1422 = vlaneseq
      %v1423 = vshrl.u32 %v1422, 7
      %v1424 = vsub.s32 0, %v1423
      %v1425 = vrot.slane %v1420, %v1424
      %v1427 = vmul.f32 %v910, %v1425
      %v1428 = vmul.f32 %v913, %v1425
      %v1429 = vmul.f32 %v918, %v1425
      %v1430 = vmul.f32 %v921, %v1425
      %v1431 = vmul.f32 %v926, %v1425
      %v1432 = vmul.f32 %v929, %v1425
      %v1433 = vmul.f32 %v934, %v1425
      %v1434 = vmul.f32 %v937, %v1425
      %v1435 = vmul.f32 %v942, %v1425
      %v1436 = vmul.f32 %v945, %v1425
      %v1437 = vmul.f32 %v950, %v1425
      %v1438 = vmul.f32 %v953, %v1425
      %v1439 = vmul.f32 %v958, %v1425
      %v1440 = vmul.f32 %v961, %v1425
      %v1441 = vmul.f32 %v966, %v1425
      %v1442 = vmul.f32 %v969, %v1425
      %v1443 = vmul.f32 %v974, %v1425
      %v1444 = vmul.f32 %v977, %v1425
      %v1445 = vmul.f32 %v982, %v1425
      %v1446 = vmul.f32 %v985, %v1425
      %v1447 = vmul.f32 %v990, %v1425
      %v1448 = vmul.f32 %v993, %v1425
      %v1449 = vmul.f32 %v998, %v1425
      %v1450 = vmul.f32 %v1001, %v1425
      %v1451 = vmul.f32 %v1006, %v1425
      %v1452 = vmul.f32 %v1009, %v1425
      %v1453 = vmul.f32 %v1014, %v1425
      %v1454 = vmul.f32 %v1017, %v1425
      %v1455 = vmul.f32 %v1022, %v1425
      %v1456 = vmul.f32 %v1025, %v1425
      %v1457 = vmul.f32 %v1030, %v1425
      %v1458 = vmul.f32 %v1033, %v1425
      %v1459 = vmul.f32 %v1038, %v1425
      %v1460 = vmul.f32 %v1041, %v1425
      %v1461 = vmul.f32 %v1046, %v1425
      %v1462 = vmul.f32 %v1049, %v1425
      %v1463 = vmul.f32 %v1054, %v1425
      %v1464 = vmul.f32 %v1057, %v1425
      %v1465 = vmul.f32 %v1062, %v1425
      %v1466 = vmul.f32 %v1065, %v1425
      %v1467 = vmul.f32 %v1070, %v1425
      %v1468 = vmul.f32 %v1073, %v1425
      %v1469 = vmul.f32 %v1078, %v1425
      %v1470 = vmul.f32 %v1081, %v1425
      %v1471 = vmul.f32 %v1086, %v1425
      %v1472 = vmul.f32 %v1089, %v1425
      %v1473 = vmul.f32 %v1094, %v1425
      %v1474 = vmul.f32 %v1097, %v1425
      %v1475 = vmul.f32 %v1102, %v1425
      %v1476 = vmul.f32 %v1105, %v1425
      %v1477 = vmul.f32 %v1110, %v1425
      %v1478 = vmul.f32 %v1113, %v1425
      %v1479 = vmul.f32 %v1118, %v1425
      %v1480 = vmul.f32 %v1121, %v1425
      %v1481 = vmul.f32 %v1126, %v1425
      %v1482 = vmul.f32 %v1129, %v1425
      %v1483 = vmul.f32 %v1134, %v1425
      %v1484 = vmul.f32 %v1137, %v1425
      %v1485 = vmul.f32 %v1142, %v1425
      %v1486 = vmul.f32 %v1145, %v1425
      %v1487 = vmul.f32 %v1150, %v1425
      %v1488 = vmul.f32 %v1153, %v1425
      %v1489 = vmul.f32 %v1158, %v1425
      %v1490 = vmul.f32 %v1161, %v1425
      %v1491 = vmul.f32 %v1166, %v1425
      %v1492 = vmul.f32 %v1169, %v1425
      %v1493 = vmul.f32 %v1174, %v1425
      %v1494 = vmul.f32 %v1177, %v1425
      %v1495 = vmul.f32 %v1182, %v1425
      %v1496 = vmul.f32 %v1185, %v1425
      %v1497 = vmul.f32 %v1190, %v1425
      %v1498 = vmul.f32 %v1193, %v1425
      %v1499 = vmul.f32 %v1198, %v1425
      %v1500 = vmul.f32 %v1201, %v1425
      %v1501 = vmul.f32 %v1206, %v1425
      %v1502 = vmul.f32 %v1209, %v1425
      %v1503 = vmul.f32 %v1214, %v1425
      %v1504 = vmul.f32 %v1217, %v1425
      %v1505 = vmul.f32 %v1222, %v1425
      %v1506 = vmul.f32 %v1225, %v1425
      %v1507 = vmul.f32 %v1230, %v1425
      %v1508 = vmul.f32 %v1233, %v1425
      %v1509 = vmul.f32 %v1238, %v1425
      %v1510 = vmul.f32 %v1241, %v1425
      %v1511 = vmul.f32 %v1246, %v1425
      %v1512 = vmul.f32 %v1249, %v1425
      %v1513 = vmul.f32 %v1254, %v1425
      %v1514 = vmul.f32 %v1257, %v1425
      %v1515 = vmul.f32 %v1262, %v1425
      %v1516 = vmul.f32 %v1265, %v1425
      %v1517 = vmul.f32 %v1270, %v1425
      %v1518 = vmul.f32 %v1273, %v1425
      %v1519 = vmul.f32 %v1278, %v1425
      %v1520 = vmul.f32 %v1281, %v1425
      %v1521 = vmul.f32 %v1286, %v1425
      %v1522 = vmul.f32 %v1289, %v1425
      %v1523 = vmul.f32 %v1294, %v1425
      %v1524 = vmul.f32 %v1297, %v1425
      %v1525 = vmul.f32 %v1302, %v1425
      %v1526 = vmul.f32 %v1305, %v1425
      %v1527 = vmul.f32 %v1310, %v1425
      %v1528 = vmul.f32 %v1313, %v1425
      %v1529 = vmul.f32 %v1318, %v1425
      %v1530 = vmul.f32 %v1321, %v1425
      %v1531 = vmul.f32 %v1326, %v1425
      %v1532 = vmul.f32 %v1329, %v1425
      %v1533 = vmul.f32 %v1334, %v1425
      %v1534 = vmul.f32 %v1337, %v1425
      %v1535 = vmul.f32 %v1342, %v1425
      %v1536 = vmul.f32 %v1345, %v1425
      %v1537 = vmul.f32 %v1350, %v1425
      %v1538 = vmul.f32 %v1353, %v1425
      %v1539 = vmul.f32 %v1358, %v1425
      %v1540 = vmul.f32 %v1361, %v1425
      %v1541 = vmul.f32 %v1366, %v1425
      %v1542 = vmul.f32 %v1369, %v1425
      %v1543 = vmul.f32 %v1374, %v1425
      %v1544 = vmul.f32 %v1377, %v1425
      %v1545 = vmul.f32 %v1382, %v1425
      %v1546 = vmul.f32 %v1385, %v1425
      %v1547 = vmul.f32 %v1390, %v1425
      %v1548 = vmul.f32 %v1393, %v1425
      %v1549 = vmul.f32 %v1398, %v1425
      %v1550 = vmul.f32 %v1401, %v1425
      %v1551 = vmul.f32 %v1406, %v1425
      %v1552 = vmul.f32 %v1409, %v1425
      %v1553 = vmul.f32 %v1414, %v1425
      %v1554 = vmul.f32 %v1417, %v1425
      %v1555 = vld [vmem:[%s3] sm:$0x1]
      %v1557 = vlaneseq
      %v1558 = vshrl.u32 %v1557, 7
      %v1559 = vsub.s32 0, %v1558
      %v1560 = vrot.slane %v1555, %v1559
      %v1562 = vadd.f32 %v1427, %v1560
      %v1563 = vadd.f32 %v1428, %v1560
      %v1564 = vadd.f32 %v1429, %v1560
      %v1565 = vadd.f32 %v1430, %v1560
      %v1566 = vadd.f32 %v1431, %v1560
      %v1567 = vadd.f32 %v1432, %v1560
      %v1568 = vadd.f32 %v1433, %v1560
      %v1569 = vadd.f32 %v1434, %v1560
      %v1570 = vadd.f32 %v1435, %v1560
      %v1571 = vadd.f32 %v1436, %v1560
      %v1572 = vadd.f32 %v1437, %v1560
      %v1573 = vadd.f32 %v1438, %v1560
      %v1574 = vadd.f32 %v1439, %v1560
      %v1575 = vadd.f32 %v1440, %v1560
      %v1576 = vadd.f32 %v1441, %v1560
      %v1577 = vadd.f32 %v1442, %v1560
      %v1578 = vadd.f32 %v1443, %v1560
      %v1579 = vadd.f32 %v1444, %v1560
      %v1580 = vadd.f32 %v1445, %v1560
      %v1581 = vadd.f32 %v1446, %v1560
      %v1582 = vadd.f32 %v1447, %v1560
      %v1583 = vadd.f32 %v1448, %v1560
      %v1584 = vadd.f32 %v1449, %v1560
      %v1585 = vadd.f32 %v1450, %v1560
      %v1586 = vadd.f32 %v1451, %v1560
      %v1587 = vadd.f32 %v1452, %v1560
      %v1588 = vadd.f32 %v1453, %v1560
      %v1589 = vadd.f32 %v1454, %v1560
      %v1590 = vadd.f32 %v1455, %v1560
      %v1591 = vadd.f32 %v1456, %v1560
      %v1592 = vadd.f32 %v1457, %v1560
      %v1593 = vadd.f32 %v1458, %v1560
      %v1594 = vadd.f32 %v1459, %v1560
      %v1595 = vadd.f32 %v1460, %v1560
      %v1596 = vadd.f32 %v1461, %v1560
      %v1597 = vadd.f32 %v1462, %v1560
      %v1598 = vadd.f32 %v1463, %v1560
      %v1599 = vadd.f32 %v1464, %v1560
      %v1600 = vadd.f32 %v1465, %v1560
      %v1601 = vadd.f32 %v1466, %v1560
      %v1602 = vadd.f32 %v1467, %v1560
      %v1603 = vadd.f32 %v1468, %v1560
      %v1604 = vadd.f32 %v1469, %v1560
      %v1605 = vadd.f32 %v1470, %v1560
      %v1606 = vadd.f32 %v1471, %v1560
      %v1607 = vadd.f32 %v1472, %v1560
      %v1608 = vadd.f32 %v1473, %v1560
      %v1609 = vadd.f32 %v1474, %v1560
      %v1610 = vadd.f32 %v1475, %v1560
      %v1611 = vadd.f32 %v1476, %v1560
      %v1612 = vadd.f32 %v1477, %v1560
      %v1613 = vadd.f32 %v1478, %v1560
      %v1614 = vadd.f32 %v1479, %v1560
      %v1615 = vadd.f32 %v1480, %v1560
      %v1616 = vadd.f32 %v1481, %v1560
      %v1617 = vadd.f32 %v1482, %v1560
      %v1618 = vadd.f32 %v1483, %v1560
      %v1619 = vadd.f32 %v1484, %v1560
      %v1620 = vadd.f32 %v1485, %v1560
      %v1621 = vadd.f32 %v1486, %v1560
      %v1622 = vadd.f32 %v1487, %v1560
      %v1623 = vadd.f32 %v1488, %v1560
      %v1624 = vadd.f32 %v1489, %v1560
      %v1625 = vadd.f32 %v1490, %v1560
      %v1626 = vadd.f32 %v1491, %v1560
      %v1627 = vadd.f32 %v1492, %v1560
      %v1628 = vadd.f32 %v1493, %v1560
      %v1629 = vadd.f32 %v1494, %v1560
      %v1630 = vadd.f32 %v1495, %v1560
      %v1631 = vadd.f32 %v1496, %v1560
      %v1632 = vadd.f32 %v1497, %v1560
      %v1633 = vadd.f32 %v1498, %v1560
      %v1634 = vadd.f32 %v1499, %v1560
      %v1635 = vadd.f32 %v1500, %v1560
      %v1636 = vadd.f32 %v1501, %v1560
      %v1637 = vadd.f32 %v1502, %v1560
      %v1638 = vadd.f32 %v1503, %v1560
      %v1639 = vadd.f32 %v1504, %v1560
      %v1640 = vadd.f32 %v1505, %v1560
      %v1641 = vadd.f32 %v1506, %v1560
      %v1642 = vadd.f32 %v1507, %v1560
      %v1643 = vadd.f32 %v1508, %v1560
      %v1644 = vadd.f32 %v1509, %v1560
      %v1645 = vadd.f32 %v1510, %v1560
      %v1646 = vadd.f32 %v1511, %v1560
      %v1647 = vadd.f32 %v1512, %v1560
      %v1648 = vadd.f32 %v1513, %v1560
      %v1649 = vadd.f32 %v1514, %v1560
      %v1650 = vadd.f32 %v1515, %v1560
      %v1651 = vadd.f32 %v1516, %v1560
      %v1652 = vadd.f32 %v1517, %v1560
      %v1653 = vadd.f32 %v1518, %v1560
      %v1654 = vadd.f32 %v1519, %v1560
      %v1655 = vadd.f32 %v1520, %v1560
      %v1656 = vadd.f32 %v1521, %v1560
      %v1657 = vadd.f32 %v1522, %v1560
      %v1658 = vadd.f32 %v1523, %v1560
      %v1659 = vadd.f32 %v1524, %v1560
      %v1660 = vadd.f32 %v1525, %v1560
      %v1661 = vadd.f32 %v1526, %v1560
      %v1662 = vadd.f32 %v1527, %v1560
      %v1663 = vadd.f32 %v1528, %v1560
      %v1664 = vadd.f32 %v1529, %v1560
      %v1665 = vadd.f32 %v1530, %v1560
      %v1666 = vadd.f32 %v1531, %v1560
      %v1667 = vadd.f32 %v1532, %v1560
      %v1668 = vadd.f32 %v1533, %v1560
      %v1669 = vadd.f32 %v1534, %v1560
      %v1670 = vadd.f32 %v1535, %v1560
      %v1671 = vadd.f32 %v1536, %v1560
      %v1672 = vadd.f32 %v1537, %v1560
      %v1673 = vadd.f32 %v1538, %v1560
      %v1674 = vadd.f32 %v1539, %v1560
      %v1675 = vadd.f32 %v1540, %v1560
      %v1676 = vadd.f32 %v1541, %v1560
      %v1677 = vadd.f32 %v1542, %v1560
      %v1678 = vadd.f32 %v1543, %v1560
      %v1679 = vadd.f32 %v1544, %v1560
      %v1680 = vadd.f32 %v1545, %v1560
      %v1681 = vadd.f32 %v1546, %v1560
      %v1682 = vadd.f32 %v1547, %v1560
      %v1683 = vadd.f32 %v1548, %v1560
      %v1684 = vadd.f32 %v1549, %v1560
      %v1685 = vadd.f32 %v1550, %v1560
      %v1686 = vadd.f32 %v1551, %v1560
      %v1687 = vadd.f32 %v1552, %v1560
      %v1688 = vadd.f32 %v1553, %v1560
      %v1689 = vadd.f32 %v1554, %v1560
      %vm1690 = vcmp.ge.f32.partialorder %v1562, 0.0
      %vm1691 = vcmp.ge.f32.partialorder %v1563, 0.0
      %vm1692 = vcmp.ge.f32.partialorder %v1564, 0.0
      %vm1693 = vcmp.ge.f32.partialorder %v1565, 0.0
      %vm1694 = vcmp.ge.f32.partialorder %v1566, 0.0
      %vm1695 = vcmp.ge.f32.partialorder %v1567, 0.0
      %vm1696 = vcmp.ge.f32.partialorder %v1568, 0.0
      %vm1697 = vcmp.ge.f32.partialorder %v1569, 0.0
      %vm1698 = vcmp.ge.f32.partialorder %v1570, 0.0
      %vm1699 = vcmp.ge.f32.partialorder %v1571, 0.0
      %vm1700 = vcmp.ge.f32.partialorder %v1572, 0.0
      %vm1701 = vcmp.ge.f32.partialorder %v1573, 0.0
      %vm1702 = vcmp.ge.f32.partialorder %v1574, 0.0
      %vm1703 = vcmp.ge.f32.partialorder %v1575, 0.0
      %vm1704 = vcmp.ge.f32.partialorder %v1576, 0.0
      %vm1705 = vcmp.ge.f32.partialorder %v1577, 0.0
      %vm1706 = vcmp.ge.f32.partialorder %v1578, 0.0
      %vm1707 = vcmp.ge.f32.partialorder %v1579, 0.0
      %vm1708 = vcmp.ge.f32.partialorder %v1580, 0.0
      %vm1709 = vcmp.ge.f32.partialorder %v1581, 0.0
      %vm1710 = vcmp.ge.f32.partialorder %v1582, 0.0
      %vm1711 = vcmp.ge.f32.partialorder %v1583, 0.0
      %vm1712 = vcmp.ge.f32.partialorder %v1584, 0.0
      %vm1713 = vcmp.ge.f32.partialorder %v1585, 0.0
      %vm1714 = vcmp.ge.f32.partialorder %v1586, 0.0
      %vm1715 = vcmp.ge.f32.partialorder %v1587, 0.0
      %vm1716 = vcmp.ge.f32.partialorder %v1588, 0.0
      %vm1717 = vcmp.ge.f32.partialorder %v1589, 0.0
      %vm1718 = vcmp.ge.f32.partialorder %v1590, 0.0
      %vm1719 = vcmp.ge.f32.partialorder %v1591, 0.0
      %vm1720 = vcmp.ge.f32.partialorder %v1592, 0.0
      %vm1721 = vcmp.ge.f32.partialorder %v1593, 0.0
      %vm1722 = vcmp.ge.f32.partialorder %v1594, 0.0
      %vm1723 = vcmp.ge.f32.partialorder %v1595, 0.0
      %vm1724 = vcmp.ge.f32.partialorder %v1596, 0.0
      %vm1725 = vcmp.ge.f32.partialorder %v1597, 0.0
      %vm1726 = vcmp.ge.f32.partialorder %v1598, 0.0
      %vm1727 = vcmp.ge.f32.partialorder %v1599, 0.0
      %vm1728 = vcmp.ge.f32.partialorder %v1600, 0.0
      %vm1729 = vcmp.ge.f32.partialorder %v1601, 0.0
      %vm1730 = vcmp.ge.f32.partialorder %v1602, 0.0
      %vm1731 = vcmp.ge.f32.partialorder %v1603, 0.0
      %vm1732 = vcmp.ge.f32.partialorder %v1604, 0.0
      %vm1733 = vcmp.ge.f32.partialorder %v1605, 0.0
      %vm1734 = vcmp.ge.f32.partialorder %v1606, 0.0
      %vm1735 = vcmp.ge.f32.partialorder %v1607, 0.0
      %vm1736 = vcmp.ge.f32.partialorder %v1608, 0.0
      %vm1737 = vcmp.ge.f32.partialorder %v1609, 0.0
      %vm1738 = vcmp.ge.f32.partialorder %v1610, 0.0
      %vm1739 = vcmp.ge.f32.partialorder %v1611, 0.0
      %vm1740 = vcmp.ge.f32.partialorder %v1612, 0.0
      %vm1741 = vcmp.ge.f32.partialorder %v1613, 0.0
      %vm1742 = vcmp.ge.f32.partialorder %v1614, 0.0
      %vm1743 = vcmp.ge.f32.partialorder %v1615, 0.0
      %vm1744 = vcmp.ge.f32.partialorder %v1616, 0.0
      %vm1745 = vcmp.ge.f32.partialorder %v1617, 0.0
      %vm1746 = vcmp.ge.f32.partialorder %v1618, 0.0
      %vm1747 = vcmp.ge.f32.partialorder %v1619, 0.0
      %vm1748 = vcmp.ge.f32.partialorder %v1620, 0.0
      %vm1749 = vcmp.ge.f32.partialorder %v1621, 0.0
      %vm1750 = vcmp.ge.f32.partialorder %v1622, 0.0
      %vm1751 = vcmp.ge.f32.partialorder %v1623, 0.0
      %vm1752 = vcmp.ge.f32.partialorder %v1624, 0.0
      %vm1753 = vcmp.ge.f32.partialorder %v1625, 0.0
      %vm1754 = vcmp.ge.f32.partialorder %v1626, 0.0
      %vm1755 = vcmp.ge.f32.partialorder %v1627, 0.0
      %vm1756 = vcmp.ge.f32.partialorder %v1628, 0.0
      %vm1757 = vcmp.ge.f32.partialorder %v1629, 0.0
      %vm1758 = vcmp.ge.f32.partialorder %v1630, 0.0
      %vm1759 = vcmp.ge.f32.partialorder %v1631, 0.0
      %vm1760 = vcmp.ge.f32.partialorder %v1632, 0.0
      %vm1761 = vcmp.ge.f32.partialorder %v1633, 0.0
      %vm1762 = vcmp.ge.f32.partialorder %v1634, 0.0
      %vm1763 = vcmp.ge.f32.partialorder %v1635, 0.0
      %vm1764 = vcmp.ge.f32.partialorder %v1636, 0.0
      %vm1765 = vcmp.ge.f32.partialorder %v1637, 0.0
      %vm1766 = vcmp.ge.f32.partialorder %v1638, 0.0
      %vm1767 = vcmp.ge.f32.partialorder %v1639, 0.0
      %vm1768 = vcmp.ge.f32.partialorder %v1640, 0.0
      %vm1769 = vcmp.ge.f32.partialorder %v1641, 0.0
      %vm1770 = vcmp.ge.f32.partialorder %v1642, 0.0
      %vm1771 = vcmp.ge.f32.partialorder %v1643, 0.0
      %vm1772 = vcmp.ge.f32.partialorder %v1644, 0.0
      %vm1773 = vcmp.ge.f32.partialorder %v1645, 0.0
      %vm1774 = vcmp.ge.f32.partialorder %v1646, 0.0
      %vm1775 = vcmp.ge.f32.partialorder %v1647, 0.0
      %vm1776 = vcmp.ge.f32.partialorder %v1648, 0.0
      %vm1777 = vcmp.ge.f32.partialorder %v1649, 0.0
      %vm1778 = vcmp.ge.f32.partialorder %v1650, 0.0
      %vm1779 = vcmp.ge.f32.partialorder %v1651, 0.0
      %vm1780 = vcmp.ge.f32.partialorder %v1652, 0.0
      %vm1781 = vcmp.ge.f32.partialorder %v1653, 0.0
      %vm1782 = vcmp.ge.f32.partialorder %v1654, 0.0
      %vm1783 = vcmp.ge.f32.partialorder %v1655, 0.0
      %vm1784 = vcmp.ge.f32.partialorder %v1656, 0.0
      %vm1785 = vcmp.ge.f32.partialorder %v1657, 0.0
      %vm1786 = vcmp.ge.f32.partialorder %v1658, 0.0
      %vm1787 = vcmp.ge.f32.partialorder %v1659, 0.0
      %vm1788 = vcmp.ge.f32.partialorder %v1660, 0.0
      %vm1789 = vcmp.ge.f32.partialorder %v1661, 0.0
      %vm1790 = vcmp.ge.f32.partialorder %v1662, 0.0
      %vm1791 = vcmp.ge.f32.partialorder %v1663, 0.0
      %vm1792 = vcmp.ge.f32.partialorder %v1664, 0.0
      %vm1793 = vcmp.ge.f32.partialorder %v1665, 0.0
      %vm1794 = vcmp.ge.f32.partialorder %v1666, 0.0
      %vm1795 = vcmp.ge.f32.partialorder %v1667, 0.0
      %vm1796 = vcmp.ge.f32.partialorder %v1668, 0.0
      %vm1797 = vcmp.ge.f32.partialorder %v1669, 0.0
      %vm1798 = vcmp.ge.f32.partialorder %v1670, 0.0
      %vm1799 = vcmp.ge.f32.partialorder %v1671, 0.0
      %vm1800 = vcmp.ge.f32.partialorder %v1672, 0.0
      %vm1801 = vcmp.ge.f32.partialorder %v1673, 0.0
      %vm1802 = vcmp.ge.f32.partialorder %v1674, 0.0
      %vm1803 = vcmp.ge.f32.partialorder %v1675, 0.0
      %vm1804 = vcmp.ge.f32.partialorder %v1676, 0.0
      %vm1805 = vcmp.ge.f32.partialorder %v1677, 0.0
      %vm1806 = vcmp.ge.f32.partialorder %v1678, 0.0
      %vm1807 = vcmp.ge.f32.partialorder %v1679, 0.0
      %vm1808 = vcmp.ge.f32.partialorder %v1680, 0.0
      %vm1809 = vcmp.ge.f32.partialorder %v1681, 0.0
      %vm1810 = vcmp.ge.f32.partialorder %v1682, 0.0
      %vm1811 = vcmp.ge.f32.partialorder %v1683, 0.0
      %vm1812 = vcmp.ge.f32.partialorder %v1684, 0.0
      %vm1813 = vcmp.ge.f32.partialorder %v1685, 0.0
      %vm1814 = vcmp.ge.f32.partialorder %v1686, 0.0
      %vm1815 = vcmp.ge.f32.partialorder %v1687, 0.0
      %vm1816 = vcmp.ge.f32.partialorder %v1688, 0.0
      %vm1817 = vcmp.ge.f32.partialorder %v1689, 0.0
      %v1818 = vmul.f32 %v1562, 0.2
      %v1819 = vmul.f32 %v1563, 0.2
      %v1820 = vmul.f32 %v1564, 0.2
      %v1821 = vmul.f32 %v1565, 0.2
      %v1822 = vmul.f32 %v1566, 0.2
      %v1823 = vmul.f32 %v1567, 0.2
      %v1824 = vmul.f32 %v1568, 0.2
      %v1825 = vmul.f32 %v1569, 0.2
      %v1826 = vmul.f32 %v1570, 0.2
      %v1827 = vmul.f32 %v1571, 0.2
      %v1828 = vmul.f32 %v1572, 0.2
      %v1829 = vmul.f32 %v1573, 0.2
      %v1830 = vmul.f32 %v1574, 0.2
      %v1831 = vmul.f32 %v1575, 0.2
      %v1832 = vmul.f32 %v1576, 0.2
      %v1833 = vmul.f32 %v1577, 0.2
      %v1834 = vmul.f32 %v1578, 0.2
      %v1835 = vmul.f32 %v1579, 0.2
      %v1836 = vmul.f32 %v1580, 0.2
      %v1837 = vmul.f32 %v1581, 0.2
      %v1838 = vmul.f32 %v1582, 0.2
      %v1839 = vmul.f32 %v1583, 0.2
      %v1840 = vmul.f32 %v1584, 0.2
      %v1841 = vmul.f32 %v1585, 0.2
      %v1842 = vmul.f32 %v1586, 0.2
      %v1843 = vmul.f32 %v1587, 0.2
      %v1844 = vmul.f32 %v1588, 0.2
      %v1845 = vmul.f32 %v1589, 0.2
      %v1846 = vmul.f32 %v1590, 0.2
      %v1847 = vmul.f32 %v1591, 0.2
      %v1848 = vmul.f32 %v1592, 0.2
      %v1849 = vmul.f32 %v1593, 0.2
      %v1850 = vmul.f32 %v1594, 0.2
      %v1851 = vmul.f32 %v1595, 0.2
      %v1852 = vmul.f32 %v1596, 0.2
      %v1853 = vmul.f32 %v1597, 0.2
      %v1854 = vmul.f32 %v1598, 0.2
      %v1855 = vmul.f32 %v1599, 0.2
      %v1856 = vmul.f32 %v1600, 0.2
      %v1857 = vmul.f32 %v1601, 0.2
      %v1858 = vmul.f32 %v1602, 0.2
      %v1859 = vmul.f32 %v1603, 0.2
      %v1860 = vmul.f32 %v1604, 0.2
      %v1861 = vmul.f32 %v1605, 0.2
      %v1862 = vmul.f32 %v1606, 0.2
      %v1863 = vmul.f32 %v1607, 0.2
      %v1864 = vmul.f32 %v1608, 0.2
      %v1865 = vmul.f32 %v1609, 0.2
      %v1866 = vmul.f32 %v1610, 0.2
      %v1867 = vmul.f32 %v1611, 0.2
      %v1868 = vmul.f32 %v1612, 0.2
      %v1869 = vmul.f32 %v1613, 0.2
      %v1870 = vmul.f32 %v1614, 0.2
      %v1871 = vmul.f32 %v1615, 0.2
      %v1872 = vmul.f32 %v1616, 0.2
      %v1873 = vmul.f32 %v1617, 0.2
      %v1874 = vmul.f32 %v1618, 0.2
      %v1875 = vmul.f32 %v1619, 0.2
      %v1876 = vmul.f32 %v1620, 0.2
      %v1877 = vmul.f32 %v1621, 0.2
      %v1878 = vmul.f32 %v1622, 0.2
      %v1879 = vmul.f32 %v1623, 0.2
      %v1880 = vmul.f32 %v1624, 0.2
      %v1881 = vmul.f32 %v1625, 0.2
      %v1882 = vmul.f32 %v1626, 0.2
      %v1883 = vmul.f32 %v1627, 0.2
      %v1884 = vmul.f32 %v1628, 0.2
      %v1885 = vmul.f32 %v1629, 0.2
      %v1886 = vmul.f32 %v1630, 0.2
      %v1887 = vmul.f32 %v1631, 0.2
      %v1888 = vmul.f32 %v1632, 0.2
      %v1889 = vmul.f32 %v1633, 0.2
      %v1890 = vmul.f32 %v1634, 0.2
      %v1891 = vmul.f32 %v1635, 0.2
      %v1892 = vmul.f32 %v1636, 0.2
      %v1893 = vmul.f32 %v1637, 0.2
      %v1894 = vmul.f32 %v1638, 0.2
      %v1895 = vmul.f32 %v1639, 0.2
      %v1896 = vmul.f32 %v1640, 0.2
      %v1897 = vmul.f32 %v1641, 0.2
      %v1898 = vmul.f32 %v1642, 0.2
      %v1899 = vmul.f32 %v1643, 0.2
      %v1900 = vmul.f32 %v1644, 0.2
      %v1901 = vmul.f32 %v1645, 0.2
      %v1902 = vmul.f32 %v1646, 0.2
      %v1903 = vmul.f32 %v1647, 0.2
      %v1904 = vmul.f32 %v1648, 0.2
      %v1905 = vmul.f32 %v1649, 0.2
      %v1906 = vmul.f32 %v1650, 0.2
      %v1907 = vmul.f32 %v1651, 0.2
      %v1908 = vmul.f32 %v1652, 0.2
      %v1909 = vmul.f32 %v1653, 0.2
      %v1910 = vmul.f32 %v1654, 0.2
      %v1911 = vmul.f32 %v1655, 0.2
      %v1912 = vmul.f32 %v1656, 0.2
      %v1913 = vmul.f32 %v1657, 0.2
      %v1914 = vmul.f32 %v1658, 0.2
      %v1915 = vmul.f32 %v1659, 0.2
      %v1916 = vmul.f32 %v1660, 0.2
      %v1917 = vmul.f32 %v1661, 0.2
      %v1918 = vmul.f32 %v1662, 0.2
      %v1919 = vmul.f32 %v1663, 0.2
      %v1920 = vmul.f32 %v1664, 0.2
      %v1921 = vmul.f32 %v1665, 0.2
      %v1922 = vmul.f32 %v1666, 0.2
      %v1923 = vmul.f32 %v1667, 0.2
      %v1924 = vmul.f32 %v1668, 0.2
      %v1925 = vmul.f32 %v1669, 0.2
      %v1926 = vmul.f32 %v1670, 0.2
      %v1927 = vmul.f32 %v1671, 0.2
      %v1928 = vmul.f32 %v1672, 0.2
      %v1929 = vmul.f32 %v1673, 0.2
      %v1930 = vmul.f32 %v1674, 0.2
      %v1931 = vmul.f32 %v1675, 0.2
      %v1932 = vmul.f32 %v1676, 0.2
      %v1933 = vmul.f32 %v1677, 0.2
      %v1934 = vmul.f32 %v1678, 0.2
      %v1935 = vmul.f32 %v1679, 0.2
      %v1936 = vmul.f32 %v1680, 0.2
      %v1937 = vmul.f32 %v1681, 0.2
      %v1938 = vmul.f32 %v1682, 0.2
      %v1939 = vmul.f32 %v1683, 0.2
      %v1940 = vmul.f32 %v1684, 0.2
      %v1941 = vmul.f32 %v1685, 0.2
      %v1942 = vmul.f32 %v1686, 0.2
      %v1943 = vmul.f32 %v1687, 0.2
      %v1944 = vmul.f32 %v1688, 0.2
      %v1945 = vmul.f32 %v1689, 0.2
      %v1946 = vsel %vm1690, %v1562, %v1818
      %v1947 = vsel %vm1691, %v1563, %v1819
      %v1948 = vsel %vm1692, %v1564, %v1820
      %v1949 = vsel %vm1693, %v1565, %v1821
      %v1950 = vsel %vm1694, %v1566, %v1822
      %v1951 = vsel %vm1695, %v1567, %v1823
      %v1952 = vsel %vm1696, %v1568, %v1824
      %v1953 = vsel %vm1697, %v1569, %v1825
      %v1954 = vsel %vm1698, %v1570, %v1826
      %v1955 = vsel %vm1699, %v1571, %v1827
      %v1956 = vsel %vm1700, %v1572, %v1828
      %v1957 = vsel %vm1701, %v1573, %v1829
      %v1958 = vsel %vm1702, %v1574, %v1830
      %v1959 = vsel %vm1703, %v1575, %v1831
      %v1960 = vsel %vm1704, %v1576, %v1832
      %v1961 = vsel %vm1705, %v1577, %v1833
      %v1962 = vsel %vm1706, %v1578, %v1834
      %v1963 = vsel %vm1707, %v1579, %v1835
      %v1964 = vsel %vm1708, %v1580, %v1836
      %v1965 = vsel %vm1709, %v1581, %v1837
      %v1966 = vsel %vm1710, %v1582, %v1838
      %v1967 = vsel %vm1711, %v1583, %v1839
      %v1968 = vsel %vm1712, %v1584, %v1840
      %v1969 = vsel %vm1713, %v1585, %v1841
      %v1970 = vsel %vm1714, %v1586, %v1842
      %v1971 = vsel %vm1715, %v1587, %v1843
      %v1972 = vsel %vm1716, %v1588, %v1844
      %v1973 = vsel %vm1717, %v1589, %v1845
      %v1974 = vsel %vm1718, %v1590, %v1846
      %v1975 = vsel %vm1719, %v1591, %v1847
      %v1976 = vsel %vm1720, %v1592, %v1848
      %v1977 = vsel %vm1721, %v1593, %v1849
      %v1978 = vsel %vm1722, %v1594, %v1850
      %v1979 = vsel %vm1723, %v1595, %v1851
      %v1980 = vsel %vm1724, %v1596, %v1852
      %v1981 = vsel %vm1725, %v1597, %v1853
      %v1982 = vsel %vm1726, %v1598, %v1854
      %v1983 = vsel %vm1727, %v1599, %v1855
      %v1984 = vsel %vm1728, %v1600, %v1856
      %v1985 = vsel %vm1729, %v1601, %v1857
      %v1986 = vsel %vm1730, %v1602, %v1858
      %v1987 = vsel %vm1731, %v1603, %v1859
      %v1988 = vsel %vm1732, %v1604, %v1860
      %v1989 = vsel %vm1733, %v1605, %v1861
      %v1990 = vsel %vm1734, %v1606, %v1862
      %v1991 = vsel %vm1735, %v1607, %v1863
      %v1992 = vsel %vm1736, %v1608, %v1864
      %v1993 = vsel %vm1737, %v1609, %v1865
      %v1994 = vsel %vm1738, %v1610, %v1866
      %v1995 = vsel %vm1739, %v1611, %v1867
      %v1996 = vsel %vm1740, %v1612, %v1868
      %v1997 = vsel %vm1741, %v1613, %v1869
      %v1998 = vsel %vm1742, %v1614, %v1870
      %v1999 = vsel %vm1743, %v1615, %v1871
      %v2000 = vsel %vm1744, %v1616, %v1872
      %v2001 = vsel %vm1745, %v1617, %v1873
      %v2002 = vsel %vm1746, %v1618, %v1874
      %v2003 = vsel %vm1747, %v1619, %v1875
      %v2004 = vsel %vm1748, %v1620, %v1876
      %v2005 = vsel %vm1749, %v1621, %v1877
      %v2006 = vsel %vm1750, %v1622, %v1878
      %v2007 = vsel %vm1751, %v1623, %v1879
      %v2008 = vsel %vm1752, %v1624, %v1880
      %v2009 = vsel %vm1753, %v1625, %v1881
      %v2010 = vsel %vm1754, %v1626, %v1882
      %v2011 = vsel %vm1755, %v1627, %v1883
      %v2012 = vsel %vm1756, %v1628, %v1884
      %v2013 = vsel %vm1757, %v1629, %v1885
      %v2014 = vsel %vm1758, %v1630, %v1886
      %v2015 = vsel %vm1759, %v1631, %v1887
      %v2016 = vsel %vm1760, %v1632, %v1888
      %v2017 = vsel %vm1761, %v1633, %v1889
      %v2018 = vsel %vm1762, %v1634, %v1890
      %v2019 = vsel %vm1763, %v1635, %v1891
      %v2020 = vsel %vm1764, %v1636, %v1892
      %v2021 = vsel %vm1765, %v1637, %v1893
      %v2022 = vsel %vm1766, %v1638, %v1894
      %v2023 = vsel %vm1767, %v1639, %v1895
      %v2024 = vsel %vm1768, %v1640, %v1896
      %v2025 = vsel %vm1769, %v1641, %v1897
      %v2026 = vsel %vm1770, %v1642, %v1898
      %v2027 = vsel %vm1771, %v1643, %v1899
      %v2028 = vsel %vm1772, %v1644, %v1900
      %v2029 = vsel %vm1773, %v1645, %v1901
      %v2030 = vsel %vm1774, %v1646, %v1902
      %v2031 = vsel %vm1775, %v1647, %v1903
      %v2032 = vsel %vm1776, %v1648, %v1904
      %v2033 = vsel %vm1777, %v1649, %v1905
      %v2034 = vsel %vm1778, %v1650, %v1906
      %v2035 = vsel %vm1779, %v1651, %v1907
      %v2036 = vsel %vm1780, %v1652, %v1908
      %v2037 = vsel %vm1781, %v1653, %v1909
      %v2038 = vsel %vm1782, %v1654, %v1910
      %v2039 = vsel %vm1783, %v1655, %v1911
      %v2040 = vsel %vm1784, %v1656, %v1912
      %v2041 = vsel %vm1785, %v1657, %v1913
      %v2042 = vsel %vm1786, %v1658, %v1914
      %v2043 = vsel %vm1787, %v1659, %v1915
      %v2044 = vsel %vm1788, %v1660, %v1916
      %v2045 = vsel %vm1789, %v1661, %v1917
      %v2046 = vsel %vm1790, %v1662, %v1918
      %v2047 = vsel %vm1791, %v1663, %v1919
      %v2048 = vsel %vm1792, %v1664, %v1920
      %v2049 = vsel %vm1793, %v1665, %v1921
      %v2050 = vsel %vm1794, %v1666, %v1922
      %v2051 = vsel %vm1795, %v1667, %v1923
      %v2052 = vsel %vm1796, %v1668, %v1924
      %v2053 = vsel %vm1797, %v1669, %v1925
      %v2054 = vsel %vm1798, %v1670, %v1926
      %v2055 = vsel %vm1799, %v1671, %v1927
      %v2056 = vsel %vm1800, %v1672, %v1928
      %v2057 = vsel %vm1801, %v1673, %v1929
      %v2058 = vsel %vm1802, %v1674, %v1930
      %v2059 = vsel %vm1803, %v1675, %v1931
      %v2060 = vsel %vm1804, %v1676, %v1932
      %v2061 = vsel %vm1805, %v1677, %v1933
      %v2062 = vsel %vm1806, %v1678, %v1934
      %v2063 = vsel %vm1807, %v1679, %v1935
      %v2064 = vsel %vm1808, %v1680, %v1936
      %v2065 = vsel %vm1809, %v1681, %v1937
      %v2066 = vsel %vm1810, %v1682, %v1938
      %v2067 = vsel %vm1811, %v1683, %v1939
      %v2068 = vsel %vm1812, %v1684, %v1940
      %v2069 = vsel %vm1813, %v1685, %v1941
      %v2070 = vsel %vm1814, %v1686, %v1942
      %v2071 = vsel %vm1815, %v1687, %v1943
      %v2072 = vsel %vm1816, %v1688, %v1944
      %v2073 = vsel %vm1817, %v1689, %v1945
      %v2074 = vpack.c.bf16 %v1947, %v1946
      %v2075 = vpack.c.bf16 %v1949, %v1948
      %v2076 = vpack.c.bf16 %v1951, %v1950
      %v2077 = vpack.c.bf16 %v1953, %v1952
      %v2078 = vpack.c.bf16 %v1955, %v1954
      %v2079 = vpack.c.bf16 %v1957, %v1956
      %v2080 = vpack.c.bf16 %v1959, %v1958
      %v2081 = vpack.c.bf16 %v1961, %v1960
      %v2082 = vpack.c.bf16 %v1963, %v1962
      %v2083 = vpack.c.bf16 %v1965, %v1964
      %v2084 = vpack.c.bf16 %v1967, %v1966
      %v2085 = vpack.c.bf16 %v1969, %v1968
      %v2086 = vpack.c.bf16 %v1971, %v1970
      %v2087 = vpack.c.bf16 %v1973, %v1972
      %v2088 = vpack.c.bf16 %v1975, %v1974
      %v2089 = vpack.c.bf16 %v1977, %v1976
      %v2090 = vpack.c.bf16 %v1979, %v1978
      %v2091 = vpack.c.bf16 %v1981, %v1980
      %v2092 = vpack.c.bf16 %v1983, %v1982
      %v2093 = vpack.c.bf16 %v1985, %v1984
      %v2094 = vpack.c.bf16 %v1987, %v1986
      %v2095 = vpack.c.bf16 %v1989, %v1988
      %v2096 = vpack.c.bf16 %v1991, %v1990
      %v2097 = vpack.c.bf16 %v1993, %v1992
      %v2098 = vpack.c.bf16 %v1995, %v1994
      %v2099 = vpack.c.bf16 %v1997, %v1996
      %v2100 = vpack.c.bf16 %v1999, %v1998
      %v2101 = vpack.c.bf16 %v2001, %v2000
      %v2102 = vpack.c.bf16 %v2003, %v2002
      %v2103 = vpack.c.bf16 %v2005, %v2004
      %v2104 = vpack.c.bf16 %v2007, %v2006
      %v2105 = vpack.c.bf16 %v2009, %v2008
      %v2106 = vpack.c.bf16 %v2011, %v2010
      %v2107 = vpack.c.bf16 %v2013, %v2012
      %v2108 = vpack.c.bf16 %v2015, %v2014
      %v2109 = vpack.c.bf16 %v2017, %v2016
      %v2110 = vpack.c.bf16 %v2019, %v2018
      %v2111 = vpack.c.bf16 %v2021, %v2020
      %v2112 = vpack.c.bf16 %v2023, %v2022
      %v2113 = vpack.c.bf16 %v2025, %v2024
      %v2114 = vpack.c.bf16 %v2027, %v2026
      %v2115 = vpack.c.bf16 %v2029, %v2028
      %v2116 = vpack.c.bf16 %v2031, %v2030
      %v2117 = vpack.c.bf16 %v2033, %v2032
      %v2118 = vpack.c.bf16 %v2035, %v2034
      %v2119 = vpack.c.bf16 %v2037, %v2036
      %v2120 = vpack.c.bf16 %v2039, %v2038
      %v2121 = vpack.c.bf16 %v2041, %v2040
      %v2122 = vpack.c.bf16 %v2043, %v2042
      %v2123 = vpack.c.bf16 %v2045, %v2044
      %v2124 = vpack.c.bf16 %v2047, %v2046
      %v2125 = vpack.c.bf16 %v2049, %v2048
      %v2126 = vpack.c.bf16 %v2051, %v2050
      %v2127 = vpack.c.bf16 %v2053, %v2052
      %v2128 = vpack.c.bf16 %v2055, %v2054
      %v2129 = vpack.c.bf16 %v2057, %v2056
      %v2130 = vpack.c.bf16 %v2059, %v2058
      %v2131 = vpack.c.bf16 %v2061, %v2060
      %v2132 = vpack.c.bf16 %v2063, %v2062
      %v2133 = vpack.c.bf16 %v2065, %v2064
      %v2134 = vpack.c.bf16 %v2067, %v2066
      %v2135 = vpack.c.bf16 %v2069, %v2068
      %v2136 = vpack.c.bf16 %v2071, %v2070
      %v2137 = vpack.c.bf16 %v2073, %v2072
      %v2202 = vunpack.c.l.b16 %v2074
      %v2203 = vunpack.c.h.b16 %v2074
      %v2204 = vunpack.c.l.b16 %v2075
      %v2205 = vunpack.c.h.b16 %v2075
      %v2206 = vunpack.c.l.b16 %v2076
      %v2207 = vunpack.c.h.b16 %v2076
      %v2208 = vunpack.c.l.b16 %v2077
      %v2209 = vunpack.c.h.b16 %v2077
      %v2210 = vunpack.c.l.b16 %v2078
      %v2211 = vunpack.c.h.b16 %v2078
      %v2212 = vunpack.c.l.b16 %v2079
      %v2213 = vunpack.c.h.b16 %v2079
      %v2214 = vunpack.c.l.b16 %v2080
      %v2215 = vunpack.c.h.b16 %v2080
      %v2216 = vunpack.c.l.b16 %v2081
      %v2217 = vunpack.c.h.b16 %v2081
      %v2218 = vunpack.c.l.b16 %v2082
      %v2219 = vunpack.c.h.b16 %v2082
      %v2220 = vunpack.c.l.b16 %v2083
      %v2221 = vunpack.c.h.b16 %v2083
      %v2222 = vunpack.c.l.b16 %v2084
      %v2223 = vunpack.c.h.b16 %v2084
      %v2224 = vunpack.c.l.b16 %v2085
      %v2225 = vunpack.c.h.b16 %v2085
      %v2226 = vunpack.c.l.b16 %v2086
      %v2227 = vunpack.c.h.b16 %v2086
      %v2228 = vunpack.c.l.b16 %v2087
      %v2229 = vunpack.c.h.b16 %v2087
      %v2230 = vunpack.c.l.b16 %v2088
      %v2231 = vunpack.c.h.b16 %v2088
      %v2232 = vunpack.c.l.b16 %v2089
      %v2233 = vunpack.c.h.b16 %v2089
      %v2234 = vunpack.c.l.b16 %v2090
      %v2235 = vunpack.c.h.b16 %v2090
      %v2236 = vunpack.c.l.b16 %v2091
      %v2237 = vunpack.c.h.b16 %v2091
      %v2238 = vunpack.c.l.b16 %v2092
      %v2239 = vunpack.c.h.b16 %v2092
      %v2240 = vunpack.c.l.b16 %v2093
      %v2241 = vunpack.c.h.b16 %v2093
      %v2242 = vunpack.c.l.b16 %v2094
      %v2243 = vunpack.c.h.b16 %v2094
      %v2244 = vunpack.c.l.b16 %v2095
      %v2245 = vunpack.c.h.b16 %v2095
      %v2246 = vunpack.c.l.b16 %v2096
      %v2247 = vunpack.c.h.b16 %v2096
      %v2248 = vunpack.c.l.b16 %v2097
      %v2249 = vunpack.c.h.b16 %v2097
      %v2250 = vunpack.c.l.b16 %v2098
      %v2251 = vunpack.c.h.b16 %v2098
      %v2252 = vunpack.c.l.b16 %v2099
      %v2253 = vunpack.c.h.b16 %v2099
      %v2254 = vunpack.c.l.b16 %v2100
      %v2255 = vunpack.c.h.b16 %v2100
      %v2256 = vunpack.c.l.b16 %v2101
      %v2257 = vunpack.c.h.b16 %v2101
      %v2258 = vunpack.c.l.b16 %v2102
      %v2259 = vunpack.c.h.b16 %v2102
      %v2260 = vunpack.c.l.b16 %v2103
      %v2261 = vunpack.c.h.b16 %v2103
      %v2262 = vunpack.c.l.b16 %v2104
      %v2263 = vunpack.c.h.b16 %v2104
      %v2264 = vunpack.c.l.b16 %v2105
      %v2265 = vunpack.c.h.b16 %v2105
      %v2266 = vunpack.c.l.b16 %v2106
      %v2267 = vunpack.c.h.b16 %v2106
      %v2268 = vunpack.c.l.b16 %v2107
      %v2269 = vunpack.c.h.b16 %v2107
      %v2270 = vunpack.c.l.b16 %v2108
      %v2271 = vunpack.c.h.b16 %v2108
      %v2272 = vunpack.c.l.b16 %v2109
      %v2273 = vunpack.c.h.b16 %v2109
      %v2274 = vunpack.c.l.b16 %v2110
      %v2275 = vunpack.c.h.b16 %v2110
      %v2276 = vunpack.c.l.b16 %v2111
      %v2277 = vunpack.c.h.b16 %v2111
      %v2278 = vunpack.c.l.b16 %v2112
      %v2279 = vunpack.c.h.b16 %v2112
      %v2280 = vunpack.c.l.b16 %v2113
      %v2281 = vunpack.c.h.b16 %v2113
      %v2282 = vunpack.c.l.b16 %v2114
      %v2283 = vunpack.c.h.b16 %v2114
      %v2284 = vunpack.c.l.b16 %v2115
      %v2285 = vunpack.c.h.b16 %v2115
      %v2286 = vunpack.c.l.b16 %v2116
      %v2287 = vunpack.c.h.b16 %v2116
      %v2288 = vunpack.c.l.b16 %v2117
      %v2289 = vunpack.c.h.b16 %v2117
      %v2290 = vunpack.c.l.b16 %v2118
      %v2291 = vunpack.c.h.b16 %v2118
      %v2292 = vunpack.c.l.b16 %v2119
      %v2293 = vunpack.c.h.b16 %v2119
      %v2294 = vunpack.c.l.b16 %v2120
      %v2295 = vunpack.c.h.b16 %v2120
      %v2296 = vunpack.c.l.b16 %v2121
      %v2297 = vunpack.c.h.b16 %v2121
      %v2298 = vunpack.c.l.b16 %v2122
      %v2299 = vunpack.c.h.b16 %v2122
      %v2300 = vunpack.c.l.b16 %v2123
      %v2301 = vunpack.c.h.b16 %v2123
      %v2302 = vunpack.c.l.b16 %v2124
      %v2303 = vunpack.c.h.b16 %v2124
      %v2304 = vunpack.c.l.b16 %v2125
      %v2305 = vunpack.c.h.b16 %v2125
      %v2306 = vunpack.c.l.b16 %v2126
      %v2307 = vunpack.c.h.b16 %v2126
      %v2308 = vunpack.c.l.b16 %v2127
      %v2309 = vunpack.c.h.b16 %v2127
      %v2310 = vunpack.c.l.b16 %v2128
      %v2311 = vunpack.c.h.b16 %v2128
      %v2312 = vunpack.c.l.b16 %v2129
      %v2313 = vunpack.c.h.b16 %v2129
      %v2314 = vunpack.c.l.b16 %v2130
      %v2315 = vunpack.c.h.b16 %v2130
      %v2316 = vunpack.c.l.b16 %v2131
      %v2317 = vunpack.c.h.b16 %v2131
      %v2318 = vunpack.c.l.b16 %v2132
      %v2319 = vunpack.c.h.b16 %v2132
      %v2320 = vunpack.c.l.b16 %v2133
      %v2321 = vunpack.c.h.b16 %v2133
      %v2322 = vunpack.c.l.b16 %v2134
      %v2323 = vunpack.c.h.b16 %v2134
      %v2324 = vunpack.c.l.b16 %v2135
      %v2325 = vunpack.c.h.b16 %v2135
      %v2326 = vunpack.c.l.b16 %v2136
      %v2327 = vunpack.c.h.b16 %v2136
      %v2328 = vunpack.c.l.b16 %v2137
      %v2329 = vunpack.c.h.b16 %v2137
      %v2330 = vpack.c.b16 %v2202, %v2202
      %v2331 = vpack.c.b16 %v2203, %v2203
      %v2332 = vpack.c.b16 %v2204, %v2204
      %v2333 = vpack.c.b16 %v2205, %v2205
      %v2334 = vpack.c.b16 %v2206, %v2206
      %v2335 = vpack.c.b16 %v2207, %v2207
      %v2336 = vpack.c.b16 %v2208, %v2208
      %v2337 = vpack.c.b16 %v2209, %v2209
      %v2338 = vpack.c.b16 %v2210, %v2210
      %v2339 = vpack.c.b16 %v2211, %v2211
      %v2340 = vpack.c.b16 %v2212, %v2212
      %v2341 = vpack.c.b16 %v2213, %v2213
      %v2342 = vpack.c.b16 %v2214, %v2214
      %v2343 = vpack.c.b16 %v2215, %v2215
      %v2344 = vpack.c.b16 %v2216, %v2216
      %v2345 = vpack.c.b16 %v2217, %v2217
      %v2346 = vpack.c.b16 %v2218, %v2218
      %v2347 = vpack.c.b16 %v2219, %v2219
      %v2348 = vpack.c.b16 %v2220, %v2220
      %v2349 = vpack.c.b16 %v2221, %v2221
      %v2350 = vpack.c.b16 %v2222, %v2222
      %v2351 = vpack.c.b16 %v2223, %v2223
      %v2352 = vpack.c.b16 %v2224, %v2224
      %v2353 = vpack.c.b16 %v2225, %v2225
      %v2354 = vpack.c.b16 %v2226, %v2226
      %v2355 = vpack.c.b16 %v2227, %v2227
      %v2356 = vpack.c.b16 %v2228, %v2228
      %v2357 = vpack.c.b16 %v2229, %v2229
      %v2358 = vpack.c.b16 %v2230, %v2230
      %v2359 = vpack.c.b16 %v2231, %v2231
      %v2360 = vpack.c.b16 %v2232, %v2232
      %v2361 = vpack.c.b16 %v2233, %v2233
      %v2362 = vpack.c.b16 %v2234, %v2234
      %v2363 = vpack.c.b16 %v2235, %v2235
      %v2364 = vpack.c.b16 %v2236, %v2236
      %v2365 = vpack.c.b16 %v2237, %v2237
      %v2366 = vpack.c.b16 %v2238, %v2238
      %v2367 = vpack.c.b16 %v2239, %v2239
      %v2368 = vpack.c.b16 %v2240, %v2240
      %v2369 = vpack.c.b16 %v2241, %v2241
      %v2370 = vpack.c.b16 %v2242, %v2242
      %v2371 = vpack.c.b16 %v2243, %v2243
      %v2372 = vpack.c.b16 %v2244, %v2244
      %v2373 = vpack.c.b16 %v2245, %v2245
      %v2374 = vpack.c.b16 %v2246, %v2246
      %v2375 = vpack.c.b16 %v2247, %v2247
      %v2376 = vpack.c.b16 %v2248, %v2248
      %v2377 = vpack.c.b16 %v2249, %v2249
      %v2378 = vpack.c.b16 %v2250, %v2250
      %v2379 = vpack.c.b16 %v2251, %v2251
      %v2380 = vpack.c.b16 %v2252, %v2252
      %v2381 = vpack.c.b16 %v2253, %v2253
      %v2382 = vpack.c.b16 %v2254, %v2254
      %v2383 = vpack.c.b16 %v2255, %v2255
      %v2384 = vpack.c.b16 %v2256, %v2256
      %v2385 = vpack.c.b16 %v2257, %v2257
      %v2386 = vpack.c.b16 %v2258, %v2258
      %v2387 = vpack.c.b16 %v2259, %v2259
      %v2388 = vpack.c.b16 %v2260, %v2260
      %v2389 = vpack.c.b16 %v2261, %v2261
      %v2390 = vpack.c.b16 %v2262, %v2262
      %v2391 = vpack.c.b16 %v2263, %v2263
      %v2392 = vpack.c.b16 %v2264, %v2264
      %v2393 = vpack.c.b16 %v2265, %v2265
      %v2394 = vpack.c.b16 %v2266, %v2266
      %v2395 = vpack.c.b16 %v2267, %v2267
      %v2396 = vpack.c.b16 %v2268, %v2268
      %v2397 = vpack.c.b16 %v2269, %v2269
      %v2398 = vpack.c.b16 %v2270, %v2270
      %v2399 = vpack.c.b16 %v2271, %v2271
      %v2400 = vpack.c.b16 %v2272, %v2272
      %v2401 = vpack.c.b16 %v2273, %v2273
      %v2402 = vpack.c.b16 %v2274, %v2274
      %v2403 = vpack.c.b16 %v2275, %v2275
      %v2404 = vpack.c.b16 %v2276, %v2276
      %v2405 = vpack.c.b16 %v2277, %v2277
      %v2406 = vpack.c.b16 %v2278, %v2278
      %v2407 = vpack.c.b16 %v2279, %v2279
      %v2408 = vpack.c.b16 %v2280, %v2280
      %v2409 = vpack.c.b16 %v2281, %v2281
      %v2410 = vpack.c.b16 %v2282, %v2282
      %v2411 = vpack.c.b16 %v2283, %v2283
      %v2412 = vpack.c.b16 %v2284, %v2284
      %v2413 = vpack.c.b16 %v2285, %v2285
      %v2414 = vpack.c.b16 %v2286, %v2286
      %v2415 = vpack.c.b16 %v2287, %v2287
      %v2416 = vpack.c.b16 %v2288, %v2288
      %v2417 = vpack.c.b16 %v2289, %v2289
      %v2418 = vpack.c.b16 %v2290, %v2290
      %v2419 = vpack.c.b16 %v2291, %v2291
      %v2420 = vpack.c.b16 %v2292, %v2292
      %v2421 = vpack.c.b16 %v2293, %v2293
      %v2422 = vpack.c.b16 %v2294, %v2294
      %v2423 = vpack.c.b16 %v2295, %v2295
      %v2424 = vpack.c.b16 %v2296, %v2296
      %v2425 = vpack.c.b16 %v2297, %v2297
      %v2426 = vpack.c.b16 %v2298, %v2298
      %v2427 = vpack.c.b16 %v2299, %v2299
      %v2428 = vpack.c.b16 %v2300, %v2300
      %v2429 = vpack.c.b16 %v2301, %v2301
      %v2430 = vpack.c.b16 %v2302, %v2302
      %v2431 = vpack.c.b16 %v2303, %v2303
      %v2432 = vpack.c.b16 %v2304, %v2304
      %v2433 = vpack.c.b16 %v2305, %v2305
      %v2434 = vpack.c.b16 %v2306, %v2306
      %v2435 = vpack.c.b16 %v2307, %v2307
      %v2436 = vpack.c.b16 %v2308, %v2308
      %v2437 = vpack.c.b16 %v2309, %v2309
      %v2438 = vpack.c.b16 %v2310, %v2310
      %v2439 = vpack.c.b16 %v2311, %v2311
      %v2440 = vpack.c.b16 %v2312, %v2312
      %v2441 = vpack.c.b16 %v2313, %v2313
      %v2442 = vpack.c.b16 %v2314, %v2314
      %v2443 = vpack.c.b16 %v2315, %v2315
      %v2444 = vpack.c.b16 %v2316, %v2316
      %v2445 = vpack.c.b16 %v2317, %v2317
      %v2446 = vpack.c.b16 %v2318, %v2318
      %v2447 = vpack.c.b16 %v2319, %v2319
      %v2448 = vpack.c.b16 %v2320, %v2320
      %v2449 = vpack.c.b16 %v2321, %v2321
      %v2450 = vpack.c.b16 %v2322, %v2322
      %v2451 = vpack.c.b16 %v2323, %v2323
      %v2452 = vpack.c.b16 %v2324, %v2324
      %v2453 = vpack.c.b16 %v2325, %v2325
      %v2454 = vpack.c.b16 %v2326, %v2326
      %v2455 = vpack.c.b16 %v2327, %v2327
      %v2456 = vpack.c.b16 %v2328, %v2328
      %v2457 = vpack.c.b16 %v2329, %v2329
      %2586 = vst [vmem:[%s199] sm:$0xf] %v2330
      %2587 = vst [vmem:[%s199 + $0x4] sm:$0xf] %v2331
      %2588 = vst [vmem:[%s199 + $0x8] sm:$0xf] %v2332
      %2589 = vst [vmem:[%s199 + $0xc] sm:$0xf] %v2333
      %2590 = vst [vmem:[%s199 + $0x10] sm:$0xf] %v2334
      %2591 = vst [vmem:[%s199 + $0x14] sm:$0xf] %v2335
      %2592 = vst [vmem:[%s199 + $0x18] sm:$0xf] %v2336
      %2593 = vst [vmem:[%s199 + $0x1c] sm:$0xf] %v2337
      %2594 = vst [vmem:[%s199 + $0x20] sm:$0xf] %v2338
      %2595 = vst [vmem:[%s199 + $0x24] sm:$0xf] %v2339
      %2596 = vst [vmem:[%s199 + $0x28] sm:$0xf] %v2340
      %2597 = vst [vmem:[%s199 + $0x2c] sm:$0xf] %v2341
      %2598 = vst [vmem:[%s199 + $0x30] sm:$0xf] %v2342
      %2599 = vst [vmem:[%s199 + $0x34] sm:$0xf] %v2343
      %2600 = vst [vmem:[%s199 + $0x38] sm:$0xf] %v2344
      %2601 = vst [vmem:[%s199 + $0x3c] sm:$0xf] %v2345
      %2602 = vst [vmem:[%s199 + $0x40] sm:$0xf] %v2346
      %2603 = vst [vmem:[%s199 + $0x44] sm:$0xf] %v2347
      %2604 = vst [vmem:[%s199 + $0x48] sm:$0xf] %v2348
      %2605 = vst [vmem:[%s199 + $0x4c] sm:$0xf] %v2349
      %2606 = vst [vmem:[%s199 + $0x50] sm:$0xf] %v2350
      %2607 = vst [vmem:[%s199 + $0x54] sm:$0xf] %v2351
      %2608 = vst [vmem:[%s199 + $0x58] sm:$0xf] %v2352
      %2609 = vst [vmem:[%s199 + $0x5c] sm:$0xf] %v2353
      %2610 = vst [vmem:[%s199 + $0x60] sm:$0xf] %v2354
      %2611 = vst [vmem:[%s199 + $0x64] sm:$0xf] %v2355
      %2612 = vst [vmem:[%s199 + $0x68] sm:$0xf] %v2356
      %2613 = vst [vmem:[%s199 + $0x6c] sm:$0xf] %v2357
      %2614 = vst [vmem:[%s199 + $0x70] sm:$0xf] %v2358
      %2615 = vst [vmem:[%s199 + $0x74] sm:$0xf] %v2359
      %2616 = vst [vmem:[%s199 + $0x78] sm:$0xf] %v2360
      %2617 = vst [vmem:[%s199 + $0x7c] sm:$0xf] %v2361
      %2618 = vst [vmem:[%s199 + $0x80] sm:$0xf] %v2362
      %2619 = vst [vmem:[%s199 + $0x84] sm:$0xf] %v2363
      %2620 = vst [vmem:[%s199 + $0x88] sm:$0xf] %v2364
      %2621 = vst [vmem:[%s199 + $0x8c] sm:$0xf] %v2365
      %2622 = vst [vmem:[%s199 + $0x90] sm:$0xf] %v2366
      %2623 = vst [vmem:[%s199 + $0x94] sm:$0xf] %v2367
      %2624 = vst [vmem:[%s199 + $0x98] sm:$0xf] %v2368
      %2625 = vst [vmem:[%s199 + $0x9c] sm:$0xf] %v2369
      %2626 = vst [vmem:[%s199 + $0xa0] sm:$0xf] %v2370
      %2627 = vst [vmem:[%s199 + $0xa4] sm:$0xf] %v2371
      %2628 = vst [vmem:[%s199 + $0xa8] sm:$0xf] %v2372
      %2629 = vst [vmem:[%s199 + $0xac] sm:$0xf] %v2373
      %2630 = vst [vmem:[%s199 + $0xb0] sm:$0xf] %v2374
      %2631 = vst [vmem:[%s199 + $0xb4] sm:$0xf] %v2375
      %2632 = vst [vmem:[%s199 + $0xb8] sm:$0xf] %v2376
      %2633 = vst [vmem:[%s199 + $0xbc] sm:$0xf] %v2377
      %2634 = vst [vmem:[%s199 + $0xc0] sm:$0xf] %v2378
      %2635 = vst [vmem:[%s199 + $0xc4] sm:$0xf] %v2379
      %2636 = vst [vmem:[%s199 + $0xc8] sm:$0xf] %v2380
      %2637 = vst [vmem:[%s199 + $0xcc] sm:$0xf] %v2381
      %2638 = vst [vmem:[%s199 + $0xd0] sm:$0xf] %v2382
      %2639 = vst [vmem:[%s199 + $0xd4] sm:$0xf] %v2383
      %2640 = vst [vmem:[%s199 + $0xd8] sm:$0xf] %v2384
      %2641 = vst [vmem:[%s199 + $0xdc] sm:$0xf] %v2385
      %2642 = vst [vmem:[%s199 + $0xe0] sm:$0xf] %v2386
      %2643 = vst [vmem:[%s199 + $0xe4] sm:$0xf] %v2387
      %2644 = vst [vmem:[%s199 + $0xe8] sm:$0xf] %v2388
      %2645 = vst [vmem:[%s199 + $0xec] sm:$0xf] %v2389
      %2646 = vst [vmem:[%s199 + $0xf0] sm:$0xf] %v2390
      %2647 = vst [vmem:[%s199 + $0xf4] sm:$0xf] %v2391
      %2648 = vst [vmem:[%s199 + $0xf8] sm:$0xf] %v2392
      %2649 = vst [vmem:[%s199 + $0xfc] sm:$0xf] %v2393
      %2650 = vst [vmem:[%s199 + $0x100] sm:$0xf] %v2394
      %2651 = vst [vmem:[%s199 + $0x104] sm:$0xf] %v2395
      %2652 = vst [vmem:[%s199 + $0x108] sm:$0xf] %v2396
      %2653 = vst [vmem:[%s199 + $0x10c] sm:$0xf] %v2397
      %2654 = vst [vmem:[%s199 + $0x110] sm:$0xf] %v2398
      %2655 = vst [vmem:[%s199 + $0x114] sm:$0xf] %v2399
      %2656 = vst [vmem:[%s199 + $0x118] sm:$0xf] %v2400
      %2657 = vst [vmem:[%s199 + $0x11c] sm:$0xf] %v2401
      %2658 = vst [vmem:[%s199 + $0x120] sm:$0xf] %v2402
      %2659 = vst [vmem:[%s199 + $0x124] sm:$0xf] %v2403
      %2660 = vst [vmem:[%s199 + $0x128] sm:$0xf] %v2404
      %2661 = vst [vmem:[%s199 + $0x12c] sm:$0xf] %v2405
      %2662 = vst [vmem:[%s199 + $0x130] sm:$0xf] %v2406
      %2663 = vst [vmem:[%s199 + $0x134] sm:$0xf] %v2407
      %2664 = vst [vmem:[%s199 + $0x138] sm:$0xf] %v2408
      %2665 = vst [vmem:[%s199 + $0x13c] sm:$0xf] %v2409
      %2666 = vst [vmem:[%s199 + $0x140] sm:$0xf] %v2410
      %2667 = vst [vmem:[%s199 + $0x144] sm:$0xf] %v2411
      %2668 = vst [vmem:[%s199 + $0x148] sm:$0xf] %v2412
      %2669 = vst [vmem:[%s199 + $0x14c] sm:$0xf] %v2413
      %2670 = vst [vmem:[%s199 + $0x150] sm:$0xf] %v2414
      %2671 = vst [vmem:[%s199 + $0x154] sm:$0xf] %v2415
      %2672 = vst [vmem:[%s199 + $0x158] sm:$0xf] %v2416
      %2673 = vst [vmem:[%s199 + $0x15c] sm:$0xf] %v2417
      %2674 = vst [vmem:[%s199 + $0x160] sm:$0xf] %v2418
      %2675 = vst [vmem:[%s199 + $0x164] sm:$0xf] %v2419
      %2676 = vst [vmem:[%s199 + $0x168] sm:$0xf] %v2420
      %2677 = vst [vmem:[%s199 + $0x16c] sm:$0xf] %v2421
      %2678 = vst [vmem:[%s199 + $0x170] sm:$0xf] %v2422
      %2679 = vst [vmem:[%s199 + $0x174] sm:$0xf] %v2423
      %2680 = vst [vmem:[%s199 + $0x178] sm:$0xf] %v2424
      %2681 = vst [vmem:[%s199 + $0x17c] sm:$0xf] %v2425
      %2682 = vst [vmem:[%s199 + $0x180] sm:$0xf] %v2426
      %2683 = vst [vmem:[%s199 + $0x184] sm:$0xf] %v2427
      %2684 = vst [vmem:[%s199 + $0x188] sm:$0xf] %v2428
      %2685 = vst [vmem:[%s199 + $0x18c] sm:$0xf] %v2429
      %2686 = vst [vmem:[%s199 + $0x190] sm:$0xf] %v2430
      %2687 = vst [vmem:[%s199 + $0x194] sm:$0xf] %v2431
      %2688 = vst [vmem:[%s199 + $0x198] sm:$0xf] %v2432
      %2689 = vst [vmem:[%s199 + $0x19c] sm:$0xf] %v2433
      %2690 = vst [vmem:[%s199 + $0x1a0] sm:$0xf] %v2434
      %2691 = vst [vmem:[%s199 + $0x1a4] sm:$0xf] %v2435
      %2692 = vst [vmem:[%s199 + $0x1a8] sm:$0xf] %v2436
      %2693 = vst [vmem:[%s199 + $0x1ac] sm:$0xf] %v2437
      %2694 = vst [vmem:[%s199 + $0x1b0] sm:$0xf] %v2438
      %2695 = vst [vmem:[%s199 + $0x1b4] sm:$0xf] %v2439
      %2696 = vst [vmem:[%s199 + $0x1b8] sm:$0xf] %v2440
      %2697 = vst [vmem:[%s199 + $0x1bc] sm:$0xf] %v2441
      %2698 = vst [vmem:[%s199 + $0x1c0] sm:$0xf] %v2442
      %2699 = vst [vmem:[%s199 + $0x1c4] sm:$0xf] %v2443
      %2700 = vst [vmem:[%s199 + $0x1c8] sm:$0xf] %v2444
      %2701 = vst [vmem:[%s199 + $0x1cc] sm:$0xf] %v2445
      %2702 = vst [vmem:[%s199 + $0x1d0] sm:$0xf] %v2446
      %2703 = vst [vmem:[%s199 + $0x1d4] sm:$0xf] %v2447
      %2704 = vst [vmem:[%s199 + $0x1d8] sm:$0xf] %v2448
      %2705 = vst [vmem:[%s199 + $0x1dc] sm:$0xf] %v2449
      %2706 = vst [vmem:[%s199 + $0x1e0] sm:$0xf] %v2450
      %2707 = vst [vmem:[%s199 + $0x1e4] sm:$0xf] %v2451
      %2708 = vst [vmem:[%s199 + $0x1e8] sm:$0xf] %v2452
      %2709 = vst [vmem:[%s199 + $0x1ec] sm:$0xf] %v2453
      %2710 = vst [vmem:[%s199 + $0x1f0] sm:$0xf] %v2454
      %2711 = vst [vmem:[%s199 + $0x1f4] sm:$0xf] %v2455
      %2712 = vst [vmem:[%s199 + $0x1f8] sm:$0xf] %v2456
      %2713 = vst [vmem:[%s199 + $0x1fc] sm:$0xf] %v2457
      %s2714 = smul.u32 128, %s15
      %p2715 = scmp.lt.s32.totalorder %s2714, 1023
      %s2716 = scalar_select %p2715, %s2714, 1023
      %s2717 = smul.addr %s2716, 4
      %s2718 = scalar_lea.vmem %s4, %s2717
      // Predicated region
      $region37: #{discriminator_forward.5} parent=35 // pred_check
        %p2719 = pneg %p122
      $region38: #{discriminator_forward.5} parent=35 // pred_check_branch
        %2721 = sbr.rel (%p2719) target = $region40
      $region39: #{discriminator_forward.5} parent=35 // pred_region
        %s2722 = smul.u32 128, %s15
      $region40: #{discriminator_forward.5} parent=35 // pred_fallthru
        _
    $region36: #{discriminator_forward.5} parent=5 // pred_fallthru
      _
    %p2723 = scmp.le.s32.totalorder 2, %s10
    // Predicated region
    $region41: #{discriminator_forward.5} parent=5 // pred_check
      %p2724 = pneg %p2723
    $region42: #{discriminator_forward.5} parent=5 // pred_check_branch
      %2726 = sbr.rel (%p2724) target = $region44
    $region43: #{discriminator_forward.5} parent=5 // pred_region
      %s2727 = ssub.s32 %s10, 2
      // Predicated region
      $region45: #{discriminator_forward.5} parent=43 // pred_check
        %p2728 = pneg %p128
      $region46: #{discriminator_forward.5} parent=43 // pred_check_branch
        %2730 = sbr.rel (%p2728) target = $region48
      $region47: #{discriminator_forward.5} parent=43 // pred_region
        %s2731 = smul.u32 128, %s16
        %p2732 = scmp.lt.s32.totalorder %s2731, 1023
        %s2733 = scalar_select %p2732, %s2731, 1023
        %s2734 = smul.addr %s2733, 4
        %s2735 = scalar_lea.vmem %s4, %s2734
      $region48: #{discriminator_forward.5} parent=43 // pred_fallthru
        _
    $region44: #{discriminator_forward.5} parent=5 // pred_fallthru
      _
  $region6: #{discriminator_forward.5} parent=0 // loop_footer
    %s14 = sadd.s32 1, %s10
  $region7: #{discriminator_forward.5} parent=0 // loop_footer_branch
    %9 = sbr.rel target = $region3
  $region8: #{discriminator_forward.5} parent=0 // loop_exit
    _

// kernel: discriminator_forward.6
$region0: #{discriminator_forward.6}
  #allocation0 [shape = 'u32[]', space=smem, size = 0x4, offset = 0x4, fixed_abs, tag = 'smem constant byte address 0x4 - core index']
  #allocation1 [shape = 'u32[144,128]{1,0:T(1,128)}', space=vmem, size = 0x12000, scoped, tag = 'internal scratch']
  %s0 = inlined_call_operand.vmem [shape: bf16[1024,432], index: 0, kind: input, shape index: {}]
  %s1 = inlined_call_operand.vmem [shape: bf16[432,128], index: 1, kind: input, shape index: {}]
  %s2 = inlined_call_operand.vmem [shape: f32[1,128], index: 2, kind: input, shape index: {}]
  %s3 = inlined_call_operand.vmem [shape: f32[1,128], index: 3, kind: input, shape index: {}]
  %s4 = inlined_call_operand.vmem [shape: bf16[1024,128], index: 4, kind: output, shape index: {}]
  %s5 = sld [smem:[#allocation0]]
  $region26: #{discriminator_forward.6} parent=0
    _
  %s7 = ssub.s32 1, %s5
  %s8 = scalar_select 0, %s7, %s5
  // Predicated region
  $region2: #{discriminator_forward.6} parent=0 // pred_check
    _
  $region3: #{discriminator_forward.6} parent=0 // pred_check_branch
    %10 = sbr.rel (0) target = $region5
  $region4: #{discriminator_forward.6} parent=0 // pred_region
    _
  $region5: #{discriminator_forward.6} parent=0 // pred_fallthru
    _
  // Predicated region
  $region6: #{discriminator_forward.6} parent=0 // pred_check
    _
  $region7: #{discriminator_forward.6} parent=0 // pred_check_branch
    %12 = sbr.rel (0) target = $region9
  $region8: #{discriminator_forward.6} parent=0 // pred_region
    _
  $region9: #{discriminator_forward.6} parent=0 // pred_fallthru
    _
  // Predicated region
  $region10: #{discriminator_forward.6} parent=0 // pred_check
    _
  $region11: #{discriminator_forward.6} parent=0 // pred_check_branch
    %14 = sbr.rel (0) target = $region13
  $region12: #{discriminator_forward.6} parent=0 // pred_region
    _
  $region13: #{discriminator_forward.6} parent=0 // pred_fallthru
    _
  // Predicated region
  $region14: #{discriminator_forward.6} parent=0 // pred_check
    _
  $region15: #{discriminator_forward.6} parent=0 // pred_check_branch
    %16 = sbr.rel (0) target = $region17
  $region16: #{discriminator_forward.6} parent=0 // pred_region
    _
  $region17: #{discriminator_forward.6} parent=0 // pred_fallthru
    _
  %v18 = vld [vmem:[%s0] sm:$0xff]
  %v19 = vld [vmem:[%s0 + $0x8] sm:$0xff]
  %v20 = vld [vmem:[%s0 + $0x10] sm:$0xff]
  %v21 = vld [vmem:[%s0 + $0x18] sm:$0xff]
  %v22 = vld [vmem:[%s0 + $0x20] sm:$0xff]
  %v23 = vld [vmem:[%s0 + $0x28] sm:$0xff]
  %v24 = vld [vmem:[%s0 + $0x30] sm:$0xff]
  %v25 = vld [vmem:[%s0 + $0x38] sm:$0xff]
  %v26 = vld [vmem:[%s0 + $0x40] sm:$0xff]
  %v27 = vld [vmem:[%s0 + $0x48] sm:$0xff]
  %v28 = vld [vmem:[%s0 + $0x50] sm:$0xff]
  %v29 = vld [vmem:[%s0 + $0x58] sm:$0xff]
  %v30 = vld [vmem:[%s0 + $0x60] sm:$0xff]
  %v31 = vld [vmem:[%s0 + $0x68] sm:$0xff]
  %v32 = vld [vmem:[%s0 + $0x70] sm:$0xff]
  %v33 = vld [vmem:[%s0 + $0x78] sm:$0xff]
  %v34 = vld [vmem:[%s0 + $0x80] sm:$0xff]
  %v35 = vld [vmem:[%s0 + $0x88] sm:$0xff]
  %v36 = vld [vmem:[%s0 + $0x90] sm:$0xff]
  %v37 = vld [vmem:[%s0 + $0x98] sm:$0xff]
  %v38 = vld [vmem:[%s0 + $0xa0] sm:$0xff]
  %v39 = vld [vmem:[%s0 + $0xa8] sm:$0xff]
  %v40 = vld [vmem:[%s0 + $0xb0] sm:$0xff]
  %v41 = vld [vmem:[%s0 + $0xb8] sm:$0xff]
  %v42 = vld [vmem:[%s0 + $0xc0] sm:$0xff]
  %v43 = vld [vmem:[%s0 + $0xc8] sm:$0xff]
  %v44 = vld [vmem:[%s0 + $0xd0] sm:$0xff]
  %v45 = vld [vmem:[%s0 + $0xd8] sm:$0xff]
  %v46 = vld [vmem:[%s0 + $0xe0] sm:$0xff]
  %v47 = vld [vmem:[%s0 + $0xe8] sm:$0xff]
  %v48 = vld [vmem:[%s0 + $0xf0] sm:$0xff]
  %v49 = vld [vmem:[%s0 + $0xf8] sm:$0xff]
  %v50 = vld [vmem:[%s0 + $0x100] sm:$0xff]
  %v51 = vld [vmem:[%s0 + $0x108] sm:$0xff]
  %v52 = vld [vmem:[%s0 + $0x110] sm:$0xff]
  %v53 = vld [vmem:[%s0 + $0x118] sm:$0xff]
  %v54 = vld [vmem:[%s0 + $0x120] sm:$0xff]
  %v55 = vld [vmem:[%s0 + $0x128] sm:$0xff]
  %v56 = vld [vmem:[%s0 + $0x130] sm:$0xff]
  %v57 = vld [vmem:[%s0 + $0x138] sm:$0xff]
  %v58 = vld [vmem:[%s0 + $0x140] sm:$0xff]
  %v59 = vld [vmem:[%s0 + $0x148] sm:$0xff]
  %v60 = vld [vmem:[%s0 + $0x150] sm:$0xff]
  %v61 = vld [vmem:[%s0 + $0x158] sm:$0xff]
  %v62 = vld [vmem:[%s0 + $0x160] sm:$0xff]
  %v63 = vld [vmem:[%s0 + $0x168] sm:$0xff]
  %v64 = vld [vmem:[%s0 + $0x170] sm:$0xff]
  %v65 = vld [vmem:[%s0 + $0x178] sm:$0xff]
  %v66 = vld [vmem:[%s0 + $0x180] sm:$0xff]
  %v67 = vld [vmem:[%s0 + $0x188] sm:$0xff]
  %v68 = vld [vmem:[%s0 + $0x190] sm:$0xff]
  %v69 = vld [vmem:[%s0 + $0x198] sm:$0xff]
  %v70 = vld [vmem:[%s0 + $0x1a0] sm:$0xff]
  %v71 = vld [vmem:[%s0 + $0x1a8] sm:$0xff]
  %v72 = vld [vmem:[%s0 + $0x1b0] sm:$0xff]
  %v73 = vld [vmem:[%s0 + $0x1b8] sm:$0xff]
  %v74 = vld [vmem:[%s0 + $0x1c0] sm:$0xff]
  %v75 = vld [vmem:[%s0 + $0x1c8] sm:$0xff]
  %v76 = vld [vmem:[%s0 + $0x1d0] sm:$0xff]
  %v77 = vld [vmem:[%s0 + $0x1d8] sm:$0xff]
  %v78 = vld [vmem:[%s0 + $0x1e0] sm:$0xff]
  %v79 = vld [vmem:[%s0 + $0x1e8] sm:$0xff]
  %v80 = vld [vmem:[%s0 + $0x1f0] sm:$0xff]
  %v81 = vld [vmem:[%s0 + $0x1f8] sm:$0xff]
  %v82 = vld [vmem:[%s0 + $0x200] sm:$0xff]
  %v83 = vld [vmem:[%s0 + $0x208] sm:$0xff]
  %v84 = vld [vmem:[%s0 + $0x210] sm:$0xff]
  %v85 = vld [vmem:[%s0 + $0x218] sm:$0xff]
  %v86 = vld [vmem:[%s0 + $0x220] sm:$0xff]
  %v87 = vld [vmem:[%s0 + $0x228] sm:$0xff]
  %v88 = vld [vmem:[%s0 + $0x230] sm:$0xff]
  %v89 = vld [vmem:[%s0 + $0x238] sm:$0xff]
  %v90 = vld [vmem:[%s0 + $0x240] sm:$0xff]
  %v91 = vld [vmem:[%s0 + $0x248] sm:$0xff]
  %v92 = vld [vmem:[%s0 + $0x250] sm:$0xff]
  %v93 = vld [vmem:[%s0 + $0x258] sm:$0xff]
  %v94 = vld [vmem:[%s0 + $0x260] sm:$0xff]
  %v95 = vld [vmem:[%s0 + $0x268] sm:$0xff]
  %v96 = vld [vmem:[%s0 + $0x270] sm:$0xff]
  %v97 = vld [vmem:[%s0 + $0x278] sm:$0xff]
  %v98 = vld [vmem:[%s0 + $0x280] sm:$0xff]
  %v99 = vld [vmem:[%s0 + $0x288] sm:$0xff]
  %v100 = vld [vmem:[%s0 + $0x290] sm:$0xff]
  %v101 = vld [vmem:[%s0 + $0x298] sm:$0xff]
  %v102 = vld [vmem:[%s0 + $0x2a0] sm:$0xff]
  %v103 = vld [vmem:[%s0 + $0x2a8] sm:$0xff]
  %v104 = vld [vmem:[%s0 + $0x2b0] sm:$0xff]
  %v105 = vld [vmem:[%s0 + $0x2b8] sm:$0xff]
  %v106 = vld [vmem:[%s0 + $0x2c0] sm:$0xff]
  %v107 = vld [vmem:[%s0 + $0x2c8] sm:$0xff]
  %v108 = vld [vmem:[%s0 + $0x2d0] sm:$0xff]
  %v109 = vld [vmem:[%s0 + $0x2d8] sm:$0xff]
  %v110 = vld [vmem:[%s0 + $0x2e0] sm:$0xff]
  %v111 = vld [vmem:[%s0 + $0x2e8] sm:$0xff]
  %v112 = vld [vmem:[%s0 + $0x2f0] sm:$0xff]
  %v113 = vld [vmem:[%s0 + $0x2f8] sm:$0xff]
  %v114 = vld [vmem:[%s0 + $0x300] sm:$0xff]
  %v115 = vld [vmem:[%s0 + $0x308] sm:$0xff]
  %v116 = vld [vmem:[%s0 + $0x310] sm:$0xff]
  %v117 = vld [vmem:[%s0 + $0x318] sm:$0xff]
  %v118 = vld [vmem:[%s0 + $0x320] sm:$0xff]
  %v119 = vld [vmem:[%s0 + $0x328] sm:$0xff]
  %v120 = vld [vmem:[%s0 + $0x330] sm:$0xff]
  %v121 = vld [vmem:[%s0 + $0x338] sm:$0xff]
  %v122 = vld [vmem:[%s0 + $0x340] sm:$0xff]
  %v123 = vld [vmem:[%s0 + $0x348] sm:$0xff]
  %v124 = vld [vmem:[%s0 + $0x350] sm:$0xff]
  %v125 = vld [vmem:[%s0 + $0x358] sm:$0xff]
  %v126 = vld [vmem:[%s0 + $0x360] sm:$0xff]
  %v127 = vld [vmem:[%s0 + $0x368] sm:$0xff]
  %v128 = vld [vmem:[%s0 + $0x370] sm:$0xff]
  %v129 = vld [vmem:[%s0 + $0x378] sm:$0xff]
  %v130 = vld [vmem:[%s0 + $0x380] sm:$0xff]
  %v131 = vld [vmem:[%s0 + $0x388] sm:$0xff]
  %v132 = vld [vmem:[%s0 + $0x390] sm:$0xff]
  %v133 = vld [vmem:[%s0 + $0x398] sm:$0xff]
  %v134 = vld [vmem:[%s0 + $0x3a0] sm:$0xff]
  %v135 = vld [vmem:[%s0 + $0x3a8] sm:$0xff]
  %v136 = vld [vmem:[%s0 + $0x3b0] sm:$0xff]
  %v137 = vld [vmem:[%s0 + $0x3b8] sm:$0xff]
  %v138 = vld [vmem:[%s0 + $0x3c0] sm:$0xff]
  %v139 = vld [vmem:[%s0 + $0x3c8] sm:$0xff]
  %v140 = vld [vmem:[%s0 + $0x3d0] sm:$0xff]
  %v141 = vld [vmem:[%s0 + $0x3d8] sm:$0xff]
  %v142 = vld [vmem:[%s0 + $0x3e0] sm:$0xff]
  %v143 = vld [vmem:[%s0 + $0x3e8] sm:$0xff]
  %v144 = vld [vmem:[%s0 + $0x3f0] sm:$0xff]
  %v145 = vld [vmem:[%s0 + $0x3f8] sm:$0xff]
  %v146 = vld [vmem:[%s0 + $0x400] sm:$0xff]
  %v147 = vld [vmem:[%s0 + $0x408] sm:$0xff]
  %v148 = vld [vmem:[%s0 + $0x410] sm:$0xff]
  %v149 = vld [vmem:[%s0 + $0x418] sm:$0xff]
  %v150 = vld [vmem:[%s0 + $0x420] sm:$0xff]
  %v151 = vld [vmem:[%s0 + $0x428] sm:$0xff]
  %v152 = vld [vmem:[%s0 + $0x430] sm:$0xff]
  %v153 = vld [vmem:[%s0 + $0x438] sm:$0xff]
  %v154 = vld [vmem:[%s0 + $0x440] sm:$0xff]
  %v155 = vld [vmem:[%s0 + $0x448] sm:$0xff]
  %v156 = vld [vmem:[%s0 + $0x450] sm:$0xff]
  %v157 = vld [vmem:[%s0 + $0x458] sm:$0xff]
  %v158 = vld [vmem:[%s0 + $0x460] sm:$0xff]
  %v159 = vld [vmem:[%s0 + $0x468] sm:$0xff]
  %v160 = vld [vmem:[%s0 + $0x470] sm:$0xff]
  %v161 = vld [vmem:[%s0 + $0x478] sm:$0xff]
  %v162 = vld [vmem:[%s0 + $0x480] sm:$0xff]
  %v163 = vld [vmem:[%s0 + $0x488] sm:$0xff]
  %v164 = vld [vmem:[%s0 + $0x490] sm:$0xff]
  %v165 = vld [vmem:[%s0 + $0x498] sm:$0xff]
  %v166 = vld [vmem:[%s0 + $0x4a0] sm:$0xff]
  %v167 = vld [vmem:[%s0 + $0x4a8] sm:$0xff]
  %v168 = vld [vmem:[%s0 + $0x4b0] sm:$0xff]
  %v169 = vld [vmem:[%s0 + $0x4b8] sm:$0xff]
  %v170 = vld [vmem:[%s0 + $0x4c0] sm:$0xff]
  %v171 = vld [vmem:[%s0 + $0x4c8] sm:$0xff]
  %v172 = vld [vmem:[%s0 + $0x4d0] sm:$0xff]
  %v173 = vld [vmem:[%s0 + $0x4d8] sm:$0xff]
  %v174 = vld [vmem:[%s0 + $0x4e0] sm:$0xff]
  %v175 = vld [vmem:[%s0 + $0x4e8] sm:$0xff]
  %v176 = vld [vmem:[%s0 + $0x4f0] sm:$0xff]
  %v177 = vld [vmem:[%s0 + $0x4f8] sm:$0xff]
  %v178 = vld [vmem:[%s0 + $0x500] sm:$0xff]
  %v179 = vld [vmem:[%s0 + $0x508] sm:$0xff]
  %v180 = vld [vmem:[%s0 + $0x510] sm:$0xff]
  %v181 = vld [vmem:[%s0 + $0x518] sm:$0xff]
  %v182 = vld [vmem:[%s0 + $0x520] sm:$0xff]
  %v183 = vld [vmem:[%s0 + $0x528] sm:$0xff]
  %v184 = vld [vmem:[%s0 + $0x530] sm:$0xff]
  %v185 = vld [vmem:[%s0 + $0x538] sm:$0xff]
  %v186 = vld [vmem:[%s0 + $0x540] sm:$0xff]
  %v187 = vld [vmem:[%s0 + $0x548] sm:$0xff]
  %v188 = vld [vmem:[%s0 + $0x550] sm:$0xff]
  %v189 = vld [vmem:[%s0 + $0x558] sm:$0xff]
  %v190 = vld [vmem:[%s0 + $0x560] sm:$0xff]
  %v191 = vld [vmem:[%s0 + $0x568] sm:$0xff]
  %v192 = vld [vmem:[%s0 + $0x570] sm:$0xff]
  %v193 = vld [vmem:[%s0 + $0x578] sm:$0xff]
  %v194 = vld [vmem:[%s0 + $0x580] sm:$0xff]
  %v195 = vld [vmem:[%s0 + $0x588] sm:$0xff]
  %v196 = vld [vmem:[%s0 + $0x590] sm:$0xff]
  %v197 = vld [vmem:[%s0 + $0x598] sm:$0xff]
  %v198 = vld [vmem:[%s0 + $0x5a0] sm:$0xff]
  %v199 = vld [vmem:[%s0 + $0x5a8] sm:$0xff]
  %v200 = vld [vmem:[%s0 + $0x5b0] sm:$0xff]
  %v201 = vld [vmem:[%s0 + $0x5b8] sm:$0xff]
  %v202 = vld [vmem:[%s0 + $0x5c0] sm:$0xff]
  %v203 = vld [vmem:[%s0 + $0x5c8] sm:$0xff]
  %v204 = vld [vmem:[%s0 + $0x5d0] sm:$0xff]
  %v205 = vld [vmem:[%s0 + $0x5d8] sm:$0xff]
  %v206 = vld [vmem:[%s0 + $0x5e0] sm:$0xff]
  %v207 = vld [vmem:[%s0 + $0x5e8] sm:$0xff]
  %v208 = vld [vmem:[%s0 + $0x5f0] sm:$0xff]
  %v209 = vld [vmem:[%s0 + $0x5f8] sm:$0xff]
  %v210 = vld [vmem:[%s0 + $0x600] sm:$0xff]
  %v211 = vld [vmem:[%s0 + $0x608] sm:$0xff]
  %v212 = vld [vmem:[%s0 + $0x610] sm:$0xff]
  %v213 = vld [vmem:[%s0 + $0x618] sm:$0xff]
  %v214 = vld [vmem:[%s0 + $0x620] sm:$0xff]
  %v215 = vld [vmem:[%s0 + $0x628] sm:$0xff]
  %v216 = vld [vmem:[%s0 + $0x630] sm:$0xff]
  %v217 = vld [vmem:[%s0 + $0x638] sm:$0xff]
  %v218 = vld [vmem:[%s0 + $0x640] sm:$0xff]
  %v219 = vld [vmem:[%s0 + $0x648] sm:$0xff]
  %v220 = vld [vmem:[%s0 + $0x650] sm:$0xff]
  %v221 = vld [vmem:[%s0 + $0x658] sm:$0xff]
  %v222 = vld [vmem:[%s0 + $0x660] sm:$0xff]
  %v223 = vld [vmem:[%s0 + $0x668] sm:$0xff]
  %v224 = vld [vmem:[%s0 + $0x670] sm:$0xff]
  %v225 = vld [vmem:[%s0 + $0x678] sm:$0xff]
  %v226 = vld [vmem:[%s0 + $0x680] sm:$0xff]
  %v227 = vld [vmem:[%s0 + $0x688] sm:$0xff]
  %v228 = vld [vmem:[%s0 + $0x690] sm:$0xff]
  %v229 = vld [vmem:[%s0 + $0x698] sm:$0xff]
  %v230 = vld [vmem:[%s0 + $0x6a0] sm:$0xff]
  %v231 = vld [vmem:[%s0 + $0x6a8] sm:$0xff]
  %v232 = vld [vmem:[%s0 + $0x6b0] sm:$0xff]
  %v233 = vld [vmem:[%s0 + $0x6b8] sm:$0xff]
  %v234 = vld [vmem:[%s0 + $0x6c0] sm:$0xff]
  %v235 = vld [vmem:[%s0 + $0x6c8] sm:$0xff]
  %v236 = vld [vmem:[%s0 + $0x6d0] sm:$0xff]
  %v237 = vld [vmem:[%s0 + $0x6d8] sm:$0xff]
  %v238 = vld [vmem:[%s0 + $0x6e0] sm:$0xff]
  %v239 = vld [vmem:[%s0 + $0x6e8] sm:$0xff]
  %v240 = vld [vmem:[%s0 + $0x6f0] sm:$0xff]
  %v241 = vld [vmem:[%s0 + $0x6f8] sm:$0xff]
  %v242 = vld [vmem:[%s0 + $0x700] sm:$0xff]
  %v243 = vld [vmem:[%s0 + $0x708] sm:$0xff]
  %v244 = vld [vmem:[%s0 + $0x710] sm:$0xff]
  %v245 = vld [vmem:[%s0 + $0x718] sm:$0xff]
  %v246 = vld [vmem:[%s0 + $0x720] sm:$0xff]
  %v247 = vld [vmem:[%s0 + $0x728] sm:$0xff]
  %v248 = vld [vmem:[%s0 + $0x730] sm:$0xff]
  %v249 = vld [vmem:[%s0 + $0x738] sm:$0xff]
  %v250 = vld [vmem:[%s0 + $0x740] sm:$0xff]
  %v251 = vld [vmem:[%s0 + $0x748] sm:$0xff]
  %v252 = vld [vmem:[%s0 + $0x750] sm:$0xff]
  %v253 = vld [vmem:[%s0 + $0x758] sm:$0xff]
  %v254 = vld [vmem:[%s0 + $0x760] sm:$0xff]
  %v255 = vld [vmem:[%s0 + $0x768] sm:$0xff]
  %v256 = vld [vmem:[%s0 + $0x770] sm:$0xff]
  %v257 = vld [vmem:[%s0 + $0x778] sm:$0xff]
  %v258 = vld [vmem:[%s0 + $0x780] sm:$0xff]
  %v259 = vld [vmem:[%s0 + $0x788] sm:$0xff]
  %v260 = vld [vmem:[%s0 + $0x790] sm:$0xff]
  %v261 = vld [vmem:[%s0 + $0x798] sm:$0xff]
  %v262 = vld [vmem:[%s0 + $0x7a0] sm:$0xff]
  %v263 = vld [vmem:[%s0 + $0x7a8] sm:$0xff]
  %v264 = vld [vmem:[%s0 + $0x7b0] sm:$0xff]
  %v265 = vld [vmem:[%s0 + $0x7b8] sm:$0xff]
  %v266 = vld [vmem:[%s0 + $0x7c0] sm:$0xff]
  %v267 = vld [vmem:[%s0 + $0x7c8] sm:$0xff]
  %v268 = vld [vmem:[%s0 + $0x7d0] sm:$0xff]
  %v269 = vld [vmem:[%s0 + $0x7d8] sm:$0xff]
  %v270 = vld [vmem:[%s0 + $0x7e0] sm:$0xff]
  %v271 = vld [vmem:[%s0 + $0x7e8] sm:$0xff]
  %v272 = vld [vmem:[%s0 + $0x7f0] sm:$0xff]
  %v273 = vld [vmem:[%s0 + $0x7f8] sm:$0xff]
  %v274 = vld [vmem:[%s1] sm:$0xf]
  %v275 = vld [vmem:[%s1 + $0x4] sm:$0xf]
  %v276 = vld [vmem:[%s1 + $0x8] sm:$0xf]
  %v277 = vld [vmem:[%s1 + $0xc] sm:$0xf]
  %v278 = vld [vmem:[%s1 + $0x10] sm:$0xf]
  %v279 = vld [vmem:[%s1 + $0x14] sm:$0xf]
  %v280 = vld [vmem:[%s1 + $0x18] sm:$0xf]
  %v281 = vld [vmem:[%s1 + $0x1c] sm:$0xf]
  %v282 = vld [vmem:[%s1 + $0x20] sm:$0xf]
  %v283 = vld [vmem:[%s1 + $0x24] sm:$0xf]
  %v284 = vld [vmem:[%s1 + $0x28] sm:$0xf]
  %v285 = vld [vmem:[%s1 + $0x2c] sm:$0xf]
  %v286 = vld [vmem:[%s1 + $0x30] sm:$0xf]
  %v287 = vld [vmem:[%s1 + $0x34] sm:$0xf]
  %v288 = vld [vmem:[%s1 + $0x38] sm:$0xf]
  %v289 = vld [vmem:[%s1 + $0x3c] sm:$0xf]
  %v290 = vld [vmem:[%s1 + $0x40] sm:$0xf]
  %v291 = vld [vmem:[%s1 + $0x44] sm:$0xf]
  %v292 = vld [vmem:[%s1 + $0x48] sm:$0xf]
  %v293 = vld [vmem:[%s1 + $0x4c] sm:$0xf]
  %v294 = vld [vmem:[%s1 + $0x50] sm:$0xf]
  %v295 = vld [vmem:[%s1 + $0x54] sm:$0xf]
  %v296 = vld [vmem:[%s1 + $0x58] sm:$0xf]
  %v297 = vld [vmem:[%s1 + $0x5c] sm:$0xf]
  %v298 = vld [vmem:[%s1 + $0x60] sm:$0xf]
  %v299 = vld [vmem:[%s1 + $0x64] sm:$0xf]
  %v300 = vld [vmem:[%s1 + $0x68] sm:$0xf]
  %v301 = vld [vmem:[%s1 + $0x6c] sm:$0xf]
  %v302 = vld [vmem:[%s1 + $0x70] sm:$0xf]
  %v303 = vld [vmem:[%s1 + $0x74] sm:$0xf]
  %v304 = vld [vmem:[%s1 + $0x78] sm:$0xf]
  %v305 = vld [vmem:[%s1 + $0x7c] sm:$0xf]
  %v306 = vld [vmem:[%s1 + $0x80] sm:$0xf]
  %v307 = vld [vmem:[%s1 + $0x84] sm:$0xf]
  %v308 = vld [vmem:[%s1 + $0x88] sm:$0xf]
  %v309 = vld [vmem:[%s1 + $0x8c] sm:$0xf]
  %v310 = vld [vmem:[%s1 + $0x90] sm:$0xf]
  %v311 = vld [vmem:[%s1 + $0x94] sm:$0xf]
  %v312 = vld [vmem:[%s1 + $0x98] sm:$0xf]
  %v313 = vld [vmem:[%s1 + $0x9c] sm:$0xf]
  %v314 = vld [vmem:[%s1 + $0xa0] sm:$0xf]
  %v315 = vld [vmem:[%s1 + $0xa4] sm:$0xf]
  %v316 = vld [vmem:[%s1 + $0xa8] sm:$0xf]
  %v317 = vld [vmem:[%s1 + $0xac] sm:$0xf]
  %v318 = vld [vmem:[%s1 + $0xb0] sm:$0xf]
  %v319 = vld [vmem:[%s1 + $0xb4] sm:$0xf]
  %v320 = vld [vmem:[%s1 + $0xb8] sm:$0xf]
  %v321 = vld [vmem:[%s1 + $0xbc] sm:$0xf]
  %v322 = vld [vmem:[%s1 + $0xc0] sm:$0xf]
  %v323 = vld [vmem:[%s1 + $0xc4] sm:$0xf]
  %v324 = vld [vmem:[%s1 + $0xc8] sm:$0xf]
  %v325 = vld [vmem:[%s1 + $0xcc] sm:$0xf]
  %v326 = vld [vmem:[%s1 + $0xd0] sm:$0xf]
  %v327 = vld [vmem:[%s1 + $0xd4] sm:$0xf]
  %v584 = vunpack.c.l.b16 %v18
  %v585 = vunpack.c.h.b16 %v18
  %v586 = vunpack.c.l.b16 %v19
  %v587 = vunpack.c.h.b16 %v19
  %v588 = vunpack.c.l.b16 %v20
  %v589 = vunpack.c.h.b16 %v20
  %v590 = vunpack.c.l.b16 %v21
  %v591 = vunpack.c.h.b16 %v21
  %v592 = vunpack.c.l.b16 %v22
  %v593 = vunpack.c.h.b16 %v22
  %v594 = vunpack.c.l.b16 %v23
  %v595 = vunpack.c.h.b16 %v23
  %v596 = vunpack.c.l.b16 %v24
  %v597 = vunpack.c.h.b16 %v24
  %v598 = vunpack.c.l.b16 %v25
  %v599 = vunpack.c.h.b16 %v25
  %v600 = vunpack.c.l.b16 %v26
  %v601 = vunpack.c.h.b16 %v26
  %v602 = vunpack.c.l.b16 %v27
  %v603 = vunpack.c.h.b16 %v27
  %v604 = vunpack.c.l.b16 %v28
  %v605 = vunpack.c.h.b16 %v28
  %v606 = vunpack.c.l.b16 %v29
  %v607 = vunpack.c.h.b16 %v29
  %v608 = vunpack.c.l.b16 %v30
  %v609 = vunpack.c.h.b16 %v30
  %v610 = vunpack.c.l.b16 %v31
  %v611 = vunpack.c.h.b16 %v31
  %v612 = vunpack.c.l.b16 %v32
  %v613 = vunpack.c.h.b16 %v32
  %v614 = vunpack.c.l.b16 %v33
  %v615 = vunpack.c.h.b16 %v33
  %v616 = vunpack.c.l.b16 %v34
  %v617 = vunpack.c.h.b16 %v34
  %v618 = vunpack.c.l.b16 %v35
  %v619 = vunpack.c.h.b16 %v35
  %v620 = vunpack.c.l.b16 %v36
  %v621 = vunpack.c.h.b16 %v36
  %v622 = vunpack.c.l.b16 %v37
  %v623 = vunpack.c.h.b16 %v37
  %v624 = vunpack.c.l.b16 %v38
  %v625 = vunpack.c.h.b16 %v38
  %v626 = vunpack.c.l.b16 %v39
  %v627 = vunpack.c.h.b16 %v39
  %v628 = vunpack.c.l.b16 %v40
  %v629 = vunpack.c.h.b16 %v40
  %v630 = vunpack.c.l.b16 %v41
  %v631 = vunpack.c.h.b16 %v41
  %v632 = vunpack.c.l.b16 %v42
  %v633 = vunpack.c.h.b16 %v42
  %v634 = vunpack.c.l.b16 %v43
  %v635 = vunpack.c.h.b16 %v43
  %v636 = vunpack.c.l.b16 %v44
  %v637 = vunpack.c.h.b16 %v44
  %v638 = vunpack.c.l.b16 %v45
  %v639 = vunpack.c.h.b16 %v45
  %v640 = vunpack.c.l.b16 %v46
  %v641 = vunpack.c.h.b16 %v46
  %v642 = vunpack.c.l.b16 %v47
  %v643 = vunpack.c.h.b16 %v47
  %v644 = vunpack.c.l.b16 %v48
  %v645 = vunpack.c.h.b16 %v48
  %v646 = vunpack.c.l.b16 %v49
  %v647 = vunpack.c.h.b16 %v49
  %v648 = vunpack.c.l.b16 %v50
  %v649 = vunpack.c.h.b16 %v50
  %v650 = vunpack.c.l.b16 %v51
  %v651 = vunpack.c.h.b16 %v51
  %v652 = vunpack.c.l.b16 %v52
  %v653 = vunpack.c.h.b16 %v52
  %v654 = vunpack.c.l.b16 %v53
  %v655 = vunpack.c.h.b16 %v53
  %v656 = vunpack.c.l.b16 %v54
  %v657 = vunpack.c.h.b16 %v54
  %v658 = vunpack.c.l.b16 %v55
  %v659 = vunpack.c.h.b16 %v55
  %v660 = vunpack.c.l.b16 %v56
  %v661 = vunpack.c.h.b16 %v56
  %v662 = vunpack.c.l.b16 %v57
  %v663 = vunpack.c.h.b16 %v57
  %v664 = vunpack.c.l.b16 %v58
  %v665 = vunpack.c.h.b16 %v58
  %v666 = vunpack.c.l.b16 %v59
  %v667 = vunpack.c.h.b16 %v59
  %v668 = vunpack.c.l.b16 %v60
  %v669 = vunpack.c.h.b16 %v60
  %v670 = vunpack.c.l.b16 %v61
  %v671 = vunpack.c.h.b16 %v61
  %v672 = vunpack.c.l.b16 %v62
  %v673 = vunpack.c.h.b16 %v62
  %v674 = vunpack.c.l.b16 %v63
  %v675 = vunpack.c.h.b16 %v63
  %v676 = vunpack.c.l.b16 %v64
  %v677 = vunpack.c.h.b16 %v64
  %v678 = vunpack.c.l.b16 %v65
  %v679 = vunpack.c.h.b16 %v65
  %v680 = vunpack.c.l.b16 %v66
  %v681 = vunpack.c.h.b16 %v66
  %v682 = vunpack.c.l.b16 %v67
  %v683 = vunpack.c.h.b16 %v67
  %v684 = vunpack.c.l.b16 %v68
  %v685 = vunpack.c.h.b16 %v68
  %v686 = vunpack.c.l.b16 %v69
  %v687 = vunpack.c.h.b16 %v69
  %v688 = vunpack.c.l.b16 %v70
  %v689 = vunpack.c.h.b16 %v70
  %v690 = vunpack.c.l.b16 %v71
  %v691 = vunpack.c.h.b16 %v71
  %v692 = vunpack.c.l.b16 %v72
  %v693 = vunpack.c.h.b16 %v72
  %v694 = vunpack.c.l.b16 %v73
  %v695 = vunpack.c.h.b16 %v73
  %v696 = vunpack.c.l.b16 %v74
  %v697 = vunpack.c.h.b16 %v74
  %v698 = vunpack.c.l.b16 %v75
  %v699 = vunpack.c.h.b16 %v75
  %v700 = vunpack.c.l.b16 %v76
  %v701 = vunpack.c.h.b16 %v76
  %v702 = vunpack.c.l.b16 %v77
  %v703 = vunpack.c.h.b16 %v77
  %v704 = vunpack.c.l.b16 %v78
  %v705 = vunpack.c.h.b16 %v78
  %v706 = vunpack.c.l.b16 %v79
  %v707 = vunpack.c.h.b16 %v79
  %v708 = vunpack.c.l.b16 %v80
  %v709 = vunpack.c.h.b16 %v80
  %v710 = vunpack.c.l.b16 %v81
  %v711 = vunpack.c.h.b16 %v81
  %v712 = vunpack.c.l.b16 %v82
  %v713 = vunpack.c.h.b16 %v82
  %v714 = vunpack.c.l.b16 %v83
  %v715 = vunpack.c.h.b16 %v83
  %v716 = vunpack.c.l.b16 %v84
  %v717 = vunpack.c.h.b16 %v84
  %v718 = vunpack.c.l.b16 %v85
  %v719 = vunpack.c.h.b16 %v85
  %v720 = vunpack.c.l.b16 %v86
  %v721 = vunpack.c.h.b16 %v86
  %v722 = vunpack.c.l.b16 %v87
  %v723 = vunpack.c.h.b16 %v87
  %v724 = vunpack.c.l.b16 %v88
  %v725 = vunpack.c.h.b16 %v88
  %v726 = vunpack.c.l.b16 %v89
  %v727 = vunpack.c.h.b16 %v89
  %v728 = vunpack.c.l.b16 %v90
  %v729 = vunpack.c.h.b16 %v90
  %v730 = vunpack.c.l.b16 %v91
  %v731 = vunpack.c.h.b16 %v91
  %v732 = vunpack.c.l.b16 %v92
  %v733 = vunpack.c.h.b16 %v92
  %v734 = vunpack.c.l.b16 %v93
  %v735 = vunpack.c.h.b16 %v93
  %v736 = vunpack.c.l.b16 %v94
  %v737 = vunpack.c.h.b16 %v94
  %v738 = vunpack.c.l.b16 %v95
  %v739 = vunpack.c.h.b16 %v95
  %v740 = vunpack.c.l.b16 %v96
  %v741 = vunpack.c.h.b16 %v96
  %v742 = vunpack.c.l.b16 %v97
  %v743 = vunpack.c.h.b16 %v97
  %v744 = vunpack.c.l.b16 %v98
  %v745 = vunpack.c.h.b16 %v98
  %v746 = vunpack.c.l.b16 %v99
  %v747 = vunpack.c.h.b16 %v99
  %v748 = vunpack.c.l.b16 %v100
  %v749 = vunpack.c.h.b16 %v100
  %v750 = vunpack.c.l.b16 %v101
  %v751 = vunpack.c.h.b16 %v101
  %v752 = vunpack.c.l.b16 %v102
  %v753 = vunpack.c.h.b16 %v102
  %v754 = vunpack.c.l.b16 %v103
  %v755 = vunpack.c.h.b16 %v103
  %v756 = vunpack.c.l.b16 %v104
  %v757 = vunpack.c.h.b16 %v104
  %v758 = vunpack.c.l.b16 %v105
  %v759 = vunpack.c.h.b16 %v105
  %v760 = vunpack.c.l.b16 %v106
  %v761 = vunpack.c.h.b16 %v106
  %v762 = vunpack.c.l.b16 %v107
  %v763 = vunpack.c.h.b16 %v107
  %v764 = vunpack.c.l.b16 %v108
  %v765 = vunpack.c.h.b16 %v108
  %v766 = vunpack.c.l.b16 %v109
  %v767 = vunpack.c.h.b16 %v109
  %v768 = vunpack.c.l.b16 %v110
  %v769 = vunpack.c.h.b16 %v110
  %v770 = vunpack.c.l.b16 %v111
  %v771 = vunpack.c.h.b16 %v111
  %v772 = vunpack.c.l.b16 %v112
  %v773 = vunpack.c.h.b16 %v112
  %v774 = vunpack.c.l.b16 %v113
  %v775 = vunpack.c.h.b16 %v113
  %v776 = vunpack.c.l.b16 %v114
  %v777 = vunpack.c.h.b16 %v114
  %v778 = vunpack.c.l.b16 %v115
  %v779 = vunpack.c.h.b16 %v115
  %v780 = vunpack.c.l.b16 %v116
  %v781 = vunpack.c.h.b16 %v116
  %v782 = vunpack.c.l.b16 %v117
  %v783 = vunpack.c.h.b16 %v117
  %v784 = vunpack.c.l.b16 %v118
  %v785 = vunpack.c.h.b16 %v118
  %v786 = vunpack.c.l.b16 %v119
  %v787 = vunpack.c.h.b16 %v119
  %v788 = vunpack.c.l.b16 %v120
  %v789 = vunpack.c.h.b16 %v120
  %v790 = vunpack.c.l.b16 %v121
  %v791 = vunpack.c.h.b16 %v121
  %v792 = vunpack.c.l.b16 %v122
  %v793 = vunpack.c.h.b16 %v122
  %v794 = vunpack.c.l.b16 %v123
  %v795 = vunpack.c.h.b16 %v123
  %v796 = vunpack.c.l.b16 %v124
  %v797 = vunpack.c.h.b16 %v124
  %v798 = vunpack.c.l.b16 %v125
  %v799 = vunpack.c.h.b16 %v125
  %v800 = vunpack.c.l.b16 %v126
  %v801 = vunpack.c.h.b16 %v126
  %v802 = vunpack.c.l.b16 %v127
  %v803 = vunpack.c.h.b16 %v127
  %v804 = vunpack.c.l.b16 %v128
  %v805 = vunpack.c.h.b16 %v128
  %v806 = vunpack.c.l.b16 %v129
  %v807 = vunpack.c.h.b16 %v129
  %v808 = vunpack.c.l.b16 %v130
  %v809 = vunpack.c.h.b16 %v130
  %v810 = vunpack.c.l.b16 %v131
  %v811 = vunpack.c.h.b16 %v131
  %v812 = vunpack.c.l.b16 %v132
  %v813 = vunpack.c.h.b16 %v132
  %v814 = vunpack.c.l.b16 %v133
  %v815 = vunpack.c.h.b16 %v133
  %v816 = vunpack.c.l.b16 %v134
  %v817 = vunpack.c.h.b16 %v134
  %v818 = vunpack.c.l.b16 %v135
  %v819 = vunpack.c.h.b16 %v135
  %v820 = vunpack.c.l.b16 %v136
  %v821 = vunpack.c.h.b16 %v136
  %v822 = vunpack.c.l.b16 %v137
  %v823 = vunpack.c.h.b16 %v137
  %v824 = vunpack.c.l.b16 %v138
  %v825 = vunpack.c.h.b16 %v138
  %v826 = vunpack.c.l.b16 %v139
  %v827 = vunpack.c.h.b16 %v139
  %v828 = vunpack.c.l.b16 %v140
  %v829 = vunpack.c.h.b16 %v140
  %v830 = vunpack.c.l.b16 %v141
  %v831 = vunpack.c.h.b16 %v141
  %v832 = vunpack.c.l.b16 %v142
  %v833 = vunpack.c.h.b16 %v142
  %v834 = vunpack.c.l.b16 %v143
  %v835 = vunpack.c.h.b16 %v143
  %v836 = vunpack.c.l.b16 %v144
  %v837 = vunpack.c.h.b16 %v144
  %v838 = vunpack.c.l.b16 %v145
  %v839 = vunpack.c.h.b16 %v145
  %v840 = vunpack.c.l.b16 %v146
  %v841 = vunpack.c.h.b16 %v146
  %v842 = vunpack.c.l.b16 %v147
  %v843 = vunpack.c.h.b16 %v147
  %v844 = vunpack.c.l.b16 %v148
  %v845 = vunpack.c.h.b16 %v148
  %v846 = vunpack.c.l.b16 %v149
  %v847 = vunpack.c.h.b16 %v149
  %v848 = vunpack.c.l.b16 %v150
  %v849 = vunpack.c.h.b16 %v150
  %v850 = vunpack.c.l.b16 %v151
  %v851 = vunpack.c.h.b16 %v151
  %v852 = vunpack.c.l.b16 %v152
  %v853 = vunpack.c.h.b16 %v152
  %v854 = vunpack.c.l.b16 %v153
  %v855 = vunpack.c.h.b16 %v153
  %v856 = vunpack.c.l.b16 %v154
  %v857 = vunpack.c.h.b16 %v154
  %v858 = vunpack.c.l.b16 %v155
  %v859 = vunpack.c.h.b16 %v155
  %v860 = vunpack.c.l.b16 %v156
  %v861 = vunpack.c.h.b16 %v156
  %v862 = vunpack.c.l.b16 %v157
  %v863 = vunpack.c.h.b16 %v157
  %v864 = vunpack.c.l.b16 %v158
  %v865 = vunpack.c.h.b16 %v158
  %v866 = vunpack.c.l.b16 %v159
  %v867 = vunpack.c.h.b16 %v159
  %v868 = vunpack.c.l.b16 %v160
  %v869 = vunpack.c.h.b16 %v160
  %v870 = vunpack.c.l.b16 %v161
  %v871 = vunpack.c.h.b16 %v161
  %v872 = vunpack.c.l.b16 %v162
  %v873 = vunpack.c.h.b16 %v162
  %v874 = vunpack.c.l.b16 %v163
  %v875 = vunpack.c.h.b16 %v163
  %v876 = vunpack.c.l.b16 %v164
  %v877 = vunpack.c.h.b16 %v164
  %v878 = vunpack.c.l.b16 %v165
  %v879 = vunpack.c.h.b16 %v165
  %v880 = vunpack.c.l.b16 %v166
  %v881 = vunpack.c.h.b16 %v166
  %v882 = vunpack.c.l.b16 %v167
  %v883 = vunpack.c.h.b16 %v167
  %v884 = vunpack.c.l.b16 %v168
  %v885 = vunpack.c.h.b16 %v168
  %v886 = vunpack.c.l.b16 %v169
  %v887 = vunpack.c.h.b16 %v169
  %v888 = vunpack.c.l.b16 %v170
  %v889 = vunpack.c.h.b16 %v170
  %v890 = vunpack.c.l.b16 %v171
  %v891 = vunpack.c.h.b16 %v171
  %v892 = vunpack.c.l.b16 %v172
  %v893 = vunpack.c.h.b16 %v172
  %v894 = vunpack.c.l.b16 %v173
  %v895 = vunpack.c.h.b16 %v173
  %v896 = vunpack.c.l.b16 %v174
  %v897 = vunpack.c.h.b16 %v174
  %v898 = vunpack.c.l.b16 %v175
  %v899 = vunpack.c.h.b16 %v175
  %v900 = vunpack.c.l.b16 %v176
  %v901 = vunpack.c.h.b16 %v176
  %v902 = vunpack.c.l.b16 %v177
  %v903 = vunpack.c.h.b16 %v177
  %v904 = vunpack.c.l.b16 %v178
  %v905 = vunpack.c.h.b16 %v178
  %v906 = vunpack.c.l.b16 %v179
  %v907 = vunpack.c.h.b16 %v179
  %v908 = vunpack.c.l.b16 %v180
  %v909 = vunpack.c.h.b16 %v180
  %v910 = vunpack.c.l.b16 %v181
  %v911 = vunpack.c.h.b16 %v181
  %v912 = vunpack.c.l.b16 %v182
  %v913 = vunpack.c.h.b16 %v182
  %v914 = vunpack.c.l.b16 %v183
  %v915 = vunpack.c.h.b16 %v183
  %v916 = vunpack.c.l.b16 %v184
  %v917 = vunpack.c.h.b16 %v184
  %v918 = vunpack.c.l.b16 %v185
  %v919 = vunpack.c.h.b16 %v185
  %v920 = vunpack.c.l.b16 %v186
  %v921 = vunpack.c.h.b16 %v186
  %v922 = vunpack.c.l.b16 %v187
  %v923 = vunpack.c.h.b16 %v187
  %v924 = vunpack.c.l.b16 %v188
  %v925 = vunpack.c.h.b16 %v188
  %v926 = vunpack.c.l.b16 %v189
  %v927 = vunpack.c.h.b16 %v189
  %v928 = vunpack.c.l.b16 %v190
  %v929 = vunpack.c.h.b16 %v190
  %v930 = vunpack.c.l.b16 %v191
  %v931 = vunpack.c.h.b16 %v191
  %v932 = vunpack.c.l.b16 %v192
  %v933 = vunpack.c.h.b16 %v192
  %v934 = vunpack.c.l.b16 %v193
  %v935 = vunpack.c.h.b16 %v193
  %v936 = vunpack.c.l.b16 %v194
  %v937 = vunpack.c.h.b16 %v194
  %v938 = vunpack.c.l.b16 %v195
  %v939 = vunpack.c.h.b16 %v195
  %v940 = vunpack.c.l.b16 %v196
  %v941 = vunpack.c.h.b16 %v196
  %v942 = vunpack.c.l.b16 %v197
  %v943 = vunpack.c.h.b16 %v197
  %v944 = vunpack.c.l.b16 %v198
  %v945 = vunpack.c.h.b16 %v198
  %v946 = vunpack.c.l.b16 %v199
  %v947 = vunpack.c.h.b16 %v199
  %v948 = vunpack.c.l.b16 %v200
  %v949 = vunpack.c.h.b16 %v200
  %v950 = vunpack.c.l.b16 %v201
  %v951 = vunpack.c.h.b16 %v201
  %v952 = vunpack.c.l.b16 %v202
  %v953 = vunpack.c.h.b16 %v202
  %v954 = vunpack.c.l.b16 %v203
  %v955 = vunpack.c.h.b16 %v203
  %v956 = vunpack.c.l.b16 %v204
  %v957 = vunpack.c.h.b16 %v204
  %v958 = vunpack.c.l.b16 %v205
  %v959 = vunpack.c.h.b16 %v205
  %v960 = vunpack.c.l.b16 %v206
  %v961 = vunpack.c.h.b16 %v206
  %v962 = vunpack.c.l.b16 %v207
  %v963 = vunpack.c.h.b16 %v207
  %v964 = vunpack.c.l.b16 %v208
  %v965 = vunpack.c.h.b16 %v208
  %v966 = vunpack.c.l.b16 %v209
  %v967 = vunpack.c.h.b16 %v209
  %v968 = vunpack.c.l.b16 %v210
  %v969 = vunpack.c.h.b16 %v210
  %v970 = vunpack.c.l.b16 %v211
  %v971 = vunpack.c.h.b16 %v211
  %v972 = vunpack.c.l.b16 %v212
  %v973 = vunpack.c.h.b16 %v212
  %v974 = vunpack.c.l.b16 %v213
  %v975 = vunpack.c.h.b16 %v213
  %v976 = vunpack.c.l.b16 %v214
  %v977 = vunpack.c.h.b16 %v214
  %v978 = vunpack.c.l.b16 %v215
  %v979 = vunpack.c.h.b16 %v215
  %v980 = vunpack.c.l.b16 %v216
  %v981 = vunpack.c.h.b16 %v216
  %v982 = vunpack.c.l.b16 %v217
  %v983 = vunpack.c.h.b16 %v217
  %v984 = vunpack.c.l.b16 %v218
  %v985 = vunpack.c.h.b16 %v218
  %v986 = vunpack.c.l.b16 %v219
  %v987 = vunpack.c.h.b16 %v219
  %v988 = vunpack.c.l.b16 %v220
  %v989 = vunpack.c.h.b16 %v220
  %v990 = vunpack.c.l.b16 %v221
  %v991 = vunpack.c.h.b16 %v221
  %v992 = vunpack.c.l.b16 %v222
  %v993 = vunpack.c.h.b16 %v222
  %v994 = vunpack.c.l.b16 %v223
  %v995 = vunpack.c.h.b16 %v223
  %v996 = vunpack.c.l.b16 %v224
  %v997 = vunpack.c.h.b16 %v224
  %v998 = vunpack.c.l.b16 %v225
  %v999 = vunpack.c.h.b16 %v225
  %v1000 = vunpack.c.l.b16 %v226
  %v1001 = vunpack.c.h.b16 %v226
  %v1002 = vunpack.c.l.b16 %v227
  %v1003 = vunpack.c.h.b16 %v227
  %v1004 = vunpack.c.l.b16 %v228
  %v1005 = vunpack.c.h.b16 %v228
  %v1006 = vunpack.c.l.b16 %v229
  %v1007 = vunpack.c.h.b16 %v229
  %v1008 = vunpack.c.l.b16 %v230
  %v1009 = vunpack.c.h.b16 %v230
  %v1010 = vunpack.c.l.b16 %v231
  %v1011 = vunpack.c.h.b16 %v231
  %v1012 = vunpack.c.l.b16 %v232
  %v1013 = vunpack.c.h.b16 %v232
  %v1014 = vunpack.c.l.b16 %v233
  %v1015 = vunpack.c.h.b16 %v233
  %v1016 = vunpack.c.l.b16 %v234
  %v1017 = vunpack.c.h.b16 %v234
  %v1018 = vunpack.c.l.b16 %v235
  %v1019 = vunpack.c.h.b16 %v235
  %v1020 = vunpack.c.l.b16 %v236
  %v1021 = vunpack.c.h.b16 %v236
  %v1022 = vunpack.c.l.b16 %v237
  %v1023 = vunpack.c.h.b16 %v237
  %v1024 = vunpack.c.l.b16 %v238
  %v1025 = vunpack.c.h.b16 %v238
  %v1026 = vunpack.c.l.b16 %v239
  %v1027 = vunpack.c.h.b16 %v239
  %v1028 = vunpack.c.l.b16 %v240
  %v1029 = vunpack.c.h.b16 %v240
  %v1030 = vunpack.c.l.b16 %v241
  %v1031 = vunpack.c.h.b16 %v241
  %v1032 = vunpack.c.l.b16 %v242
  %v1033 = vunpack.c.h.b16 %v242
  %v1034 = vunpack.c.l.b16 %v243
  %v1035 = vunpack.c.h.b16 %v243
  %v1036 = vunpack.c.l.b16 %v244
  %v1037 = vunpack.c.h.b16 %v244
  %v1038 = vunpack.c.l.b16 %v245
  %v1039 = vunpack.c.h.b16 %v245
  %v1040 = vunpack.c.l.b16 %v246
  %v1041 = vunpack.c.h.b16 %v246
  %v1042 = vunpack.c.l.b16 %v247
  %v1043 = vunpack.c.h.b16 %v247
  %v1044 = vunpack.c.l.b16 %v248
  %v1045 = vunpack.c.h.b16 %v248
  %v1046 = vunpack.c.l.b16 %v249
  %v1047 = vunpack.c.h.b16 %v249
  %v1048 = vunpack.c.l.b16 %v250
  %v1049 = vunpack.c.h.b16 %v250
  %v1050 = vunpack.c.l.b16 %v251
  %v1051 = vunpack.c.h.b16 %v251
  %v1052 = vunpack.c.l.b16 %v252
  %v1053 = vunpack.c.h.b16 %v252
  %v1054 = vunpack.c.l.b16 %v253
  %v1055 = vunpack.c.h.b16 %v253
  %v1056 = vunpack.c.l.b16 %v254
  %v1057 = vunpack.c.h.b16 %v254
  %v1058 = vunpack.c.l.b16 %v255
  %v1059 = vunpack.c.h.b16 %v255
  %v1060 = vunpack.c.l.b16 %v256
  %v1061 = vunpack.c.h.b16 %v256
  %v1062 = vunpack.c.l.b16 %v257
  %v1063 = vunpack.c.h.b16 %v257
  %v1064 = vunpack.c.l.b16 %v258
  %v1065 = vunpack.c.h.b16 %v258
  %v1066 = vunpack.c.l.b16 %v259
  %v1067 = vunpack.c.h.b16 %v259
  %v1068 = vunpack.c.l.b16 %v260
  %v1069 = vunpack.c.h.b16 %v260
  %v1070 = vunpack.c.l.b16 %v261
  %v1071 = vunpack.c.h.b16 %v261
  %v1072 = vunpack.c.l.b16 %v262
  %v1073 = vunpack.c.h.b16 %v262
  %v1074 = vunpack.c.l.b16 %v263
  %v1075 = vunpack.c.h.b16 %v263
  %v1076 = vunpack.c.l.b16 %v264
  %v1077 = vunpack.c.h.b16 %v264
  %v1078 = vunpack.c.l.b16 %v265
  %v1079 = vunpack.c.h.b16 %v265
  %v1080 = vunpack.c.l.b16 %v266
  %v1081 = vunpack.c.h.b16 %v266
  %v1082 = vunpack.c.l.b16 %v267
  %v1083 = vunpack.c.h.b16 %v267
  %v1084 = vunpack.c.l.b16 %v268
  %v1085 = vunpack.c.h.b16 %v268
  %v1086 = vunpack.c.l.b16 %v269
  %v1087 = vunpack.c.h.b16 %v269
  %v1088 = vunpack.c.l.b16 %v270
  %v1089 = vunpack.c.h.b16 %v270
  %v1090 = vunpack.c.l.b16 %v271
  %v1091 = vunpack.c.h.b16 %v271
  %v1092 = vunpack.c.l.b16 %v272
  %v1093 = vunpack.c.h.b16 %v272
  %v1094 = vunpack.c.l.b16 %v273
  %v1095 = vunpack.c.h.b16 %v273
  %v1096 = vpack.c.b16 %v588, %v584
  %v1097 = vpack.c.b16 %v589, %v585
  %v1098 = vpack.c.b16 %v590, %v586
  %v1099 = vpack.c.b16 %v591, %v587
  %v1100 = vpack.c.b16 %v596, %v592
  %v1101 = vpack.c.b16 %v597, %v593
  %v1102 = vpack.c.b16 %v598, %v594
  %v1103 = vpack.c.b16 %v599, %v595
  %v1104 = vpack.c.b16 %v604, %v600
  %v1105 = vpack.c.b16 %v605, %v601
  %v1106 = vpack.c.b16 %v606, %v602
  %v1107 = vpack.c.b16 %v607, %v603
  %v1108 = vpack.c.b16 %v612, %v608
  %v1109 = vpack.c.b16 %v613, %v609
  %v1110 = vpack.c.b16 %v614, %v610
  %v1111 = vpack.c.b16 %v615, %v611
  %v1112 = vpack.c.b16 %v620, %v616
  %v1113 = vpack.c.b16 %v621, %v617
  %v1114 = vpack.c.b16 %v622, %v618
  %v1115 = vpack.c.b16 %v623, %v619
  %v1116 = vpack.c.b16 %v628, %v624
  %v1117 = vpack.c.b16 %v629, %v625
  %v1118 = vpack.c.b16 %v630, %v626
  %v1119 = vpack.c.b16 %v631, %v627
  %v1120 = vpack.c.b16 %v636, %v632
  %v1121 = vpack.c.b16 %v637, %v633
  %v1122 = vpack.c.b16 %v638, %v634
  %v1123 = vpack.c.b16 %v639, %v635
  %v1124 = vpack.c.b16 %v644, %v640
  %v1125 = vpack.c.b16 %v645, %v641
  %v1126 = vpack.c.b16 %v646, %v642
  %v1127 = vpack.c.b16 %v647, %v643
  %v1128 = vpack.c.b16 %v652, %v648
  %v1129 = vpack.c.b16 %v653, %v649
  %v1130 = vpack.c.b16 %v654, %v650
  %v1131 = vpack.c.b16 %v655, %v651
  %v1132 = vpack.c.b16 %v660, %v656
  %v1133 = vpack.c.b16 %v661, %v657
  %v1134 = vpack.c.b16 %v662, %v658
  %v1135 = vpack.c.b16 %v663, %v659
  %v1136 = vpack.c.b16 %v668, %v664
  %v1137 = vpack.c.b16 %v669, %v665
  %v1138 = vpack.c.b16 %v670, %v666
  %v1139 = vpack.c.b16 %v671, %v667
  %v1140 = vpack.c.b16 %v676, %v672
  %v1141 = vpack.c.b16 %v677, %v673
  %v1142 = vpack.c.b16 %v678, %v674
  %v1143 = vpack.c.b16 %v679, %v675
  %v1144 = vpack.c.b16 %v684, %v680
  %v1145 = vpack.c.b16 %v685, %v681
  %v1146 = vpack.c.b16 %v686, %v682
  %v1147 = vpack.c.b16 %v687, %v683
  %v1148 = vpack.c.b16 %v692, %v688
  %v1149 = vpack.c.b16 %v693, %v689
  %v1150 = vpack.c.b16 %v694, %v690
  %v1151 = vpack.c.b16 %v695, %v691
  %v1152 = vpack.c.b16 %v700, %v696
  %v1153 = vpack.c.b16 %v701, %v697
  %v1154 = vpack.c.b16 %v702, %v698
  %v1155 = vpack.c.b16 %v703, %v699
  %v1156 = vpack.c.b16 %v708, %v704
  %v1157 = vpack.c.b16 %v709, %v705
  %v1158 = vpack.c.b16 %v710, %v706
  %v1159 = vpack.c.b16 %v711, %v707
  %v1160 = vpack.c.b16 %v716, %v712
  %v1161 = vpack.c.b16 %v717, %v713
  %v1162 = vpack.c.b16 %v718, %v714
  %v1163 = vpack.c.b16 %v719, %v715
  %v1164 = vpack.c.b16 %v724, %v720
  %v1165 = vpack.c.b16 %v725, %v721
  %v1166 = vpack.c.b16 %v726, %v722
  %v1167 = vpack.c.b16 %v727, %v723
  %v1168 = vpack.c.b16 %v732, %v728
  %v1169 = vpack.c.b16 %v733, %v729
  %v1170 = vpack.c.b16 %v734, %v730
  %v1171 = vpack.c.b16 %v735, %v731
  %v1172 = vpack.c.b16 %v740, %v736
  %v1173 = vpack.c.b16 %v741, %v737
  %v1174 = vpack.c.b16 %v742, %v738
  %v1175 = vpack.c.b16 %v743, %v739
  %v1176 = vpack.c.b16 %v748, %v744
  %v1177 = vpack.c.b16 %v749, %v745
  %v1178 = vpack.c.b16 %v750, %v746
  %v1179 = vpack.c.b16 %v751, %v747
  %v1180 = vpack.c.b16 %v756, %v752
  %v1181 = vpack.c.b16 %v757, %v753
  %v1182 = vpack.c.b16 %v758, %v754
  %v1183 = vpack.c.b16 %v759, %v755
  %v1184 = vpack.c.b16 %v764, %v760
  %v1185 = vpack.c.b16 %v765, %v761
  %v1186 = vpack.c.b16 %v766, %v762
  %v1187 = vpack.c.b16 %v767, %v763
  %v1188 = vpack.c.b16 %v772, %v768
  %v1189 = vpack.c.b16 %v773, %v769
  %v1190 = vpack.c.b16 %v774, %v770
  %v1191 = vpack.c.b16 %v775, %v771
  %v1192 = vpack.c.b16 %v780, %v776
  %v1193 = vpack.c.b16 %v781, %v777
  %v1194 = vpack.c.b16 %v782, %v778
  %v1195 = vpack.c.b16 %v783, %v779
  %v1196 = vpack.c.b16 %v788, %v784
  %v1197 = vpack.c.b16 %v789, %v785
  %v1198 = vpack.c.b16 %v790, %v786
  %v1199 = vpack.c.b16 %v791, %v787
  %v1200 = vpack.c.b16 %v796, %v792
  %v1201 = vpack.c.b16 %v797, %v793
  %v1202 = vpack.c.b16 %v798, %v794
  %v1203 = vpack.c.b16 %v799, %v795
  %v1204 = vpack.c.b16 %v804, %v800
  %v1205 = vpack.c.b16 %v805, %v801
  %v1206 = vpack.c.b16 %v806, %v802
  %v1207 = vpack.c.b16 %v807, %v803
  %v1208 = vpack.c.b16 %v812, %v808
  %v1209 = vpack.c.b16 %v813, %v809
  %v1210 = vpack.c.b16 %v814, %v810
  %v1211 = vpack.c.b16 %v815, %v811
  %v1212 = vpack.c.b16 %v820, %v816
  %v1213 = vpack.c.b16 %v821, %v817
  %v1214 = vpack.c.b16 %v822, %v818
  %v1215 = vpack.c.b16 %v823, %v819
  %v1216 = vpack.c.b16 %v828, %v824
  %v1217 = vpack.c.b16 %v829, %v825
  %v1218 = vpack.c.b16 %v830, %v826
  %v1219 = vpack.c.b16 %v831, %v827
  %v1220 = vpack.c.b16 %v836, %v832
  %v1221 = vpack.c.b16 %v837, %v833
  %v1222 = vpack.c.b16 %v838, %v834
  %v1223 = vpack.c.b16 %v839, %v835
  %v1224 = vpack.c.b16 %v844, %v840
  %v1225 = vpack.c.b16 %v845, %v841
  %v1226 = vpack.c.b16 %v846, %v842
  %v1227 = vpack.c.b16 %v847, %v843
  %v1228 = vpack.c.b16 %v852, %v848
  %v1229 = vpack.c.b16 %v853, %v849
  %v1230 = vpack.c.b16 %v854, %v850
  %v1231 = vpack.c.b16 %v855, %v851
  %v1232 = vpack.c.b16 %v860, %v856
  %v1233 = vpack.c.b16 %v861, %v857
  %v1234 = vpack.c.b16 %v862, %v858
  %v1235 = vpack.c.b16 %v863, %v859
  %v1236 = vpack.c.b16 %v868, %v864
  %v1237 = vpack.c.b16 %v869, %v865
  %v1238 = vpack.c.b16 %v870, %v866
  %v1239 = vpack.c.b16 %v871, %v867
  %v1240 = vpack.c.b16 %v876, %v872
  %v1241 = vpack.c.b16 %v877, %v873
  %v1242 = vpack.c.b16 %v878, %v874
  %v1243 = vpack.c.b16 %v879, %v875
  %v1244 = vpack.c.b16 %v884, %v880
  %v1245 = vpack.c.b16 %v885, %v881
  %v1246 = vpack.c.b16 %v886, %v882
  %v1247 = vpack.c.b16 %v887, %v883
  %v1248 = vpack.c.b16 %v892, %v888
  %v1249 = vpack.c.b16 %v893, %v889
  %v1250 = vpack.c.b16 %v894, %v890
  %v1251 = vpack.c.b16 %v895, %v891
  %v1252 = vpack.c.b16 %v900, %v896
  %v1253 = vpack.c.b16 %v901, %v897
  %v1254 = vpack.c.b16 %v902, %v898
  %v1255 = vpack.c.b16 %v903, %v899
  %v1256 = vpack.c.b16 %v908, %v904
  %v1257 = vpack.c.b16 %v909, %v905
  %v1258 = vpack.c.b16 %v910, %v906
  %v1259 = vpack.c.b16 %v911, %v907
  %v1260 = vpack.c.b16 %v916, %v912
  %v1261 = vpack.c.b16 %v917, %v913
  %v1262 = vpack.c.b16 %v918, %v914
  %v1263 = vpack.c.b16 %v919, %v915
  %v1264 = vpack.c.b16 %v924, %v920
  %v1265 = vpack.c.b16 %v925, %v921
  %v1266 = vpack.c.b16 %v926, %v922
  %v1267 = vpack.c.b16 %v927, %v923
  %v1268 = vpack.c.b16 %v932, %v928
  %v1269 = vpack.c.b16 %v933, %v929
  %v1270 = vpack.c.b16 %v934, %v930
  %v1271 = vpack.c.b16 %v935, %v931
  %v1272 = vpack.c.b16 %v940, %v936
  %v1273 = vpack.c.b16 %v941, %v937
  %v1274 = vpack.c.b16 %v942, %v938
  %v1275 = vpack.c.b16 %v943, %v939
  %v1276 = vpack.c.b16 %v948, %v944
  %v1277 = vpack.c.b16 %v949, %v945
  %v1278 = vpack.c.b16 %v950, %v946
  %v1279 = vpack.c.b16 %v951, %v947
  %v1280 = vpack.c.b16 %v956, %v952
  %v1281 = vpack.c.b16 %v957, %v953
  %v1282 = vpack.c.b16 %v958, %v954
  %v1283 = vpack.c.b16 %v959, %v955
  %v1284 = vpack.c.b16 %v964, %v960
  %v1285 = vpack.c.b16 %v965, %v961
  %v1286 = vpack.c.b16 %v966, %v962
  %v1287 = vpack.c.b16 %v967, %v963
  %v1288 = vpack.c.b16 %v972, %v968
  %v1289 = vpack.c.b16 %v973, %v969
  %v1290 = vpack.c.b16 %v974, %v970
  %v1291 = vpack.c.b16 %v975, %v971
  %v1292 = vpack.c.b16 %v980, %v976
  %v1293 = vpack.c.b16 %v981, %v977
  %v1294 = vpack.c.b16 %v982, %v978
  %v1295 = vpack.c.b16 %v983, %v979
  %v1296 = vpack.c.b16 %v988, %v984
  %v1297 = vpack.c.b16 %v989, %v985
  %v1298 = vpack.c.b16 %v990, %v986
  %v1299 = vpack.c.b16 %v991, %v987
  %v1300 = vpack.c.b16 %v996, %v992
  %v1301 = vpack.c.b16 %v997, %v993
  %v1302 = vpack.c.b16 %v998, %v994
  %v1303 = vpack.c.b16 %v999, %v995
  %v1304 = vpack.c.b16 %v1004, %v1000
  %v1305 = vpack.c.b16 %v1005, %v1001
  %v1306 = vpack.c.b16 %v1006, %v1002
  %v1307 = vpack.c.b16 %v1007, %v1003
  %v1308 = vpack.c.b16 %v1012, %v1008
  %v1309 = vpack.c.b16 %v1013, %v1009
  %v1310 = vpack.c.b16 %v1014, %v1010
  %v1311 = vpack.c.b16 %v1015, %v1011
  %v1312 = vpack.c.b16 %v1020, %v1016
  %v1313 = vpack.c.b16 %v1021, %v1017
  %v1314 = vpack.c.b16 %v1022, %v1018
  %v1315 = vpack.c.b16 %v1023, %v1019
  %v1316 = vpack.c.b16 %v1028, %v1024
  %v1317 = vpack.c.b16 %v1029, %v1025
  %v1318 = vpack.c.b16 %v1030, %v1026
  %v1319 = vpack.c.b16 %v1031, %v1027
  %v1320 = vpack.c.b16 %v1036, %v1032
  %v1321 = vpack.c.b16 %v1037, %v1033
  %v1322 = vpack.c.b16 %v1038, %v1034
  %v1323 = vpack.c.b16 %v1039, %v1035
  %v1324 = vpack.c.b16 %v1044, %v1040
  %v1325 = vpack.c.b16 %v1045, %v1041
  %v1326 = vpack.c.b16 %v1046, %v1042
  %v1327 = vpack.c.b16 %v1047, %v1043
  %v1328 = vpack.c.b16 %v1052, %v1048
  %v1329 = vpack.c.b16 %v1053, %v1049
  %v1330 = vpack.c.b16 %v1054, %v1050
  %v1331 = vpack.c.b16 %v1055, %v1051
  %v1332 = vpack.c.b16 %v1060, %v1056
  %v1333 = vpack.c.b16 %v1061, %v1057
  %v1334 = vpack.c.b16 %v1062, %v1058
  %v1335 = vpack.c.b16 %v1063, %v1059
  %v1336 = vpack.c.b16 %v1068, %v1064
  %v1337 = vpack.c.b16 %v1069, %v1065
  %v1338 = vpack.c.b16 %v1070, %v1066
  %v1339 = vpack.c.b16 %v1071, %v1067
  %v1340 = vpack.c.b16 %v1076, %v1072
  %v1341 = vpack.c.b16 %v1077, %v1073
  %v1342 = vpack.c.b16 %v1078, %v1074
  %v1343 = vpack.c.b16 %v1079, %v1075
  %v1344 = vpack.c.b16 %v1084, %v1080
  %v1345 = vpack.c.b16 %v1085, %v1081
  %v1346 = vpack.c.b16 %v1086, %v1082
  %v1347 = vpack.c.b16 %v1087, %v1083
  %v1348 = vpack.c.b16 %v1092, %v1088
  %v1349 = vpack.c.b16 %v1093, %v1089
  %v1350 = vpack.c.b16 %v1094, %v1090
  %v1351 = vpack.c.b16 %v1095, %v1091
  %v1598 = vunpack.c.l.b16 %v274
  %v1599 = vunpack.c.l.b16 %v275
  %v1600 = vunpack.c.l.b16 %v276
  %v1601 = vunpack.c.l.b16 %v277
  %v1602 = vunpack.c.l.b16 %v278
  %v1603 = vunpack.c.l.b16 %v279
  %v1604 = vunpack.c.l.b16 %v280
  %v1605 = vunpack.c.l.b16 %v281
  %v1606 = vunpack.c.l.b16 %v282
  %v1607 = vunpack.c.l.b16 %v283
  %v1608 = vunpack.c.l.b16 %v284
  %v1609 = vunpack.c.l.b16 %v285
  %v1610 = vunpack.c.l.b16 %v286
  %v1611 = vunpack.c.l.b16 %v287
  %v1612 = vunpack.c.l.b16 %v288
  %v1613 = vunpack.c.l.b16 %v289
  %v1614 = vunpack.c.l.b16 %v290
  %v1615 = vunpack.c.l.b16 %v291
  %v1616 = vunpack.c.l.b16 %v292
  %v1617 = vunpack.c.l.b16 %v293
  %v1618 = vunpack.c.l.b16 %v294
  %v1619 = vunpack.c.l.b16 %v295
  %v1620 = vunpack.c.l.b16 %v296
  %v1621 = vunpack.c.l.b16 %v297
  %v1622 = vunpack.c.l.b16 %v298
  %v1623 = vunpack.c.l.b16 %v299
  %v1624 = vunpack.c.l.b16 %v300
  %v1625 = vunpack.c.l.b16 %v301
  %v1626 = vunpack.c.l.b16 %v302
  %v1627 = vunpack.c.l.b16 %v303
  %v1628 = vunpack.c.l.b16 %v304
  %v1629 = vunpack.c.l.b16 %v305
  %v1630 = vunpack.c.l.b16 %v306
  %v1631 = vunpack.c.l.b16 %v307
  %v1632 = vunpack.c.l.b16 %v308
  %v1633 = vunpack.c.l.b16 %v309
  %v1634 = vunpack.c.l.b16 %v310
  %v1635 = vunpack.c.l.b16 %v311
  %v1636 = vunpack.c.l.b16 %v312
  %v1637 = vunpack.c.l.b16 %v313
  %v1638 = vunpack.c.l.b16 %v314
  %v1639 = vunpack.c.l.b16 %v315
  %v1640 = vunpack.c.l.b16 %v316
  %v1641 = vunpack.c.l.b16 %v317
  %v1642 = vunpack.c.l.b16 %v318
  %v1643 = vunpack.c.l.b16 %v319
  %v1644 = vunpack.c.l.b16 %v320
  %v1645 = vunpack.c.l.b16 %v321
  %v1646 = vunpack.c.l.b16 %v322
  %v1647 = vunpack.c.l.b16 %v323
  %v1648 = vunpack.c.l.b16 %v324
  %v1649 = vunpack.c.l.b16 %v325
  %v1650 = vunpack.c.l.b16 %v326
  %v1651 = vunpack.c.l.b16 %v327
  %v1652 = vpack.c.b16 %v1599, %v1598
  %v1653 = vpack.c.b16 %v1601, %v1600
  %v1654 = vpack.c.b16 %v1603, %v1602
  %v1655 = vpack.c.b16 %v1605, %v1604
  %v1656 = vpack.c.b16 %v1607, %v1606
  %v1657 = vpack.c.b16 %v1609, %v1608
  %v1658 = vpack.c.b16 %v1611, %v1610
  %v1659 = vpack.c.b16 %v1613, %v1612
  %v1660 = vpack.c.b16 %v1615, %v1614
  %v1661 = vpack.c.b16 %v1617, %v1616
  %v1662 = vpack.c.b16 %v1619, %v1618
  %v1663 = vpack.c.b16 %v1621, %v1620
  %v1664 = vpack.c.b16 %v1623, %v1622
  %v1665 = vpack.c.b16 %v1625, %v1624
  %v1666 = vpack.c.b16 %v1627, %v1626
  %v1667 = vpack.c.b16 %v1629, %v1628
  %v1668 = vpack.c.b16 %v1631, %v1630
  %v1669 = vpack.c.b16 %v1633, %v1632
  %v1670 = vpack.c.b16 %v1635, %v1634
  %v1671 = vpack.c.b16 %v1637, %v1636
  %v1672 = vpack.c.b16 %v1639, %v1638
  %v1673 = vpack.c.b16 %v1641, %v1640
  %v1674 = vpack.c.b16 %v1643, %v1642
  %v1675 = vpack.c.b16 %v1645, %v1644
  %v1676 = vpack.c.b16 %v1647, %v1646
  %v1677 = vpack.c.b16 %v1649, %v1648
  %v1678 = vpack.c.b16 %v1651, %v1650
  %vm1706 = vcmask 392192
  %v1708 = vsel %vm1706, %v1099, 0
  %v1711 = vsel %vm1706, %v1103, 0
  %v1714 = vsel %vm1706, %v1107, 0
  %v1717 = vsel %vm1706, %v1111, 0
  %v1720 = vsel %vm1706, %v1115, 0
  %v1723 = vsel %vm1706, %v1119, 0
  %v1726 = vsel %vm1706, %v1123, 0
  %v1729 = vsel %vm1706, %v1127, 0
  %v1732 = vsel %vm1706, %v1131, 0
  %v1735 = vsel %vm1706, %v1135, 0
  %v1738 = vsel %vm1706, %v1139, 0
  %v1741 = vsel %vm1706, %v1143, 0
  %v1744 = vsel %vm1706, %v1147, 0
  %v1747 = vsel %vm1706, %v1151, 0
  %v1750 = vsel %vm1706, %v1155, 0
  %v1753 = vsel %vm1706, %v1159, 0
  %v1756 = vsel %vm1706, %v1163, 0
  %v1759 = vsel %vm1706, %v1167, 0
  %v1762 = vsel %vm1706, %v1171, 0
  %v1765 = vsel %vm1706, %v1175, 0
  %v1768 = vsel %vm1706, %v1179, 0
  %v1771 = vsel %vm1706, %v1183, 0
  %v1774 = vsel %vm1706, %v1187, 0
  %v1777 = vsel %vm1706, %v1191, 0
  %v1780 = vsel %vm1706, %v1195, 0
  %v1783 = vsel %vm1706, %v1199, 0
  %v1786 = vsel %vm1706, %v1203, 0
  %v1789 = vsel %vm1706, %v1207, 0
  %v1792 = vsel %vm1706, %v1211, 0
  %v1795 = vsel %vm1706, %v1215, 0
  %v1798 = vsel %vm1706, %v1219, 0
  %v1801 = vsel %vm1706, %v1223, 0
  %v1804 = vsel %vm1706, %v1227, 0
  %v1807 = vsel %vm1706, %v1231, 0
  %v1810 = vsel %vm1706, %v1235, 0
  %v1813 = vsel %vm1706, %v1239, 0
  %v1816 = vsel %vm1706, %v1243, 0
  %v1819 = vsel %vm1706, %v1247, 0
  %v1822 = vsel %vm1706, %v1251, 0
  %v1825 = vsel %vm1706, %v1255, 0
  %v1828 = vsel %vm1706, %v1259, 0
  %v1831 = vsel %vm1706, %v1263, 0
  %v1834 = vsel %vm1706, %v1267, 0
  %v1837 = vsel %vm1706, %v1271, 0
  %v1840 = vsel %vm1706, %v1275, 0
  %v1843 = vsel %vm1706, %v1279, 0
  %v1846 = vsel %vm1706, %v1283, 0
  %v1849 = vsel %vm1706, %v1287, 0
  %v1852 = vsel %vm1706, %v1291, 0
  %v1855 = vsel %vm1706, %v1295, 0
  %v1858 = vsel %vm1706, %v1299, 0
  %v1861 = vsel %vm1706, %v1303, 0
  %v1864 = vsel %vm1706, %v1307, 0
  %v1867 = vsel %vm1706, %v1311, 0
  %v1870 = vsel %vm1706, %v1315, 0
  %v1873 = vsel %vm1706, %v1319, 0
  %v1876 = vsel %vm1706, %v1323, 0
  %v1879 = vsel %vm1706, %v1327, 0
  %v1882 = vsel %vm1706, %v1331, 0
  %v1885 = vsel %vm1706, %v1335, 0
  %v1888 = vsel %vm1706, %v1339, 0
  %v1891 = vsel %vm1706, %v1343, 0
  %v1894 = vsel %vm1706, %v1347, 0
  %v1897 = vsel %vm1706, %v1351, 0
  %1899 = vmatprep.subr.bf16.mxu0 0
  %1900 = vmatpush1.bf16.msra.mxu0 %v1659
  %1901 = vmatprep.subr.bf16.mxu0 0
  %1902 = vmatpush1.bf16.msra.mxu0 %v1658
  %1903 = vmatprep.subr.bf16.mxu0 0
  %1904 = vmatpush1.bf16.msra.mxu0 %v1657
  %1905 = vmatprep.subr.bf16.mxu0 0
  %1906 = vmatpush1.bf16.msra.mxu0 %v1656
  %1907 = vmatprep.subr.bf16.mxu0 0
  %1908 = vmatpush1.bf16.msra.mxu0 %v1655
  %1909 = vmatprep.subr.bf16.mxu0 0
  %1910 = vmatpush1.bf16.msra.mxu0 %v1654
  %1911 = vmatprep.subr.bf16.mxu0 0
  %1912 = vmatpush1.bf16.msra.mxu0 %v1653
  %1913 = vmatprep.subr.bf16.mxu0 0
  %1914 = vmatpush1.bf16.msra.mxu0 %v1652
  %1915 = vmatprep.subr.bf16.mxu0 0
  %1916 = vmatpush2.bf16.msra.mxu0 %v1667
  %1917 = vmatprep.subr.bf16.mxu0 0
  %1918 = vmatpush2.bf16.msra.mxu0 %v1666
  %1919 = vmatprep.subr.bf16.mxu0 0
  %1920 = vmatpush2.bf16.msra.mxu0 %v1665
  %1921 = vmatprep.subr.bf16.mxu0 0
  %1922 = vmatpush2.bf16.msra.mxu0 %v1664
  %1923 = vmatprep.subr.bf16.mxu0 0
  %1924 = vmatpush2.bf16.msra.mxu0 %v1663
  %1925 = vmatprep.subr.bf16.mxu0 0
  %1926 = vmatpush2.bf16.msra.mxu0 %v1662
  %1927 = vmatprep.subr.bf16.mxu0 0
  %1928 = vmatpush2.bf16.msra.mxu0 %v1661
  %1929 = vmatprep.subr.bf16.mxu0 0
  %1930 = vmatpush2.bf16.msra.mxu0 %v1660
  %1931 = vmatprep.mubr.bf16.mxu0 %v1097
  %1932 = vmatmul.mubr.bf16.gmra.mxu0 %v1096
  %v1933 = vpop.f32.mrf.mxu0
  %v1934 = vadd.f32 0.0, %v1933
  %v1935 = vpop.f32.mrf.mxu0
  %v1936 = vpop.f32.mrf.mxu0
  %v1937 = vadd.f32 0.0, %v1936
  %v1938 = vpop.f32.mrf.mxu0
  %1939 = vmatprep.mubr.bf16.mxu0 %v1101
  %1940 = vmatmul.mubr.bf16.gmra.mxu0 %v1100
  %v1941 = vpop.f32.mrf.mxu0
  %v1942 = vadd.f32 0.0, %v1941
  %v1943 = vpop.f32.mrf.mxu0
  %v1944 = vpop.f32.mrf.mxu0
  %v1945 = vadd.f32 0.0, %v1944
  %v1946 = vpop.f32.mrf.mxu0
  %1947 = vmatprep.mubr.bf16.mxu0 %v1105
  %1948 = vmatmul.mubr.bf16.gmra.mxu0 %v1104
  %v1949 = vpop.f32.mrf.mxu0
  %v1950 = vadd.f32 0.0, %v1949
  %v1951 = vpop.f32.mrf.mxu0
  %v1952 = vpop.f32.mrf.mxu0
  %v1953 = vadd.f32 0.0, %v1952
  %v1954 = vpop.f32.mrf.mxu0
  %1955 = vmatprep.mubr.bf16.mxu0 %v1109
  %1956 = vmatmul.mubr.bf16.gmra.mxu0 %v1108
  %v1957 = vpop.f32.mrf.mxu0
  %v1958 = vadd.f32 0.0, %v1957
  %v1959 = vpop.f32.mrf.mxu0
  %v1960 = vpop.f32.mrf.mxu0
  %v1961 = vadd.f32 0.0, %v1960
  %v1962 = vpop.f32.mrf.mxu0
  %1963 = vmatprep.mubr.bf16.mxu0 %v1113
  %1964 = vmatmul.mubr.bf16.gmra.mxu0 %v1112
  %v1965 = vpop.f32.mrf.mxu0
  %v1966 = vadd.f32 0.0, %v1965
  %v1967 = vpop.f32.mrf.mxu0
  %v1968 = vpop.f32.mrf.mxu0
  %v1969 = vadd.f32 0.0, %v1968
  %v1970 = vpop.f32.mrf.mxu0
  %1971 = vmatprep.mubr.bf16.mxu0 %v1117
  %1972 = vmatmul.mubr.bf16.gmra.mxu0 %v1116
  %v1973 = vpop.f32.mrf.mxu0
  %v1974 = vadd.f32 0.0, %v1973
  %v1975 = vpop.f32.mrf.mxu0
  %v1976 = vpop.f32.mrf.mxu0
  %v1977 = vadd.f32 0.0, %v1976
  %v1978 = vpop.f32.mrf.mxu0
  %1979 = vmatprep.mubr.bf16.mxu0 %v1121
  %1980 = vmatmul.mubr.bf16.gmra.mxu0 %v1120
  %v1981 = vpop.f32.mrf.mxu0
  %v1982 = vadd.f32 0.0, %v1981
  %v1983 = vpop.f32.mrf.mxu0
  %v1984 = vpop.f32.mrf.mxu0
  %v1985 = vadd.f32 0.0, %v1984
  %v1986 = vpop.f32.mrf.mxu0
  %1987 = vmatprep.mubr.bf16.mxu0 %v1125
  %1988 = vmatmul.mubr.bf16.gmra.mxu0 %v1124
  %v1989 = vpop.f32.mrf.mxu0
  %v1990 = vadd.f32 0.0, %v1989
  %v1991 = vpop.f32.mrf.mxu0
  %v1992 = vpop.f32.mrf.mxu0
  %v1993 = vadd.f32 0.0, %v1992
  %v1994 = vpop.f32.mrf.mxu0
  %1995 = vmatprep.mubr.bf16.mxu0 %v1129
  %1996 = vmatmul.mubr.bf16.gmra.mxu0 %v1128
  %v1997 = vpop.f32.mrf.mxu0
  %v1998 = vadd.f32 0.0, %v1997
  %v1999 = vpop.f32.mrf.mxu0
  %v2000 = vpop.f32.mrf.mxu0
  %v2001 = vadd.f32 0.0, %v2000
  %v2002 = vpop.f32.mrf.mxu0
  %2003 = vmatprep.mubr.bf16.mxu0 %v1133
  %2004 = vmatmul.mubr.bf16.gmra.mxu0 %v1132
  %v2005 = vpop.f32.mrf.mxu0
  %v2006 = vadd.f32 0.0, %v2005
  %v2007 = vpop.f32.mrf.mxu0
  %v2008 = vpop.f32.mrf.mxu0
  %v2009 = vadd.f32 0.0, %v2008
  %v2010 = vpop.f32.mrf.mxu0
  %2011 = vmatprep.mubr.bf16.mxu0 %v1137
  %2012 = vmatmul.mubr.bf16.gmra.mxu0 %v1136
  %v2013 = vpop.f32.mrf.mxu0
  %v2014 = vadd.f32 0.0, %v2013
  %v2015 = vpop.f32.mrf.mxu0
  %v2016 = vpop.f32.mrf.mxu0
  %v2017 = vadd.f32 0.0, %v2016
  %v2018 = vpop.f32.mrf.mxu0
  %2019 = vmatprep.mubr.bf16.mxu0 %v1141
  %2020 = vmatmul.mubr.bf16.gmra.mxu0 %v1140
  %v2021 = vpop.f32.mrf.mxu0
  %v2022 = vadd.f32 0.0, %v2021
  %v2023 = vpop.f32.mrf.mxu0
  %v2024 = vpop.f32.mrf.mxu0
  %v2025 = vadd.f32 0.0, %v2024
  %v2026 = vpop.f32.mrf.mxu0
  %2027 = vmatprep.mubr.bf16.mxu0 %v1145
  %2028 = vmatmul.mubr.bf16.gmra.mxu0 %v1144
  %v2029 = vpop.f32.mrf.mxu0
  %v2030 = vadd.f32 0.0, %v2029
  %v2031 = vpop.f32.mrf.mxu0
  %v2032 = vpop.f32.mrf.mxu0
  %v2033 = vadd.f32 0.0, %v2032
  %v2034 = vpop.f32.mrf.mxu0
  %2035 = vmatprep.mubr.bf16.mxu0 %v1149
  %2036 = vmatmul.mubr.bf16.gmra.mxu0 %v1148
  %v2037 = vpop.f32.mrf.mxu0
  %v2038 = vadd.f32 0.0, %v2037
  %v2039 = vpop.f32.mrf.mxu0
  %v2040 = vpop.f32.mrf.mxu0
  %v2041 = vadd.f32 0.0, %v2040
  %v2042 = vpop.f32.mrf.mxu0
  %2043 = vmatprep.mubr.bf16.mxu0 %v1153
  %2044 = vmatmul.mubr.bf16.gmra.mxu0 %v1152
  %v2045 = vpop.f32.mrf.mxu0
  %v2046 = vadd.f32 0.0, %v2045
  %v2047 = vpop.f32.mrf.mxu0
  %v2048 = vpop.f32.mrf.mxu0
  %v2049 = vadd.f32 0.0, %v2048
  %v2050 = vpop.f32.mrf.mxu0
  %2051 = vmatprep.mubr.bf16.mxu0 %v1157
  %2052 = vmatmul.mubr.bf16.gmra.mxu0 %v1156
  %v2053 = vpop.f32.mrf.mxu0
  %v2054 = vadd.f32 0.0, %v2053
  %v2055 = vpop.f32.mrf.mxu0
  %v2056 = vpop.f32.mrf.mxu0
  %v2057 = vadd.f32 0.0, %v2056
  %v2058 = vpop.f32.mrf.mxu0
  %2059 = vmatprep.mubr.bf16.mxu0 %v1161
  %2060 = vmatmul.mubr.bf16.gmra.mxu0 %v1160
  %v2061 = vpop.f32.mrf.mxu0
  %v2062 = vadd.f32 0.0, %v2061
  %v2063 = vpop.f32.mrf.mxu0
  %v2064 = vpop.f32.mrf.mxu0
  %v2065 = vadd.f32 0.0, %v2064
  %v2066 = vpop.f32.mrf.mxu0
  %2067 = vmatprep.mubr.bf16.mxu0 %v1165
  %2068 = vmatmul.mubr.bf16.gmra.mxu0 %v1164
  %v2069 = vpop.f32.mrf.mxu0
  %v2070 = vadd.f32 0.0, %v2069
  %v2071 = vpop.f32.mrf.mxu0
  %v2072 = vpop.f32.mrf.mxu0
  %v2073 = vadd.f32 0.0, %v2072
  %v2074 = vpop.f32.mrf.mxu0
  %2075 = vmatprep.mubr.bf16.mxu0 %v1169
  %2076 = vmatmul.mubr.bf16.gmra.mxu0 %v1168
  %v2077 = vpop.f32.mrf.mxu0
  %v2078 = vadd.f32 0.0, %v2077
  %v2079 = vpop.f32.mrf.mxu0
  %v2080 = vpop.f32.mrf.mxu0
  %v2081 = vadd.f32 0.0, %v2080
  %v2082 = vpop.f32.mrf.mxu0
  %2083 = vmatprep.mubr.bf16.mxu0 %v1173
  %2084 = vmatmul.mubr.bf16.gmra.mxu0 %v1172
  %v2085 = vpop.f32.mrf.mxu0
  %v2086 = vadd.f32 0.0, %v2085
  %v2087 = vpop.f32.mrf.mxu0
  %v2088 = vpop.f32.mrf.mxu0
  %v2089 = vadd.f32 0.0, %v2088
  %v2090 = vpop.f32.mrf.mxu0
  %2091 = vmatprep.mubr.bf16.mxu0 %v1177
  %2092 = vmatmul.mubr.bf16.gmra.mxu0 %v1176
  %v2093 = vpop.f32.mrf.mxu0
  %v2094 = vadd.f32 0.0, %v2093
  %v2095 = vpop.f32.mrf.mxu0
  %v2096 = vpop.f32.mrf.mxu0
  %v2097 = vadd.f32 0.0, %v2096
  %v2098 = vpop.f32.mrf.mxu0
  %2099 = vmatprep.mubr.bf16.mxu0 %v1181
  %2100 = vmatmul.mubr.bf16.gmra.mxu0 %v1180
  %v2101 = vpop.f32.mrf.mxu0
  %v2102 = vadd.f32 0.0, %v2101
  %v2103 = vpop.f32.mrf.mxu0
  %v2104 = vpop.f32.mrf.mxu0
  %v2105 = vadd.f32 0.0, %v2104
  %v2106 = vpop.f32.mrf.mxu0
  %2107 = vmatprep.mubr.bf16.mxu0 %v1185
  %2108 = vmatmul.mubr.bf16.gmra.mxu0 %v1184
  %v2109 = vpop.f32.mrf.mxu0
  %v2110 = vadd.f32 0.0, %v2109
  %v2111 = vpop.f32.mrf.mxu0
  %v2112 = vpop.f32.mrf.mxu0
  %v2113 = vadd.f32 0.0, %v2112
  %v2114 = vpop.f32.mrf.mxu0
  %2115 = vmatprep.mubr.bf16.mxu0 %v1189
  %2116 = vmatmul.mubr.bf16.gmra.mxu0 %v1188
  %v2117 = vpop.f32.mrf.mxu0
  %v2118 = vadd.f32 0.0, %v2117
  %v2119 = vpop.f32.mrf.mxu0
  %v2120 = vpop.f32.mrf.mxu0
  %v2121 = vadd.f32 0.0, %v2120
  %v2122 = vpop.f32.mrf.mxu0
  %2123 = vmatprep.mubr.bf16.mxu0 %v1193
  %2124 = vmatmul.mubr.bf16.gmra.mxu0 %v1192
  %v2125 = vpop.f32.mrf.mxu0
  %v2126 = vadd.f32 0.0, %v2125
  %v2127 = vpop.f32.mrf.mxu0
  %v2128 = vpop.f32.mrf.mxu0
  %v2129 = vadd.f32 0.0, %v2128
  %v2130 = vpop.f32.mrf.mxu0
  %2131 = vmatprep.mubr.bf16.mxu0 %v1197
  %2132 = vmatmul.mubr.bf16.gmra.mxu0 %v1196
  %v2133 = vpop.f32.mrf.mxu0
  %v2134 = vadd.f32 0.0, %v2133
  %v2135 = vpop.f32.mrf.mxu0
  %v2136 = vpop.f32.mrf.mxu0
  %v2137 = vadd.f32 0.0, %v2136
  %v2138 = vpop.f32.mrf.mxu0
  %2139 = vmatprep.mubr.bf16.mxu0 %v1201
  %2140 = vmatmul.mubr.bf16.gmra.mxu0 %v1200
  %v2141 = vpop.f32.mrf.mxu0
  %v2142 = vadd.f32 0.0, %v2141
  %v2143 = vpop.f32.mrf.mxu0
  %v2144 = vpop.f32.mrf.mxu0
  %v2145 = vadd.f32 0.0, %v2144
  %v2146 = vpop.f32.mrf.mxu0
  %2147 = vmatprep.mubr.bf16.mxu0 %v1205
  %2148 = vmatmul.mubr.bf16.gmra.mxu0 %v1204
  %v2149 = vpop.f32.mrf.mxu0
  %v2150 = vadd.f32 0.0, %v2149
  %v2151 = vpop.f32.mrf.mxu0
  %v2152 = vpop.f32.mrf.mxu0
  %v2153 = vadd.f32 0.0, %v2152
  %v2154 = vpop.f32.mrf.mxu0
  %2155 = vmatprep.mubr.bf16.mxu0 %v1209
  %2156 = vmatmul.mubr.bf16.gmra.mxu0 %v1208
  %v2157 = vpop.f32.mrf.mxu0
  %v2158 = vadd.f32 0.0, %v2157
  %v2159 = vpop.f32.mrf.mxu0
  %v2160 = vpop.f32.mrf.mxu0
  %v2161 = vadd.f32 0.0, %v2160
  %v2162 = vpop.f32.mrf.mxu0
  %2163 = vmatprep.mubr.bf16.mxu0 %v1213
  %2164 = vmatmul.mubr.bf16.gmra.mxu0 %v1212
  %v2165 = vpop.f32.mrf.mxu0
  %v2166 = vadd.f32 0.0, %v2165
  %v2167 = vpop.f32.mrf.mxu0
  %v2168 = vpop.f32.mrf.mxu0
  %v2169 = vadd.f32 0.0, %v2168
  %v2170 = vpop.f32.mrf.mxu0
  %2171 = vmatprep.mubr.bf16.mxu0 %v1217
  %2172 = vmatmul.mubr.bf16.gmra.mxu0 %v1216
  %v2173 = vpop.f32.mrf.mxu0
  %v2174 = vadd.f32 0.0, %v2173
  %v2175 = vpop.f32.mrf.mxu0
  %v2176 = vpop.f32.mrf.mxu0
  %v2177 = vadd.f32 0.0, %v2176
  %v2178 = vpop.f32.mrf.mxu0
  %2179 = vmatprep.mubr.bf16.mxu0 %v1221
  %2180 = vmatmul.mubr.bf16.gmra.mxu0 %v1220
  %v2181 = vpop.f32.mrf.mxu0
  %v2182 = vadd.f32 0.0, %v2181
  %v2183 = vpop.f32.mrf.mxu0
  %v2184 = vpop.f32.mrf.mxu0
  %v2185 = vadd.f32 0.0, %v2184
  %v2186 = vpop.f32.mrf.mxu0
  %2187 = vmatprep.mubr.bf16.mxu0 %v1225
  %2188 = vmatmul.mubr.bf16.gmra.mxu0 %v1224
  %v2189 = vpop.f32.mrf.mxu0
  %v2190 = vadd.f32 0.0, %v2189
  %v2191 = vpop.f32.mrf.mxu0
  %v2192 = vpop.f32.mrf.mxu0
  %v2193 = vadd.f32 0.0, %v2192
  %v2194 = vpop.f32.mrf.mxu0
  %2195 = vmatprep.mubr.bf16.mxu0 %v1229
  %2196 = vmatmul.mubr.bf16.gmra.mxu0 %v1228
  %v2197 = vpop.f32.mrf.mxu0
  %v2198 = vadd.f32 0.0, %v2197
  %v2199 = vpop.f32.mrf.mxu0
  %v2200 = vpop.f32.mrf.mxu0
  %v2201 = vadd.f32 0.0, %v2200
  %v2202 = vpop.f32.mrf.mxu0
  %2203 = vmatprep.mubr.bf16.mxu0 %v1233
  %2204 = vmatmul.mubr.bf16.gmra.mxu0 %v1232
  %v2205 = vpop.f32.mrf.mxu0
  %v2206 = vadd.f32 0.0, %v2205
  %v2207 = vpop.f32.mrf.mxu0
  %v2208 = vpop.f32.mrf.mxu0
  %v2209 = vadd.f32 0.0, %v2208
  %v2210 = vpop.f32.mrf.mxu0
  %2211 = vmatprep.mubr.bf16.mxu0 %v1237
  %2212 = vmatmul.mubr.bf16.gmra.mxu0 %v1236
  %v2213 = vpop.f32.mrf.mxu0
  %v2214 = vadd.f32 0.0, %v2213
  %v2215 = vpop.f32.mrf.mxu0
  %v2216 = vpop.f32.mrf.mxu0
  %v2217 = vadd.f32 0.0, %v2216
  %v2218 = vpop.f32.mrf.mxu0
  %2219 = vmatprep.mubr.bf16.mxu0 %v1241
  %2220 = vmatmul.mubr.bf16.gmra.mxu0 %v1240
  %v2221 = vpop.f32.mrf.mxu0
  %v2222 = vadd.f32 0.0, %v2221
  %v2223 = vpop.f32.mrf.mxu0
  %v2224 = vpop.f32.mrf.mxu0
  %v2225 = vadd.f32 0.0, %v2224
  %v2226 = vpop.f32.mrf.mxu0
  %2227 = vmatprep.mubr.bf16.mxu0 %v1245
  %2228 = vmatmul.mubr.bf16.gmra.mxu0 %v1244
  %v2229 = vpop.f32.mrf.mxu0
  %v2230 = vadd.f32 0.0, %v2229
  %v2231 = vpop.f32.mrf.mxu0
  %v2232 = vpop.f32.mrf.mxu0
  %v2233 = vadd.f32 0.0, %v2232
  %v2234 = vpop.f32.mrf.mxu0
  %2235 = vmatprep.mubr.bf16.mxu0 %v1249
  %2236 = vmatmul.mubr.bf16.gmra.mxu0 %v1248
  %v2237 = vpop.f32.mrf.mxu0
  %v2238 = vadd.f32 0.0, %v2237
  %v2239 = vpop.f32.mrf.mxu0
  %v2240 = vpop.f32.mrf.mxu0
  %v2241 = vadd.f32 0.0, %v2240
  %v2242 = vpop.f32.mrf.mxu0
  %2243 = vmatprep.mubr.bf16.mxu0 %v1253
  %2244 = vmatmul.mubr.bf16.gmra.mxu0 %v1252
  %v2245 = vpop.f32.mrf.mxu0
  %v2246 = vadd.f32 0.0, %v2245
  %v2247 = vpop.f32.mrf.mxu0
  %v2248 = vpop.f32.mrf.mxu0
  %v2249 = vadd.f32 0.0, %v2248
  %v2250 = vpop.f32.mrf.mxu0
  %2251 = vmatprep.mubr.bf16.mxu0 %v1257
  %2252 = vmatmul.mubr.bf16.gmra.mxu0 %v1256
  %v2253 = vpop.f32.mrf.mxu0
  %v2254 = vadd.f32 0.0, %v2253
  %v2255 = vpop.f32.mrf.mxu0
  %v2256 = vpop.f32.mrf.mxu0
  %v2257 = vadd.f32 0.0, %v2256
  %v2258 = vpop.f32.mrf.mxu0
  %2259 = vmatprep.mubr.bf16.mxu0 %v1261
  %2260 = vmatmul.mubr.bf16.gmra.mxu0 %v1260
  %v2261 = vpop.f32.mrf.mxu0
  %v2262 = vadd.f32 0.0, %v2261
  %v2263 = vpop.f32.mrf.mxu0
  %v2264 = vpop.f32.mrf.mxu0
  %v2265 = vadd.f32 0.0, %v2264
  %v2266 = vpop.f32.mrf.mxu0
  %2267 = vmatprep.mubr.bf16.mxu0 %v1265
  %2268 = vmatmul.mubr.bf16.gmra.mxu0 %v1264
  %v2269 = vpop.f32.mrf.mxu0
  %v2270 = vadd.f32 0.0, %v2269
  %v2271 = vpop.f32.mrf.mxu0
  %v2272 = vpop.f32.mrf.mxu0
  %v2273 = vadd.f32 0.0, %v2272
  %v2274 = vpop.f32.mrf.mxu0
  %2275 = vmatprep.mubr.bf16.mxu0 %v1269
  %2276 = vmatmul.mubr.bf16.gmra.mxu0 %v1268
  %v2277 = vpop.f32.mrf.mxu0
  %v2278 = vadd.f32 0.0, %v2277
  %v2279 = vpop.f32.mrf.mxu0
  %v2280 = vpop.f32.mrf.mxu0
  %v2281 = vadd.f32 0.0, %v2280
  %v2282 = vpop.f32.mrf.mxu0
  %2283 = vmatprep.mubr.bf16.mxu0 %v1273
  %2284 = vmatmul.mubr.bf16.gmra.mxu0 %v1272
  %v2285 = vpop.f32.mrf.mxu0
  %v2286 = vadd.f32 0.0, %v2285
  %v2287 = vpop.f32.mrf.mxu0
  %v2288 = vpop.f32.mrf.mxu0
  %v2289 = vadd.f32 0.0, %v2288
  %v2290 = vpop.f32.mrf.mxu0
  %2291 = vmatprep.mubr.bf16.mxu0 %v1277
  %2292 = vmatmul.mubr.bf16.gmra.mxu0 %v1276
  %v2293 = vpop.f32.mrf.mxu0
  %v2294 = vadd.f32 0.0, %v2293
  %v2295 = vpop.f32.mrf.mxu0
  %v2296 = vpop.f32.mrf.mxu0
  %v2297 = vadd.f32 0.0, %v2296
  %v2298 = vpop.f32.mrf.mxu0
  %2299 = vmatprep.mubr.bf16.mxu0 %v1281
  %2300 = vmatmul.mubr.bf16.gmra.mxu0 %v1280
  %v2301 = vpop.f32.mrf.mxu0
  %v2302 = vadd.f32 0.0, %v2301
  %v2303 = vpop.f32.mrf.mxu0
  %v2304 = vpop.f32.mrf.mxu0
  %v2305 = vadd.f32 0.0, %v2304
  %v2306 = vpop.f32.mrf.mxu0
  %2307 = vmatprep.mubr.bf16.mxu0 %v1285
  %2308 = vmatmul.mubr.bf16.gmra.mxu0 %v1284
  %v2309 = vpop.f32.mrf.mxu0
  %v2310 = vadd.f32 0.0, %v2309
  %v2311 = vpop.f32.mrf.mxu0
  %v2312 = vpop.f32.mrf.mxu0
  %v2313 = vadd.f32 0.0, %v2312
  %v2314 = vpop.f32.mrf.mxu0
  %2315 = vmatprep.mubr.bf16.mxu0 %v1289
  %2316 = vmatmul.mubr.bf16.gmra.mxu0 %v1288
  %v2317 = vpop.f32.mrf.mxu0
  %v2318 = vadd.f32 0.0, %v2317
  %v2319 = vpop.f32.mrf.mxu0
  %v2320 = vpop.f32.mrf.mxu0
  %v2321 = vadd.f32 0.0, %v2320
  %v2322 = vpop.f32.mrf.mxu0
  %2323 = vmatprep.mubr.bf16.mxu0 %v1293
  %2324 = vmatmul.mubr.bf16.gmra.mxu0 %v1292
  %v2325 = vpop.f32.mrf.mxu0
  %v2326 = vadd.f32 0.0, %v2325
  %v2327 = vpop.f32.mrf.mxu0
  %v2328 = vpop.f32.mrf.mxu0
  %v2329 = vadd.f32 0.0, %v2328
  %v2330 = vpop.f32.mrf.mxu0
  %2331 = vmatprep.mubr.bf16.mxu0 %v1297
  %2332 = vmatmul.mubr.bf16.gmra.mxu0 %v1296
  %v2333 = vpop.f32.mrf.mxu0
  %v2334 = vadd.f32 0.0, %v2333
  %v2335 = vpop.f32.mrf.mxu0
  %v2336 = vpop.f32.mrf.mxu0
  %v2337 = vadd.f32 0.0, %v2336
  %v2338 = vpop.f32.mrf.mxu0
  %2339 = vmatprep.mubr.bf16.mxu0 %v1301
  %2340 = vmatmul.mubr.bf16.gmra.mxu0 %v1300
  %v2341 = vpop.f32.mrf.mxu0
  %v2342 = vadd.f32 0.0, %v2341
  %v2343 = vpop.f32.mrf.mxu0
  %v2344 = vpop.f32.mrf.mxu0
  %v2345 = vadd.f32 0.0, %v2344
  %v2346 = vpop.f32.mrf.mxu0
  %2347 = vmatprep.mubr.bf16.mxu0 %v1305
  %2348 = vmatmul.mubr.bf16.gmra.mxu0 %v1304
  %v2349 = vpop.f32.mrf.mxu0
  %v2350 = vadd.f32 0.0, %v2349
  %v2351 = vpop.f32.mrf.mxu0
  %v2352 = vpop.f32.mrf.mxu0
  %v2353 = vadd.f32 0.0, %v2352
  %v2354 = vpop.f32.mrf.mxu0
  %2355 = vmatprep.mubr.bf16.mxu0 %v1309
  %2356 = vmatmul.mubr.bf16.gmra.mxu0 %v1308
  %v2357 = vpop.f32.mrf.mxu0
  %v2358 = vadd.f32 0.0, %v2357
  %v2359 = vpop.f32.mrf.mxu0
  %v2360 = vpop.f32.mrf.mxu0
  %v2361 = vadd.f32 0.0, %v2360
  %v2362 = vpop.f32.mrf.mxu0
  %2363 = vmatprep.mubr.bf16.mxu0 %v1313
  %2364 = vmatmul.mubr.bf16.gmra.mxu0 %v1312
  %v2365 = vpop.f32.mrf.mxu0
  %v2366 = vadd.f32 0.0, %v2365
  %v2367 = vpop.f32.mrf.mxu0
  %v2368 = vpop.f32.mrf.mxu0
  %v2369 = vadd.f32 0.0, %v2368
  %v2370 = vpop.f32.mrf.mxu0
  %2371 = vmatprep.mubr.bf16.mxu0 %v1317
  %2372 = vmatmul.mubr.bf16.gmra.mxu0 %v1316
  %v2373 = vpop.f32.mrf.mxu0
  %v2374 = vadd.f32 0.0, %v2373
  %v2375 = vpop.f32.mrf.mxu0
  %v2376 = vpop.f32.mrf.mxu0
  %v2377 = vadd.f32 0.0, %v2376
  %v2378 = vpop.f32.mrf.mxu0
  %2379 = vmatprep.mubr.bf16.mxu0 %v1321
  %2380 = vmatmul.mubr.bf16.gmra.mxu0 %v1320
  %v2381 = vpop.f32.mrf.mxu0
  %v2382 = vadd.f32 0.0, %v2381
  %v2383 = vpop.f32.mrf.mxu0
  %v2384 = vpop.f32.mrf.mxu0
  %v2385 = vadd.f32 0.0, %v2384
  %v2386 = vpop.f32.mrf.mxu0
  %2387 = vmatprep.mubr.bf16.mxu0 %v1325
  %2388 = vmatmul.mubr.bf16.gmra.mxu0 %v1324
  %v2389 = vpop.f32.mrf.mxu0
  %v2390 = vadd.f32 0.0, %v2389
  %v2391 = vpop.f32.mrf.mxu0
  %v2392 = vpop.f32.mrf.mxu0
  %v2393 = vadd.f32 0.0, %v2392
  %v2394 = vpop.f32.mrf.mxu0
  %2395 = vmatprep.mubr.bf16.mxu0 %v1329
  %2396 = vmatmul.mubr.bf16.gmra.mxu0 %v1328
  %v2397 = vpop.f32.mrf.mxu0
  %v2398 = vadd.f32 0.0, %v2397
  %v2399 = vpop.f32.mrf.mxu0
  %v2400 = vpop.f32.mrf.mxu0
  %v2401 = vadd.f32 0.0, %v2400
  %v2402 = vpop.f32.mrf.mxu0
  %2403 = vmatprep.mubr.bf16.mxu0 %v1333
  %2404 = vmatmul.mubr.bf16.gmra.mxu0 %v1332
  %v2405 = vpop.f32.mrf.mxu0
  %v2406 = vadd.f32 0.0, %v2405
  %v2407 = vpop.f32.mrf.mxu0
  %v2408 = vpop.f32.mrf.mxu0
  %v2409 = vadd.f32 0.0, %v2408
  %v2410 = vpop.f32.mrf.mxu0
  %2411 = vmatprep.mubr.bf16.mxu0 %v1337
  %2412 = vmatmul.mubr.bf16.gmra.mxu0 %v1336
  %v2413 = vpop.f32.mrf.mxu0
  %v2414 = vadd.f32 0.0, %v2413
  %v2415 = vpop.f32.mrf.mxu0
  %v2416 = vpop.f32.mrf.mxu0
  %v2417 = vadd.f32 0.0, %v2416
  %v2418 = vpop.f32.mrf.mxu0
  %2419 = vmatprep.mubr.bf16.mxu0 %v1341
  %2420 = vmatmul.mubr.bf16.gmra.mxu0 %v1340
  %v2421 = vpop.f32.mrf.mxu0
  %v2422 = vadd.f32 0.0, %v2421
  %v2423 = vpop.f32.mrf.mxu0
  %v2424 = vpop.f32.mrf.mxu0
  %v2425 = vadd.f32 0.0, %v2424
  %v2426 = vpop.f32.mrf.mxu0
  %2427 = vmatprep.mubr.bf16.mxu0 %v1345
  %2428 = vmatmul.mubr.bf16.gmra.mxu0 %v1344
  %v2429 = vpop.f32.mrf.mxu0
  %v2430 = vadd.f32 0.0, %v2429
  %v2431 = vpop.f32.mrf.mxu0
  %v2432 = vpop.f32.mrf.mxu0
  %v2433 = vadd.f32 0.0, %v2432
  %v2434 = vpop.f32.mrf.mxu0
  %2435 = vmatprep.mubr.bf16.mxu0 %v1349
  %2436 = vmatmul.mubr.bf16.gmra.mxu0 %v1348
  %v2437 = vpop.f32.mrf.mxu0
  %v2438 = vadd.f32 0.0, %v2437
  %v2439 = vpop.f32.mrf.mxu0
  %v2440 = vpop.f32.mrf.mxu0
  %v2441 = vadd.f32 0.0, %v2440
  %v2442 = vpop.f32.mrf.mxu0
  %2443 = vdwg.mxu0
  %2444 = vmatprep.subr.bf16.mxu0 0
  %2445 = vmatpush1.bf16.msra.mxu0 %v1675
  %2446 = vmatprep.subr.bf16.mxu0 0
  %2447 = vmatpush1.bf16.msra.mxu0 %v1674
  %2448 = vmatprep.subr.bf16.mxu0 0
  %2449 = vmatpush1.bf16.msra.mxu0 %v1673
  %2450 = vmatprep.subr.bf16.mxu0 0
  %2451 = vmatpush1.bf16.msra.mxu0 %v1672
  %2452 = vmatprep.subr.bf16.mxu0 0
  %2453 = vmatpush1.bf16.msra.mxu0 %v1671
  %2454 = vmatprep.subr.bf16.mxu0 0
  %2455 = vmatpush1.bf16.msra.mxu0 %v1670
  %2456 = vmatprep.subr.bf16.mxu0 0
  %2457 = vmatpush1.bf16.msra.mxu0 %v1669
  %2458 = vmatprep.subr.bf16.mxu0 0
  %2459 = vmatpush1.bf16.msra.mxu0 %v1668
  %2460 = vmatprep.subr.bf16.mxu0 0
  %2461 = vmatpush2.bf16.msra.mxu0 0
  %2462 = vmatprep.subr.bf16.mxu0 0
  %2463 = vmatpush2.bf16.msra.mxu0 0
  %2464 = vmatprep.subr.bf16.mxu0 0
  %2465 = vmatpush2.bf16.msra.mxu0 0
  %2466 = vmatprep.subr.bf16.mxu0 0
  %2467 = vmatpush2.bf16.msra.mxu0 0
  %2468 = vmatprep.subr.bf16.mxu0 0
  %2469 = vmatpush2.bf16.msra.mxu0 0
  %2470 = vmatprep.subr.bf16.mxu0 0
  %2471 = vmatpush2.bf16.msra.mxu0 %v1678
  %2472 = vmatprep.subr.bf16.mxu0 0
  %2473 = vmatpush2.bf16.msra.mxu0 %v1677
  %2474 = vmatprep.subr.bf16.mxu0 0
  %2475 = vmatpush2.bf16.msra.mxu0 %v1676
  %2476 = vmatprep.mubr.bf16.mxu0 %v1708
  %2477 = vmatmul.mubr.bf16.gmra.mxu0 %v1098
  %v2478 = vpop.f32.mrf.mxu0
  %v2479 = vadd.f32 %v1934, %v2478
  %v2480 = vpop.f32.mrf.mxu0
  %v2481 = vpop.f32.mrf.mxu0
  %v2482 = vadd.f32 %v1937, %v2481
  %v2483 = vpop.f32.mrf.mxu0
  %2484 = vmatprep.mubr.bf16.mxu0 %v1711
  %2485 = vmatmul.mubr.bf16.gmra.mxu0 %v1102
  %v2486 = vpop.f32.mrf.mxu0
  %v2487 = vadd.f32 %v1942, %v2486
  %v2488 = vpop.f32.mrf.mxu0
  %v2489 = vpop.f32.mrf.mxu0
  %v2490 = vadd.f32 %v1945, %v2489
  %v2491 = vpop.f32.mrf.mxu0
  %2492 = vmatprep.mubr.bf16.mxu0 %v1714
  %2493 = vmatmul.mubr.bf16.gmra.mxu0 %v1106
  %v2494 = vpop.f32.mrf.mxu0
  %v2495 = vadd.f32 %v1950, %v2494
  %v2496 = vpop.f32.mrf.mxu0
  %v2497 = vpop.f32.mrf.mxu0
  %v2498 = vadd.f32 %v1953, %v2497
  %v2499 = vpop.f32.mrf.mxu0
  %2500 = vmatprep.mubr.bf16.mxu0 %v1717
  %2501 = vmatmul.mubr.bf16.gmra.mxu0 %v1110
  %v2502 = vpop.f32.mrf.mxu0
  %v2503 = vadd.f32 %v1958, %v2502
  %v2504 = vpop.f32.mrf.mxu0
  %v2505 = vpop.f32.mrf.mxu0
  %v2506 = vadd.f32 %v1961, %v2505
  %v2507 = vpop.f32.mrf.mxu0
  %2508 = vmatprep.mubr.bf16.mxu0 %v1720
  %2509 = vmatmul.mubr.bf16.gmra.mxu0 %v1114
  %v2510 = vpop.f32.mrf.mxu0
  %v2511 = vadd.f32 %v1966, %v2510
  %v2512 = vpop.f32.mrf.mxu0
  %v2513 = vpop.f32.mrf.mxu0
  %v2514 = vadd.f32 %v1969, %v2513
  %v2515 = vpop.f32.mrf.mxu0
  %2516 = vmatprep.mubr.bf16.mxu0 %v1723
  %2517 = vmatmul.mubr.bf16.gmra.mxu0 %v1118
  %v2518 = vpop.f32.mrf.mxu0
  %v2519 = vadd.f32 %v1974, %v2518
  %v2520 = vpop.f32.mrf.mxu0
  %v2521 = vpop.f32.mrf.mxu0
  %v2522 = vadd.f32 %v1977, %v2521
  %v2523 = vpop.f32.mrf.mxu0
  %2524 = vmatprep.mubr.bf16.mxu0 %v1726
  %2525 = vmatmul.mubr.bf16.gmra.mxu0 %v1122
  %v2526 = vpop.f32.mrf.mxu0
  %v2527 = vadd.f32 %v1982, %v2526
  %v2528 = vpop.f32.mrf.mxu0
  %v2529 = vpop.f32.mrf.mxu0
  %v2530 = vadd.f32 %v1985, %v2529
  %v2531 = vpop.f32.mrf.mxu0
  %2532 = vmatprep.mubr.bf16.mxu0 %v1729
  %2533 = vmatmul.mubr.bf16.gmra.mxu0 %v1126
  %v2534 = vpop.f32.mrf.mxu0
  %v2535 = vadd.f32 %v1990, %v2534
  %v2536 = vpop.f32.mrf.mxu0
  %v2537 = vpop.f32.mrf.mxu0
  %v2538 = vadd.f32 %v1993, %v2537
  %v2539 = vpop.f32.mrf.mxu0
  %2540 = vmatprep.mubr.bf16.mxu0 %v1732
  %2541 = vmatmul.mubr.bf16.gmra.mxu0 %v1130
  %v2542 = vpop.f32.mrf.mxu0
  %v2543 = vadd.f32 %v1998, %v2542
  %v2544 = vpop.f32.mrf.mxu0
  %v2545 = vpop.f32.mrf.mxu0
  %v2546 = vadd.f32 %v2001, %v2545
  %v2547 = vpop.f32.mrf.mxu0
  %2548 = vmatprep.mubr.bf16.mxu0 %v1735
  %2549 = vmatmul.mubr.bf16.gmra.mxu0 %v1134
  %v2550 = vpop.f32.mrf.mxu0
  %v2551 = vadd.f32 %v2006, %v2550
  %v2552 = vpop.f32.mrf.mxu0
  %v2553 = vpop.f32.mrf.mxu0
  %v2554 = vadd.f32 %v2009, %v2553
  %v2555 = vpop.f32.mrf.mxu0
  %2556 = vmatprep.mubr.bf16.mxu0 %v1738
  %2557 = vmatmul.mubr.bf16.gmra.mxu0 %v1138
  %v2558 = vpop.f32.mrf.mxu0
  %v2559 = vadd.f32 %v2014, %v2558
  %v2560 = vpop.f32.mrf.mxu0
  %v2561 = vpop.f32.mrf.mxu0
  %v2562 = vadd.f32 %v2017, %v2561
  %v2563 = vpop.f32.mrf.mxu0
  %2564 = vmatprep.mubr.bf16.mxu0 %v1741
  %2565 = vmatmul.mubr.bf16.gmra.mxu0 %v1142
  %v2566 = vpop.f32.mrf.mxu0
  %v2567 = vadd.f32 %v2022, %v2566
  %v2568 = vpop.f32.mrf.mxu0
  %v2569 = vpop.f32.mrf.mxu0
  %v2570 = vadd.f32 %v2025, %v2569
  %v2571 = vpop.f32.mrf.mxu0
  %2572 = vmatprep.mubr.bf16.mxu0 %v1744
  %2573 = vmatmul.mubr.bf16.gmra.mxu0 %v1146
  %v2574 = vpop.f32.mrf.mxu0
  %v2575 = vadd.f32 %v2030, %v2574
  %v2576 = vpop.f32.mrf.mxu0
  %v2577 = vpop.f32.mrf.mxu0
  %v2578 = vadd.f32 %v2033, %v2577
  %v2579 = vpop.f32.mrf.mxu0
  %2580 = vmatprep.mubr.bf16.mxu0 %v1747
  %2581 = vmatmul.mubr.bf16.gmra.mxu0 %v1150
  %v2582 = vpop.f32.mrf.mxu0
  %v2583 = vadd.f32 %v2038, %v2582
  %v2584 = vpop.f32.mrf.mxu0
  %v2585 = vpop.f32.mrf.mxu0
  %v2586 = vadd.f32 %v2041, %v2585
  %v2587 = vpop.f32.mrf.mxu0
  %2588 = vmatprep.mubr.bf16.mxu0 %v1750
  %2589 = vmatmul.mubr.bf16.gmra.mxu0 %v1154
  %v2590 = vpop.f32.mrf.mxu0
  %v2591 = vadd.f32 %v2046, %v2590
  %v2592 = vpop.f32.mrf.mxu0
  %v2593 = vpop.f32.mrf.mxu0
  %v2594 = vadd.f32 %v2049, %v2593
  %v2595 = vpop.f32.mrf.mxu0
  %2596 = vmatprep.mubr.bf16.mxu0 %v1753
  %2597 = vmatmul.mubr.bf16.gmra.mxu0 %v1158
  %v2598 = vpop.f32.mrf.mxu0
  %v2599 = vadd.f32 %v2054, %v2598
  %v2600 = vpop.f32.mrf.mxu0
  %v2601 = vpop.f32.mrf.mxu0
  %v2602 = vadd.f32 %v2057, %v2601
  %v2603 = vpop.f32.mrf.mxu0
  %2604 = vmatprep.mubr.bf16.mxu0 %v1756
  %2605 = vmatmul.mubr.bf16.gmra.mxu0 %v1162
  %v2606 = vpop.f32.mrf.mxu0
  %v2607 = vadd.f32 %v2062, %v2606
  %v2608 = vpop.f32.mrf.mxu0
  %v2609 = vpop.f32.mrf.mxu0
  %v2610 = vadd.f32 %v2065, %v2609
  %v2611 = vpop.f32.mrf.mxu0
  %2612 = vmatprep.mubr.bf16.mxu0 %v1759
  %2613 = vmatmul.mubr.bf16.gmra.mxu0 %v1166
  %v2614 = vpop.f32.mrf.mxu0
  %v2615 = vadd.f32 %v2070, %v2614
  %v2616 = vpop.f32.mrf.mxu0
  %v2617 = vpop.f32.mrf.mxu0
  %v2618 = vadd.f32 %v2073, %v2617
  %v2619 = vpop.f32.mrf.mxu0
  %2620 = vmatprep.mubr.bf16.mxu0 %v1762
  %2621 = vmatmul.mubr.bf16.gmra.mxu0 %v1170
  %v2622 = vpop.f32.mrf.mxu0
  %v2623 = vadd.f32 %v2078, %v2622
  %v2624 = vpop.f32.mrf.mxu0
  %v2625 = vpop.f32.mrf.mxu0
  %v2626 = vadd.f32 %v2081, %v2625
  %v2627 = vpop.f32.mrf.mxu0
  %2628 = vmatprep.mubr.bf16.mxu0 %v1765
  %2629 = vmatmul.mubr.bf16.gmra.mxu0 %v1174
  %v2630 = vpop.f32.mrf.mxu0
  %v2631 = vadd.f32 %v2086, %v2630
  %v2632 = vpop.f32.mrf.mxu0
  %v2633 = vpop.f32.mrf.mxu0
  %v2634 = vadd.f32 %v2089, %v2633
  %v2635 = vpop.f32.mrf.mxu0
  %2636 = vmatprep.mubr.bf16.mxu0 %v1768
  %2637 = vmatmul.mubr.bf16.gmra.mxu0 %v1178
  %v2638 = vpop.f32.mrf.mxu0
  %v2639 = vadd.f32 %v2094, %v2638
  %v2640 = vpop.f32.mrf.mxu0
  %v2641 = vpop.f32.mrf.mxu0
  %v2642 = vadd.f32 %v2097, %v2641
  %v2643 = vpop.f32.mrf.mxu0
  %2644 = vmatprep.mubr.bf16.mxu0 %v1771
  %2645 = vmatmul.mubr.bf16.gmra.mxu0 %v1182
  %v2646 = vpop.f32.mrf.mxu0
  %v2647 = vadd.f32 %v2102, %v2646
  %v2648 = vpop.f32.mrf.mxu0
  %v2649 = vpop.f32.mrf.mxu0
  %v2650 = vadd.f32 %v2105, %v2649
  %v2651 = vpop.f32.mrf.mxu0
  %2652 = vmatprep.mubr.bf16.mxu0 %v1774
  %2653 = vmatmul.mubr.bf16.gmra.mxu0 %v1186
  %v2654 = vpop.f32.mrf.mxu0
  %v2655 = vadd.f32 %v2110, %v2654
  %v2656 = vpop.f32.mrf.mxu0
  %v2657 = vpop.f32.mrf.mxu0
  %v2658 = vadd.f32 %v2113, %v2657
  %v2659 = vpop.f32.mrf.mxu0
  %2660 = vmatprep.mubr.bf16.mxu0 %v1777
  %2661 = vmatmul.mubr.bf16.gmra.mxu0 %v1190
  %v2662 = vpop.f32.mrf.mxu0
  %v2663 = vadd.f32 %v2118, %v2662
  %v2664 = vpop.f32.mrf.mxu0
  %v2665 = vpop.f32.mrf.mxu0
  %v2666 = vadd.f32 %v2121, %v2665
  %v2667 = vpop.f32.mrf.mxu0
  %2668 = vmatprep.mubr.bf16.mxu0 %v1780
  %2669 = vmatmul.mubr.bf16.gmra.mxu0 %v1194
  %v2670 = vpop.f32.mrf.mxu0
  %v2671 = vadd.f32 %v2126, %v2670
  %v2672 = vpop.f32.mrf.mxu0
  %v2673 = vpop.f32.mrf.mxu0
  %v2674 = vadd.f32 %v2129, %v2673
  %v2675 = vpop.f32.mrf.mxu0
  %2676 = vmatprep.mubr.bf16.mxu0 %v1783
  %2677 = vmatmul.mubr.bf16.gmra.mxu0 %v1198
  %v2678 = vpop.f32.mrf.mxu0
  %v2679 = vadd.f32 %v2134, %v2678
  %v2680 = vpop.f32.mrf.mxu0
  %v2681 = vpop.f32.mrf.mxu0
  %v2682 = vadd.f32 %v2137, %v2681
  %v2683 = vpop.f32.mrf.mxu0
  %2684 = vmatprep.mubr.bf16.mxu0 %v1786
  %2685 = vmatmul.mubr.bf16.gmra.mxu0 %v1202
  %v2686 = vpop.f32.mrf.mxu0
  %v2687 = vadd.f32 %v2142, %v2686
  %v2688 = vpop.f32.mrf.mxu0
  %v2689 = vpop.f32.mrf.mxu0
  %v2690 = vadd.f32 %v2145, %v2689
  %v2691 = vpop.f32.mrf.mxu0
  %2692 = vmatprep.mubr.bf16.mxu0 %v1789
  %2693 = vmatmul.mubr.bf16.gmra.mxu0 %v1206
  %v2694 = vpop.f32.mrf.mxu0
  %v2695 = vadd.f32 %v2150, %v2694
  %v2696 = vpop.f32.mrf.mxu0
  %v2697 = vpop.f32.mrf.mxu0
  %v2698 = vadd.f32 %v2153, %v2697
  %v2699 = vpop.f32.mrf.mxu0
  %2700 = vmatprep.mubr.bf16.mxu0 %v1792
  %2701 = vmatmul.mubr.bf16.gmra.mxu0 %v1210
  %v2702 = vpop.f32.mrf.mxu0
  %v2703 = vadd.f32 %v2158, %v2702
  %v2704 = vpop.f32.mrf.mxu0
  %v2705 = vpop.f32.mrf.mxu0
  %v2706 = vadd.f32 %v2161, %v2705
  %v2707 = vpop.f32.mrf.mxu0
  %2708 = vmatprep.mubr.bf16.mxu0 %v1795
  %2709 = vmatmul.mubr.bf16.gmra.mxu0 %v1214
  %v2710 = vpop.f32.mrf.mxu0
  %v2711 = vadd.f32 %v2166, %v2710
  %v2712 = vpop.f32.mrf.mxu0
  %v2713 = vpop.f32.mrf.mxu0
  %v2714 = vadd.f32 %v2169, %v2713
  %v2715 = vpop.f32.mrf.mxu0
  %2716 = vmatprep.mubr.bf16.mxu0 %v1798
  %2717 = vmatmul.mubr.bf16.gmra.mxu0 %v1218
  %v2718 = vpop.f32.mrf.mxu0
  %v2719 = vadd.f32 %v2174, %v2718
  %v2720 = vpop.f32.mrf.mxu0
  %v2721 = vpop.f32.mrf.mxu0
  %v2722 = vadd.f32 %v2177, %v2721
  %v2723 = vpop.f32.mrf.mxu0
  %2724 = vmatprep.mubr.bf16.mxu0 %v1801
  %2725 = vmatmul.mubr.bf16.gmra.mxu0 %v1222
  %v2726 = vpop.f32.mrf.mxu0
  %v2727 = vadd.f32 %v2182, %v2726
  %v2728 = vpop.f32.mrf.mxu0
  %v2729 = vpop.f32.mrf.mxu0
  %v2730 = vadd.f32 %v2185, %v2729
  %v2731 = vpop.f32.mrf.mxu0
  %2732 = vmatprep.mubr.bf16.mxu0 %v1804
  %2733 = vmatmul.mubr.bf16.gmra.mxu0 %v1226
  %v2734 = vpop.f32.mrf.mxu0
  %v2735 = vadd.f32 %v2190, %v2734
  %v2736 = vpop.f32.mrf.mxu0
  %v2737 = vpop.f32.mrf.mxu0
  %v2738 = vadd.f32 %v2193, %v2737
  %v2739 = vpop.f32.mrf.mxu0
  %2740 = vmatprep.mubr.bf16.mxu0 %v1807
  %2741 = vmatmul.mubr.bf16.gmra.mxu0 %v1230
  %v2742 = vpop.f32.mrf.mxu0
  %v2743 = vadd.f32 %v2198, %v2742
  %v2744 = vpop.f32.mrf.mxu0
  %v2745 = vpop.f32.mrf.mxu0
  %v2746 = vadd.f32 %v2201, %v2745
  %v2747 = vpop.f32.mrf.mxu0
  %2748 = vmatprep.mubr.bf16.mxu0 %v1810
  %2749 = vmatmul.mubr.bf16.gmra.mxu0 %v1234
  %v2750 = vpop.f32.mrf.mxu0
  %v2751 = vadd.f32 %v2206, %v2750
  %v2752 = vpop.f32.mrf.mxu0
  %v2753 = vpop.f32.mrf.mxu0
  %v2754 = vadd.f32 %v2209, %v2753
  %v2755 = vpop.f32.mrf.mxu0
  %2756 = vmatprep.mubr.bf16.mxu0 %v1813
  %2757 = vmatmul.mubr.bf16.gmra.mxu0 %v1238
  %v2758 = vpop.f32.mrf.mxu0
  %v2759 = vadd.f32 %v2214, %v2758
  %v2760 = vpop.f32.mrf.mxu0
  %v2761 = vpop.f32.mrf.mxu0
  %v2762 = vadd.f32 %v2217, %v2761
  %v2763 = vpop.f32.mrf.mxu0
  %2764 = vmatprep.mubr.bf16.mxu0 %v1816
  %2765 = vmatmul.mubr.bf16.gmra.mxu0 %v1242
  %v2766 = vpop.f32.mrf.mxu0
  %v2767 = vadd.f32 %v2222, %v2766
  %v2768 = vpop.f32.mrf.mxu0
  %v2769 = vpop.f32.mrf.mxu0
  %v2770 = vadd.f32 %v2225, %v2769
  %v2771 = vpop.f32.mrf.mxu0
  %2772 = vmatprep.mubr.bf16.mxu0 %v1819
  %2773 = vmatmul.mubr.bf16.gmra.mxu0 %v1246
  %v2774 = vpop.f32.mrf.mxu0
  %v2775 = vadd.f32 %v2230, %v2774
  %v2776 = vpop.f32.mrf.mxu0
  %v2777 = vpop.f32.mrf.mxu0
  %v2778 = vadd.f32 %v2233, %v2777
  %v2779 = vpop.f32.mrf.mxu0
  %2780 = vmatprep.mubr.bf16.mxu0 %v1822
  %2781 = vmatmul.mubr.bf16.gmra.mxu0 %v1250
  %v2782 = vpop.f32.mrf.mxu0
  %v2783 = vadd.f32 %v2238, %v2782
  %v2784 = vpop.f32.mrf.mxu0
  %v2785 = vpop.f32.mrf.mxu0
  %v2786 = vadd.f32 %v2241, %v2785
  %v2787 = vpop.f32.mrf.mxu0
  %2788 = vmatprep.mubr.bf16.mxu0 %v1825
  %2789 = vmatmul.mubr.bf16.gmra.mxu0 %v1254
  %v2790 = vpop.f32.mrf.mxu0
  %v2791 = vadd.f32 %v2246, %v2790
  %v2792 = vpop.f32.mrf.mxu0
  %v2793 = vpop.f32.mrf.mxu0
  %v2794 = vadd.f32 %v2249, %v2793
  %v2795 = vpop.f32.mrf.mxu0
  %2796 = vmatprep.mubr.bf16.mxu0 %v1828
  %2797 = vmatmul.mubr.bf16.gmra.mxu0 %v1258
  %v2798 = vpop.f32.mrf.mxu0
  %v2799 = vadd.f32 %v2254, %v2798
  %v2800 = vpop.f32.mrf.mxu0
  %v2801 = vpop.f32.mrf.mxu0
  %v2802 = vadd.f32 %v2257, %v2801
  %v2803 = vpop.f32.mrf.mxu0
  %2804 = vmatprep.mubr.bf16.mxu0 %v1831
  %2805 = vmatmul.mubr.bf16.gmra.mxu0 %v1262
  %v2806 = vpop.f32.mrf.mxu0
  %v2807 = vadd.f32 %v2262, %v2806
  %v2808 = vpop.f32.mrf.mxu0
  %v2809 = vpop.f32.mrf.mxu0
  %v2810 = vadd.f32 %v2265, %v2809
  %v2811 = vpop.f32.mrf.mxu0
  %2812 = vmatprep.mubr.bf16.mxu0 %v1834
  %2813 = vmatmul.mubr.bf16.gmra.mxu0 %v1266
  %v2814 = vpop.f32.mrf.mxu0
  %v2815 = vadd.f32 %v2270, %v2814
  %v2816 = vpop.f32.mrf.mxu0
  %v2817 = vpop.f32.mrf.mxu0
  %v2818 = vadd.f32 %v2273, %v2817
  %v2819 = vpop.f32.mrf.mxu0
  %2820 = vmatprep.mubr.bf16.mxu0 %v1837
  %2821 = vmatmul.mubr.bf16.gmra.mxu0 %v1270
  %v2822 = vpop.f32.mrf.mxu0
  %v2823 = vadd.f32 %v2278, %v2822
  %v2824 = vpop.f32.mrf.mxu0
  %v2825 = vpop.f32.mrf.mxu0
  %v2826 = vadd.f32 %v2281, %v2825
  %v2827 = vpop.f32.mrf.mxu0
  %2828 = vmatprep.mubr.bf16.mxu0 %v1840
  %2829 = vmatmul.mubr.bf16.gmra.mxu0 %v1274
  %v2830 = vpop.f32.mrf.mxu0
  %v2831 = vadd.f32 %v2286, %v2830
  %v2832 = vpop.f32.mrf.mxu0
  %v2833 = vpop.f32.mrf.mxu0
  %v2834 = vadd.f32 %v2289, %v2833
  %v2835 = vpop.f32.mrf.mxu0
  %2836 = vmatprep.mubr.bf16.mxu0 %v1843
  %2837 = vmatmul.mubr.bf16.gmra.mxu0 %v1278
  %v2838 = vpop.f32.mrf.mxu0
  %v2839 = vadd.f32 %v2294, %v2838
  %v2840 = vpop.f32.mrf.mxu0
  %v2841 = vpop.f32.mrf.mxu0
  %v2842 = vadd.f32 %v2297, %v2841
  %v2843 = vpop.f32.mrf.mxu0
  %2844 = vmatprep.mubr.bf16.mxu0 %v1846
  %2845 = vmatmul.mubr.bf16.gmra.mxu0 %v1282
  %v2846 = vpop.f32.mrf.mxu0
  %v2847 = vadd.f32 %v2302, %v2846
  %v2848 = vpop.f32.mrf.mxu0
  %v2849 = vpop.f32.mrf.mxu0
  %v2850 = vadd.f32 %v2305, %v2849
  %v2851 = vpop.f32.mrf.mxu0
  %2852 = vmatprep.mubr.bf16.mxu0 %v1849
  %2853 = vmatmul.mubr.bf16.gmra.mxu0 %v1286
  %v2854 = vpop.f32.mrf.mxu0
  %v2855 = vadd.f32 %v2310, %v2854
  %v2856 = vpop.f32.mrf.mxu0
  %v2857 = vpop.f32.mrf.mxu0
  %v2858 = vadd.f32 %v2313, %v2857
  %v2859 = vpop.f32.mrf.mxu0
  %2860 = vmatprep.mubr.bf16.mxu0 %v1852
  %2861 = vmatmul.mubr.bf16.gmra.mxu0 %v1290
  %v2862 = vpop.f32.mrf.mxu0
  %v2863 = vadd.f32 %v2318, %v2862
  %v2864 = vpop.f32.mrf.mxu0
  %v2865 = vpop.f32.mrf.mxu0
  %v2866 = vadd.f32 %v2321, %v2865
  %v2867 = vpop.f32.mrf.mxu0
  %2868 = vmatprep.mubr.bf16.mxu0 %v1855
  %2869 = vmatmul.mubr.bf16.gmra.mxu0 %v1294
  %v2870 = vpop.f32.mrf.mxu0
  %v2871 = vadd.f32 %v2326, %v2870
  %v2872 = vpop.f32.mrf.mxu0
  %v2873 = vpop.f32.mrf.mxu0
  %v2874 = vadd.f32 %v2329, %v2873
  %v2875 = vpop.f32.mrf.mxu0
  %2876 = vmatprep.mubr.bf16.mxu0 %v1858
  %2877 = vmatmul.mubr.bf16.gmra.mxu0 %v1298
  %v2878 = vpop.f32.mrf.mxu0
  %v2879 = vadd.f32 %v2334, %v2878
  %v2880 = vpop.f32.mrf.mxu0
  %v2881 = vpop.f32.mrf.mxu0
  %v2882 = vadd.f32 %v2337, %v2881
  %v2883 = vpop.f32.mrf.mxu0
  %2884 = vmatprep.mubr.bf16.mxu0 %v1861
  %2885 = vmatmul.mubr.bf16.gmra.mxu0 %v1302
  %v2886 = vpop.f32.mrf.mxu0
  %v2887 = vadd.f32 %v2342, %v2886
  %v2888 = vpop.f32.mrf.mxu0
  %v2889 = vpop.f32.mrf.mxu0
  %v2890 = vadd.f32 %v2345, %v2889
  %v2891 = vpop.f32.mrf.mxu0
  %2892 = vmatprep.mubr.bf16.mxu0 %v1864
  %2893 = vmatmul.mubr.bf16.gmra.mxu0 %v1306
  %v2894 = vpop.f32.mrf.mxu0
  %v2895 = vadd.f32 %v2350, %v2894
  %v2896 = vpop.f32.mrf.mxu0
  %v2897 = vpop.f32.mrf.mxu0
  %v2898 = vadd.f32 %v2353, %v2897
  %v2899 = vpop.f32.mrf.mxu0
  %2900 = vmatprep.mubr.bf16.mxu0 %v1867
  %2901 = vmatmul.mubr.bf16.gmra.mxu0 %v1310
  %v2902 = vpop.f32.mrf.mxu0
  %v2903 = vadd.f32 %v2358, %v2902
  %v2904 = vpop.f32.mrf.mxu0
  %v2905 = vpop.f32.mrf.mxu0
  %v2906 = vadd.f32 %v2361, %v2905
  %v2907 = vpop.f32.mrf.mxu0
  %2908 = vmatprep.mubr.bf16.mxu0 %v1870
  %2909 = vmatmul.mubr.bf16.gmra.mxu0 %v1314
  %v2910 = vpop.f32.mrf.mxu0
  %v2911 = vadd.f32 %v2366, %v2910
  %v2912 = vpop.f32.mrf.mxu0
  %v2913 = vpop.f32.mrf.mxu0
  %v2914 = vadd.f32 %v2369, %v2913
  %v2915 = vpop.f32.mrf.mxu0
  %2916 = vmatprep.mubr.bf16.mxu0 %v1873
  %2917 = vmatmul.mubr.bf16.gmra.mxu0 %v1318
  %v2918 = vpop.f32.mrf.mxu0
  %v2919 = vadd.f32 %v2374, %v2918
  %v2920 = vpop.f32.mrf.mxu0
  %v2921 = vpop.f32.mrf.mxu0
  %v2922 = vadd.f32 %v2377, %v2921
  %v2923 = vpop.f32.mrf.mxu0
  %2924 = vmatprep.mubr.bf16.mxu0 %v1876
  %2925 = vmatmul.mubr.bf16.gmra.mxu0 %v1322
  %v2926 = vpop.f32.mrf.mxu0
  %v2927 = vadd.f32 %v2382, %v2926
  %v2928 = vpop.f32.mrf.mxu0
  %v2929 = vpop.f32.mrf.mxu0
  %v2930 = vadd.f32 %v2385, %v2929
  %v2931 = vpop.f32.mrf.mxu0
  %2932 = vmatprep.mubr.bf16.mxu0 %v1879
  %2933 = vmatmul.mubr.bf16.gmra.mxu0 %v1326
  %v2934 = vpop.f32.mrf.mxu0
  %v2935 = vadd.f32 %v2390, %v2934
  %v2936 = vpop.f32.mrf.mxu0
  %v2937 = vpop.f32.mrf.mxu0
  %v2938 = vadd.f32 %v2393, %v2937
  %v2939 = vpop.f32.mrf.mxu0
  %2940 = vmatprep.mubr.bf16.mxu0 %v1882
  %2941 = vmatmul.mubr.bf16.gmra.mxu0 %v1330
  %v2942 = vpop.f32.mrf.mxu0
  %v2943 = vadd.f32 %v2398, %v2942
  %v2944 = vpop.f32.mrf.mxu0
  %v2945 = vpop.f32.mrf.mxu0
  %v2946 = vadd.f32 %v2401, %v2945
  %v2947 = vpop.f32.mrf.mxu0
  %2948 = vmatprep.mubr.bf16.mxu0 %v1885
  %2949 = vmatmul.mubr.bf16.gmra.mxu0 %v1334
  %v2950 = vpop.f32.mrf.mxu0
  %v2951 = vadd.f32 %v2406, %v2950
  %v2952 = vpop.f32.mrf.mxu0
  %v2953 = vpop.f32.mrf.mxu0
  %v2954 = vadd.f32 %v2409, %v2953
  %v2955 = vpop.f32.mrf.mxu0
  %2956 = vmatprep.mubr.bf16.mxu0 %v1888
  %2957 = vmatmul.mubr.bf16.gmra.mxu0 %v1338
  %v2958 = vpop.f32.mrf.mxu0
  %v2959 = vadd.f32 %v2414, %v2958
  %v2960 = vpop.f32.mrf.mxu0
  %v2961 = vpop.f32.mrf.mxu0
  %v2962 = vadd.f32 %v2417, %v2961
  %v2963 = vpop.f32.mrf.mxu0
  %2964 = vmatprep.mubr.bf16.mxu0 %v1891
  %2965 = vmatmul.mubr.bf16.gmra.mxu0 %v1342
  %v2966 = vpop.f32.mrf.mxu0
  %v2967 = vadd.f32 %v2422, %v2966
  %v2968 = vpop.f32.mrf.mxu0
  %v2969 = vpop.f32.mrf.mxu0
  %v2970 = vadd.f32 %v2425, %v2969
  %v2971 = vpop.f32.mrf.mxu0
  %2972 = vmatprep.mubr.bf16.mxu0 %v1894
  %2973 = vmatmul.mubr.bf16.gmra.mxu0 %v1346
  %v2974 = vpop.f32.mrf.mxu0
  %v2975 = vadd.f32 %v2430, %v2974
  %v2976 = vpop.f32.mrf.mxu0
  %v2977 = vpop.f32.mrf.mxu0
  %v2978 = vadd.f32 %v2433, %v2977
  %v2979 = vpop.f32.mrf.mxu0
  %2980 = vmatprep.mubr.bf16.mxu0 %v1897
  %2981 = vmatmul.mubr.bf16.gmra.mxu0 %v1350
  %v2982 = vpop.f32.mrf.mxu0
  %v2983 = vadd.f32 %v2438, %v2982
  %v2984 = vpop.f32.mrf.mxu0
  %v2985 = vpop.f32.mrf.mxu0
  %v2986 = vadd.f32 %v2441, %v2985
  %v2987 = vpop.f32.mrf.mxu0
  %2988 = vdwg.mxu0
  %v2989 = vadd.f32 %v2479, %v2482
  %v2990 = vadd.f32 %v2989, %v2487
  %v2991 = vadd.f32 %v2990, %v2490
  %v2992 = vadd.f32 %v2991, %v2495
  %v2993 = vadd.f32 %v2992, %v2498
  %v2994 = vadd.f32 %v2993, %v2503
  %v2995 = vadd.f32 %v2994, %v2506
  %v2996 = vadd.f32 %v2995, %v2511
  %v2997 = vadd.f32 %v2996, %v2514
  %v2998 = vadd.f32 %v2997, %v2519
  %v2999 = vadd.f32 %v2998, %v2522
  %v3000 = vadd.f32 %v2999, %v2527
  %v3001 = vadd.f32 %v3000, %v2530
  %v3002 = vadd.f32 %v3001, %v2535
  %v3003 = vadd.f32 %v3002, %v2538
  %v3004 = vadd.f32 %v3003, %v2543
  %v3005 = vadd.f32 %v3004, %v2546
  %v3006 = vadd.f32 %v3005, %v2551
  %v3007 = vadd.f32 %v3006, %v2554
  %v3008 = vadd.f32 %v3007, %v2559
  %v3009 = vadd.f32 %v3008, %v2562
  %v3010 = vadd.f32 %v3009, %v2567
  %v3011 = vadd.f32 %v3010, %v2570
  %v3012 = vadd.f32 %v3011, %v2575
  %v3013 = vadd.f32 %v3012, %v2578
  %v3014 = vadd.f32 %v3013, %v2583
  %v3015 = vadd.f32 %v3014, %v2586
  %v3016 = vadd.f32 %v3015, %v2591
  %v3017 = vadd.f32 %v3016, %v2594
  %v3018 = vadd.f32 %v3017, %v2599
  %v3019 = vadd.f32 %v3018, %v2602
  %v3020 = vadd.f32 %v3019, %v2607
  %v3021 = vadd.f32 %v3020, %v2610
  %v3022 = vadd.f32 %v3021, %v2615
  %v3023 = vadd.f32 %v3022, %v2618
  %v3024 = vadd.f32 %v3023, %v2623
  %v3025 = vadd.f32 %v3024, %v2626
  %v3026 = vadd.f32 %v3025, %v2631
  %v3027 = vadd.f32 %v3026, %v2634
  %v3028 = vadd.f32 %v3027, %v2639
  %v3029 = vadd.f32 %v3028, %v2642
  %v3030 = vadd.f32 %v3029, %v2647
  %v3031 = vadd.f32 %v3030, %v2650
  %v3032 = vadd.f32 %v3031, %v2655
  %v3033 = vadd.f32 %v3032, %v2658
  %v3034 = vadd.f32 %v3033, %v2663
  %v3035 = vadd.f32 %v3034, %v2666
  %v3036 = vadd.f32 %v3035, %v2671
  %v3037 = vadd.f32 %v3036, %v2674
  %v3038 = vadd.f32 %v3037, %v2679
  %v3039 = vadd.f32 %v3038, %v2682
  %v3040 = vadd.f32 %v3039, %v2687
  %v3041 = vadd.f32 %v3040, %v2690
  %v3042 = vadd.f32 %v3041, %v2695
  %v3043 = vadd.f32 %v3042, %v2698
  %v3044 = vadd.f32 %v3043, %v2703
  %v3045 = vadd.f32 %v3044, %v2706
  %v3046 = vadd.f32 %v3045, %v2711
  %v3047 = vadd.f32 %v3046, %v2714
  %v3048 = vadd.f32 %v3047, %v2719
  %v3049 = vadd.f32 %v3048, %v2722
  %v3050 = vadd.f32 %v3049, %v2727
  %v3051 = vadd.f32 %v3050, %v2730
  %v3052 = vadd.f32 %v3051, %v2735
  %v3053 = vadd.f32 %v3052, %v2738
  %v3054 = vadd.f32 %v3053, %v2743
  %v3055 = vadd.f32 %v3054, %v2746
  %v3056 = vadd.f32 %v3055, %v2751
  %v3057 = vadd.f32 %v3056, %v2754
  %v3058 = vadd.f32 %v3057, %v2759
  %v3059 = vadd.f32 %v3058, %v2762
  %v3060 = vadd.f32 %v3059, %v2767
  %v3061 = vadd.f32 %v3060, %v2770
  %v3062 = vadd.f32 %v3061, %v2775
  %v3063 = vadd.f32 %v3062, %v2778
  %v3064 = vadd.f32 %v3063, %v2783
  %v3065 = vadd.f32 %v3064, %v2786
  %v3066 = vadd.f32 %v3065, %v2791
  %v3067 = vadd.f32 %v3066, %v2794
  %v3068 = vadd.f32 %v3067, %v2799
  %v3069 = vadd.f32 %v3068, %v2802
  %v3070 = vadd.f32 %v3069, %v2807
  %v3071 = vadd.f32 %v3070, %v2810
  %v3072 = vadd.f32 %v3071, %v2815
  %v3073 = vadd.f32 %v3072, %v2818
  %v3074 = vadd.f32 %v3073, %v2823
  %v3075 = vadd.f32 %v3074, %v2826
  %v3076 = vadd.f32 %v3075, %v2831
  %v3077 = vadd.f32 %v3076, %v2834
  %v3078 = vadd.f32 %v3077, %v2839
  %v3079 = vadd.f32 %v3078, %v2842
  %v3080 = vadd.f32 %v3079, %v2847
  %v3081 = vadd.f32 %v3080, %v2850
  %v3082 = vadd.f32 %v3081, %v2855
  %v3083 = vadd.f32 %v3082, %v2858
  %v3084 = vadd.f32 %v3083, %v2863
  %v3085 = vadd.f32 %v3084, %v2866
  %v3086 = vadd.f32 %v3085, %v2871
  %v3087 = vadd.f32 %v3086, %v2874
  %v3088 = vadd.f32 %v3087, %v2879
  %v3089 = vadd.f32 %v3088, %v2882
  %v3090 = vadd.f32 %v3089, %v2887
  %v3091 = vadd.f32 %v3090, %v2890
  %v3092 = vadd.f32 %v3091, %v2895
  %v3093 = vadd.f32 %v3092, %v2898
  %v3094 = vadd.f32 %v3093, %v2903
  %v3095 = vadd.f32 %v3094, %v2906
  %v3096 = vadd.f32 %v3095, %v2911
  %v3097 = vadd.f32 %v3096, %v2914
  %v3098 = vadd.f32 %v3097, %v2919
  %v3099 = vadd.f32 %v3098, %v2922
  %v3100 = vadd.f32 %v3099, %v2927
  %v3101 = vadd.f32 %v3100, %v2930
  %v3102 = vadd.f32 %v3101, %v2935
  %v3103 = vadd.f32 %v3102, %v2938
  %v3104 = vadd.f32 %v3103, %v2943
  %v3105 = vadd.f32 %v3104, %v2946
  %v3106 = vadd.f32 %v3105, %v2951
  %v3107 = vadd.f32 %v3106, %v2954
  %v3108 = vadd.f32 %v3107, %v2959
  %v3109 = vadd.f32 %v3108, %v2962
  %v3110 = vadd.f32 %v3109, %v2967
  %v3111 = vadd.f32 %v3110, %v2970
  %v3112 = vadd.f32 %v3111, %v2975
  %v3113 = vadd.f32 %v3112, %v2978
  %v3114 = vadd.f32 %v3113, %v2983
  %v3115 = vadd.f32 %v3114, %v2986
  %v3116 = vrot.slane %v3115, 4
  %v3117 = vadd.f32 %v3115, %v3116
  %v3118 = vrot.slane %v3117, 2
  %v3119 = vadd.f32 %v3117, %v3118
  %v3120 = vrot.slane %v3119, 1
  %v3121 = vadd.f32 %v3119, %v3120
  %v3122 = vmul.f32 %v3121, 0.0009765625
  %v3123 = vmul.f32 %v2479, %v2479
  %v3124 = vmul.f32 %v2482, %v2482
  %v3125 = vmul.f32 %v2487, %v2487
  %v3126 = vmul.f32 %v2490, %v2490
  %v3127 = vmul.f32 %v2495, %v2495
  %v3128 = vmul.f32 %v2498, %v2498
  %v3129 = vmul.f32 %v2503, %v2503
  %v3130 = vmul.f32 %v2506, %v2506
  %v3131 = vmul.f32 %v2511, %v2511
  %v3132 = vmul.f32 %v2514, %v2514
  %v3133 = vmul.f32 %v2519, %v2519
  %v3134 = vmul.f32 %v2522, %v2522
  %v3135 = vmul.f32 %v2527, %v2527
  %v3136 = vmul.f32 %v2530, %v2530
  %v3137 = vmul.f32 %v2535, %v2535
  %v3138 = vmul.f32 %v2538, %v2538
  %v3139 = vmul.f32 %v2543, %v2543
  %v3140 = vmul.f32 %v2546, %v2546
  %v3141 = vmul.f32 %v2551, %v2551
  %v3142 = vmul.f32 %v2554, %v2554
  %v3143 = vmul.f32 %v2559, %v2559
  %v3144 = vmul.f32 %v2562, %v2562
  %v3145 = vmul.f32 %v2567, %v2567
  %v3146 = vmul.f32 %v2570, %v2570
  %v3147 = vmul.f32 %v2575, %v2575
  %v3148 = vmul.f32 %v2578, %v2578
  %v3149 = vmul.f32 %v2583, %v2583
  %v3150 = vmul.f32 %v2586, %v2586
  %v3151 = vmul.f32 %v2591, %v2591
  %v3152 = vmul.f32 %v2594, %v2594
  %v3153 = vmul.f32 %v2599, %v2599
  %v3154 = vmul.f32 %v2602, %v2602
  %v3155 = vmul.f32 %v2607, %v2607
  %v3156 = vmul.f32 %v2610, %v2610
  %v3157 = vmul.f32 %v2615, %v2615
  %v3158 = vmul.f32 %v2618, %v2618
  %v3159 = vmul.f32 %v2623, %v2623
  %v3160 = vmul.f32 %v2626, %v2626
  %v3161 = vmul.f32 %v2631, %v2631
  %v3162 = vmul.f32 %v2634, %v2634
  %v3163 = vmul.f32 %v2639, %v2639
  %v3164 = vmul.f32 %v2642, %v2642
  %v3165 = vmul.f32 %v2647, %v2647
  %v3166 = vmul.f32 %v2650, %v2650
  %v3167 = vmul.f32 %v2655, %v2655
  %v3168 = vmul.f32 %v2658, %v2658
  %v3169 = vmul.f32 %v2663, %v2663
  %v3170 = vmul.f32 %v2666, %v2666
  %v3171 = vmul.f32 %v2671, %v2671
  %v3172 = vmul.f32 %v2674, %v2674
  %v3173 = vmul.f32 %v2679, %v2679
  %v3174 = vmul.f32 %v2682, %v2682
  %v3175 = vmul.f32 %v2687, %v2687
  %v3176 = vmul.f32 %v2690, %v2690
  %v3177 = vmul.f32 %v2695, %v2695
  %v3178 = vmul.f32 %v2698, %v2698
  %v3179 = vmul.f32 %v2703, %v2703
  %v3180 = vmul.f32 %v2706, %v2706
  %v3181 = vmul.f32 %v2711, %v2711
  %v3182 = vmul.f32 %v2714, %v2714
  %v3183 = vmul.f32 %v2719, %v2719
  %v3184 = vmul.f32 %v2722, %v2722
  %v3185 = vmul.f32 %v2727, %v2727
  %v3186 = vmul.f32 %v2730, %v2730
  %v3187 = vmul.f32 %v2735, %v2735
  %v3188 = vmul.f32 %v2738, %v2738
  %v3189 = vmul.f32 %v2743, %v2743
  %v3190 = vmul.f32 %v2746, %v2746
  %v3191 = vmul.f32 %v2751, %v2751
  %v3192 = vmul.f32 %v2754, %v2754
  %v3193 = vmul.f32 %v2759, %v2759
  %v3194 = vmul.f32 %v2762, %v2762
  %v3195 = vmul.f32 %v2767, %v2767
  %v3196 = vmul.f32 %v2770, %v2770
  %v3197 = vmul.f32 %v2775, %v2775
  %v3198 = vmul.f32 %v2778, %v2778
  %v3199 = vmul.f32 %v2783, %v2783
  %v3200 = vmul.f32 %v2786, %v2786
  %v3201 = vmul.f32 %v2791, %v2791
  %v3202 = vmul.f32 %v2794, %v2794
  %v3203 = vmul.f32 %v2799, %v2799
  %v3204 = vmul.f32 %v2802, %v2802
  %v3205 = vmul.f32 %v2807, %v2807
  %v3206 = vmul.f32 %v2810, %v2810
  %v3207 = vmul.f32 %v2815, %v2815
  %v3208 = vmul.f32 %v2818, %v2818
  %v3209 = vmul.f32 %v2823, %v2823
  %v3210 = vmul.f32 %v2826, %v2826
  %v3211 = vmul.f32 %v2831, %v2831
  %v3212 = vmul.f32 %v2834, %v2834
  %v3213 = vmul.f32 %v2839, %v2839
  %v3214 = vmul.f32 %v2842, %v2842
  %v3215 = vmul.f32 %v2847, %v2847
  %v3216 = vmul.f32 %v2850, %v2850
  %v3217 = vmul.f32 %v2855, %v2855
  %v3218 = vmul.f32 %v2858, %v2858
  %v3219 = vmul.f32 %v2863, %v2863
  %v3220 = vmul.f32 %v2866, %v2866
  %v3221 = vmul.f32 %v2871, %v2871
  %v3222 = vmul.f32 %v2874, %v2874
  %v3223 = vmul.f32 %v2879, %v2879
  %v3224 = vmul.f32 %v2882, %v2882
  %v3225 = vmul.f32 %v2887, %v2887
  %v3226 = vmul.f32 %v2890, %v2890
  %v3227 = vmul.f32 %v2895, %v2895
  %v3228 = vmul.f32 %v2898, %v2898
  %v3229 = vmul.f32 %v2903, %v2903
  %v3230 = vmul.f32 %v2906, %v2906
  %v3231 = vmul.f32 %v2911, %v2911
  %v3232 = vmul.f32 %v2914, %v2914
  %v3233 = vmul.f32 %v2919, %v2919
  %v3234 = vmul.f32 %v2922, %v2922
  %v3235 = vmul.f32 %v2927, %v2927
  %v3236 = vmul.f32 %v2930, %v2930
  %v3237 = vmul.f32 %v2935, %v2935
  %v3238 = vmul.f32 %v2938, %v2938
  %v3239 = vmul.f32 %v2943, %v2943
  %v3240 = vmul.f32 %v2946, %v2946
  %v3241 = vmul.f32 %v2951, %v2951
  %v3242 = vmul.f32 %v2954, %v2954
  %v3243 = vmul.f32 %v2959, %v2959
  %v3244 = vmul.f32 %v2962, %v2962
  %v3245 = vmul.f32 %v2967, %v2967
  %v3246 = vmul.f32 %v2970, %v2970
  %v3247 = vmul.f32 %v2975, %v2975
  %v3248 = vmul.f32 %v2978, %v2978
  %v3249 = vmul.f32 %v2983, %v2983
  %v3250 = vmul.f32 %v2986, %v2986
  %v3251 = vadd.f32 %v3123, %v3124
  %v3252 = vadd.f32 %v3251, %v3125
  %v3253 = vadd.f32 %v3252, %v3126
  %v3254 = vadd.f32 %v3253, %v3127
  %v3255 = vadd.f32 %v3254, %v3128
  %v3256 = vadd.f32 %v3255, %v3129
  %v3257 = vadd.f32 %v3256, %v3130
  %v3258 = vadd.f32 %v3257, %v3131
  %v3259 = vadd.f32 %v3258, %v3132
  %v3260 = vadd.f32 %v3259, %v3133
  %v3261 = vadd.f32 %v3260, %v3134
  %v3262 = vadd.f32 %v3261, %v3135
  %v3263 = vadd.f32 %v3262, %v3136
  %v3264 = vadd.f32 %v3263, %v3137
  %v3265 = vadd.f32 %v3264, %v3138
  %v3266 = vadd.f32 %v3265, %v3139
  %v3267 = vadd.f32 %v3266, %v3140
  %v3268 = vadd.f32 %v3267, %v3141
  %v3269 = vadd.f32 %v3268, %v3142
  %v3270 = vadd.f32 %v3269, %v3143
  %v3271 = vadd.f32 %v3270, %v3144
  %v3272 = vadd.f32 %v3271, %v3145
  %v3273 = vadd.f32 %v3272, %v3146
  %v3274 = vadd.f32 %v3273, %v3147
  %v3275 = vadd.f32 %v3274, %v3148
  %v3276 = vadd.f32 %v3275, %v3149
  %v3277 = vadd.f32 %v3276, %v3150
  %v3278 = vadd.f32 %v3277, %v3151
  %v3279 = vadd.f32 %v3278, %v3152
  %v3280 = vadd.f32 %v3279, %v3153
  %v3281 = vadd.f32 %v3280, %v3154
  %v3282 = vadd.f32 %v3281, %v3155
  %v3283 = vadd.f32 %v3282, %v3156
  %v3284 = vadd.f32 %v3283, %v3157
  %v3285 = vadd.f32 %v3284, %v3158
  %v3286 = vadd.f32 %v3285, %v3159
  %v3287 = vadd.f32 %v3286, %v3160
  %v3288 = vadd.f32 %v3287, %v3161
  %v3289 = vadd.f32 %v3288, %v3162
  %v3290 = vadd.f32 %v3289, %v3163
  %v3291 = vadd.f32 %v3290, %v3164
  %v3292 = vadd.f32 %v3291, %v3165
  %v3293 = vadd.f32 %v3292, %v3166
  %v3294 = vadd.f32 %v3293, %v3167
  %v3295 = vadd.f32 %v3294, %v3168
  %v3296 = vadd.f32 %v3295, %v3169
  %v3297 = vadd.f32 %v3296, %v3170
  %v3298 = vadd.f32 %v3297, %v3171
  %v3299 = vadd.f32 %v3298, %v3172
  %v3300 = vadd.f32 %v3299, %v3173
  %v3301 = vadd.f32 %v3300, %v3174
  %v3302 = vadd.f32 %v3301, %v3175
  %v3303 = vadd.f32 %v3302, %v3176
  %v3304 = vadd.f32 %v3303, %v3177
  %v3305 = vadd.f32 %v3304, %v3178
  %v3306 = vadd.f32 %v3305, %v3179
  %v3307 = vadd.f32 %v3306, %v3180
  %v3308 = vadd.f32 %v3307, %v3181
  %v3309 = vadd.f32 %v3308, %v3182
  %v3310 = vadd.f32 %v3309, %v3183
  %v3311 = vadd.f32 %v3310, %v3184
  %v3312 = vadd.f32 %v3311, %v3185
  %v3313 = vadd.f32 %v3312, %v3186
  %v3314 = vadd.f32 %v3313, %v3187
  %v3315 = vadd.f32 %v3314, %v3188
  %v3316 = vadd.f32 %v3315, %v3189
  %v3317 = vadd.f32 %v3316, %v3190
  %v3318 = vadd.f32 %v3317, %v3191
  %v3319 = vadd.f32 %v3318, %v3192
  %v3320 = vadd.f32 %v3319, %v3193
  %v3321 = vadd.f32 %v3320, %v3194
  %v3322 = vadd.f32 %v3321, %v3195
  %v3323 = vadd.f32 %v3322, %v3196
  %v3324 = vadd.f32 %v3323, %v3197
  %v3325 = vadd.f32 %v3324, %v3198
  %v3326 = vadd.f32 %v3325, %v3199
  %v3327 = vadd.f32 %v3326, %v3200
  %v3328 = vadd.f32 %v3327, %v3201
  %v3329 = vadd.f32 %v3328, %v3202
  %v3330 = vadd.f32 %v3329, %v3203
  %v3331 = vadd.f32 %v3330, %v3204
  %v3332 = vadd.f32 %v3331, %v3205
  %v3333 = vadd.f32 %v3332, %v3206
  %v3334 = vadd.f32 %v3333, %v3207
  %v3335 = vadd.f32 %v3334, %v3208
  %v3336 = vadd.f32 %v3335, %v3209
  %v3337 = vadd.f32 %v3336, %v3210
  %v3338 = vadd.f32 %v3337, %v3211
  %v3339 = vadd.f32 %v3338, %v3212
  %v3340 = vadd.f32 %v3339, %v3213
  %v3341 = vadd.f32 %v3340, %v3214
  %v3342 = vadd.f32 %v3341, %v3215
  %v3343 = vadd.f32 %v3342, %v3216
  %v3344 = vadd.f32 %v3343, %v3217
  %v3345 = vadd.f32 %v3344, %v3218
  %v3346 = vadd.f32 %v3345, %v3219
  %v3347 = vadd.f32 %v3346, %v3220
  %v3348 = vadd.f32 %v3347, %v3221
  %v3349 = vadd.f32 %v3348, %v3222
  %v3350 = vadd.f32 %v3349, %v3223
  %v3351 = vadd.f32 %v3350, %v3224
  %v3352 = vadd.f32 %v3351, %v3225
  %v3353 = vadd.f32 %v3352, %v3226
  %v3354 = vadd.f32 %v3353, %v3227
  %v3355 = vadd.f32 %v3354, %v3228
  %v3356 = vadd.f32 %v3355, %v3229
  %v3357 = vadd.f32 %v3356, %v3230
  %v3358 = vadd.f32 %v3357, %v3231
  %v3359 = vadd.f32 %v3358, %v3232
  %v3360 = vadd.f32 %v3359, %v3233
  %v3361 = vadd.f32 %v3360, %v3234
  %v3362 = vadd.f32 %v3361, %v3235
  %v3363 = vadd.f32 %v3362, %v3236
  %v3364 = vadd.f32 %v3363, %v3237
  %v3365 = vadd.f32 %v3364, %v3238
  %v3366 = vadd.f32 %v3365, %v3239
  %v3367 = vadd.f32 %v3366, %v3240
  %v3368 = vadd.f32 %v3367, %v3241
  %v3369 = vadd.f32 %v3368, %v3242
  %v3370 = vadd.f32 %v3369, %v3243
  %v3371 = vadd.f32 %v3370, %v3244
  %v3372 = vadd.f32 %v3371, %v3245
  %v3373 = vadd.f32 %v3372, %v3246
  %v3374 = vadd.f32 %v3373, %v3247
  %v3375 = vadd.f32 %v3374, %v3248
  %v3376 = vadd.f32 %v3375, %v3249
  %v3377 = vadd.f32 %v3376, %v3250
  %v3378 = vrot.slane %v3377, 4
  %v3379 = vadd.f32 %v3377, %v3378
  %v3380 = vrot.slane %v3379, 2
  %v3381 = vadd.f32 %v3379, %v3380
  %v3382 = vrot.slane %v3381, 1
  %v3383 = vadd.f32 %v3381, %v3382
  %v3384 = vmul.f32 %v3383, 0.0009765625
  %v3385 = vmul.f32 %v3122, %v3122
  %v3386 = vsub.f32 %v3384, %v3385
  %v3387 = vmax.f32 %v3386, 0.0
  %v3388 = vld [vmem:[%s2] sm:$0x1]
  %v3389 = vadd.f32 %v3387, 1e-05
  %v3390 = vrsqrt.pop %v3389
  %v3391 = vmul.f32 %v3388, %v3390
  %v3392 = vld [vmem:[%s3] sm:$0x1]
  %v3393 = vmul.f32 %v3122, %v3391
  %v3394 = vsub.f32 %v3392, %v3393
  %v3396 = vlaneseq
  %v3397 = vshrl.u32 %v3396, 7
  %v3398 = vsub.s32 0, %v3397
  %v3399 = vrot.slane %v3391, %v3398
  %v3401 = vmul.f32 %v2479, %v3399
  %v3402 = vmul.f32 %v2482, %v3399
  %v3403 = vmul.f32 %v2487, %v3399
  %v3404 = vmul.f32 %v2490, %v3399
  %v3405 = vmul.f32 %v2495, %v3399
  %v3406 = vmul.f32 %v2498, %v3399
  %v3407 = vmul.f32 %v2503, %v3399
  %v3408 = vmul.f32 %v2506, %v3399
  %v3409 = vmul.f32 %v2511, %v3399
  %v3410 = vmul.f32 %v2514, %v3399
  %v3411 = vmul.f32 %v2519, %v3399
  %v3412 = vmul.f32 %v2522, %v3399
  %v3413 = vmul.f32 %v2527, %v3399
  %v3414 = vmul.f32 %v2530, %v3399
  %v3415 = vmul.f32 %v2535, %v3399
  %v3416 = vmul.f32 %v2538, %v3399
  %v3417 = vmul.f32 %v2543, %v3399
  %v3418 = vmul.f32 %v2546, %v3399
  %v3419 = vmul.f32 %v2551, %v3399
  %v3420 = vmul.f32 %v2554, %v3399
  %v3421 = vmul.f32 %v2559, %v3399
  %v3422 = vmul.f32 %v2562, %v3399
  %v3423 = vmul.f32 %v2567, %v3399
  %v3424 = vmul.f32 %v2570, %v3399
  %v3425 = vmul.f32 %v2575, %v3399
  %v3426 = vmul.f32 %v2578, %v3399
  %v3427 = vmul.f32 %v2583, %v3399
  %v3428 = vmul.f32 %v2586, %v3399
  %v3429 = vmul.f32 %v2591, %v3399
  %v3430 = vmul.f32 %v2594, %v3399
  %v3431 = vmul.f32 %v2599, %v3399
  %v3432 = vmul.f32 %v2602, %v3399
  %v3433 = vmul.f32 %v2607, %v3399
  %v3434 = vmul.f32 %v2610, %v3399
  %v3435 = vmul.f32 %v2615, %v3399
  %v3436 = vmul.f32 %v2618, %v3399
  %v3437 = vmul.f32 %v2623, %v3399
  %v3438 = vmul.f32 %v2626, %v3399
  %v3439 = vmul.f32 %v2631, %v3399
  %v3440 = vmul.f32 %v2634, %v3399
  %v3441 = vmul.f32 %v2639, %v3399
  %v3442 = vmul.f32 %v2642, %v3399
  %v3443 = vmul.f32 %v2647, %v3399
  %v3444 = vmul.f32 %v2650, %v3399
  %v3445 = vmul.f32 %v2655, %v3399
  %v3446 = vmul.f32 %v2658, %v3399
  %v3447 = vmul.f32 %v2663, %v3399
  %v3448 = vmul.f32 %v2666, %v3399
  %v3449 = vmul.f32 %v2671, %v3399
  %v3450 = vmul.f32 %v2674, %v3399
  %v3451 = vmul.f32 %v2679, %v3399
  %v3452 = vmul.f32 %v2682, %v3399
  %v3453 = vmul.f32 %v2687, %v3399
  %v3454 = vmul.f32 %v2690, %v3399
  %v3455 = vmul.f32 %v2695, %v3399
  %v3456 = vmul.f32 %v2698, %v3399
  %v3457 = vmul.f32 %v2703, %v3399
  %v3458 = vmul.f32 %v2706, %v3399
  %v3459 = vmul.f32 %v2711, %v3399
  %v3460 = vmul.f32 %v2714, %v3399
  %v3461 = vmul.f32 %v2719, %v3399
  %v3462 = vmul.f32 %v2722, %v3399
  %v3463 = vmul.f32 %v2727, %v3399
  %v3464 = vmul.f32 %v2730, %v3399
  %v3465 = vmul.f32 %v2735, %v3399
  %v3466 = vmul.f32 %v2738, %v3399
  %v3467 = vmul.f32 %v2743, %v3399
  %v3468 = vmul.f32 %v2746, %v3399
  %v3469 = vmul.f32 %v2751, %v3399
  %v3470 = vmul.f32 %v2754, %v3399
  %v3471 = vmul.f32 %v2759, %v3399
  %v3472 = vmul.f32 %v2762, %v3399
  %v3473 = vmul.f32 %v2767, %v3399
  %v3474 = vmul.f32 %v2770, %v3399
  %v3475 = vmul.f32 %v2775, %v3399
  %v3476 = vmul.f32 %v2778, %v3399
  %v3477 = vmul.f32 %v2783, %v3399
  %v3478 = vmul.f32 %v2786, %v3399
  %v3479 = vmul.f32 %v2791, %v3399
  %v3480 = vmul.f32 %v2794, %v3399
  %v3481 = vmul.f32 %v2799, %v3399
  %v3482 = vmul.f32 %v2802, %v3399
  %v3483 = vmul.f32 %v2807, %v3399
  %v3484 = vmul.f32 %v2810, %v3399
  %v3485 = vmul.f32 %v2815, %v3399
  %v3486 = vmul.f32 %v2818, %v3399
  %v3487 = vmul.f32 %v2823, %v3399
  %v3488 = vmul.f32 %v2826, %v3399
  %v3489 = vmul.f32 %v2831, %v3399
  %v3490 = vmul.f32 %v2834, %v3399
  %v3491 = vmul.f32 %v2839, %v3399
  %v3492 = vmul.f32 %v2842, %v3399
  %v3493 = vmul.f32 %v2847, %v3399
  %v3494 = vmul.f32 %v2850, %v3399
  %v3495 = vmul.f32 %v2855, %v3399
  %v3496 = vmul.f32 %v2858, %v3399
  %v3497 = vmul.f32 %v2863, %v3399
  %v3498 = vmul.f32 %v2866, %v3399
  %v3499 = vmul.f32 %v2871, %v3399
  %v3500 = vmul.f32 %v2874, %v3399
  %v3501 = vmul.f32 %v2879, %v3399
  %v3502 = vmul.f32 %v2882, %v3399
  %v3503 = vmul.f32 %v2887, %v3399
  %v3504 = vmul.f32 %v2890, %v3399
  %v3505 = vmul.f32 %v2895, %v3399
  %v3506 = vmul.f32 %v2898, %v3399
  %v3507 = vmul.f32 %v2903, %v3399
  %v3508 = vmul.f32 %v2906, %v3399
  %v3509 = vmul.f32 %v2911, %v3399
  %v3510 = vmul.f32 %v2914, %v3399
  %v3511 = vmul.f32 %v2919, %v3399
  %v3512 = vmul.f32 %v2922, %v3399
  %v3513 = vmul.f32 %v2927, %v3399
  %v3514 = vmul.f32 %v2930, %v3399
  %v3515 = vmul.f32 %v2935, %v3399
  %v3516 = vmul.f32 %v2938, %v3399
  %v3517 = vmul.f32 %v2943, %v3399
  %v3518 = vmul.f32 %v2946, %v3399
  %v3519 = vmul.f32 %v2951, %v3399
  %v3520 = vmul.f32 %v2954, %v3399
  %v3521 = vmul.f32 %v2959, %v3399
  %v3522 = vmul.f32 %v2962, %v3399
  %v3523 = vmul.f32 %v2967, %v3399
  %v3524 = vmul.f32 %v2970, %v3399
  %v3525 = vmul.f32 %v2975, %v3399
  %v3526 = vmul.f32 %v2978, %v3399
  %v3527 = vmul.f32 %v2983, %v3399
  %v3528 = vmul.f32 %v2986, %v3399
  %v3530 = vlaneseq
  %v3531 = vshrl.u32 %v3530, 7
  %v3532 = vsub.s32 0, %v3531
  %v3533 = vrot.slane %v3394, %v3532
  %v3535 = vadd.f32 %v3401, %v3533
  %v3536 = vadd.f32 %v3402, %v3533
  %v3537 = vadd.f32 %v3403, %v3533
  %v3538 = vadd.f32 %v3404, %v3533
  %v3539 = vadd.f32 %v3405, %v3533
  %v3540 = vadd.f32 %v3406, %v3533
  %v3541 = vadd.f32 %v3407, %v3533
  %v3542 = vadd.f32 %v3408, %v3533
  %v3543 = vadd.f32 %v3409, %v3533
  %v3544 = vadd.f32 %v3410, %v3533
  %v3545 = vadd.f32 %v3411, %v3533
  %v3546 = vadd.f32 %v3412, %v3533
  %v3547 = vadd.f32 %v3413, %v3533
  %v3548 = vadd.f32 %v3414, %v3533
  %v3549 = vadd.f32 %v3415, %v3533
  %v3550 = vadd.f32 %v3416, %v3533
  %v3551 = vadd.f32 %v3417, %v3533
  %v3552 = vadd.f32 %v3418, %v3533
  %v3553 = vadd.f32 %v3419, %v3533
  %v3554 = vadd.f32 %v3420, %v3533
  %v3555 = vadd.f32 %v3421, %v3533
  %v3556 = vadd.f32 %v3422, %v3533
  %v3557 = vadd.f32 %v3423, %v3533
  %v3558 = vadd.f32 %v3424, %v3533
  %v3559 = vadd.f32 %v3425, %v3533
  %v3560 = vadd.f32 %v3426, %v3533
  %v3561 = vadd.f32 %v3427, %v3533
  %v3562 = vadd.f32 %v3428, %v3533
  %v3563 = vadd.f32 %v3429, %v3533
  %v3564 = vadd.f32 %v3430, %v3533
  %v3565 = vadd.f32 %v3431, %v3533
  %v3566 = vadd.f32 %v3432, %v3533
  %v3567 = vadd.f32 %v3433, %v3533
  %v3568 = vadd.f32 %v3434, %v3533
  %v3569 = vadd.f32 %v3435, %v3533
  %v3570 = vadd.f32 %v3436, %v3533
  %v3571 = vadd.f32 %v3437, %v3533
  %v3572 = vadd.f32 %v3438, %v3533
  %v3573 = vadd.f32 %v3439, %v3533
  %v3574 = vadd.f32 %v3440, %v3533
  %v3575 = vadd.f32 %v3441, %v3533
  %v3576 = vadd.f32 %v3442, %v3533
  %v3577 = vadd.f32 %v3443, %v3533
  %v3578 = vadd.f32 %v3444, %v3533
  %v3579 = vadd.f32 %v3445, %v3533
  %v3580 = vadd.f32 %v3446, %v3533
  %v3581 = vadd.f32 %v3447, %v3533
  %v3582 = vadd.f32 %v3448, %v3533
  %v3583 = vadd.f32 %v3449, %v3533
  %v3584 = vadd.f32 %v3450, %v3533
  %v3585 = vadd.f32 %v3451, %v3533
  %v3586 = vadd.f32 %v3452, %v3533
  %v3587 = vadd.f32 %v3453, %v3533
  %v3588 = vadd.f32 %v3454, %v3533
  %v3589 = vadd.f32 %v3455, %v3533
  %v3590 = vadd.f32 %v3456, %v3533
  %v3591 = vadd.f32 %v3457, %v3533
  %v3592 = vadd.f32 %v3458, %v3533
  %v3593 = vadd.f32 %v3459, %v3533
  %v3594 = vadd.f32 %v3460, %v3533
  %v3595 = vadd.f32 %v3461, %v3533
  %v3596 = vadd.f32 %v3462, %v3533
  %v3597 = vadd.f32 %v3463, %v3533
  %v3598 = vadd.f32 %v3464, %v3533
  %v3599 = vadd.f32 %v3465, %v3533
  %v3600 = vadd.f32 %v3466, %v3533
  %v3601 = vadd.f32 %v3467, %v3533
  %v3602 = vadd.f32 %v3468, %v3533
  %v3603 = vadd.f32 %v3469, %v3533
  %v3604 = vadd.f32 %v3470, %v3533
  %v3605 = vadd.f32 %v3471, %v3533
  %v3606 = vadd.f32 %v3472, %v3533
  %v3607 = vadd.f32 %v3473, %v3533
  %v3608 = vadd.f32 %v3474, %v3533
  %v3609 = vadd.f32 %v3475, %v3533
  %v3610 = vadd.f32 %v3476, %v3533
  %v3611 = vadd.f32 %v3477, %v3533
  %v3612 = vadd.f32 %v3478, %v3533
  %v3613 = vadd.f32 %v3479, %v3533
  %v3614 = vadd.f32 %v3480, %v3533
  %v3615 = vadd.f32 %v3481, %v3533
  %v3616 = vadd.f32 %v3482, %v3533
  %v3617 = vadd.f32 %v3483, %v3533
  %v3618 = vadd.f32 %v3484, %v3533
  %v3619 = vadd.f32 %v3485, %v3533
  %v3620 = vadd.f32 %v3486, %v3533
  %v3621 = vadd.f32 %v3487, %v3533
  %v3622 = vadd.f32 %v3488, %v3533
  %v3623 = vadd.f32 %v3489, %v3533
  %v3624 = vadd.f32 %v3490, %v3533
  %v3625 = vadd.f32 %v3491, %v3533
  %v3626 = vadd.f32 %v3492, %v3533
  %v3627 = vadd.f32 %v3493, %v3533
  %v3628 = vadd.f32 %v3494, %v3533
  %v3629 = vadd.f32 %v3495, %v3533
  %v3630 = vadd.f32 %v3496, %v3533
  %v3631 = vadd.f32 %v3497, %v3533
  %v3632 = vadd.f32 %v3498, %v3533
  %v3633 = vadd.f32 %v3499, %v3533
  %v3634 = vadd.f32 %v3500, %v3533
  %v3635 = vadd.f32 %v3501, %v3533
  %v3636 = vadd.f32 %v3502, %v3533
  %v3637 = vadd.f32 %v3503, %v3533
  %v3638 = vadd.f32 %v3504, %v3533
  %v3639 = vadd.f32 %v3505, %v3533
  %v3640 = vadd.f32 %v3506, %v3533
  %v3641 = vadd.f32 %v3507, %v3533
  %v3642 = vadd.f32 %v3508, %v3533
  %v3643 = vadd.f32 %v3509, %v3533
  %v3644 = vadd.f32 %v3510, %v3533
  %v3645 = vadd.f32 %v3511, %v3533
  %v3646 = vadd.f32 %v3512, %v3533
  %v3647 = vadd.f32 %v3513, %v3533
  %v3648 = vadd.f32 %v3514, %v3533
  %v3649 = vadd.f32 %v3515, %v3533
  %v3650 = vadd.f32 %v3516, %v3533
  %v3651 = vadd.f32 %v3517, %v3533
  %v3652 = vadd.f32 %v3518, %v3533
  %v3653 = vadd.f32 %v3519, %v3533
  %v3654 = vadd.f32 %v3520, %v3533
  %v3655 = vadd.f32 %v3521, %v3533
  %v3656 = vadd.f32 %v3522, %v3533
  %v3657 = vadd.f32 %v3523, %v3533
  %v3658 = vadd.f32 %v3524, %v3533
  %v3659 = vadd.f32 %v3525, %v3533
  %v3660 = vadd.f32 %v3526, %v3533
  %v3661 = vadd.f32 %v3527, %v3533
  %v3662 = vadd.f32 %v3528, %v3533
  %vm3663 = vcmp.ge.f32.partialorder %v3535, 0.0
  %vm3664 = vcmp.ge.f32.partialorder %v3536, 0.0
  %vm3665 = vcmp.ge.f32.partialorder %v3537, 0.0
  %vm3666 = vcmp.ge.f32.partialorder %v3538, 0.0
  %vm3667 = vcmp.ge.f32.partialorder %v3539, 0.0
  %vm3668 = vcmp.ge.f32.partialorder %v3540, 0.0
  %vm3669 = vcmp.ge.f32.partialorder %v3541, 0.0
  %vm3670 = vcmp.ge.f32.partialorder %v3542, 0.0
  %vm3671 = vcmp.ge.f32.partialorder %v3543, 0.0
  %vm3672 = vcmp.ge.f32.partialorder %v3544, 0.0
  %vm3673 = vcmp.ge.f32.partialorder %v3545, 0.0
  %vm3674 = vcmp.ge.f32.partialorder %v3546, 0.0
  %vm3675 = vcmp.ge.f32.partialorder %v3547, 0.0
  %vm3676 = vcmp.ge.f32.partialorder %v3548, 0.0
  %vm3677 = vcmp.ge.f32.partialorder %v3549, 0.0
  %vm3678 = vcmp.ge.f32.partialorder %v3550, 0.0
  %vm3679 = vcmp.ge.f32.partialorder %v3551, 0.0
  %vm3680 = vcmp.ge.f32.partialorder %v3552, 0.0
  %vm3681 = vcmp.ge.f32.partialorder %v3553, 0.0
  %vm3682 = vcmp.ge.f32.partialorder %v3554, 0.0
  %vm3683 = vcmp.ge.f32.partialorder %v3555, 0.0
  %vm3684 = vcmp.ge.f32.partialorder %v3556, 0.0
  %vm3685 = vcmp.ge.f32.partialorder %v3557, 0.0
  %vm3686 = vcmp.ge.f32.partialorder %v3558, 0.0
  %vm3687 = vcmp.ge.f32.partialorder %v3559, 0.0
  %vm3688 = vcmp.ge.f32.partialorder %v3560, 0.0
  %vm3689 = vcmp.ge.f32.partialorder %v3561, 0.0
  %vm3690 = vcmp.ge.f32.partialorder %v3562, 0.0
  %vm3691 = vcmp.ge.f32.partialorder %v3563, 0.0
  %vm3692 = vcmp.ge.f32.partialorder %v3564, 0.0
  %vm3693 = vcmp.ge.f32.partialorder %v3565, 0.0
  %vm3694 = vcmp.ge.f32.partialorder %v3566, 0.0
  %vm3695 = vcmp.ge.f32.partialorder %v3567, 0.0
  %vm3696 = vcmp.ge.f32.partialorder %v3568, 0.0
  %vm3697 = vcmp.ge.f32.partialorder %v3569, 0.0
  %vm3698 = vcmp.ge.f32.partialorder %v3570, 0.0
  %vm3699 = vcmp.ge.f32.partialorder %v3571, 0.0
  %vm3700 = vcmp.ge.f32.partialorder %v3572, 0.0
  %vm3701 = vcmp.ge.f32.partialorder %v3573, 0.0
  %vm3702 = vcmp.ge.f32.partialorder %v3574, 0.0
  %vm3703 = vcmp.ge.f32.partialorder %v3575, 0.0
  %vm3704 = vcmp.ge.f32.partialorder %v3576, 0.0
  %vm3705 = vcmp.ge.f32.partialorder %v3577, 0.0
  %vm3706 = vcmp.ge.f32.partialorder %v3578, 0.0
  %vm3707 = vcmp.ge.f32.partialorder %v3579, 0.0
  %vm3708 = vcmp.ge.f32.partialorder %v3580, 0.0
  %vm3709 = vcmp.ge.f32.partialorder %v3581, 0.0
  %vm3710 = vcmp.ge.f32.partialorder %v3582, 0.0
  %vm3711 = vcmp.ge.f32.partialorder %v3583, 0.0
  %vm3712 = vcmp.ge.f32.partialorder %v3584, 0.0
  %vm3713 = vcmp.ge.f32.partialorder %v3585, 0.0
  %vm3714 = vcmp.ge.f32.partialorder %v3586, 0.0
  %vm3715 = vcmp.ge.f32.partialorder %v3587, 0.0
  %vm3716 = vcmp.ge.f32.partialorder %v3588, 0.0
  %vm3717 = vcmp.ge.f32.partialorder %v3589, 0.0
  %vm3718 = vcmp.ge.f32.partialorder %v3590, 0.0
  %vm3719 = vcmp.ge.f32.partialorder %v3591, 0.0
  %vm3720 = vcmp.ge.f32.partialorder %v3592, 0.0
  %vm3721 = vcmp.ge.f32.partialorder %v3593, 0.0
  %vm3722 = vcmp.ge.f32.partialorder %v3594, 0.0
  %vm3723 = vcmp.ge.f32.partialorder %v3595, 0.0
  %vm3724 = vcmp.ge.f32.partialorder %v3596, 0.0
  %vm3725 = vcmp.ge.f32.partialorder %v3597, 0.0
  %vm3726 = vcmp.ge.f32.partialorder %v3598, 0.0
  %vm3727 = vcmp.ge.f32.partialorder %v3599, 0.0
  %vm3728 = vcmp.ge.f32.partialorder %v3600, 0.0
  %vm3729 = vcmp.ge.f32.partialorder %v3601, 0.0
  %vm3730 = vcmp.ge.f32.partialorder %v3602, 0.0
  %vm3731 = vcmp.ge.f32.partialorder %v3603, 0.0
  %vm3732 = vcmp.ge.f32.partialorder %v3604, 0.0
  %vm3733 = vcmp.ge.f32.partialorder %v3605, 0.0
  %vm3734 = vcmp.ge.f32.partialorder %v3606, 0.0
  %vm3735 = vcmp.ge.f32.partialorder %v3607, 0.0
  %vm3736 = vcmp.ge.f32.partialorder %v3608, 0.0
  %vm3737 = vcmp.ge.f32.partialorder %v3609, 0.0
  %vm3738 = vcmp.ge.f32.partialorder %v3610, 0.0
  %vm3739 = vcmp.ge.f32.partialorder %v3611, 0.0
  %vm3740 = vcmp.ge.f32.partialorder %v3612, 0.0
  %vm3741 = vcmp.ge.f32.partialorder %v3613, 0.0
  %vm3742 = vcmp.ge.f32.partialorder %v3614, 0.0
  %vm3743 = vcmp.ge.f32.partialorder %v3615, 0.0
  %vm3744 = vcmp.ge.f32.partialorder %v3616, 0.0
  %vm3745 = vcmp.ge.f32.partialorder %v3617, 0.0
  %vm3746 = vcmp.ge.f32.partialorder %v3618, 0.0
  %vm3747 = vcmp.ge.f32.partialorder %v3619, 0.0
  %vm3748 = vcmp.ge.f32.partialorder %v3620, 0.0
  %vm3749 = vcmp.ge.f32.partialorder %v3621, 0.0
  %vm3750 = vcmp.ge.f32.partialorder %v3622, 0.0
  %vm3751 = vcmp.ge.f32.partialorder %v3623, 0.0
  %vm3752 = vcmp.ge.f32.partialorder %v3624, 0.0
  %vm3753 = vcmp.ge.f32.partialorder %v3625, 0.0
  %vm3754 = vcmp.ge.f32.partialorder %v3626, 0.0
  %vm3755 = vcmp.ge.f32.partialorder %v3627, 0.0
  %vm3756 = vcmp.ge.f32.partialorder %v3628, 0.0
  %vm3757 = vcmp.ge.f32.partialorder %v3629, 0.0
  %vm3758 = vcmp.ge.f32.partialorder %v3630, 0.0
  %vm3759 = vcmp.ge.f32.partialorder %v3631, 0.0
  %vm3760 = vcmp.ge.f32.partialorder %v3632, 0.0
  %vm3761 = vcmp.ge.f32.partialorder %v3633, 0.0
  %vm3762 = vcmp.ge.f32.partialorder %v3634, 0.0
  %vm3763 = vcmp.ge.f32.partialorder %v3635, 0.0
  %vm3764 = vcmp.ge.f32.partialorder %v3636, 0.0
  %vm3765 = vcmp.ge.f32.partialorder %v3637, 0.0
  %vm3766 = vcmp.ge.f32.partialorder %v3638, 0.0
  %vm3767 = vcmp.ge.f32.partialorder %v3639, 0.0
  %vm3768 = vcmp.ge.f32.partialorder %v3640, 0.0
  %vm3769 = vcmp.ge.f32.partialorder %v3641, 0.0
  %vm3770 = vcmp.ge.f32.partialorder %v3642, 0.0
  %vm3771 = vcmp.ge.f32.partialorder %v3643, 0.0
  %vm3772 = vcmp.ge.f32.partialorder %v3644, 0.0
  %vm3773 = vcmp.ge.f32.partialorder %v3645, 0.0
  %vm3774 = vcmp.ge.f32.partialorder %v3646, 0.0
  %vm3775 = vcmp.ge.f32.partialorder %v3647, 0.0
  %vm3776 = vcmp.ge.f32.partialorder %v3648, 0.0
  %vm3777 = vcmp.ge.f32.partialorder %v3649, 0.0
  %vm3778 = vcmp.ge.f32.partialorder %v3650, 0.0
  %vm3779 = vcmp.ge.f32.partialorder %v3651, 0.0
  %vm3780 = vcmp.ge.f32.partialorder %v3652, 0.0
  %vm3781 = vcmp.ge.f32.partialorder %v3653, 0.0
  %vm3782 = vcmp.ge.f32.partialorder %v3654, 0.0
  %vm3783 = vcmp.ge.f32.partialorder %v3655, 0.0
  %vm3784 = vcmp.ge.f32.partialorder %v3656, 0.0
  %vm3785 = vcmp.ge.f32.partialorder %v3657, 0.0
  %vm3786 = vcmp.ge.f32.partialorder %v3658, 0.0
  %vm3787 = vcmp.ge.f32.partialorder %v3659, 0.0
  %vm3788 = vcmp.ge.f32.partialorder %v3660, 0.0
  %vm3789 = vcmp.ge.f32.partialorder %v3661, 0.0
  %vm3790 = vcmp.ge.f32.partialorder %v3662, 0.0
  %v3791 = vmul.f32 %v3535, 0.2
  %v3792 = vmul.f32 %v3536, 0.2
  %v3793 = vmul.f32 %v3537, 0.2
  %v3794 = vmul.f32 %v3538, 0.2
  %v3795 = vmul.f32 %v3539, 0.2
  %v3796 = vmul.f32 %v3540, 0.2
  %v3797 = vmul.f32 %v3541, 0.2
  %v3798 = vmul.f32 %v3542, 0.2
  %v3799 = vmul.f32 %v3543, 0.2
  %v3800 = vmul.f32 %v3544, 0.2
  %v3801 = vmul.f32 %v3545, 0.2
  %v3802 = vmul.f32 %v3546, 0.2
  %v3803 = vmul.f32 %v3547, 0.2
  %v3804 = vmul.f32 %v3548, 0.2
  %v3805 = vmul.f32 %v3549, 0.2
  %v3806 = vmul.f32 %v3550, 0.2
  %v3807 = vmul.f32 %v3551, 0.2
  %v3808 = vmul.f32 %v3552, 0.2
  %v3809 = vmul.f32 %v3553, 0.2
  %v3810 = vmul.f32 %v3554, 0.2
  %v3811 = vmul.f32 %v3555, 0.2
  %v3812 = vmul.f32 %v3556, 0.2
  %v3813 = vmul.f32 %v3557, 0.2
  %v3814 = vmul.f32 %v3558, 0.2
  %v3815 = vmul.f32 %v3559, 0.2
  %v3816 = vmul.f32 %v3560, 0.2
  %v3817 = vmul.f32 %v3561, 0.2
  %v3818 = vmul.f32 %v3562, 0.2
  %v3819 = vmul.f32 %v3563, 0.2
  %v3820 = vmul.f32 %v3564, 0.2
  %v3821 = vmul.f32 %v3565, 0.2
  %v3822 = vmul.f32 %v3566, 0.2
  %v3823 = vmul.f32 %v3567, 0.2
  %v3824 = vmul.f32 %v3568, 0.2
  %v3825 = vmul.f32 %v3569, 0.2
  %v3826 = vmul.f32 %v3570, 0.2
  %v3827 = vmul.f32 %v3571, 0.2
  %v3828 = vmul.f32 %v3572, 0.2
  %v3829 = vmul.f32 %v3573, 0.2
  %v3830 = vmul.f32 %v3574, 0.2
  %v3831 = vmul.f32 %v3575, 0.2
  %v3832 = vmul.f32 %v3576, 0.2
  %v3833 = vmul.f32 %v3577, 0.2
  %v3834 = vmul.f32 %v3578, 0.2
  %v3835 = vmul.f32 %v3579, 0.2
  %v3836 = vmul.f32 %v3580, 0.2
  %v3837 = vmul.f32 %v3581, 0.2
  %v3838 = vmul.f32 %v3582, 0.2
  %v3839 = vmul.f32 %v3583, 0.2
  %v3840 = vmul.f32 %v3584, 0.2
  %v3841 = vmul.f32 %v3585, 0.2
  %v3842 = vmul.f32 %v3586, 0.2
  %v3843 = vmul.f32 %v3587, 0.2
  %v3844 = vmul.f32 %v3588, 0.2
  %v3845 = vmul.f32 %v3589, 0.2
  %v3846 = vmul.f32 %v3590, 0.2
  %v3847 = vmul.f32 %v3591, 0.2
  %v3848 = vmul.f32 %v3592, 0.2
  %v3849 = vmul.f32 %v3593, 0.2
  %v3850 = vmul.f32 %v3594, 0.2
  %v3851 = vmul.f32 %v3595, 0.2
  %v3852 = vmul.f32 %v3596, 0.2
  %v3853 = vmul.f32 %v3597, 0.2
  %v3854 = vmul.f32 %v3598, 0.2
  %v3855 = vmul.f32 %v3599, 0.2
  %v3856 = vmul.f32 %v3600, 0.2
  %v3857 = vmul.f32 %v3601, 0.2
  %v3858 = vmul.f32 %v3602, 0.2
  %v3859 = vmul.f32 %v3603, 0.2
  %v3860 = vmul.f32 %v3604, 0.2
  %v3861 = vmul.f32 %v3605, 0.2
  %v3862 = vmul.f32 %v3606, 0.2
  %v3863 = vmul.f32 %v3607, 0.2
  %v3864 = vmul.f32 %v3608, 0.2
  %v3865 = vmul.f32 %v3609, 0.2
  %v3866 = vmul.f32 %v3610, 0.2
  %v3867 = vmul.f32 %v3611, 0.2
  %v3868 = vmul.f32 %v3612, 0.2
  %v3869 = vmul.f32 %v3613, 0.2
  %v3870 = vmul.f32 %v3614, 0.2
  %v3871 = vmul.f32 %v3615, 0.2
  %v3872 = vmul.f32 %v3616, 0.2
  %v3873 = vmul.f32 %v3617, 0.2
  %v3874 = vmul.f32 %v3618, 0.2
  %v3875 = vmul.f32 %v3619, 0.2
  %v3876 = vmul.f32 %v3620, 0.2
  %v3877 = vmul.f32 %v3621, 0.2
  %v3878 = vmul.f32 %v3622, 0.2
  %v3879 = vmul.f32 %v3623, 0.2
  %v3880 = vmul.f32 %v3624, 0.2
  %v3881 = vmul.f32 %v3625, 0.2
  %v3882 = vmul.f32 %v3626, 0.2
  %v3883 = vmul.f32 %v3627, 0.2
  %v3884 = vmul.f32 %v3628, 0.2
  %v3885 = vmul.f32 %v3629, 0.2
  %v3886 = vmul.f32 %v3630, 0.2
  %v3887 = vmul.f32 %v3631, 0.2
  %v3888 = vmul.f32 %v3632, 0.2
  %v3889 = vmul.f32 %v3633, 0.2
  %v3890 = vmul.f32 %v3634, 0.2
  %v3891 = vmul.f32 %v3635, 0.2
  %v3892 = vmul.f32 %v3636, 0.2
  %v3893 = vmul.f32 %v3637, 0.2
  %v3894 = vmul.f32 %v3638, 0.2
  %v3895 = vmul.f32 %v3639, 0.2
  %v3896 = vmul.f32 %v3640, 0.2
  %v3897 = vmul.f32 %v3641, 0.2
  %v3898 = vmul.f32 %v3642, 0.2
  %v3899 = vmul.f32 %v3643, 0.2
  %v3900 = vmul.f32 %v3644, 0.2
  %v3901 = vmul.f32 %v3645, 0.2
  %v3902 = vmul.f32 %v3646, 0.2
  %v3903 = vmul.f32 %v3647, 0.2
  %v3904 = vmul.f32 %v3648, 0.2
  %v3905 = vmul.f32 %v3649, 0.2
  %v3906 = vmul.f32 %v3650, 0.2
  %v3907 = vmul.f32 %v3651, 0.2
  %v3908 = vmul.f32 %v3652, 0.2
  %v3909 = vmul.f32 %v3653, 0.2
  %v3910 = vmul.f32 %v3654, 0.2
  %v3911 = vmul.f32 %v3655, 0.2
  %v3912 = vmul.f32 %v3656, 0.2
  %v3913 = vmul.f32 %v3657, 0.2
  %v3914 = vmul.f32 %v3658, 0.2
  %v3915 = vmul.f32 %v3659, 0.2
  %v3916 = vmul.f32 %v3660, 0.2
  %v3917 = vmul.f32 %v3661, 0.2
  %v3918 = vmul.f32 %v3662, 0.2
  %v3919 = vsel %vm3663, %v3535, %v3791
  %v3920 = vsel %vm3664, %v3536, %v3792
  %v3921 = vsel %vm3665, %v3537, %v3793
  %v3922 = vsel %vm3666, %v3538, %v3794
  %v3923 = vsel %vm3667, %v3539, %v3795
  %v3924 = vsel %vm3668, %v3540, %v3796
  %v3925 = vsel %vm3669, %v3541, %v3797
  %v3926 = vsel %vm3670, %v3542, %v3798
  %v3927 = vsel %vm3671, %v3543, %v3799
  %v3928 = vsel %vm3672, %v3544, %v3800
  %v3929 = vsel %vm3673, %v3545, %v3801
  %v3930 = vsel %vm3674, %v3546, %v3802
  %v3931 = vsel %vm3675, %v3547, %v3803
  %v3932 = vsel %vm3676, %v3548, %v3804
  %v3933 = vsel %vm3677, %v3549, %v3805
  %v3934 = vsel %vm3678, %v3550, %v3806
  %v3935 = vsel %vm3679, %v3551, %v3807
  %v3936 = vsel %vm3680, %v3552, %v3808
  %v3937 = vsel %vm3681, %v3553, %v3809
  %v3938 = vsel %vm3682, %v3554, %v3810
  %v3939 = vsel %vm3683, %v3555, %v3811
  %v3940 = vsel %vm3684, %v3556, %v3812
  %v3941 = vsel %vm3685, %v3557, %v3813
  %v3942 = vsel %vm3686, %v3558, %v3814
  %v3943 = vsel %vm3687, %v3559, %v3815
  %v3944 = vsel %vm3688, %v3560, %v3816
  %v3945 = vsel %vm3689, %v3561, %v3817
  %v3946 = vsel %vm3690, %v3562, %v3818
  %v3947 = vsel %vm3691, %v3563, %v3819
  %v3948 = vsel %vm3692, %v3564, %v3820
  %v3949 = vsel %vm3693, %v3565, %v3821
  %v3950 = vsel %vm3694, %v3566, %v3822
  %v3951 = vsel %vm3695, %v3567, %v3823
  %v3952 = vsel %vm3696, %v3568, %v3824
  %v3953 = vsel %vm3697, %v3569, %v3825
  %v3954 = vsel %vm3698, %v3570, %v3826
  %v3955 = vsel %vm3699, %v3571, %v3827
  %v3956 = vsel %vm3700, %v3572, %v3828
  %v3957 = vsel %vm3701, %v3573, %v3829
  %v3958 = vsel %vm3702, %v3574, %v3830
  %v3959 = vsel %vm3703, %v3575, %v3831
  %v3960 = vsel %vm3704, %v3576, %v3832
  %v3961 = vsel %vm3705, %v3577, %v3833
  %v3962 = vsel %vm3706, %v3578, %v3834
  %v3963 = vsel %vm3707, %v3579, %v3835
  %v3964 = vsel %vm3708, %v3580, %v3836
  %v3965 = vsel %vm3709, %v3581, %v3837
  %v3966 = vsel %vm3710, %v3582, %v3838
  %v3967 = vsel %vm3711, %v3583, %v3839
  %v3968 = vsel %vm3712, %v3584, %v3840
  %v3969 = vsel %vm3713, %v3585, %v3841
  %v3970 = vsel %vm3714, %v3586, %v3842
  %v3971 = vsel %vm3715, %v3587, %v3843
  %v3972 = vsel %vm3716, %v3588, %v3844
  %v3973 = vsel %vm3717, %v3589, %v3845
  %v3974 = vsel %vm3718, %v3590, %v3846
  %v3975 = vsel %vm3719, %v3591, %v3847
  %v3976 = vsel %vm3720, %v3592, %v3848
  %v3977 = vsel %vm3721, %v3593, %v3849
  %v3978 = vsel %vm3722, %v3594, %v3850
  %v3979 = vsel %vm3723, %v3595, %v3851
  %v3980 = vsel %vm3724, %v3596, %v3852
  %v3981 = vsel %vm3725, %v3597, %v3853
  %v3982 = vsel %vm3726, %v3598, %v3854
  %v3983 = vsel %vm3727, %v3599, %v3855
  %v3984 = vsel %vm3728, %v3600, %v3856
  %v3985 = vsel %vm3729, %v3601, %v3857
  %v3986 = vsel %vm3730, %v3602, %v3858
  %v3987 = vsel %vm3731, %v3603, %v3859
  %v3988 = vsel %vm3732, %v3604, %v3860
  %v3989 = vsel %vm3733, %v3605, %v3861
  %v3990 = vsel %vm3734, %v3606, %v3862
  %v3991 = vsel %vm3735, %v3607, %v3863
  %v3992 = vsel %vm3736, %v3608, %v3864
  %v3993 = vsel %vm3737, %v3609, %v3865
  %v3994 = vsel %vm3738, %v3610, %v3866
  %v3995 = vsel %vm3739, %v3611, %v3867
  %v3996 = vsel %vm3740, %v3612, %v3868
  %v3997 = vsel %vm3741, %v3613, %v3869
  %v3998 = vsel %vm3742, %v3614, %v3870
  %v3999 = vsel %vm3743, %v3615, %v3871
  %v4000 = vsel %vm3744, %v3616, %v3872
  %v4001 = vsel %vm3745, %v3617, %v3873
  %v4002 = vsel %vm3746, %v3618, %v3874
  %v4003 = vsel %vm3747, %v3619, %v3875
  %v4004 = vsel %vm3748, %v3620, %v3876
  %v4005 = vsel %vm3749, %v3621, %v3877
  %v4006 = vsel %vm3750, %v3622, %v3878
  %v4007 = vsel %vm3751, %v3623, %v3879
  %v4008 = vsel %vm3752, %v3624, %v3880
  %v4009 = vsel %vm3753, %v3625, %v3881
  %v4010 = vsel %vm3754, %v3626, %v3882
  %v4011 = vsel %vm3755, %v3627, %v3883
  %v4012 = vsel %vm3756, %v3628, %v3884
  %v4013 = vsel %vm3757, %v3629, %v3885
  %v4014 = vsel %vm3758, %v3630, %v3886
  %v4015 = vsel %vm3759, %v3631, %v3887
  %v4016 = vsel %vm3760, %v3632, %v3888
  %v4017 = vsel %vm3761, %v3633, %v3889
  %v4018 = vsel %vm3762, %v3634, %v3890
  %v4019 = vsel %vm3763, %v3635, %v3891
  %v4020 = vsel %vm3764, %v3636, %v3892
  %v4021 = vsel %vm3765, %v3637, %v3893
  %v4022 = vsel %vm3766, %v3638, %v3894
  %v4023 = vsel %vm3767, %v3639, %v3895
  %v4024 = vsel %vm3768, %v3640, %v3896
  %v4025 = vsel %vm3769, %v3641, %v3897
  %v4026 = vsel %vm3770, %v3642, %v3898
  %v4027 = vsel %vm3771, %v3643, %v3899
  %v4028 = vsel %vm3772, %v3644, %v3900
  %v4029 = vsel %vm3773, %v3645, %v3901
  %v4030 = vsel %vm3774, %v3646, %v3902
  %v4031 = vsel %vm3775, %v3647, %v3903
  %v4032 = vsel %vm3776, %v3648, %v3904
  %v4033 = vsel %vm3777, %v3649, %v3905
  %v4034 = vsel %vm3778, %v3650, %v3906
  %v4035 = vsel %vm3779, %v3651, %v3907
  %v4036 = vsel %vm3780, %v3652, %v3908
  %v4037 = vsel %vm3781, %v3653, %v3909
  %v4038 = vsel %vm3782, %v3654, %v3910
  %v4039 = vsel %vm3783, %v3655, %v3911
  %v4040 = vsel %vm3784, %v3656, %v3912
  %v4041 = vsel %vm3785, %v3657, %v3913
  %v4042 = vsel %vm3786, %v3658, %v3914
  %v4043 = vsel %vm3787, %v3659, %v3915
  %v4044 = vsel %vm3788, %v3660, %v3916
  %v4045 = vsel %vm3789, %v3661, %v3917
  %v4046 = vsel %vm3790, %v3662, %v3918
  %v4047 = vpack.c.bf16 %v3920, %v3919
  %v4048 = vpack.c.bf16 %v3922, %v3921
  %v4049 = vpack.c.bf16 %v3924, %v3923
  %v4050 = vpack.c.bf16 %v3926, %v3925
  %v4051 = vpack.c.bf16 %v3928, %v3927
  %v4052 = vpack.c.bf16 %v3930, %v3929
  %v4053 = vpack.c.bf16 %v3932, %v3931
  %v4054 = vpack.c.bf16 %v3934, %v3933
  %v4055 = vpack.c.bf16 %v3936, %v3935
  %v4056 = vpack.c.bf16 %v3938, %v3937
  %v4057 = vpack.c.bf16 %v3940, %v3939
  %v4058 = vpack.c.bf16 %v3942, %v3941
  %v4059 = vpack.c.bf16 %v3944, %v3943
  %v4060 = vpack.c.bf16 %v3946, %v3945
  %v4061 = vpack.c.bf16 %v3948, %v3947
  %v4062 = vpack.c.bf16 %v3950, %v3949
  %v4063 = vpack.c.bf16 %v3952, %v3951
  %v4064 = vpack.c.bf16 %v3954, %v3953
  %v4065 = vpack.c.bf16 %v3956, %v3955
  %v4066 = vpack.c.bf16 %v3958, %v3957
  %v4067 = vpack.c.bf16 %v3960, %v3959
  %v4068 = vpack.c.bf16 %v3962, %v3961
  %v4069 = vpack.c.bf16 %v3964, %v3963
  %v4070 = vpack.c.bf16 %v3966, %v3965
  %v4071 = vpack.c.bf16 %v3968, %v3967
  %v4072 = vpack.c.bf16 %v3970, %v3969
  %v4073 = vpack.c.bf16 %v3972, %v3971
  %v4074 = vpack.c.bf16 %v3974, %v3973
  %v4075 = vpack.c.bf16 %v3976, %v3975
  %v4076 = vpack.c.bf16 %v3978, %v3977
  %v4077 = vpack.c.bf16 %v3980, %v3979
  %v4078 = vpack.c.bf16 %v3982, %v3981
  %v4079 = vpack.c.bf16 %v3984, %v3983
  %v4080 = vpack.c.bf16 %v3986, %v3985
  %v4081 = vpack.c.bf16 %v3988, %v3987
  %v4082 = vpack.c.bf16 %v3990, %v3989
  %v4083 = vpack.c.bf16 %v3992, %v3991
  %v4084 = vpack.c.bf16 %v3994, %v3993
  %v4085 = vpack.c.bf16 %v3996, %v3995
  %v4086 = vpack.c.bf16 %v3998, %v3997
  %v4087 = vpack.c.bf16 %v4000, %v3999
  %v4088 = vpack.c.bf16 %v4002, %v4001
  %v4089 = vpack.c.bf16 %v4004, %v4003
  %v4090 = vpack.c.bf16 %v4006, %v4005
  %v4091 = vpack.c.bf16 %v4008, %v4007
  %v4092 = vpack.c.bf16 %v4010, %v4009
  %v4093 = vpack.c.bf16 %v4012, %v4011
  %v4094 = vpack.c.bf16 %v4014, %v4013
  %v4095 = vpack.c.bf16 %v4016, %v4015
  %v4096 = vpack.c.bf16 %v4018, %v4017
  %v4097 = vpack.c.bf16 %v4020, %v4019
  %v4098 = vpack.c.bf16 %v4022, %v4021
  %v4099 = vpack.c.bf16 %v4024, %v4023
  %v4100 = vpack.c.bf16 %v4026, %v4025
  %v4101 = vpack.c.bf16 %v4028, %v4027
  %v4102 = vpack.c.bf16 %v4030, %v4029
  %v4103 = vpack.c.bf16 %v4032, %v4031
  %v4104 = vpack.c.bf16 %v4034, %v4033
  %v4105 = vpack.c.bf16 %v4036, %v4035
  %v4106 = vpack.c.bf16 %v4038, %v4037
  %v4107 = vpack.c.bf16 %v4040, %v4039
  %v4108 = vpack.c.bf16 %v4042, %v4041
  %v4109 = vpack.c.bf16 %v4044, %v4043
  %v4110 = vpack.c.bf16 %v4046, %v4045
  %v4175 = vunpack.c.l.b16 %v4047
  %v4176 = vunpack.c.h.b16 %v4047
  %v4177 = vunpack.c.l.b16 %v4048
  %v4178 = vunpack.c.h.b16 %v4048
  %v4179 = vunpack.c.l.b16 %v4049
  %v4180 = vunpack.c.h.b16 %v4049
  %v4181 = vunpack.c.l.b16 %v4050
  %v4182 = vunpack.c.h.b16 %v4050
  %v4183 = vunpack.c.l.b16 %v4051
  %v4184 = vunpack.c.h.b16 %v4051
  %v4185 = vunpack.c.l.b16 %v4052
  %v4186 = vunpack.c.h.b16 %v4052
  %v4187 = vunpack.c.l.b16 %v4053
  %v4188 = vunpack.c.h.b16 %v4053
  %v4189 = vunpack.c.l.b16 %v4054
  %v4190 = vunpack.c.h.b16 %v4054
  %v4191 = vunpack.c.l.b16 %v4055
  %v4192 = vunpack.c.h.b16 %v4055
  %v4193 = vunpack.c.l.b16 %v4056
  %v4194 = vunpack.c.h.b16 %v4056
  %v4195 = vunpack.c.l.b16 %v4057
  %v4196 = vunpack.c.h.b16 %v4057
  %v4197 = vunpack.c.l.b16 %v4058
  %v4198 = vunpack.c.h.b16 %v4058
  %v4199 = vunpack.c.l.b16 %v4059
  %v4200 = vunpack.c.h.b16 %v4059
  %v4201 = vunpack.c.l.b16 %v4060
  %v4202 = vunpack.c.h.b16 %v4060
  %v4203 = vunpack.c.l.b16 %v4061
  %v4204 = vunpack.c.h.b16 %v4061
  %v4205 = vunpack.c.l.b16 %v4062
  %v4206 = vunpack.c.h.b16 %v4062
  %v4207 = vunpack.c.l.b16 %v4063
  %v4208 = vunpack.c.h.b16 %v4063
  %v4209 = vunpack.c.l.b16 %v4064
  %v4210 = vunpack.c.h.b16 %v4064
  %v4211 = vunpack.c.l.b16 %v4065
  %v4212 = vunpack.c.h.b16 %v4065
  %v4213 = vunpack.c.l.b16 %v4066
  %v4214 = vunpack.c.h.b16 %v4066
  %v4215 = vunpack.c.l.b16 %v4067
  %v4216 = vunpack.c.h.b16 %v4067
  %v4217 = vunpack.c.l.b16 %v4068
  %v4218 = vunpack.c.h.b16 %v4068
  %v4219 = vunpack.c.l.b16 %v4069
  %v4220 = vunpack.c.h.b16 %v4069
  %v4221 = vunpack.c.l.b16 %v4070
  %v4222 = vunpack.c.h.b16 %v4070
  %v4223 = vunpack.c.l.b16 %v4071
  %v4224 = vunpack.c.h.b16 %v4071
  %v4225 = vunpack.c.l.b16 %v4072
  %v4226 = vunpack.c.h.b16 %v4072
  %v4227 = vunpack.c.l.b16 %v4073
  %v4228 = vunpack.c.h.b16 %v4073
  %v4229 = vunpack.c.l.b16 %v4074
  %v4230 = vunpack.c.h.b16 %v4074
  %v4231 = vunpack.c.l.b16 %v4075
  %v4232 = vunpack.c.h.b16 %v4075
  %v4233 = vunpack.c.l.b16 %v4076
  %v4234 = vunpack.c.h.b16 %v4076
  %v4235 = vunpack.c.l.b16 %v4077
  %v4236 = vunpack.c.h.b16 %v4077
  %v4237 = vunpack.c.l.b16 %v4078
  %v4238 = vunpack.c.h.b16 %v4078
  %v4239 = vunpack.c.l.b16 %v4079
  %v4240 = vunpack.c.h.b16 %v4079
  %v4241 = vunpack.c.l.b16 %v4080
  %v4242 = vunpack.c.h.b16 %v4080
  %v4243 = vunpack.c.l.b16 %v4081
  %v4244 = vunpack.c.h.b16 %v4081
  %v4245 = vunpack.c.l.b16 %v4082
  %v4246 = vunpack.c.h.b16 %v4082
  %v4247 = vunpack.c.l.b16 %v4083
  %v4248 = vunpack.c.h.b16 %v4083
  %v4249 = vunpack.c.l.b16 %v4084
  %v4250 = vunpack.c.h.b16 %v4084
  %v4251 = vunpack.c.l.b16 %v4085
  %v4252 = vunpack.c.h.b16 %v4085
  %v4253 = vunpack.c.l.b16 %v4086
  %v4254 = vunpack.c.h.b16 %v4086
  %v4255 = vunpack.c.l.b16 %v4087
  %v4256 = vunpack.c.h.b16 %v4087
  %v4257 = vunpack.c.l.b16 %v4088
  %v4258 = vunpack.c.h.b16 %v4088
  %v4259 = vunpack.c.l.b16 %v4089
  %v4260 = vunpack.c.h.b16 %v4089
  %v4261 = vunpack.c.l.b16 %v4090
  %v4262 = vunpack.c.h.b16 %v4090
  %v4263 = vunpack.c.l.b16 %v4091
  %v4264 = vunpack.c.h.b16 %v4091
  %v4265 = vunpack.c.l.b16 %v4092
  %v4266 = vunpack.c.h.b16 %v4092
  %v4267 = vunpack.c.l.b16 %v4093
  %v4268 = vunpack.c.h.b16 %v4093
  %v4269 = vunpack.c.l.b16 %v4094
  %v4270 = vunpack.c.h.b16 %v4094
  %v4271 = vunpack.c.l.b16 %v4095
  %v4272 = vunpack.c.h.b16 %v4095
  %v4273 = vunpack.c.l.b16 %v4096
  %v4274 = vunpack.c.h.b16 %v4096
  %v4275 = vunpack.c.l.b16 %v4097
  %v4276 = vunpack.c.h.b16 %v4097
  %v4277 = vunpack.c.l.b16 %v4098
  %v4278 = vunpack.c.h.b16 %v4098
  %v4279 = vunpack.c.l.b16 %v4099
  %v4280 = vunpack.c.h.b16 %v4099
  %v4281 = vunpack.c.l.b16 %v4100
  %v4282 = vunpack.c.h.b16 %v4100
  %v4283 = vunpack.c.l.b16 %v4101
  %v4284 = vunpack.c.h.b16 %v4101
  %v4285 = vunpack.c.l.b16 %v4102
  %v4286 = vunpack.c.h.b16 %v4102
  %v4287 = vunpack.c.l.b16 %v4103
  %v4288 = vunpack.c.h.b16 %v4103
  %v4289 = vunpack.c.l.b16 %v4104
  %v4290 = vunpack.c.h.b16 %v4104
  %v4291 = vunpack.c.l.b16 %v4105
  %v4292 = vunpack.c.h.b16 %v4105
  %v4293 = vunpack.c.l.b16 %v4106
  %v4294 = vunpack.c.h.b16 %v4106
  %v4295 = vunpack.c.l.b16 %v4107
  %v4296 = vunpack.c.h.b16 %v4107
  %v4297 = vunpack.c.l.b16 %v4108
  %v4298 = vunpack.c.h.b16 %v4108
  %v4299 = vunpack.c.l.b16 %v4109
  %v4300 = vunpack.c.h.b16 %v4109
  %v4301 = vunpack.c.l.b16 %v4110
  %v4302 = vunpack.c.h.b16 %v4110
  %v4303 = vpack.c.b16 %v4175, %v4175
  %v4304 = vpack.c.b16 %v4176, %v4176
  %v4305 = vpack.c.b16 %v4177, %v4177
  %v4306 = vpack.c.b16 %v4178, %v4178
  %v4307 = vpack.c.b16 %v4179, %v4179
  %v4308 = vpack.c.b16 %v4180, %v4180
  %v4309 = vpack.c.b16 %v4181, %v4181
  %v4310 = vpack.c.b16 %v4182, %v4182
  %v4311 = vpack.c.b16 %v4183, %v4183
  %v4312 = vpack.c.b16 %v4184, %v4184
  %v4313 = vpack.c.b16 %v4185, %v4185
  %v4314 = vpack.c.b16 %v4186, %v4186
  %v4315 = vpack.c.b16 %v4187, %v4187
  %v4316 = vpack.c.b16 %v4188, %v4188
  %v4317 = vpack.c.b16 %v4189, %v4189
  %v4318 = vpack.c.b16 %v4190, %v4190
  %v4319 = vpack.c.b16 %v4191, %v4191
  %v4320 = vpack.c.b16 %v4192, %v4192
  %v4321 = vpack.c.b16 %v4193, %v4193
  %v4322 = vpack.c.b16 %v4194, %v4194
  %v4323 = vpack.c.b16 %v4195, %v4195
  %v4324 = vpack.c.b16 %v4196, %v4196
  %v4325 = vpack.c.b16 %v4197, %v4197
  %v4326 = vpack.c.b16 %v4198, %v4198
  %v4327 = vpack.c.b16 %v4199, %v4199
  %v4328 = vpack.c.b16 %v4200, %v4200
  %v4329 = vpack.c.b16 %v4201, %v4201
  %v4330 = vpack.c.b16 %v4202, %v4202
  %v4331 = vpack.c.b16 %v4203, %v4203
  %v4332 = vpack.c.b16 %v4204, %v4204
  %v4333 = vpack.c.b16 %v4205, %v4205
  %v4334 = vpack.c.b16 %v4206, %v4206
  %v4335 = vpack.c.b16 %v4207, %v4207
  %v4336 = vpack.c.b16 %v4208, %v4208
  %v4337 = vpack.c.b16 %v4209, %v4209
  %v4338 = vpack.c.b16 %v4210, %v4210
  %v4339 = vpack.c.b16 %v4211, %v4211
  %v4340 = vpack.c.b16 %v4212, %v4212
  %v4341 = vpack.c.b16 %v4213, %v4213
  %v4342 = vpack.c.b16 %v4214, %v4214
  %v4343 = vpack.c.b16 %v4215, %v4215
  %v4344 = vpack.c.b16 %v4216, %v4216
  %v4345 = vpack.c.b16 %v4217, %v4217
  %v4346 = vpack.c.b16 %v4218, %v4218
  %v4347 = vpack.c.b16 %v4219, %v4219
  %v4348 = vpack.c.b16 %v4220, %v4220
  %v4349 = vpack.c.b16 %v4221, %v4221
  %v4350 = vpack.c.b16 %v4222, %v4222
  %v4351 = vpack.c.b16 %v4223, %v4223
  %v4352 = vpack.c.b16 %v4224, %v4224
  %v4353 = vpack.c.b16 %v4225, %v4225
  %v4354 = vpack.c.b16 %v4226, %v4226
  %v4355 = vpack.c.b16 %v4227, %v4227
  %v4356 = vpack.c.b16 %v4228, %v4228
  %v4357 = vpack.c.b16 %v4229, %v4229
  %v4358 = vpack.c.b16 %v4230, %v4230
  %v4359 = vpack.c.b16 %v4231, %v4231
  %v4360 = vpack.c.b16 %v4232, %v4232
  %v4361 = vpack.c.b16 %v4233, %v4233
  %v4362 = vpack.c.b16 %v4234, %v4234
  %v4363 = vpack.c.b16 %v4235, %v4235
  %v4364 = vpack.c.b16 %v4236, %v4236
  %v4365 = vpack.c.b16 %v4237, %v4237
  %v4366 = vpack.c.b16 %v4238, %v4238
  %v4367 = vpack.c.b16 %v4239, %v4239
  %v4368 = vpack.c.b16 %v4240, %v4240
  %v4369 = vpack.c.b16 %v4241, %v4241
  %v4370 = vpack.c.b16 %v4242, %v4242
  %v4371 = vpack.c.b16 %v4243, %v4243
  %v4372 = vpack.c.b16 %v4244, %v4244
  %v4373 = vpack.c.b16 %v4245, %v4245
  %v4374 = vpack.c.b16 %v4246, %v4246
  %v4375 = vpack.c.b16 %v4247, %v4247
  %v4376 = vpack.c.b16 %v4248, %v4248
  %v4377 = vpack.c.b16 %v4249, %v4249
  %v4378 = vpack.c.b16 %v4250, %v4250
  %v4379 = vpack.c.b16 %v4251, %v4251
  %v4380 = vpack.c.b16 %v4252, %v4252
  %v4381 = vpack.c.b16 %v4253, %v4253
  %v4382 = vpack.c.b16 %v4254, %v4254
  %v4383 = vpack.c.b16 %v4255, %v4255
  %v4384 = vpack.c.b16 %v4256, %v4256
  %v4385 = vpack.c.b16 %v4257, %v4257
  %v4386 = vpack.c.b16 %v4258, %v4258
  %v4387 = vpack.c.b16 %v4259, %v4259
  %v4388 = vpack.c.b16 %v4260, %v4260
  %v4389 = vpack.c.b16 %v4261, %v4261
  %v4390 = vpack.c.b16 %v4262, %v4262
  %v4391 = vpack.c.b16 %v4263, %v4263
  %v4392 = vpack.c.b16 %v4264, %v4264
  %v4393 = vpack.c.b16 %v4265, %v4265
  %v4394 = vpack.c.b16 %v4266, %v4266
  %v4395 = vpack.c.b16 %v4267, %v4267
  %v4396 = vpack.c.b16 %v4268, %v4268
  %v4397 = vpack.c.b16 %v4269, %v4269
  %v4398 = vpack.c.b16 %v4270, %v4270
  %v4399 = vpack.c.b16 %v4271, %v4271
  %v4400 = vpack.c.b16 %v4272, %v4272
  %v4401 = vpack.c.b16 %v4273, %v4273
  %v4402 = vpack.c.b16 %v4274, %v4274
  %v4403 = vpack.c.b16 %v4275, %v4275
  %v4404 = vpack.c.b16 %v4276, %v4276
  %v4405 = vpack.c.b16 %v4277, %v4277
  %v4406 = vpack.c.b16 %v4278, %v4278
  %v4407 = vpack.c.b16 %v4279, %v4279
  %v4408 = vpack.c.b16 %v4280, %v4280
  %v4409 = vpack.c.b16 %v4281, %v4281
  %v4410 = vpack.c.b16 %v4282, %v4282
  %v4411 = vpack.c.b16 %v4283, %v4283
  %v4412 = vpack.c.b16 %v4284, %v4284
  %v4413 = vpack.c.b16 %v4285, %v4285
  %v4414 = vpack.c.b16 %v4286, %v4286
  %v4415 = vpack.c.b16 %v4287, %v4287
  %v4416 = vpack.c.b16 %v4288, %v4288
  %v4417 = vpack.c.b16 %v4289, %v4289
  %v4418 = vpack.c.b16 %v4290, %v4290
  %v4419 = vpack.c.b16 %v4291, %v4291
  %v4420 = vpack.c.b16 %v4292, %v4292
  %v4421 = vpack.c.b16 %v4293, %v4293
  %v4422 = vpack.c.b16 %v4294, %v4294
  %v4423 = vpack.c.b16 %v4295, %v4295
  %v4424 = vpack.c.b16 %v4296, %v4296
  %v4425 = vpack.c.b16 %v4297, %v4297
  %v4426 = vpack.c.b16 %v4298, %v4298
  %v4427 = vpack.c.b16 %v4299, %v4299
  %v4428 = vpack.c.b16 %v4300, %v4300
  %v4429 = vpack.c.b16 %v4301, %v4301
  %v4430 = vpack.c.b16 %v4302, %v4302
  %4559 = vst [vmem:[%s4] sm:$0xf] %v4303
  %4560 = vst [vmem:[%s4 + $0x4] sm:$0xf] %v4304
  %4561 = vst [vmem:[%s4 + $0x8] sm:$0xf] %v4305
  %4562 = vst [vmem:[%s4 + $0xc] sm:$0xf] %v4306
  %4563 = vst [vmem:[%s4 + $0x10] sm:$0xf] %v4307
  %4564 = vst [vmem:[%s4 + $0x14] sm:$0xf] %v4308
  %4565 = vst [vmem:[%s4 + $0x18] sm:$0xf] %v4309
  %4566 = vst [vmem:[%s4 + $0x1c] sm:$0xf] %v4310
  %4567 = vst [vmem:[%s4 + $0x20] sm:$0xf] %v4311
  %4568 = vst [vmem:[%s4 + $0x24] sm:$0xf] %v4312
  %4569 = vst [vmem:[%s4 + $0x28] sm:$0xf] %v4313
  %4570 = vst [vmem:[%s4 + $0x2c] sm:$0xf] %v4314
  %4571 = vst [vmem:[%s4 + $0x30] sm:$0xf] %v4315
  %4572 = vst [vmem:[%s4 + $0x34] sm:$0xf] %v4316
  %4573 = vst [vmem:[%s4 + $0x38] sm:$0xf] %v4317
  %4574 = vst [vmem:[%s4 + $0x3c] sm:$0xf] %v4318
  %4575 = vst [vmem:[%s4 + $0x40] sm:$0xf] %v4319
  %4576 = vst [vmem:[%s4 + $0x44] sm:$0xf] %v4320
  %4577 = vst [vmem:[%s4 + $0x48] sm:$0xf] %v4321
  %4578 = vst [vmem:[%s4 + $0x4c] sm:$0xf] %v4322
  %4579 = vst [vmem:[%s4 + $0x50] sm:$0xf] %v4323
  %4580 = vst [vmem:[%s4 + $0x54] sm:$0xf] %v4324
  %4581 = vst [vmem:[%s4 + $0x58] sm:$0xf] %v4325
  %4582 = vst [vmem:[%s4 + $0x5c] sm:$0xf] %v4326
  %4583 = vst [vmem:[%s4 + $0x60] sm:$0xf] %v4327
  %4584 = vst [vmem:[%s4 + $0x64] sm:$0xf] %v4328
  %4585 = vst [vmem:[%s4 + $0x68] sm:$0xf] %v4329
  %4586 = vst [vmem:[%s4 + $0x6c] sm:$0xf] %v4330
  %4587 = vst [vmem:[%s4 + $0x70] sm:$0xf] %v4331
  %4588 = vst [vmem:[%s4 + $0x74] sm:$0xf] %v4332
  %4589 = vst [vmem:[%s4 + $0x78] sm:$0xf] %v4333
  %4590 = vst [vmem:[%s4 + $0x7c] sm:$0xf] %v4334
  %4591 = vst [vmem:[%s4 + $0x80] sm:$0xf] %v4335
  %4592 = vst [vmem:[%s4 + $0x84] sm:$0xf] %v4336
  %4593 = vst [vmem:[%s4 + $0x88] sm:$0xf] %v4337
  %4594 = vst [vmem:[%s4 + $0x8c] sm:$0xf] %v4338
  %4595 = vst [vmem:[%s4 + $0x90] sm:$0xf] %v4339
  %4596 = vst [vmem:[%s4 + $0x94] sm:$0xf] %v4340
  %4597 = vst [vmem:[%s4 + $0x98] sm:$0xf] %v4341
  %4598 = vst [vmem:[%s4 + $0x9c] sm:$0xf] %v4342
  %4599 = vst [vmem:[%s4 + $0xa0] sm:$0xf] %v4343
  %4600 = vst [vmem:[%s4 + $0xa4] sm:$0xf] %v4344
  %4601 = vst [vmem:[%s4 + $0xa8] sm:$0xf] %v4345
  %4602 = vst [vmem:[%s4 + $0xac] sm:$0xf] %v4346
  %4603 = vst [vmem:[%s4 + $0xb0] sm:$0xf] %v4347
  %4604 = vst [vmem:[%s4 + $0xb4] sm:$0xf] %v4348
  %4605 = vst [vmem:[%s4 + $0xb8] sm:$0xf] %v4349
  %4606 = vst [vmem:[%s4 + $0xbc] sm:$0xf] %v4350
  %4607 = vst [vmem:[%s4 + $0xc0] sm:$0xf] %v4351
  %4608 = vst [vmem:[%s4 + $0xc4] sm:$0xf] %v4352
  %4609 = vst [vmem:[%s4 + $0xc8] sm:$0xf] %v4353
  %4610 = vst [vmem:[%s4 + $0xcc] sm:$0xf] %v4354
  %4611 = vst [vmem:[%s4 + $0xd0] sm:$0xf] %v4355
  %4612 = vst [vmem:[%s4 + $0xd4] sm:$0xf] %v4356
  %4613 = vst [vmem:[%s4 + $0xd8] sm:$0xf] %v4357
  %4614 = vst [vmem:[%s4 + $0xdc] sm:$0xf] %v4358
  %4615 = vst [vmem:[%s4 + $0xe0] sm:$0xf] %v4359
  %4616 = vst [vmem:[%s4 + $0xe4] sm:$0xf] %v4360
  %4617 = vst [vmem:[%s4 + $0xe8] sm:$0xf] %v4361
  %4618 = vst [vmem:[%s4 + $0xec] sm:$0xf] %v4362
  %4619 = vst [vmem:[%s4 + $0xf0] sm:$0xf] %v4363
  %4620 = vst [vmem:[%s4 + $0xf4] sm:$0xf] %v4364
  %4621 = vst [vmem:[%s4 + $0xf8] sm:$0xf] %v4365
  %4622 = vst [vmem:[%s4 + $0xfc] sm:$0xf] %v4366
  %4623 = vst [vmem:[%s4 + $0x100] sm:$0xf] %v4367
  %4624 = vst [vmem:[%s4 + $0x104] sm:$0xf] %v4368
  %4625 = vst [vmem:[%s4 + $0x108] sm:$0xf] %v4369
  %4626 = vst [vmem:[%s4 + $0x10c] sm:$0xf] %v4370
  %4627 = vst [vmem:[%s4 + $0x110] sm:$0xf] %v4371
  %4628 = vst [vmem:[%s4 + $0x114] sm:$0xf] %v4372
  %4629 = vst [vmem:[%s4 + $0x118] sm:$0xf] %v4373
  %4630 = vst [vmem:[%s4 + $0x11c] sm:$0xf] %v4374
  %4631 = vst [vmem:[%s4 + $0x120] sm:$0xf] %v4375
  %4632 = vst [vmem:[%s4 + $0x124] sm:$0xf] %v4376
  %4633 = vst [vmem:[%s4 + $0x128] sm:$0xf] %v4377
  %4634 = vst [vmem:[%s4 + $0x12c] sm:$0xf] %v4378
  %4635 = vst [vmem:[%s4 + $0x130] sm:$0xf] %v4379
  %4636 = vst [vmem:[%s4 + $0x134] sm:$0xf] %v4380
  %4637 = vst [vmem:[%s4 + $0x138] sm:$0xf] %v4381
  %4638 = vst [vmem:[%s4 + $0x13c] sm:$0xf] %v4382
  %4639 = vst [vmem:[%s4 + $0x140] sm:$0xf] %v4383
  %4640 = vst [vmem:[%s4 + $0x144] sm:$0xf] %v4384
  %4641 = vst [vmem:[%s4 + $0x148] sm:$0xf] %v4385
  %4642 = vst [vmem:[%s4 + $0x14c] sm:$0xf] %v4386
  %4643 = vst [vmem:[%s4 + $0x150] sm:$0xf] %v4387
  %4644 = vst [vmem:[%s4 + $0x154] sm:$0xf] %v4388
  %4645 = vst [vmem:[%s4 + $0x158] sm:$0xf] %v4389
  %4646 = vst [vmem:[%s4 + $0x15c] sm:$0xf] %v4390
  %4647 = vst [vmem:[%s4 + $0x160] sm:$0xf] %v4391
  %4648 = vst [vmem:[%s4 + $0x164] sm:$0xf] %v4392
  %4649 = vst [vmem:[%s4 + $0x168] sm:$0xf] %v4393
  %4650 = vst [vmem:[%s4 + $0x16c] sm:$0xf] %v4394
  %4651 = vst [vmem:[%s4 + $0x170] sm:$0xf] %v4395
  %4652 = vst [vmem:[%s4 + $0x174] sm:$0xf] %v4396
  %4653 = vst [vmem:[%s4 + $0x178] sm:$0xf] %v4397
  %4654 = vst [vmem:[%s4 + $0x17c] sm:$0xf] %v4398
  %4655 = vst [vmem:[%s4 + $0x180] sm:$0xf] %v4399
  %4656 = vst [vmem:[%s4 + $0x184] sm:$0xf] %v4400
  %4657 = vst [vmem:[%s4 + $0x188] sm:$0xf] %v4401
  %4658 = vst [vmem:[%s4 + $0x18c] sm:$0xf] %v4402
  %4659 = vst [vmem:[%s4 + $0x190] sm:$0xf] %v4403
  %4660 = vst [vmem:[%s4 + $0x194] sm:$0xf] %v4404
  %4661 = vst [vmem:[%s4 + $0x198] sm:$0xf] %v4405
  %4662 = vst [vmem:[%s4 + $0x19c] sm:$0xf] %v4406
  %4663 = vst [vmem:[%s4 + $0x1a0] sm:$0xf] %v4407
  %4664 = vst [vmem:[%s4 + $0x1a4] sm:$0xf] %v4408
  %4665 = vst [vmem:[%s4 + $0x1a8] sm:$0xf] %v4409
  %4666 = vst [vmem:[%s4 + $0x1ac] sm:$0xf] %v4410
  %4667 = vst [vmem:[%s4 + $0x1b0] sm:$0xf] %v4411
  %4668 = vst [vmem:[%s4 + $0x1b4] sm:$0xf] %v4412
  %4669 = vst [vmem:[%s4 + $0x1b8] sm:$0xf] %v4413
  %4670 = vst [vmem:[%s4 + $0x1bc] sm:$0xf] %v4414
  %4671 = vst [vmem:[%s4 + $0x1c0] sm:$0xf] %v4415
  %4672 = vst [vmem:[%s4 + $0x1c4] sm:$0xf] %v4416
  %4673 = vst [vmem:[%s4 + $0x1c8] sm:$0xf] %v4417
  %4674 = vst [vmem:[%s4 + $0x1cc] sm:$0xf] %v4418
  %4675 = vst [vmem:[%s4 + $0x1d0] sm:$0xf] %v4419
  %4676 = vst [vmem:[%s4 + $0x1d4] sm:$0xf] %v4420
  %4677 = vst [vmem:[%s4 + $0x1d8] sm:$0xf] %v4421
  %4678 = vst [vmem:[%s4 + $0x1dc] sm:$0xf] %v4422
  %4679 = vst [vmem:[%s4 + $0x1e0] sm:$0xf] %v4423
  %4680 = vst [vmem:[%s4 + $0x1e4] sm:$0xf] %v4424
  %4681 = vst [vmem:[%s4 + $0x1e8] sm:$0xf] %v4425
  %4682 = vst [vmem:[%s4 + $0x1ec] sm:$0xf] %v4426
  %4683 = vst [vmem:[%s4 + $0x1f0] sm:$0xf] %v4427
  %4684 = vst [vmem:[%s4 + $0x1f4] sm:$0xf] %v4428
  %4685 = vst [vmem:[%s4 + $0x1f8] sm:$0xf] %v4429
  %4686 = vst [vmem:[%s4 + $0x1fc] sm:$0xf] %v4430
  // Predicated region
  $region18: #{discriminator_forward.6} parent=0 // pred_check
    _
  $region19: #{discriminator_forward.6} parent=0 // pred_check_branch
    %4688 = sbr.rel (0) target = $region21
  $region20: #{discriminator_forward.6} parent=0 // pred_region
    _
  $region21: #{discriminator_forward.6} parent=0 // pred_fallthru
    _
  // Predicated region
  $region22: #{discriminator_forward.6} parent=0 // pred_check
    _
  $region23: #{discriminator_forward.6} parent=0 // pred_check_branch
    %4690 = sbr.rel (0) target = $region25
  $region24: #{discriminator_forward.6} parent=0 // pred_region
    _
  $region25: #{discriminator_forward.6} parent=0 // pred_fallthru
    _

// kernel: discriminator_forward.7
$region0: #{discriminator_forward.7}
  #allocation0 [shape = 'u32[]', space=smem, size = 0x4, offset = 0x4, fixed_abs, tag = 'smem constant byte address 0x4 - core index']
  #allocation1 [shape = 'u32[144,128]{1,0:T(1,128)}', space=vmem, size = 0x12000, scoped, tag = 'internal scratch']
  %s0 = inlined_call_operand.vmem [shape: bf16[128,864], index: 0, kind: input, shape index: {}]
  %s1 = inlined_call_operand.vmem [shape: bf16[864,128], index: 1, kind: input, shape index: {}]
  %s2 = inlined_call_operand.vmem [shape: f32[1,128], index: 2, kind: input, shape index: {}]
  %s3 = inlined_call_operand.vmem [shape: f32[1,128], index: 3, kind: input, shape index: {}]
  %s4 = inlined_call_operand.vmem [shape: bf16[128,128], index: 4, kind: output, shape index: {}]
  %s5 = sld [smem:[#allocation0]]
  $region26: #{discriminator_forward.7} parent=0
    _
  %s7 = ssub.s32 1, %s5
  %s8 = scalar_select 0, %s7, %s5
  // Predicated region
  $region2: #{discriminator_forward.7} parent=0 // pred_check
    _
  $region3: #{discriminator_forward.7} parent=0 // pred_check_branch
    %10 = sbr.rel (0) target = $region5
  $region4: #{discriminator_forward.7} parent=0 // pred_region
    _
  $region5: #{discriminator_forward.7} parent=0 // pred_fallthru
    _
  // Predicated region
  $region6: #{discriminator_forward.7} parent=0 // pred_check
    _
  $region7: #{discriminator_forward.7} parent=0 // pred_check_branch
    %12 = sbr.rel (0) target = $region9
  $region8: #{discriminator_forward.7} parent=0 // pred_region
    _
  $region9: #{discriminator_forward.7} parent=0 // pred_fallthru
    _
  // Predicated region
  $region10: #{discriminator_forward.7} parent=0 // pred_check
    _
  $region11: #{discriminator_forward.7} parent=0 // pred_check_branch
    %14 = sbr.rel (0) target = $region13
  $region12: #{discriminator_forward.7} parent=0 // pred_region
    _
  $region13: #{discriminator_forward.7} parent=0 // pred_fallthru
    _
  // Predicated region
  $region14: #{discriminator_forward.7} parent=0 // pred_check
    _
  $region15: #{discriminator_forward.7} parent=0 // pred_check_branch
    %16 = sbr.rel (0) target = $region17
  $region16: #{discriminator_forward.7} parent=0 // pred_region
    _
  $region17: #{discriminator_forward.7} parent=0 // pred_fallthru
    _
  %v18 = vld [vmem:[%s0] sm:$0xff]
  %v19 = vld [vmem:[%s0 + $0x8] sm:$0xff]
  %v20 = vld [vmem:[%s0 + $0x10] sm:$0xff]
  %v21 = vld [vmem:[%s0 + $0x18] sm:$0xf]
  %v22 = vld [vmem:[%s0 + $0x1c] sm:$0xff]
  %v23 = vld [vmem:[%s0 + $0x24] sm:$0xff]
  %v24 = vld [vmem:[%s0 + $0x2c] sm:$0xff]
  %v25 = vld [vmem:[%s0 + $0x34] sm:$0xf]
  %v26 = vld [vmem:[%s0 + $0x38] sm:$0xff]
  %v27 = vld [vmem:[%s0 + $0x40] sm:$0xff]
  %v28 = vld [vmem:[%s0 + $0x48] sm:$0xff]
  %v29 = vld [vmem:[%s0 + $0x50] sm:$0xf]
  %v30 = vld [vmem:[%s0 + $0x54] sm:$0xff]
  %v31 = vld [vmem:[%s0 + $0x5c] sm:$0xff]
  %v32 = vld [vmem:[%s0 + $0x64] sm:$0xff]
  %v33 = vld [vmem:[%s0 + $0x6c] sm:$0xf]
  %v34 = vld [vmem:[%s0 + $0x70] sm:$0xff]
  %v35 = vld [vmem:[%s0 + $0x78] sm:$0xff]
  %v36 = vld [vmem:[%s0 + $0x80] sm:$0xff]
  %v37 = vld [vmem:[%s0 + $0x88] sm:$0xf]
  %v38 = vld [vmem:[%s0 + $0x8c] sm:$0xff]
  %v39 = vld [vmem:[%s0 + $0x94] sm:$0xff]
  %v40 = vld [vmem:[%s0 + $0x9c] sm:$0xff]
  %v41 = vld [vmem:[%s0 + $0xa4] sm:$0xf]
  %v42 = vld [vmem:[%s0 + $0xa8] sm:$0xff]
  %v43 = vld [vmem:[%s0 + $0xb0] sm:$0xff]
  %v44 = vld [vmem:[%s0 + $0xb8] sm:$0xff]
  %v45 = vld [vmem:[%s0 + $0xc0] sm:$0xf]
  %v46 = vld [vmem:[%s0 + $0xc4] sm:$0xff]
  %v47 = vld [vmem:[%s0 + $0xcc] sm:$0xff]
  %v48 = vld [vmem:[%s0 + $0xd4] sm:$0xff]
  %v49 = vld [vmem:[%s0 + $0xdc] sm:$0xf]
  %v50 = vld [vmem:[%s0 + $0xe0] sm:$0xff]
  %v51 = vld [vmem:[%s0 + $0xe8] sm:$0xff]
  %v52 = vld [vmem:[%s0 + $0xf0] sm:$0xff]
  %v53 = vld [vmem:[%s0 + $0xf8] sm:$0xf]
  %v54 = vld [vmem:[%s0 + $0xfc] sm:$0xff]
  %v55 = vld [vmem:[%s0 + $0x104] sm:$0xff]
  %v56 = vld [vmem:[%s0 + $0x10c] sm:$0xff]
  %v57 = vld [vmem:[%s0 + $0x114] sm:$0xf]
  %v58 = vld [vmem:[%s0 + $0x118] sm:$0xff]
  %v59 = vld [vmem:[%s0 + $0x120] sm:$0xff]
  %v60 = vld [vmem:[%s0 + $0x128] sm:$0xff]
  %v61 = vld [vmem:[%s0 + $0x130] sm:$0xf]
  %v62 = vld [vmem:[%s0 + $0x134] sm:$0xff]
  %v63 = vld [vmem:[%s0 + $0x13c] sm:$0xff]
  %v64 = vld [vmem:[%s0 + $0x144] sm:$0xff]
  %v65 = vld [vmem:[%s0 + $0x14c] sm:$0xf]
  %v66 = vld [vmem:[%s0 + $0x150] sm:$0xff]
  %v67 = vld [vmem:[%s0 + $0x158] sm:$0xff]
  %v68 = vld [vmem:[%s0 + $0x160] sm:$0xff]
  %v69 = vld [vmem:[%s0 + $0x168] sm:$0xf]
  %v70 = vld [vmem:[%s0 + $0x16c] sm:$0xff]
  %v71 = vld [vmem:[%s0 + $0x174] sm:$0xff]
  %v72 = vld [vmem:[%s0 + $0x17c] sm:$0xff]
  %v73 = vld [vmem:[%s0 + $0x184] sm:$0xf]
  %v74 = vld [vmem:[%s0 + $0x188] sm:$0xff]
  %v75 = vld [vmem:[%s0 + $0x190] sm:$0xff]
  %v76 = vld [vmem:[%s0 + $0x198] sm:$0xff]
  %v77 = vld [vmem:[%s0 + $0x1a0] sm:$0xf]
  %v78 = vld [vmem:[%s0 + $0x1a4] sm:$0xff]
  %v79 = vld [vmem:[%s0 + $0x1ac] sm:$0xff]
  %v80 = vld [vmem:[%s0 + $0x1b4] sm:$0xff]
  %v81 = vld [vmem:[%s0 + $0x1bc] sm:$0xf]
  %v82 = vld [vmem:[%s1] sm:$0xf]
  %v83 = vld [vmem:[%s1 + $0x4] sm:$0xf]
  %v84 = vld [vmem:[%s1 + $0x8] sm:$0xf]
  %v85 = vld [vmem:[%s1 + $0xc] sm:$0xf]
  %v86 = vld [vmem:[%s1 + $0x10] sm:$0xf]
  %v87 = vld [vmem:[%s1 + $0x14] sm:$0xf]
  %v88 = vld [vmem:[%s1 + $0x18] sm:$0xf]
  %v89 = vld [vmem:[%s1 + $0x1c] sm:$0xf]
  %v90 = vld [vmem:[%s1 + $0x20] sm:$0xf]
  %v91 = vld [vmem:[%s1 + $0x24] sm:$0xf]
  %v92 = vld [vmem:[%s1 + $0x28] sm:$0xf]
  %v93 = vld [vmem:[%s1 + $0x2c] sm:$0xf]
  %v94 = vld [vmem:[%s1 + $0x30] sm:$0xf]
  %v95 = vld [vmem:[%s1 + $0x34] sm:$0xf]
  %v96 = vld [vmem:[%s1 + $0x38] sm:$0xf]
  %v97 = vld [vmem:[%s1 + $0x3c] sm:$0xf]
  %v98 = vld [vmem:[%s1 + $0x40] sm:$0xf]
  %v99 = vld [vmem:[%s1 + $0x44] sm:$0xf]
  %v100 = vld [vmem:[%s1 + $0x48] sm:$0xf]
  %v101 = vld [vmem:[%s1 + $0x4c] sm:$0xf]
  %v102 = vld [vmem:[%s1 + $0x50] sm:$0xf]
  %v103 = vld [vmem:[%s1 + $0x54] sm:$0xf]
  %v104 = vld [vmem:[%s1 + $0x58] sm:$0xf]
  %v105 = vld [vmem:[%s1 + $0x5c] sm:$0xf]
  %v106 = vld [vmem:[%s1 + $0x60] sm:$0xf]
  %v107 = vld [vmem:[%s1 + $0x64] sm:$0xf]
  %v108 = vld [vmem:[%s1 + $0x68] sm:$0xf]
  %v109 = vld [vmem:[%s1 + $0x6c] sm:$0xf]
  %v110 = vld [vmem:[%s1 + $0x70] sm:$0xf]
  %v111 = vld [vmem:[%s1 + $0x74] sm:$0xf]
  %v112 = vld [vmem:[%s1 + $0x78] sm:$0xf]
  %v113 = vld [vmem:[%s1 + $0x7c] sm:$0xf]
  %v114 = vld [vmem:[%s1 + $0x80] sm:$0xf]
  %v115 = vld [vmem:[%s1 + $0x84] sm:$0xf]
  %v116 = vld [vmem:[%s1 + $0x88] sm:$0xf]
  %v117 = vld [vmem:[%s1 + $0x8c] sm:$0xf]
  %v118 = vld [vmem:[%s1 + $0x90] sm:$0xf]
  %v119 = vld [vmem:[%s1 + $0x94] sm:$0xf]
  %v120 = vld [vmem:[%s1 + $0x98] sm:$0xf]
  %v121 = vld [vmem:[%s1 + $0x9c] sm:$0xf]
  %v122 = vld [vmem:[%s1 + $0xa0] sm:$0xf]
  %v123 = vld [vmem:[%s1 + $0xa4] sm:$0xf]
  %v124 = vld [vmem:[%s1 + $0xa8] sm:$0xf]
  %v125 = vld [vmem:[%s1 + $0xac] sm:$0xf]
  %v126 = vld [vmem:[%s1 + $0xb0] sm:$0xf]
  %v127 = vld [vmem:[%s1 + $0xb4] sm:$0xf]
  %v128 = vld [vmem:[%s1 + $0xb8] sm:$0xf]
  %v129 = vld [vmem:[%s1 + $0xbc] sm:$0xf]
  %v130 = vld [vmem:[%s1 + $0xc0] sm:$0xf]
  %v131 = vld [vmem:[%s1 + $0xc4] sm:$0xf]
  %v132 = vld [vmem:[%s1 + $0xc8] sm:$0xf]
  %v133 = vld [vmem:[%s1 + $0xcc] sm:$0xf]
  %v134 = vld [vmem:[%s1 + $0xd0] sm:$0xf]
  %v135 = vld [vmem:[%s1 + $0xd4] sm:$0xf]
  %v136 = vld [vmem:[%s1 + $0xd8] sm:$0xf]
  %v137 = vld [vmem:[%s1 + $0xdc] sm:$0xf]
  %v138 = vld [vmem:[%s1 + $0xe0] sm:$0xf]
  %v139 = vld [vmem:[%s1 + $0xe4] sm:$0xf]
  %v140 = vld [vmem:[%s1 + $0xe8] sm:$0xf]
  %v141 = vld [vmem:[%s1 + $0xec] sm:$0xf]
  %v142 = vld [vmem:[%s1 + $0xf0] sm:$0xf]
  %v143 = vld [vmem:[%s1 + $0xf4] sm:$0xf]
  %v144 = vld [vmem:[%s1 + $0xf8] sm:$0xf]
  %v145 = vld [vmem:[%s1 + $0xfc] sm:$0xf]
  %v146 = vld [vmem:[%s1 + $0x100] sm:$0xf]
  %v147 = vld [vmem:[%s1 + $0x104] sm:$0xf]
  %v148 = vld [vmem:[%s1 + $0x108] sm:$0xf]
  %v149 = vld [vmem:[%s1 + $0x10c] sm:$0xf]
  %v150 = vld [vmem:[%s1 + $0x110] sm:$0xf]
  %v151 = vld [vmem:[%s1 + $0x114] sm:$0xf]
  %v152 = vld [vmem:[%s1 + $0x118] sm:$0xf]
  %v153 = vld [vmem:[%s1 + $0x11c] sm:$0xf]
  %v154 = vld [vmem:[%s1 + $0x120] sm:$0xf]
  %v155 = vld [vmem:[%s1 + $0x124] sm:$0xf]
  %v156 = vld [vmem:[%s1 + $0x128] sm:$0xf]
  %v157 = vld [vmem:[%s1 + $0x12c] sm:$0xf]
  %v158 = vld [vmem:[%s1 + $0x130] sm:$0xf]
  %v159 = vld [vmem:[%s1 + $0x134] sm:$0xf]
  %v160 = vld [vmem:[%s1 + $0x138] sm:$0xf]
  %v161 = vld [vmem:[%s1 + $0x13c] sm:$0xf]
  %v162 = vld [vmem:[%s1 + $0x140] sm:$0xf]
  %v163 = vld [vmem:[%s1 + $0x144] sm:$0xf]
  %v164 = vld [vmem:[%s1 + $0x148] sm:$0xf]
  %v165 = vld [vmem:[%s1 + $0x14c] sm:$0xf]
  %v166 = vld [vmem:[%s1 + $0x150] sm:$0xf]
  %v167 = vld [vmem:[%s1 + $0x154] sm:$0xf]
  %v168 = vld [vmem:[%s1 + $0x158] sm:$0xf]
  %v169 = vld [vmem:[%s1 + $0x15c] sm:$0xf]
  %v170 = vld [vmem:[%s1 + $0x160] sm:$0xf]
  %v171 = vld [vmem:[%s1 + $0x164] sm:$0xf]
  %v172 = vld [vmem:[%s1 + $0x168] sm:$0xf]
  %v173 = vld [vmem:[%s1 + $0x16c] sm:$0xf]
  %v174 = vld [vmem:[%s1 + $0x170] sm:$0xf]
  %v175 = vld [vmem:[%s1 + $0x174] sm:$0xf]
  %v176 = vld [vmem:[%s1 + $0x178] sm:$0xf]
  %v177 = vld [vmem:[%s1 + $0x17c] sm:$0xf]
  %v178 = vld [vmem:[%s1 + $0x180] sm:$0xf]
  %v179 = vld [vmem:[%s1 + $0x184] sm:$0xf]
  %v180 = vld [vmem:[%s1 + $0x188] sm:$0xf]
  %v181 = vld [vmem:[%s1 + $0x18c] sm:$0xf]
  %v182 = vld [vmem:[%s1 + $0x190] sm:$0xf]
  %v183 = vld [vmem:[%s1 + $0x194] sm:$0xf]
  %v184 = vld [vmem:[%s1 + $0x198] sm:$0xf]
  %v185 = vld [vmem:[%s1 + $0x19c] sm:$0xf]
  %v186 = vld [vmem:[%s1 + $0x1a0] sm:$0xf]
  %v187 = vld [vmem:[%s1 + $0x1a4] sm:$0xf]
  %v188 = vld [vmem:[%s1 + $0x1a8] sm:$0xf]
  %v189 = vld [vmem:[%s1 + $0x1ac] sm:$0xf]
  %v254 = vunpack.c.l.b16 %v18
  %v255 = vunpack.c.h.b16 %v18
  %v256 = vunpack.c.l.b16 %v19
  %v257 = vunpack.c.h.b16 %v19
  %v258 = vunpack.c.l.b16 %v20
  %v259 = vunpack.c.h.b16 %v20
  %v260 = vunpack.c.l.b16 %v21
  %v261 = vunpack.c.l.b16 %v22
  %v262 = vunpack.c.h.b16 %v22
  %v263 = vunpack.c.l.b16 %v23
  %v264 = vunpack.c.h.b16 %v23
  %v265 = vunpack.c.l.b16 %v24
  %v266 = vunpack.c.h.b16 %v24
  %v267 = vunpack.c.l.b16 %v25
  %v268 = vunpack.c.l.b16 %v26
  %v269 = vunpack.c.h.b16 %v26
  %v270 = vunpack.c.l.b16 %v27
  %v271 = vunpack.c.h.b16 %v27
  %v272 = vunpack.c.l.b16 %v28
  %v273 = vunpack.c.h.b16 %v28
  %v274 = vunpack.c.l.b16 %v29
  %v275 = vunpack.c.l.b16 %v30
  %v276 = vunpack.c.h.b16 %v30
  %v277 = vunpack.c.l.b16 %v31
  %v278 = vunpack.c.h.b16 %v31
  %v279 = vunpack.c.l.b16 %v32
  %v280 = vunpack.c.h.b16 %v32
  %v281 = vunpack.c.l.b16 %v33
  %v282 = vunpack.c.l.b16 %v34
  %v283 = vunpack.c.h.b16 %v34
  %v284 = vunpack.c.l.b16 %v35
  %v285 = vunpack.c.h.b16 %v35
  %v286 = vunpack.c.l.b16 %v36
  %v287 = vunpack.c.h.b16 %v36
  %v288 = vunpack.c.l.b16 %v37
  %v289 = vunpack.c.l.b16 %v38
  %v290 = vunpack.c.h.b16 %v38
  %v291 = vunpack.c.l.b16 %v39
  %v292 = vunpack.c.h.b16 %v39
  %v293 = vunpack.c.l.b16 %v40
  %v294 = vunpack.c.h.b16 %v40
  %v295 = vunpack.c.l.b16 %v41
  %v296 = vunpack.c.l.b16 %v42
  %v297 = vunpack.c.h.b16 %v42
  %v298 = vunpack.c.l.b16 %v43
  %v299 = vunpack.c.h.b16 %v43
  %v300 = vunpack.c.l.b16 %v44
  %v301 = vunpack.c.h.b16 %v44
  %v302 = vunpack.c.l.b16 %v45
  %v303 = vunpack.c.l.b16 %v46
  %v304 = vunpack.c.h.b16 %v46
  %v305 = vunpack.c.l.b16 %v47
  %v306 = vunpack.c.h.b16 %v47
  %v307 = vunpack.c.l.b16 %v48
  %v308 = vunpack.c.h.b16 %v48
  %v309 = vunpack.c.l.b16 %v49
  %v310 = vunpack.c.l.b16 %v50
  %v311 = vunpack.c.h.b16 %v50
  %v312 = vunpack.c.l.b16 %v51
  %v313 = vunpack.c.h.b16 %v51
  %v314 = vunpack.c.l.b16 %v52
  %v315 = vunpack.c.h.b16 %v52
  %v316 = vunpack.c.l.b16 %v53
  %v317 = vunpack.c.l.b16 %v54
  %v318 = vunpack.c.h.b16 %v54
  %v319 = vunpack.c.l.b16 %v55
  %v320 = vunpack.c.h.b16 %v55
  %v321 = vunpack.c.l.b16 %v56
  %v322 = vunpack.c.h.b16 %v56
  %v323 = vunpack.c.l.b16 %v57
  %v324 = vunpack.c.l.b16 %v58
  %v325 = vunpack.c.h.b16 %v58
  %v326 = vunpack.c.l.b16 %v59
  %v327 = vunpack.c.h.b16 %v59
  %v328 = vunpack.c.l.b16 %v60
  %v329 = vunpack.c.h.b16 %v60
  %v330 = vunpack.c.l.b16 %v61
  %v331 = vunpack.c.l.b16 %v62
  %v332 = vunpack.c.h.b16 %v62
  %v333 = vunpack.c.l.b16 %v63
  %v334 = vunpack.c.h.b16 %v63
  %v335 = vunpack.c.l.b16 %v64
  %v336 = vunpack.c.h.b16 %v64
  %v337 = vunpack.c.l.b16 %v65
  %v338 = vunpack.c.l.b16 %v66
  %v339 = vunpack.c.h.b16 %v66
  %v340 = vunpack.c.l.b16 %v67
  %v341 = vunpack.c.h.b16 %v67
  %v342 = vunpack.c.l.b16 %v68
  %v343 = vunpack.c.h.b16 %v68
  %v344 = vunpack.c.l.b16 %v69
  %v345 = vunpack.c.l.b16 %v70
  %v346 = vunpack.c.h.b16 %v70
  %v347 = vunpack.c.l.b16 %v71
  %v348 = vunpack.c.h.b16 %v71
  %v349 = vunpack.c.l.b16 %v72
  %v350 = vunpack.c.h.b16 %v72
  %v351 = vunpack.c.l.b16 %v73
  %v352 = vunpack.c.l.b16 %v74
  %v353 = vunpack.c.h.b16 %v74
  %v354 = vunpack.c.l.b16 %v75
  %v355 = vunpack.c.h.b16 %v75
  %v356 = vunpack.c.l.b16 %v76
  %v357 = vunpack.c.h.b16 %v76
  %v358 = vunpack.c.l.b16 %v77
  %v359 = vunpack.c.l.b16 %v78
  %v360 = vunpack.c.h.b16 %v78
  %v361 = vunpack.c.l.b16 %v79
  %v362 = vunpack.c.h.b16 %v79
  %v363 = vunpack.c.l.b16 %v80
  %v364 = vunpack.c.h.b16 %v80
  %v365 = vunpack.c.l.b16 %v81
  %v366 = vpack.c.b16 %v261, %v254
  %v367 = vpack.c.b16 %v262, %v255
  %v368 = vpack.c.b16 %v263, %v256
  %v369 = vpack.c.b16 %v264, %v257
  %v370 = vpack.c.b16 %v265, %v258
  %v371 = vpack.c.b16 %v266, %v259
  %v372 = vpack.c.b16 %v267, %v260
  %v373 = vpack.c.b16 %v275, %v268
  %v374 = vpack.c.b16 %v276, %v269
  %v375 = vpack.c.b16 %v277, %v270
  %v376 = vpack.c.b16 %v278, %v271
  %v377 = vpack.c.b16 %v279, %v272
  %v378 = vpack.c.b16 %v280, %v273
  %v379 = vpack.c.b16 %v281, %v274
  %v380 = vpack.c.b16 %v289, %v282
  %v381 = vpack.c.b16 %v290, %v283
  %v382 = vpack.c.b16 %v291, %v284
  %v383 = vpack.c.b16 %v292, %v285
  %v384 = vpack.c.b16 %v293, %v286
  %v385 = vpack.c.b16 %v294, %v287
  %v386 = vpack.c.b16 %v295, %v288
  %v387 = vpack.c.b16 %v303, %v296
  %v388 = vpack.c.b16 %v304, %v297
  %v389 = vpack.c.b16 %v305, %v298
  %v390 = vpack.c.b16 %v306, %v299
  %v391 = vpack.c.b16 %v307, %v300
  %v392 = vpack.c.b16 %v308, %v301
  %v393 = vpack.c.b16 %v309, %v302
  %v394 = vpack.c.b16 %v317, %v310
  %v395 = vpack.c.b16 %v318, %v311
  %v396 = vpack.c.b16 %v319, %v312
  %v397 = vpack.c.b16 %v320, %v313
  %v398 = vpack.c.b16 %v321, %v314
  %v399 = vpack.c.b16 %v322, %v315
  %v400 = vpack.c.b16 %v323, %v316
  %v401 = vpack.c.b16 %v331, %v324
  %v402 = vpack.c.b16 %v332, %v325
  %v403 = vpack.c.b16 %v333, %v326
  %v404 = vpack.c.b16 %v334, %v327
  %v405 = vpack.c.b16 %v335, %v328
  %v406 = vpack.c.b16 %v336, %v329
  %v407 = vpack.c.b16 %v337, %v330
  %v408 = vpack.c.b16 %v345, %v338
  %v409 = vpack.c.b16 %v346, %v339
  %v410 = vpack.c.b16 %v347, %v340
  %v411 = vpack.c.b16 %v348, %v341
  %v412 = vpack.c.b16 %v349, %v342
  %v413 = vpack.c.b16 %v350, %v343
  %v414 = vpack.c.b16 %v351, %v344
  %v415 = vpack.c.b16 %v359, %v352
  %v416 = vpack.c.b16 %v360, %v353
  %v417 = vpack.c.b16 %v361, %v354
  %v418 = vpack.c.b16 %v362, %v355
  %v419 = vpack.c.b16 %v363, %v356
  %v420 = vpack.c.b16 %v364, %v357
  %v421 = vpack.c.b16 %v365, %v358
  %v578 = vunpack.c.l.b16 %v82
  %v579 = vunpack.c.l.b16 %v83
  %v580 = vunpack.c.l.b16 %v84
  %v581 = vunpack.c.l.b16 %v85
  %v582 = vunpack.c.l.b16 %v86
  %v583 = vunpack.c.l.b16 %v87
  %v584 = vunpack.c.l.b16 %v88
  %v585 = vunpack.c.l.b16 %v89
  %v586 = vunpack.c.l.b16 %v90
  %v587 = vunpack.c.l.b16 %v91
  %v588 = vunpack.c.l.b16 %v92
  %v589 = vunpack.c.l.b16 %v93
  %v590 = vunpack.c.l.b16 %v94
  %v591 = vunpack.c.l.b16 %v95
  %v592 = vunpack.c.l.b16 %v96
  %v593 = vunpack.c.l.b16 %v97
  %v594 = vunpack.c.l.b16 %v98
  %v595 = vunpack.c.l.b16 %v99
  %v596 = vunpack.c.l.b16 %v100
  %v597 = vunpack.c.l.b16 %v101
  %v598 = vunpack.c.l.b16 %v102
  %v599 = vunpack.c.l.b16 %v103
  %v600 = vunpack.c.l.b16 %v104
  %v601 = vunpack.c.l.b16 %v105
  %v602 = vunpack.c.l.b16 %v106
  %v603 = vunpack.c.l.b16 %v107
  %v604 = vunpack.c.l.b16 %v108
  %v605 = vunpack.c.l.b16 %v109
  %v606 = vunpack.c.l.b16 %v110
  %v607 = vunpack.c.l.b16 %v111
  %v608 = vunpack.c.l.b16 %v112
  %v609 = vunpack.c.l.b16 %v113
  %v610 = vunpack.c.l.b16 %v114
  %v611 = vunpack.c.l.b16 %v115
  %v612 = vunpack.c.l.b16 %v116
  %v613 = vunpack.c.l.b16 %v117
  %v614 = vunpack.c.l.b16 %v118
  %v615 = vunpack.c.l.b16 %v119
  %v616 = vunpack.c.l.b16 %v120
  %v617 = vunpack.c.l.b16 %v121
  %v618 = vunpack.c.l.b16 %v122
  %v619 = vunpack.c.l.b16 %v123
  %v620 = vunpack.c.l.b16 %v124
  %v621 = vunpack.c.l.b16 %v125
  %v622 = vunpack.c.l.b16 %v126
  %v623 = vunpack.c.l.b16 %v127
  %v624 = vunpack.c.l.b16 %v128
  %v625 = vunpack.c.l.b16 %v129
  %v626 = vunpack.c.l.b16 %v130
  %v627 = vunpack.c.l.b16 %v131
  %v628 = vunpack.c.l.b16 %v132
  %v629 = vunpack.c.l.b16 %v133
  %v630 = vunpack.c.l.b16 %v134
  %v631 = vunpack.c.l.b16 %v135
  %v632 = vunpack.c.l.b16 %v136
  %v633 = vunpack.c.l.b16 %v137
  %v634 = vunpack.c.l.b16 %v138
  %v635 = vunpack.c.l.b16 %v139
  %v636 = vunpack.c.l.b16 %v140
  %v637 = vunpack.c.l.b16 %v141
  %v638 = vunpack.c.l.b16 %v142
  %v639 = vunpack.c.l.b16 %v143
  %v640 = vunpack.c.l.b16 %v144
  %v641 = vunpack.c.l.b16 %v145
  %v642 = vunpack.c.l.b16 %v146
  %v643 = vunpack.c.l.b16 %v147
  %v644 = vunpack.c.l.b16 %v148
  %v645 = vunpack.c.l.b16 %v149
  %v646 = vunpack.c.l.b16 %v150
  %v647 = vunpack.c.l.b16 %v151
  %v648 = vunpack.c.l.b16 %v152
  %v649 = vunpack.c.l.b16 %v153
  %v650 = vunpack.c.l.b16 %v154
  %v651 = vunpack.c.l.b16 %v155
  %v652 = vunpack.c.l.b16 %v156
  %v653 = vunpack.c.l.b16 %v157
  %v654 = vunpack.c.l.b16 %v158
  %v655 = vunpack.c.l.b16 %v159
  %v656 = vunpack.c.l.b16 %v160
  %v657 = vunpack.c.l.b16 %v161
  %v658 = vunpack.c.l.b16 %v162
  %v659 = vunpack.c.l.b16 %v163
  %v660 = vunpack.c.l.b16 %v164
  %v661 = vunpack.c.l.b16 %v165
  %v662 = vunpack.c.l.b16 %v166
  %v663 = vunpack.c.l.b16 %v167
  %v664 = vunpack.c.l.b16 %v168
  %v665 = vunpack.c.l.b16 %v169
  %v666 = vunpack.c.l.b16 %v170
  %v667 = vunpack.c.l.b16 %v171
  %v668 = vunpack.c.l.b16 %v172
  %v669 = vunpack.c.l.b16 %v173
  %v670 = vunpack.c.l.b16 %v174
  %v671 = vunpack.c.l.b16 %v175
  %v672 = vunpack.c.l.b16 %v176
  %v673 = vunpack.c.l.b16 %v177
  %v674 = vunpack.c.l.b16 %v178
  %v675 = vunpack.c.l.b16 %v179
  %v676 = vunpack.c.l.b16 %v180
  %v677 = vunpack.c.l.b16 %v181
  %v678 = vunpack.c.l.b16 %v182
  %v679 = vunpack.c.l.b16 %v183
  %v680 = vunpack.c.l.b16 %v184
  %v681 = vunpack.c.l.b16 %v185
  %v682 = vunpack.c.l.b16 %v186
  %v683 = vunpack.c.l.b16 %v187
  %v684 = vunpack.c.l.b16 %v188
  %v685 = vunpack.c.l.b16 %v189
  %v686 = vpack.c.b16 %v579, %v578
  %v687 = vpack.c.b16 %v581, %v580
  %v688 = vpack.c.b16 %v583, %v582
  %v689 = vpack.c.b16 %v585, %v584
  %v690 = vpack.c.b16 %v587, %v586
  %v691 = vpack.c.b16 %v589, %v588
  %v692 = vpack.c.b16 %v591, %v590
  %v693 = vpack.c.b16 %v593, %v592
  %v694 = vpack.c.b16 %v595, %v594
  %v695 = vpack.c.b16 %v597, %v596
  %v696 = vpack.c.b16 %v599, %v598
  %v697 = vpack.c.b16 %v601, %v600
  %v698 = vpack.c.b16 %v603, %v602
  %v699 = vpack.c.b16 %v605, %v604
  %v700 = vpack.c.b16 %v607, %v606
  %v701 = vpack.c.b16 %v609, %v608
  %v702 = vpack.c.b16 %v611, %v610
  %v703 = vpack.c.b16 %v613, %v612
  %v704 = vpack.c.b16 %v615, %v614
  %v705 = vpack.c.b16 %v617, %v616
  %v706 = vpack.c.b16 %v619, %v618
  %v707 = vpack.c.b16 %v621, %v620
  %v708 = vpack.c.b16 %v623, %v622
  %v709 = vpack.c.b16 %v625, %v624
  %v710 = vpack.c.b16 %v627, %v626
  %v711 = vpack.c.b16 %v629, %v628
  %v712 = vpack.c.b16 %v631, %v630
  %v713 = vpack.c.b16 %v633, %v632
  %v714 = vpack.c.b16 %v635, %v634
  %v715 = vpack.c.b16 %v637, %v636
  %v716 = vpack.c.b16 %v639, %v638
  %v717 = vpack.c.b16 %v641, %v640
  %v718 = vpack.c.b16 %v643, %v642
  %v719 = vpack.c.b16 %v645, %v644
  %v720 = vpack.c.b16 %v647, %v646
  %v721 = vpack.c.b16 %v649, %v648
  %v722 = vpack.c.b16 %v651, %v650
  %v723 = vpack.c.b16 %v653, %v652
  %v724 = vpack.c.b16 %v655, %v654
  %v725 = vpack.c.b16 %v657, %v656
  %v726 = vpack.c.b16 %v659, %v658
  %v727 = vpack.c.b16 %v661, %v660
  %v728 = vpack.c.b16 %v663, %v662
  %v729 = vpack.c.b16 %v665, %v664
  %v730 = vpack.c.b16 %v667, %v666
  %v731 = vpack.c.b16 %v669, %v668
  %v732 = vpack.c.b16 %v671, %v670
  %v733 = vpack.c.b16 %v673, %v672
  %v734 = vpack.c.b16 %v675, %v674
  %v735 = vpack.c.b16 %v677, %v676
  %v736 = vpack.c.b16 %v679, %v678
  %v737 = vpack.c.b16 %v681, %v680
  %v738 = vpack.c.b16 %v683, %v682
  %v739 = vpack.c.b16 %v685, %v684
  %vm794 = vcmask 785408
  %v796 = vsel %vm794, %v372, 0
  %v799 = vsel %vm794, %v379, 0
  %v802 = vsel %vm794, %v386, 0
  %v805 = vsel %vm794, %v393, 0
  %v808 = vsel %vm794, %v400, 0
  %v811 = vsel %vm794, %v407, 0
  %v814 = vsel %vm794, %v414, 0
  %v817 = vsel %vm794, %v421, 0
  %819 = vmatprep.subr.bf16.mxu0 0
  %820 = vmatpush1.bf16.msra.mxu0 %v693
  %821 = vmatprep.subr.bf16.mxu0 0
  %822 = vmatpush1.bf16.msra.mxu0 %v692
  %823 = vmatprep.subr.bf16.mxu0 0
  %824 = vmatpush1.bf16.msra.mxu0 %v691
  %825 = vmatprep.subr.bf16.mxu0 0
  %826 = vmatpush1.bf16.msra.mxu0 %v690
  %827 = vmatprep.subr.bf16.mxu0 0
  %828 = vmatpush1.bf16.msra.mxu0 %v689
  %829 = vmatprep.subr.bf16.mxu0 0
  %830 = vmatpush1.bf16.msra.mxu0 %v688
  %831 = vmatprep.subr.bf16.mxu0 0
  %832 = vmatpush1.bf16.msra.mxu0 %v687
  %833 = vmatprep.subr.bf16.mxu0 0
  %834 = vmatpush1.bf16.msra.mxu0 %v686
  %835 = vmatprep.subr.bf16.mxu0 0
  %836 = vmatpush2.bf16.msra.mxu0 %v701
  %837 = vmatprep.subr.bf16.mxu0 0
  %838 = vmatpush2.bf16.msra.mxu0 %v700
  %839 = vmatprep.subr.bf16.mxu0 0
  %840 = vmatpush2.bf16.msra.mxu0 %v699
  %841 = vmatprep.subr.bf16.mxu0 0
  %842 = vmatpush2.bf16.msra.mxu0 %v698
  %843 = vmatprep.subr.bf16.mxu0 0
  %844 = vmatpush2.bf16.msra.mxu0 %v697
  %845 = vmatprep.subr.bf16.mxu0 0
  %846 = vmatpush2.bf16.msra.mxu0 %v696
  %847 = vmatprep.subr.bf16.mxu0 0
  %848 = vmatpush2.bf16.msra.mxu0 %v695
  %849 = vmatprep.subr.bf16.mxu0 0
  %850 = vmatpush2.bf16.msra.mxu0 %v694
  %851 = vmatprep.mubr.bf16.mxu0 %v367
  %852 = vmatmul.mubr.bf16.gmra.mxu0 %v366
  %v853 = vpop.f32.mrf.mxu0
  %v854 = vadd.f32 0.0, %v853
  %v855 = vpop.f32.mrf.mxu0
  %v856 = vpop.f32.mrf.mxu0
  %v857 = vadd.f32 0.0, %v856
  %v858 = vpop.f32.mrf.mxu0
  %859 = vmatprep.mubr.bf16.mxu0 %v374
  %860 = vmatmul.mubr.bf16.gmra.mxu0 %v373
  %v861 = vpop.f32.mrf.mxu0
  %v862 = vadd.f32 0.0, %v861
  %v863 = vpop.f32.mrf.mxu0
  %v864 = vpop.f32.mrf.mxu0
  %v865 = vadd.f32 0.0, %v864
  %v866 = vpop.f32.mrf.mxu0
  %867 = vmatprep.mubr.bf16.mxu0 %v381
  %868 = vmatmul.mubr.bf16.gmra.mxu0 %v380
  %v869 = vpop.f32.mrf.mxu0
  %v870 = vadd.f32 0.0, %v869
  %v871 = vpop.f32.mrf.mxu0
  %v872 = vpop.f32.mrf.mxu0
  %v873 = vadd.f32 0.0, %v872
  %v874 = vpop.f32.mrf.mxu0
  %875 = vmatprep.mubr.bf16.mxu0 %v388
  %876 = vmatmul.mubr.bf16.gmra.mxu0 %v387
  %v877 = vpop.f32.mrf.mxu0
  %v878 = vadd.f32 0.0, %v877
  %v879 = vpop.f32.mrf.mxu0
  %v880 = vpop.f32.mrf.mxu0
  %v881 = vadd.f32 0.0, %v880
  %v882 = vpop.f32.mrf.mxu0
  %883 = vmatprep.mubr.bf16.mxu0 %v395
  %884 = vmatmul.mubr.bf16.gmra.mxu0 %v394
  %v885 = vpop.f32.mrf.mxu0
  %v886 = vadd.f32 0.0, %v885
  %v887 = vpop.f32.mrf.mxu0
  %v888 = vpop.f32.mrf.mxu0
  %v889 = vadd.f32 0.0, %v888
  %v890 = vpop.f32.mrf.mxu0
  %891 = vmatprep.mubr.bf16.mxu0 %v402
  %892 = vmatmul.mubr.bf16.gmra.mxu0 %v401
  %v893 = vpop.f32.mrf.mxu0
  %v894 = vadd.f32 0.0, %v893
  %v895 = vpop.f32.mrf.mxu0
  %v896 = vpop.f32.mrf.mxu0
  %v897 = vadd.f32 0.0, %v896
  %v898 = vpop.f32.mrf.mxu0
  %899 = vmatprep.mubr.bf16.mxu0 %v409
  %900 = vmatmul.mubr.bf16.gmra.mxu0 %v408
  %v901 = vpop.f32.mrf.mxu0
  %v902 = vadd.f32 0.0, %v901
  %v903 = vpop.f32.mrf.mxu0
  %v904 = vpop.f32.mrf.mxu0
  %v905 = vadd.f32 0.0, %v904
  %v906 = vpop.f32.mrf.mxu0
  %907 = vmatprep.mubr.bf16.mxu0 %v416
  %908 = vmatmul.mubr.bf16.gmra.mxu0 %v415
  %v909 = vpop.f32.mrf.mxu0
  %v910 = vadd.f32 0.0, %v909
  %v911 = vpop.f32.mrf.mxu0
  %v912 = vpop.f32.mrf.mxu0
  %v913 = vadd.f32 0.0, %v912
  %v914 = vpop.f32.mrf.mxu0
  %915 = vdwg.mxu0
  %916 = vmatprep.subr.bf16.mxu0 0
  %917 = vmatpush1.bf16.msra.mxu0 %v709
  %918 = vmatprep.subr.bf16.mxu0 0
  %919 = vmatpush1.bf16.msra.mxu0 %v708
  %920 = vmatprep.subr.bf16.mxu0 0
  %921 = vmatpush1.bf16.msra.mxu0 %v707
  %922 = vmatprep.subr.bf16.mxu0 0
  %923 = vmatpush1.bf16.msra.mxu0 %v706
  %924 = vmatprep.subr.bf16.mxu0 0
  %925 = vmatpush1.bf16.msra.mxu0 %v705
  %926 = vmatprep.subr.bf16.mxu0 0
  %927 = vmatpush1.bf16.msra.mxu0 %v704
  %928 = vmatprep.subr.bf16.mxu0 0
  %929 = vmatpush1.bf16.msra.mxu0 %v703
  %930 = vmatprep.subr.bf16.mxu0 0
  %931 = vmatpush1.bf16.msra.mxu0 %v702
  %932 = vmatprep.subr.bf16.mxu0 0
  %933 = vmatpush2.bf16.msra.mxu0 %v717
  %934 = vmatprep.subr.bf16.mxu0 0
  %935 = vmatpush2.bf16.msra.mxu0 %v716
  %936 = vmatprep.subr.bf16.mxu0 0
  %937 = vmatpush2.bf16.msra.mxu0 %v715
  %938 = vmatprep.subr.bf16.mxu0 0
  %939 = vmatpush2.bf16.msra.mxu0 %v714
  %940 = vmatprep.subr.bf16.mxu0 0
  %941 = vmatpush2.bf16.msra.mxu0 %v713
  %942 = vmatprep.subr.bf16.mxu0 0
  %943 = vmatpush2.bf16.msra.mxu0 %v712
  %944 = vmatprep.subr.bf16.mxu0 0
  %945 = vmatpush2.bf16.msra.mxu0 %v711
  %946 = vmatprep.subr.bf16.mxu0 0
  %947 = vmatpush2.bf16.msra.mxu0 %v710
  %948 = vmatprep.mubr.bf16.mxu0 %v369
  %949 = vmatmul.mubr.bf16.gmra.mxu0 %v368
  %v950 = vpop.f32.mrf.mxu0
  %v951 = vadd.f32 %v854, %v950
  %v952 = vpop.f32.mrf.mxu0
  %v953 = vpop.f32.mrf.mxu0
  %v954 = vadd.f32 %v857, %v953
  %v955 = vpop.f32.mrf.mxu0
  %956 = vmatprep.mubr.bf16.mxu0 %v376
  %957 = vmatmul.mubr.bf16.gmra.mxu0 %v375
  %v958 = vpop.f32.mrf.mxu0
  %v959 = vadd.f32 %v862, %v958
  %v960 = vpop.f32.mrf.mxu0
  %v961 = vpop.f32.mrf.mxu0
  %v962 = vadd.f32 %v865, %v961
  %v963 = vpop.f32.mrf.mxu0
  %964 = vmatprep.mubr.bf16.mxu0 %v383
  %965 = vmatmul.mubr.bf16.gmra.mxu0 %v382
  %v966 = vpop.f32.mrf.mxu0
  %v967 = vadd.f32 %v870, %v966
  %v968 = vpop.f32.mrf.mxu0
  %v969 = vpop.f32.mrf.mxu0
  %v970 = vadd.f32 %v873, %v969
  %v971 = vpop.f32.mrf.mxu0
  %972 = vmatprep.mubr.bf16.mxu0 %v390
  %973 = vmatmul.mubr.bf16.gmra.mxu0 %v389
  %v974 = vpop.f32.mrf.mxu0
  %v975 = vadd.f32 %v878, %v974
  %v976 = vpop.f32.mrf.mxu0
  %v977 = vpop.f32.mrf.mxu0
  %v978 = vadd.f32 %v881, %v977
  %v979 = vpop.f32.mrf.mxu0
  %980 = vmatprep.mubr.bf16.mxu0 %v397
  %981 = vmatmul.mubr.bf16.gmra.mxu0 %v396
  %v982 = vpop.f32.mrf.mxu0
  %v983 = vadd.f32 %v886, %v982
  %v984 = vpop.f32.mrf.mxu0
  %v985 = vpop.f32.mrf.mxu0
  %v986 = vadd.f32 %v889, %v985
  %v987 = vpop.f32.mrf.mxu0
  %988 = vmatprep.mubr.bf16.mxu0 %v404
  %989 = vmatmul.mubr.bf16.gmra.mxu0 %v403
  %v990 = vpop.f32.mrf.mxu0
  %v991 = vadd.f32 %v894, %v990
  %v992 = vpop.f32.mrf.mxu0
  %v993 = vpop.f32.mrf.mxu0
  %v994 = vadd.f32 %v897, %v993
  %v995 = vpop.f32.mrf.mxu0
  %996 = vmatprep.mubr.bf16.mxu0 %v411
  %997 = vmatmul.mubr.bf16.gmra.mxu0 %v410
  %v998 = vpop.f32.mrf.mxu0
  %v999 = vadd.f32 %v902, %v998
  %v1000 = vpop.f32.mrf.mxu0
  %v1001 = vpop.f32.mrf.mxu0
  %v1002 = vadd.f32 %v905, %v1001
  %v1003 = vpop.f32.mrf.mxu0
  %1004 = vmatprep.mubr.bf16.mxu0 %v418
  %1005 = vmatmul.mubr.bf16.gmra.mxu0 %v417
  %v1006 = vpop.f32.mrf.mxu0
  %v1007 = vadd.f32 %v910, %v1006
  %v1008 = vpop.f32.mrf.mxu0
  %v1009 = vpop.f32.mrf.mxu0
  %v1010 = vadd.f32 %v913, %v1009
  %v1011 = vpop.f32.mrf.mxu0
  %1012 = vdwg.mxu0
  %1013 = vmatprep.subr.bf16.mxu0 0
  %1014 = vmatpush1.bf16.msra.mxu0 %v725
  %1015 = vmatprep.subr.bf16.mxu0 0
  %1016 = vmatpush1.bf16.msra.mxu0 %v724
  %1017 = vmatprep.subr.bf16.mxu0 0
  %1018 = vmatpush1.bf16.msra.mxu0 %v723
  %1019 = vmatprep.subr.bf16.mxu0 0
  %1020 = vmatpush1.bf16.msra.mxu0 %v722
  %1021 = vmatprep.subr.bf16.mxu0 0
  %1022 = vmatpush1.bf16.msra.mxu0 %v721
  %1023 = vmatprep.subr.bf16.mxu0 0
  %1024 = vmatpush1.bf16.msra.mxu0 %v720
  %1025 = vmatprep.subr.bf16.mxu0 0
  %1026 = vmatpush1.bf16.msra.mxu0 %v719
  %1027 = vmatprep.subr.bf16.mxu0 0
  %1028 = vmatpush1.bf16.msra.mxu0 %v718
  %1029 = vmatprep.subr.bf16.mxu0 0
  %1030 = vmatpush2.bf16.msra.mxu0 %v733
  %1031 = vmatprep.subr.bf16.mxu0 0
  %1032 = vmatpush2.bf16.msra.mxu0 %v732
  %1033 = vmatprep.subr.bf16.mxu0 0
  %1034 = vmatpush2.bf16.msra.mxu0 %v731
  %1035 = vmatprep.subr.bf16.mxu0 0
  %1036 = vmatpush2.bf16.msra.mxu0 %v730
  %1037 = vmatprep.subr.bf16.mxu0 0
  %1038 = vmatpush2.bf16.msra.mxu0 %v729
  %1039 = vmatprep.subr.bf16.mxu0 0
  %1040 = vmatpush2.bf16.msra.mxu0 %v728
  %1041 = vmatprep.subr.bf16.mxu0 0
  %1042 = vmatpush2.bf16.msra.mxu0 %v727
  %1043 = vmatprep.subr.bf16.mxu0 0
  %1044 = vmatpush2.bf16.msra.mxu0 %v726
  %1045 = vmatprep.mubr.bf16.mxu0 %v371
  %1046 = vmatmul.mubr.bf16.gmra.mxu0 %v370
  %v1047 = vpop.f32.mrf.mxu0
  %v1048 = vadd.f32 %v951, %v1047
  %v1049 = vpop.f32.mrf.mxu0
  %v1050 = vpop.f32.mrf.mxu0
  %v1051 = vadd.f32 %v954, %v1050
  %v1052 = vpop.f32.mrf.mxu0
  %1053 = vmatprep.mubr.bf16.mxu0 %v378
  %1054 = vmatmul.mubr.bf16.gmra.mxu0 %v377
  %v1055 = vpop.f32.mrf.mxu0
  %v1056 = vadd.f32 %v959, %v1055
  %v1057 = vpop.f32.mrf.mxu0
  %v1058 = vpop.f32.mrf.mxu0
  %v1059 = vadd.f32 %v962, %v1058
  %v1060 = vpop.f32.mrf.mxu0
  %1061 = vmatprep.mubr.bf16.mxu0 %v385
  %1062 = vmatmul.mubr.bf16.gmra.mxu0 %v384
  %v1063 = vpop.f32.mrf.mxu0
  %v1064 = vadd.f32 %v967, %v1063
  %v1065 = vpop.f32.mrf.mxu0
  %v1066 = vpop.f32.mrf.mxu0
  %v1067 = vadd.f32 %v970, %v1066
  %v1068 = vpop.f32.mrf.mxu0
  %1069 = vmatprep.mubr.bf16.mxu0 %v392
  %1070 = vmatmul.mubr.bf16.gmra.mxu0 %v391
  %v1071 = vpop.f32.mrf.mxu0
  %v1072 = vadd.f32 %v975, %v1071
  %v1073 = vpop.f32.mrf.mxu0
  %v1074 = vpop.f32.mrf.mxu0
  %v1075 = vadd.f32 %v978, %v1074
  %v1076 = vpop.f32.mrf.mxu0
  %1077 = vmatprep.mubr.bf16.mxu0 %v399
  %1078 = vmatmul.mubr.bf16.gmra.mxu0 %v398
  %v1079 = vpop.f32.mrf.mxu0
  %v1080 = vadd.f32 %v983, %v1079
  %v1081 = vpop.f32.mrf.mxu0
  %v1082 = vpop.f32.mrf.mxu0
  %v1083 = vadd.f32 %v986, %v1082
  %v1084 = vpop.f32.mrf.mxu0
  %1085 = vmatprep.mubr.bf16.mxu0 %v406
  %1086 = vmatmul.mubr.bf16.gmra.mxu0 %v405
  %v1087 = vpop.f32.mrf.mxu0
  %v1088 = vadd.f32 %v991, %v1087
  %v1089 = vpop.f32.mrf.mxu0
  %v1090 = vpop.f32.mrf.mxu0
  %v1091 = vadd.f32 %v994, %v1090
  %v1092 = vpop.f32.mrf.mxu0
  %1093 = vmatprep.mubr.bf16.mxu0 %v413
  %1094 = vmatmul.mubr.bf16.gmra.mxu0 %v412
  %v1095 = vpop.f32.mrf.mxu0
  %v1096 = vadd.f32 %v999, %v1095
  %v1097 = vpop.f32.mrf.mxu0
  %v1098 = vpop.f32.mrf.mxu0
  %v1099 = vadd.f32 %v1002, %v1098
  %v1100 = vpop.f32.mrf.mxu0
  %1101 = vmatprep.mubr.bf16.mxu0 %v420
  %1102 = vmatmul.mubr.bf16.gmra.mxu0 %v419
  %v1103 = vpop.f32.mrf.mxu0
  %v1104 = vadd.f32 %v1007, %v1103
  %v1105 = vpop.f32.mrf.mxu0
  %v1106 = vpop.f32.mrf.mxu0
  %v1107 = vadd.f32 %v1010, %v1106
  %v1108 = vpop.f32.mrf.mxu0
  %1109 = vdwg.mxu0
  %1110 = vmatprep.subr.bf16.mxu0 0
  %1111 = vmatpush1.bf16.msra.mxu0 0
  %1112 = vmatprep.subr.bf16.mxu0 0
  %1113 = vmatpush1.bf16.msra.mxu0 0
  %1114 = vmatprep.subr.bf16.mxu0 0
  %1115 = vmatpush1.bf16.msra.mxu0 %v739
  %1116 = vmatprep.subr.bf16.mxu0 0
  %1117 = vmatpush1.bf16.msra.mxu0 %v738
  %1118 = vmatprep.subr.bf16.mxu0 0
  %1119 = vmatpush1.bf16.msra.mxu0 %v737
  %1120 = vmatprep.subr.bf16.mxu0 0
  %1121 = vmatpush1.bf16.msra.mxu0 %v736
  %1122 = vmatprep.subr.bf16.mxu0 0
  %1123 = vmatpush1.bf16.msra.mxu0 %v735
  %1124 = vmatprep.subr.bf16.mxu0 0
  %1125 = vmatpush1.bf16.msra.mxu0 %v734
  %1126 = vmatprep.subr.bf16.mxu0 0
  %1127 = vmatpush2.bf16.msra.mxu0 0
  %1128 = vmatprep.subr.bf16.mxu0 0
  %1129 = vmatpush2.bf16.msra.mxu0 0
  %1130 = vmatprep.subr.bf16.mxu0 0
  %1131 = vmatpush2.bf16.msra.mxu0 0
  %1132 = vmatprep.subr.bf16.mxu0 0
  %1133 = vmatpush2.bf16.msra.mxu0 0
  %1134 = vmatprep.subr.bf16.mxu0 0
  %1135 = vmatpush2.bf16.msra.mxu0 0
  %1136 = vmatprep.subr.bf16.mxu0 0
  %1137 = vmatpush2.bf16.msra.mxu0 0
  %1138 = vmatprep.subr.bf16.mxu0 0
  %1139 = vmatpush2.bf16.msra.mxu0 0
  %1140 = vmatprep.subr.bf16.mxu0 0
  %1141 = vmatpush2.bf16.msra.mxu0 0
  %1142 = vmatprep.mubr.bf16.mxu0 0
  %1143 = vmatmul.mubr.bf16.gmra.mxu0 %v796
  %v1144 = vpop.f32.mrf.mxu0
  %v1145 = vadd.f32 %v1048, %v1144
  %v1146 = vpop.f32.mrf.mxu0
  %v1147 = vpop.f32.mrf.mxu0
  %v1148 = vadd.f32 %v1051, %v1147
  %v1149 = vpop.f32.mrf.mxu0
  %1150 = vmatprep.mubr.bf16.mxu0 0
  %1151 = vmatmul.mubr.bf16.gmra.mxu0 %v799
  %v1152 = vpop.f32.mrf.mxu0
  %v1153 = vadd.f32 %v1056, %v1152
  %v1154 = vpop.f32.mrf.mxu0
  %v1155 = vpop.f32.mrf.mxu0
  %v1156 = vadd.f32 %v1059, %v1155
  %v1157 = vpop.f32.mrf.mxu0
  %1158 = vmatprep.mubr.bf16.mxu0 0
  %1159 = vmatmul.mubr.bf16.gmra.mxu0 %v802
  %v1160 = vpop.f32.mrf.mxu0
  %v1161 = vadd.f32 %v1064, %v1160
  %v1162 = vpop.f32.mrf.mxu0
  %v1163 = vpop.f32.mrf.mxu0
  %v1164 = vadd.f32 %v1067, %v1163
  %v1165 = vpop.f32.mrf.mxu0
  %1166 = vmatprep.mubr.bf16.mxu0 0
  %1167 = vmatmul.mubr.bf16.gmra.mxu0 %v805
  %v1168 = vpop.f32.mrf.mxu0
  %v1169 = vadd.f32 %v1072, %v1168
  %v1170 = vpop.f32.mrf.mxu0
  %v1171 = vpop.f32.mrf.mxu0
  %v1172 = vadd.f32 %v1075, %v1171
  %v1173 = vpop.f32.mrf.mxu0
  %1174 = vmatprep.mubr.bf16.mxu0 0
  %1175 = vmatmul.mubr.bf16.gmra.mxu0 %v808
  %v1176 = vpop.f32.mrf.mxu0
  %v1177 = vadd.f32 %v1080, %v1176
  %v1178 = vpop.f32.mrf.mxu0
  %v1179 = vpop.f32.mrf.mxu0
  %v1180 = vadd.f32 %v1083, %v1179
  %v1181 = vpop.f32.mrf.mxu0
  %1182 = vmatprep.mubr.bf16.mxu0 0
  %1183 = vmatmul.mubr.bf16.gmra.mxu0 %v811
  %v1184 = vpop.f32.mrf.mxu0
  %v1185 = vadd.f32 %v1088, %v1184
  %v1186 = vpop.f32.mrf.mxu0
  %v1187 = vpop.f32.mrf.mxu0
  %v1188 = vadd.f32 %v1091, %v1187
  %v1189 = vpop.f32.mrf.mxu0
  %1190 = vmatprep.mubr.bf16.mxu0 0
  %1191 = vmatmul.mubr.bf16.gmra.mxu0 %v814
  %v1192 = vpop.f32.mrf.mxu0
  %v1193 = vadd.f32 %v1096, %v1192
  %v1194 = vpop.f32.mrf.mxu0
  %v1195 = vpop.f32.mrf.mxu0
  %v1196 = vadd.f32 %v1099, %v1195
  %v1197 = vpop.f32.mrf.mxu0
  %1198 = vmatprep.mubr.bf16.mxu0 0
  %1199 = vmatmul.mubr.bf16.gmra.mxu0 %v817
  %v1200 = vpop.f32.mrf.mxu0
  %v1201 = vadd.f32 %v1104, %v1200
  %v1202 = vpop.f32.mrf.mxu0
  %v1203 = vpop.f32.mrf.mxu0
  %v1204 = vadd.f32 %v1107, %v1203
  %v1205 = vpop.f32.mrf.mxu0
  %1206 = vdwg.mxu0
  %v1207 = vadd.f32 %v1145, %v1148
  %v1208 = vadd.f32 %v1207, %v1153
  %v1209 = vadd.f32 %v1208, %v1156
  %v1210 = vadd.f32 %v1209, %v1161
  %v1211 = vadd.f32 %v1210, %v1164
  %v1212 = vadd.f32 %v1211, %v1169
  %v1213 = vadd.f32 %v1212, %v1172
  %v1214 = vadd.f32 %v1213, %v1177
  %v1215 = vadd.f32 %v1214, %v1180
  %v1216 = vadd.f32 %v1215, %v1185
  %v1217 = vadd.f32 %v1216, %v1188
  %v1218 = vadd.f32 %v1217, %v1193
  %v1219 = vadd.f32 %v1218, %v1196
  %v1220 = vadd.f32 %v1219, %v1201
  %v1221 = vadd.f32 %v1220, %v1204
  %v1222 = vrot.slane %v1221, 4
  %v1223 = vadd.f32 %v1221, %v1222
  %v1224 = vrot.slane %v1223, 2
  %v1225 = vadd.f32 %v1223, %v1224
  %v1226 = vrot.slane %v1225, 1
  %v1227 = vadd.f32 %v1225, %v1226
  %v1228 = vmul.f32 %v1227, 0.0078125
  %v1229 = vmul.f32 %v1145, %v1145
  %v1230 = vmul.f32 %v1148, %v1148
  %v1231 = vmul.f32 %v1153, %v1153
  %v1232 = vmul.f32 %v1156, %v1156
  %v1233 = vmul.f32 %v1161, %v1161
  %v1234 = vmul.f32 %v1164, %v1164
  %v1235 = vmul.f32 %v1169, %v1169
  %v1236 = vmul.f32 %v1172, %v1172
  %v1237 = vmul.f32 %v1177, %v1177
  %v1238 = vmul.f32 %v1180, %v1180
  %v1239 = vmul.f32 %v1185, %v1185
  %v1240 = vmul.f32 %v1188, %v1188
  %v1241 = vmul.f32 %v1193, %v1193
  %v1242 = vmul.f32 %v1196, %v1196
  %v1243 = vmul.f32 %v1201, %v1201
  %v1244 = vmul.f32 %v1204, %v1204
  %v1245 = vadd.f32 %v1229, %v1230
  %v1246 = vadd.f32 %v1245, %v1231
  %v1247 = vadd.f32 %v1246, %v1232
  %v1248 = vadd.f32 %v1247, %v1233
  %v1249 = vadd.f32 %v1248, %v1234
  %v1250 = vadd.f32 %v1249, %v1235
  %v1251 = vadd.f32 %v1250, %v1236
  %v1252 = vadd.f32 %v1251, %v1237
  %v1253 = vadd.f32 %v1252, %v1238
  %v1254 = vadd.f32 %v1253, %v1239
  %v1255 = vadd.f32 %v1254, %v1240
  %v1256 = vadd.f32 %v1255, %v1241
  %v1257 = vadd.f32 %v1256, %v1242
  %v1258 = vadd.f32 %v1257, %v1243
  %v1259 = vadd.f32 %v1258, %v1244
  %v1260 = vrot.slane %v1259, 4
  %v1261 = vadd.f32 %v1259, %v1260
  %v1262 = vrot.slane %v1261, 2
  %v1263 = vadd.f32 %v1261, %v1262
  %v1264 = vrot.slane %v1263, 1
  %v1265 = vadd.f32 %v1263, %v1264
  %v1266 = vmul.f32 %v1265, 0.0078125
  %v1267 = vmul.f32 %v1228, %v1228
  %v1268 = vsub.f32 %v1266, %v1267
  %v1269 = vmax.f32 %v1268, 0.0
  %v1270 = vld [vmem:[%s2] sm:$0x1]
  %v1271 = vadd.f32 %v1269, 1e-05
  %v1272 = vrsqrt.pop %v1271
  %v1273 = vmul.f32 %v1270, %v1272
  %v1274 = vld [vmem:[%s3] sm:$0x1]
  %v1275 = vmul.f32 %v1228, %v1273
  %v1276 = vsub.f32 %v1274, %v1275
  %v1278 = vlaneseq
  %v1279 = vshrl.u32 %v1278, 7
  %v1280 = vsub.s32 0, %v1279
  %v1281 = vrot.slane %v1273, %v1280
  %v1283 = vmul.f32 %v1145, %v1281
  %v1284 = vmul.f32 %v1148, %v1281
  %v1285 = vmul.f32 %v1153, %v1281
  %v1286 = vmul.f32 %v1156, %v1281
  %v1287 = vmul.f32 %v1161, %v1281
  %v1288 = vmul.f32 %v1164, %v1281
  %v1289 = vmul.f32 %v1169, %v1281
  %v1290 = vmul.f32 %v1172, %v1281
  %v1291 = vmul.f32 %v1177, %v1281
  %v1292 = vmul.f32 %v1180, %v1281
  %v1293 = vmul.f32 %v1185, %v1281
  %v1294 = vmul.f32 %v1188, %v1281
  %v1295 = vmul.f32 %v1193, %v1281
  %v1296 = vmul.f32 %v1196, %v1281
  %v1297 = vmul.f32 %v1201, %v1281
  %v1298 = vmul.f32 %v1204, %v1281
  %v1300 = vlaneseq
  %v1301 = vshrl.u32 %v1300, 7
  %v1302 = vsub.s32 0, %v1301
  %v1303 = vrot.slane %v1276, %v1302
  %v1305 = vadd.f32 %v1283, %v1303
  %v1306 = vadd.f32 %v1284, %v1303
  %v1307 = vadd.f32 %v1285, %v1303
  %v1308 = vadd.f32 %v1286, %v1303
  %v1309 = vadd.f32 %v1287, %v1303
  %v1310 = vadd.f32 %v1288, %v1303
  %v1311 = vadd.f32 %v1289, %v1303
  %v1312 = vadd.f32 %v1290, %v1303
  %v1313 = vadd.f32 %v1291, %v1303
  %v1314 = vadd.f32 %v1292, %v1303
  %v1315 = vadd.f32 %v1293, %v1303
  %v1316 = vadd.f32 %v1294, %v1303
  %v1317 = vadd.f32 %v1295, %v1303
  %v1318 = vadd.f32 %v1296, %v1303
  %v1319 = vadd.f32 %v1297, %v1303
  %v1320 = vadd.f32 %v1298, %v1303
  %vm1321 = vcmp.ge.f32.partialorder %v1305, 0.0
  %vm1322 = vcmp.ge.f32.partialorder %v1306, 0.0
  %vm1323 = vcmp.ge.f32.partialorder %v1307, 0.0
  %vm1324 = vcmp.ge.f32.partialorder %v1308, 0.0
  %vm1325 = vcmp.ge.f32.partialorder %v1309, 0.0
  %vm1326 = vcmp.ge.f32.partialorder %v1310, 0.0
  %vm1327 = vcmp.ge.f32.partialorder %v1311, 0.0
  %vm1328 = vcmp.ge.f32.partialorder %v1312, 0.0
  %vm1329 = vcmp.ge.f32.partialorder %v1313, 0.0
  %vm1330 = vcmp.ge.f32.partialorder %v1314, 0.0
  %vm1331 = vcmp.ge.f32.partialorder %v1315, 0.0
  %vm1332 = vcmp.ge.f32.partialorder %v1316, 0.0
  %vm1333 = vcmp.ge.f32.partialorder %v1317, 0.0
  %vm1334 = vcmp.ge.f32.partialorder %v1318, 0.0
  %vm1335 = vcmp.ge.f32.partialorder %v1319, 0.0
  %vm1336 = vcmp.ge.f32.partialorder %v1320, 0.0
  %v1337 = vmul.f32 %v1305, 0.2
  %v1338 = vmul.f32 %v1306, 0.2
  %v1339 = vmul.f32 %v1307, 0.2
  %v1340 = vmul.f32 %v1308, 0.2
  %v1341 = vmul.f32 %v1309, 0.2
  %v1342 = vmul.f32 %v1310, 0.2
  %v1343 = vmul.f32 %v1311, 0.2
  %v1344 = vmul.f32 %v1312, 0.2
  %v1345 = vmul.f32 %v1313, 0.2
  %v1346 = vmul.f32 %v1314, 0.2
  %v1347 = vmul.f32 %v1315, 0.2
  %v1348 = vmul.f32 %v1316, 0.2
  %v1349 = vmul.f32 %v1317, 0.2
  %v1350 = vmul.f32 %v1318, 0.2
  %v1351 = vmul.f32 %v1319, 0.2
  %v1352 = vmul.f32 %v1320, 0.2
  %v1353 = vsel %vm1321, %v1305, %v1337
  %v1354 = vsel %vm1322, %v1306, %v1338
  %v1355 = vsel %vm1323, %v1307, %v1339
  %v1356 = vsel %vm1324, %v1308, %v1340
  %v1357 = vsel %vm1325, %v1309, %v1341
  %v1358 = vsel %vm1326, %v1310, %v1342
  %v1359 = vsel %vm1327, %v1311, %v1343
  %v1360 = vsel %vm1328, %v1312, %v1344
  %v1361 = vsel %vm1329, %v1313, %v1345
  %v1362 = vsel %vm1330, %v1314, %v1346
  %v1363 = vsel %vm1331, %v1315, %v1347
  %v1364 = vsel %vm1332, %v1316, %v1348
  %v1365 = vsel %vm1333, %v1317, %v1349
  %v1366 = vsel %vm1334, %v1318, %v1350
  %v1367 = vsel %vm1335, %v1319, %v1351
  %v1368 = vsel %vm1336, %v1320, %v1352
  %v1369 = vpack.c.bf16 %v1354, %v1353
  %v1370 = vpack.c.bf16 %v1356, %v1355
  %v1371 = vpack.c.bf16 %v1358, %v1357
  %v1372 = vpack.c.bf16 %v1360, %v1359
  %v1373 = vpack.c.bf16 %v1362, %v1361
  %v1374 = vpack.c.bf16 %v1364, %v1363
  %v1375 = vpack.c.bf16 %v1366, %v1365
  %v1376 = vpack.c.bf16 %v1368, %v1367
  %v1385 = vunpack.c.l.b16 %v1369
  %v1386 = vunpack.c.h.b16 %v1369
  %v1387 = vunpack.c.l.b16 %v1370
  %v1388 = vunpack.c.h.b16 %v1370
  %v1389 = vunpack.c.l.b16 %v1371
  %v1390 = vunpack.c.h.b16 %v1371
  %v1391 = vunpack.c.l.b16 %v1372
  %v1392 = vunpack.c.h.b16 %v1372
  %v1393 = vunpack.c.l.b16 %v1373
  %v1394 = vunpack.c.h.b16 %v1373
  %v1395 = vunpack.c.l.b16 %v1374
  %v1396 = vunpack.c.h.b16 %v1374
  %v1397 = vunpack.c.l.b16 %v1375
  %v1398 = vunpack.c.h.b16 %v1375
  %v1399 = vunpack.c.l.b16 %v1376
  %v1400 = vunpack.c.h.b16 %v1376
  %v1401 = vpack.c.b16 %v1385, %v1385
  %v1402 = vpack.c.b16 %v1386, %v1386
  %v1403 = vpack.c.b16 %v1387, %v1387
  %v1404 = vpack.c.b16 %v1388, %v1388
  %v1405 = vpack.c.b16 %v1389, %v1389
  %v1406 = vpack.c.b16 %v1390, %v1390
  %v1407 = vpack.c.b16 %v1391, %v1391
  %v1408 = vpack.c.b16 %v1392, %v1392
  %v1409 = vpack.c.b16 %v1393, %v1393
  %v1410 = vpack.c.b16 %v1394, %v1394
  %v1411 = vpack.c.b16 %v1395, %v1395
  %v1412 = vpack.c.b16 %v1396, %v1396
  %v1413 = vpack.c.b16 %v1397, %v1397
  %v1414 = vpack.c.b16 %v1398, %v1398
  %v1415 = vpack.c.b16 %v1399, %v1399
  %v1416 = vpack.c.b16 %v1400, %v1400
  %1433 = vst [vmem:[%s4] sm:$0xf] %v1401
  %1434 = vst [vmem:[%s4 + $0x4] sm:$0xf] %v1402
  %1435 = vst [vmem:[%s4 + $0x8] sm:$0xf] %v1403
  %1436 = vst [vmem:[%s4 + $0xc] sm:$0xf] %v1404
  %1437 = vst [vmem:[%s4 + $0x10] sm:$0xf] %v1405
  %1438 = vst [vmem:[%s4 + $0x14] sm:$0xf] %v1406
  %1439 = vst [vmem:[%s4 + $0x18] sm:$0xf] %v1407
  %1440 = vst [vmem:[%s4 + $0x1c] sm:$0xf] %v1408
  %1441 = vst [vmem:[%s4 + $0x20] sm:$0xf] %v1409
  %1442 = vst [vmem:[%s4 + $0x24] sm:$0xf] %v1410
  %1443 = vst [vmem:[%s4 + $0x28] sm:$0xf] %v1411
  %1444 = vst [vmem:[%s4 + $0x2c] sm:$0xf] %v1412
  %1445 = vst [vmem:[%s4 + $0x30] sm:$0xf] %v1413
  %1446 = vst [vmem:[%s4 + $0x34] sm:$0xf] %v1414
  %1447 = vst [vmem:[%s4 + $0x38] sm:$0xf] %v1415
  %1448 = vst [vmem:[%s4 + $0x3c] sm:$0xf] %v1416
  // Predicated region
  $region18: #{discriminator_forward.7} parent=0 // pred_check
    _
  $region19: #{discriminator_forward.7} parent=0 // pred_check_branch
    %1450 = sbr.rel (0) target = $region21
  $region20: #{discriminator_forward.7} parent=0 // pred_region
    _
  $region21: #{discriminator_forward.7} parent=0 // pred_fallthru
    _
  // Predicated region
  $region22: #{discriminator_forward.7} parent=0 // pred_check
    _
  $region23: #{discriminator_forward.7} parent=0 // pred_check_branch
    %1452 = sbr.rel (0) target = $region25
  $region24: #{discriminator_forward.7} parent=0 // pred_region
    _
  $region25: #{discriminator_forward.7} parent=0 // pred_fallthru
    _

// kernel: discriminator_forward.8
$region0: #{discriminator_forward.8}
  #allocation0 [shape = 'u32[]', space=smem, size = 0x4, offset = 0x4, fixed_abs, tag = 'smem constant byte address 0x4 - core index']
  #allocation1 [shape = 'u32[144,128]{1,0:T(1,128)}', space=vmem, size = 0x12000, scoped, tag = 'internal scratch']
  %s0 = inlined_call_operand.vmem [shape: bf16[16,1728], index: 0, kind: input, shape index: {}]
  %s1 = inlined_call_operand.vmem [shape: bf16[1728,128], index: 1, kind: input, shape index: {}]
  %s2 = inlined_call_operand.vmem [shape: f32[1,128], index: 2, kind: input, shape index: {}]
  %s3 = inlined_call_operand.vmem [shape: f32[1,128], index: 3, kind: input, shape index: {}]
  %s4 = inlined_call_operand.vmem [shape: bf16[16,128], index: 4, kind: output, shape index: {}]
  %s5 = sld [smem:[#allocation0]]
  $region26: #{discriminator_forward.8} parent=0
    _
  %s7 = ssub.s32 1, %s5
  %s8 = scalar_select 0, %s7, %s5
  // Predicated region
  $region2: #{discriminator_forward.8} parent=0 // pred_check
    _
  $region3: #{discriminator_forward.8} parent=0 // pred_check_branch
    %10 = sbr.rel (0) target = $region5
  $region4: #{discriminator_forward.8} parent=0 // pred_region
    _
  $region5: #{discriminator_forward.8} parent=0 // pred_fallthru
    _
  // Predicated region
  $region6: #{discriminator_forward.8} parent=0 // pred_check
    _
  $region7: #{discriminator_forward.8} parent=0 // pred_check_branch
    %12 = sbr.rel (0) target = $region9
  $region8: #{discriminator_forward.8} parent=0 // pred_region
    _
  $region9: #{discriminator_forward.8} parent=0 // pred_fallthru
    _
  // Predicated region
  $region10: #{discriminator_forward.8} parent=0 // pred_check
    _
  $region11: #{discriminator_forward.8} parent=0 // pred_check_branch
    %14 = sbr.rel (0) target = $region13
  $region12: #{discriminator_forward.8} parent=0 // pred_region
    _
  $region13: #{discriminator_forward.8} parent=0 // pred_fallthru
    _
  // Predicated region
  $region14: #{discriminator_forward.8} parent=0 // pred_check
    _
  $region15: #{discriminator_forward.8} parent=0 // pred_check_branch
    %16 = sbr.rel (0) target = $region17
  $region16: #{discriminator_forward.8} parent=0 // pred_region
    _
  $region17: #{discriminator_forward.8} parent=0 // pred_fallthru
    _
  %v18 = vld [vmem:[%s0] sm:$0xff]
  %v19 = vld [vmem:[%s0 + $0x8] sm:$0xff]
  %v20 = vld [vmem:[%s0 + $0x10] sm:$0xff]
  %v21 = vld [vmem:[%s0 + $0x18] sm:$0xff]
  %v22 = vld [vmem:[%s0 + $0x20] sm:$0xff]
  %v23 = vld [vmem:[%s0 + $0x28] sm:$0xff]
  %v24 = vld [vmem:[%s0 + $0x30] sm:$0xff]
  %v25 = vld [vmem:[%s0 + $0x38] sm:$0xff]
  %v26 = vld [vmem:[%s0 + $0x40] sm:$0xff]
  %v27 = vld [vmem:[%s0 + $0x48] sm:$0xff]
  %v28 = vld [vmem:[%s0 + $0x50] sm:$0xff]
  %v29 = vld [vmem:[%s0 + $0x58] sm:$0xff]
  %v30 = vld [vmem:[%s0 + $0x60] sm:$0xff]
  %v31 = vld [vmem:[%s0 + $0x68] sm:$0xff]
  %v32 = vld [vmem:[%s1] sm:$0xf]
  %v33 = vld [vmem:[%s1 + $0x4] sm:$0xf]
  %v34 = vld [vmem:[%s1 + $0x8] sm:$0xf]
  %v35 = vld [vmem:[%s1 + $0xc] sm:$0xf]
  %v36 = vld [vmem:[%s1 + $0x10] sm:$0xf]
  %v37 = vld [vmem:[%s1 + $0x14] sm:$0xf]
  %v38 = vld [vmem:[%s1 + $0x18] sm:$0xf]
  %v39 = vld [vmem:[%s1 + $0x1c] sm:$0xf]
  %v40 = vld [vmem:[%s1 + $0x20] sm:$0xf]
  %v41 = vld [vmem:[%s1 + $0x24] sm:$0xf]
  %v42 = vld [vmem:[%s1 + $0x28] sm:$0xf]
  %v43 = vld [vmem:[%s1 + $0x2c] sm:$0xf]
  %v44 = vld [vmem:[%s1 + $0x30] sm:$0xf]
  %v45 = vld [vmem:[%s1 + $0x34] sm:$0xf]
  %v46 = vld [vmem:[%s1 + $0x38] sm:$0xf]
  %v47 = vld [vmem:[%s1 + $0x3c] sm:$0xf]
  %v48 = vld [vmem:[%s1 + $0x40] sm:$0xf]
  %v49 = vld [vmem:[%s1 + $0x44] sm:$0xf]
  %v50 = vld [vmem:[%s1 + $0x48] sm:$0xf]
  %v51 = vld [vmem:[%s1 + $0x4c] sm:$0xf]
  %v52 = vld [vmem:[%s1 + $0x50] sm:$0xf]
  %v53 = vld [vmem:[%s1 + $0x54] sm:$0xf]
  %v54 = vld [vmem:[%s1 + $0x58] sm:$0xf]
  %v55 = vld [vmem:[%s1 + $0x5c] sm:$0xf]
  %v56 = vld [vmem:[%s1 + $0x60] sm:$0xf]
  %v57 = vld [vmem:[%s1 + $0x64] sm:$0xf]
  %v58 = vld [vmem:[%s1 + $0x68] sm:$0xf]
  %v59 = vld [vmem:[%s1 + $0x6c] sm:$0xf]
  %v60 = vld [vmem:[%s1 + $0x70] sm:$0xf]
  %v61 = vld [vmem:[%s1 + $0x74] sm:$0xf]
  %v62 = vld [vmem:[%s1 + $0x78] sm:$0xf]
  %v63 = vld [vmem:[%s1 + $0x7c] sm:$0xf]
  %v64 = vld [vmem:[%s1 + $0x80] sm:$0xf]
  %v65 = vld [vmem:[%s1 + $0x84] sm:$0xf]
  %v66 = vld [vmem:[%s1 + $0x88] sm:$0xf]
  %v67 = vld [vmem:[%s1 + $0x8c] sm:$0xf]
  %v68 = vld [vmem:[%s1 + $0x90] sm:$0xf]
  %v69 = vld [vmem:[%s1 + $0x94] sm:$0xf]
  %v70 = vld [vmem:[%s1 + $0x98] sm:$0xf]
  %v71 = vld [vmem:[%s1 + $0x9c] sm:$0xf]
  %v72 = vld [vmem:[%s1 + $0xa0] sm:$0xf]
  %v73 = vld [vmem:[%s1 + $0xa4] sm:$0xf]
  %v74 = vld [vmem:[%s1 + $0xa8] sm:$0xf]
  %v75 = vld [vmem:[%s1 + $0xac] sm:$0xf]
  %v76 = vld [vmem:[%s1 + $0xb0] sm:$0xf]
  %v77 = vld [vmem:[%s1 + $0xb4] sm:$0xf]
  %v78 = vld [vmem:[%s1 + $0xb8] sm:$0xf]
  %v79 = vld [vmem:[%s1 + $0xbc] sm:$0xf]
  %v80 = vld [vmem:[%s1 + $0xc0] sm:$0xf]
  %v81 = vld [vmem:[%s1 + $0xc4] sm:$0xf]
  %v82 = vld [vmem:[%s1 + $0xc8] sm:$0xf]
  %v83 = vld [vmem:[%s1 + $0xcc] sm:$0xf]
  %v84 = vld [vmem:[%s1 + $0xd0] sm:$0xf]
  %v85 = vld [vmem:[%s1 + $0xd4] sm:$0xf]
  %v86 = vld [vmem:[%s1 + $0xd8] sm:$0xf]
  %v87 = vld [vmem:[%s1 + $0xdc] sm:$0xf]
  %v88 = vld [vmem:[%s1 + $0xe0] sm:$0xf]
  %v89 = vld [vmem:[%s1 + $0xe4] sm:$0xf]
  %v90 = vld [vmem:[%s1 + $0xe8] sm:$0xf]
  %v91 = vld [vmem:[%s1 + $0xec] sm:$0xf]
  %v92 = vld [vmem:[%s1 + $0xf0] sm:$0xf]
  %v93 = vld [vmem:[%s1 + $0xf4] sm:$0xf]
  %v94 = vld [vmem:[%s1 + $0xf8] sm:$0xf]
  %v95 = vld [vmem:[%s1 + $0xfc] sm:$0xf]
  %v96 = vld [vmem:[%s1 + $0x100] sm:$0xf]
  %v97 = vld [vmem:[%s1 + $0x104] sm:$0xf]
  %v98 = vld [vmem:[%s1 + $0x108] sm:$0xf]
  %v99 = vld [vmem:[%s1 + $0x10c] sm:$0xf]
  %v100 = vld [vmem:[%s1 + $0x110] sm:$0xf]
  %v101 = vld [vmem:[%s1 + $0x114] sm:$0xf]
  %v102 = vld [vmem:[%s1 + $0x118] sm:$0xf]
  %v103 = vld [vmem:[%s1 + $0x11c] sm:$0xf]
  %v104 = vld [vmem:[%s1 + $0x120] sm:$0xf]
  %v105 = vld [vmem:[%s1 + $0x124] sm:$0xf]
  %v106 = vld [vmem:[%s1 + $0x128] sm:$0xf]
  %v107 = vld [vmem:[%s1 + $0x12c] sm:$0xf]
  %v108 = vld [vmem:[%s1 + $0x130] sm:$0xf]
  %v109 = vld [vmem:[%s1 + $0x134] sm:$0xf]
  %v110 = vld [vmem:[%s1 + $0x138] sm:$0xf]
  %v111 = vld [vmem:[%s1 + $0x13c] sm:$0xf]
  %v112 = vld [vmem:[%s1 + $0x140] sm:$0xf]
  %v113 = vld [vmem:[%s1 + $0x144] sm:$0xf]
  %v114 = vld [vmem:[%s1 + $0x148] sm:$0xf]
  %v115 = vld [vmem:[%s1 + $0x14c] sm:$0xf]
  %v116 = vld [vmem:[%s1 + $0x150] sm:$0xf]
  %v117 = vld [vmem:[%s1 + $0x154] sm:$0xf]
  %v118 = vld [vmem:[%s1 + $0x158] sm:$0xf]
  %v119 = vld [vmem:[%s1 + $0x15c] sm:$0xf]
  %v120 = vld [vmem:[%s1 + $0x160] sm:$0xf]
  %v121 = vld [vmem:[%s1 + $0x164] sm:$0xf]
  %v122 = vld [vmem:[%s1 + $0x168] sm:$0xf]
  %v123 = vld [vmem:[%s1 + $0x16c] sm:$0xf]
  %v124 = vld [vmem:[%s1 + $0x170] sm:$0xf]
  %v125 = vld [vmem:[%s1 + $0x174] sm:$0xf]
  %v126 = vld [vmem:[%s1 + $0x178] sm:$0xf]
  %v127 = vld [vmem:[%s1 + $0x17c] sm:$0xf]
  %v128 = vld [vmem:[%s1 + $0x180] sm:$0xf]
  %v129 = vld [vmem:[%s1 + $0x184] sm:$0xf]
  %v130 = vld [vmem:[%s1 + $0x188] sm:$0xf]
  %v131 = vld [vmem:[%s1 + $0x18c] sm:$0xf]
  %v132 = vld [vmem:[%s1 + $0x190] sm:$0xf]
  %v133 = vld [vmem:[%s1 + $0x194] sm:$0xf]
  %v134 = vld [vmem:[%s1 + $0x198] sm:$0xf]
  %v135 = vld [vmem:[%s1 + $0x19c] sm:$0xf]
  %v136 = vld [vmem:[%s1 + $0x1a0] sm:$0xf]
  %v137 = vld [vmem:[%s1 + $0x1a4] sm:$0xf]
  %v138 = vld [vmem:[%s1 + $0x1a8] sm:$0xf]
  %v139 = vld [vmem:[%s1 + $0x1ac] sm:$0xf]
  %v140 = vld [vmem:[%s1 + $0x1b0] sm:$0xf]
  %v141 = vld [vmem:[%s1 + $0x1b4] sm:$0xf]
  %v142 = vld [vmem:[%s1 + $0x1b8] sm:$0xf]
  %v143 = vld [vmem:[%s1 + $0x1bc] sm:$0xf]
  %v144 = vld [vmem:[%s1 + $0x1c0] sm:$0xf]
  %v145 = vld [vmem:[%s1 + $0x1c4] sm:$0xf]
  %v146 = vld [vmem:[%s1 + $0x1c8] sm:$0xf]
  %v147 = vld [vmem:[%s1 + $0x1cc] sm:$0xf]
  %v148 = vld [vmem:[%s1 + $0x1d0] sm:$0xf]
  %v149 = vld [vmem:[%s1 + $0x1d4] sm:$0xf]
  %v150 = vld [vmem:[%s1 + $0x1d8] sm:$0xf]
  %v151 = vld [vmem:[%s1 + $0x1dc] sm:$0xf]
  %v152 = vld [vmem:[%s1 + $0x1e0] sm:$0xf]
  %v153 = vld [vmem:[%s1 + $0x1e4] sm:$0xf]
  %v154 = vld [vmem:[%s1 + $0x1e8] sm:$0xf]
  %v155 = vld [vmem:[%s1 + $0x1ec] sm:$0xf]
  %v156 = vld [vmem:[%s1 + $0x1f0] sm:$0xf]
  %v157 = vld [vmem:[%s1 + $0x1f4] sm:$0xf]
  %v158 = vld [vmem:[%s1 + $0x1f8] sm:$0xf]
  %v159 = vld [vmem:[%s1 + $0x1fc] sm:$0xf]
  %v160 = vld [vmem:[%s1 + $0x200] sm:$0xf]
  %v161 = vld [vmem:[%s1 + $0x204] sm:$0xf]
  %v162 = vld [vmem:[%s1 + $0x208] sm:$0xf]
  %v163 = vld [vmem:[%s1 + $0x20c] sm:$0xf]
  %v164 = vld [vmem:[%s1 + $0x210] sm:$0xf]
  %v165 = vld [vmem:[%s1 + $0x214] sm:$0xf]
  %v166 = vld [vmem:[%s1 + $0x218] sm:$0xf]
  %v167 = vld [vmem:[%s1 + $0x21c] sm:$0xf]
  %v168 = vld [vmem:[%s1 + $0x220] sm:$0xf]
  %v169 = vld [vmem:[%s1 + $0x224] sm:$0xf]
  %v170 = vld [vmem:[%s1 + $0x228] sm:$0xf]
  %v171 = vld [vmem:[%s1 + $0x22c] sm:$0xf]
  %v172 = vld [vmem:[%s1 + $0x230] sm:$0xf]
  %v173 = vld [vmem:[%s1 + $0x234] sm:$0xf]
  %v174 = vld [vmem:[%s1 + $0x238] sm:$0xf]
  %v175 = vld [vmem:[%s1 + $0x23c] sm:$0xf]
  %v176 = vld [vmem:[%s1 + $0x240] sm:$0xf]
  %v177 = vld [vmem:[%s1 + $0x244] sm:$0xf]
  %v178 = vld [vmem:[%s1 + $0x248] sm:$0xf]
  %v179 = vld [vmem:[%s1 + $0x24c] sm:$0xf]
  %v180 = vld [vmem:[%s1 + $0x250] sm:$0xf]
  %v181 = vld [vmem:[%s1 + $0x254] sm:$0xf]
  %v182 = vld [vmem:[%s1 + $0x258] sm:$0xf]
  %v183 = vld [vmem:[%s1 + $0x25c] sm:$0xf]
  %v184 = vld [vmem:[%s1 + $0x260] sm:$0xf]
  %v185 = vld [vmem:[%s1 + $0x264] sm:$0xf]
  %v186 = vld [vmem:[%s1 + $0x268] sm:$0xf]
  %v187 = vld [vmem:[%s1 + $0x26c] sm:$0xf]
  %v188 = vld [vmem:[%s1 + $0x270] sm:$0xf]
  %v189 = vld [vmem:[%s1 + $0x274] sm:$0xf]
  %v190 = vld [vmem:[%s1 + $0x278] sm:$0xf]
  %v191 = vld [vmem:[%s1 + $0x27c] sm:$0xf]
  %v192 = vld [vmem:[%s1 + $0x280] sm:$0xf]
  %v193 = vld [vmem:[%s1 + $0x284] sm:$0xf]
  %v194 = vld [vmem:[%s1 + $0x288] sm:$0xf]
  %v195 = vld [vmem:[%s1 + $0x28c] sm:$0xf]
  %v196 = vld [vmem:[%s1 + $0x290] sm:$0xf]
  %v197 = vld [vmem:[%s1 + $0x294] sm:$0xf]
  %v198 = vld [vmem:[%s1 + $0x298] sm:$0xf]
  %v199 = vld [vmem:[%s1 + $0x29c] sm:$0xf]
  %v200 = vld [vmem:[%s1 + $0x2a0] sm:$0xf]
  %v201 = vld [vmem:[%s1 + $0x2a4] sm:$0xf]
  %v202 = vld [vmem:[%s1 + $0x2a8] sm:$0xf]
  %v203 = vld [vmem:[%s1 + $0x2ac] sm:$0xf]
  %v204 = vld [vmem:[%s1 + $0x2b0] sm:$0xf]
  %v205 = vld [vmem:[%s1 + $0x2b4] sm:$0xf]
  %v206 = vld [vmem:[%s1 + $0x2b8] sm:$0xf]
  %v207 = vld [vmem:[%s1 + $0x2bc] sm:$0xf]
  %v208 = vld [vmem:[%s1 + $0x2c0] sm:$0xf]
  %v209 = vld [vmem:[%s1 + $0x2c4] sm:$0xf]
  %v210 = vld [vmem:[%s1 + $0x2c8] sm:$0xf]
  %v211 = vld [vmem:[%s1 + $0x2cc] sm:$0xf]
  %v212 = vld [vmem:[%s1 + $0x2d0] sm:$0xf]
  %v213 = vld [vmem:[%s1 + $0x2d4] sm:$0xf]
  %v214 = vld [vmem:[%s1 + $0x2d8] sm:$0xf]
  %v215 = vld [vmem:[%s1 + $0x2dc] sm:$0xf]
  %v216 = vld [vmem:[%s1 + $0x2e0] sm:$0xf]
  %v217 = vld [vmem:[%s1 + $0x2e4] sm:$0xf]
  %v218 = vld [vmem:[%s1 + $0x2e8] sm:$0xf]
  %v219 = vld [vmem:[%s1 + $0x2ec] sm:$0xf]
  %v220 = vld [vmem:[%s1 + $0x2f0] sm:$0xf]
  %v221 = vld [vmem:[%s1 + $0x2f4] sm:$0xf]
  %v222 = vld [vmem:[%s1 + $0x2f8] sm:$0xf]
  %v223 = vld [vmem:[%s1 + $0x2fc] sm:$0xf]
  %v224 = vld [vmem:[%s1 + $0x300] sm:$0xf]
  %v225 = vld [vmem:[%s1 + $0x304] sm:$0xf]
  %v226 = vld [vmem:[%s1 + $0x308] sm:$0xf]
  %v227 = vld [vmem:[%s1 + $0x30c] sm:$0xf]
  %v228 = vld [vmem:[%s1 + $0x310] sm:$0xf]
  %v229 = vld [vmem:[%s1 + $0x314] sm:$0xf]
  %v230 = vld [vmem:[%s1 + $0x318] sm:$0xf]
  %v231 = vld [vmem:[%s1 + $0x31c] sm:$0xf]
  %v232 = vld [vmem:[%s1 + $0x320] sm:$0xf]
  %v233 = vld [vmem:[%s1 + $0x324] sm:$0xf]
  %v234 = vld [vmem:[%s1 + $0x328] sm:$0xf]
  %v235 = vld [vmem:[%s1 + $0x32c] sm:$0xf]
  %v236 = vld [vmem:[%s1 + $0x330] sm:$0xf]
  %v237 = vld [vmem:[%s1 + $0x334] sm:$0xf]
  %v238 = vld [vmem:[%s1 + $0x338] sm:$0xf]
  %v239 = vld [vmem:[%s1 + $0x33c] sm:$0xf]
  %v240 = vld [vmem:[%s1 + $0x340] sm:$0xf]
  %v241 = vld [vmem:[%s1 + $0x344] sm:$0xf]
  %v242 = vld [vmem:[%s1 + $0x348] sm:$0xf]
  %v243 = vld [vmem:[%s1 + $0x34c] sm:$0xf]
  %v244 = vld [vmem:[%s1 + $0x350] sm:$0xf]
  %v245 = vld [vmem:[%s1 + $0x354] sm:$0xf]
  %v246 = vld [vmem:[%s1 + $0x358] sm:$0xf]
  %v247 = vld [vmem:[%s1 + $0x35c] sm:$0xf]
  %v262 = vunpack.c.l.b16 %v18
  %v263 = vunpack.c.h.b16 %v18
  %v264 = vunpack.c.l.b16 %v19
  %v265 = vunpack.c.h.b16 %v19
  %v266 = vunpack.c.l.b16 %v20
  %v267 = vunpack.c.h.b16 %v20
  %v268 = vunpack.c.l.b16 %v21
  %v269 = vunpack.c.h.b16 %v21
  %v270 = vunpack.c.l.b16 %v22
  %v271 = vunpack.c.h.b16 %v22
  %v272 = vunpack.c.l.b16 %v23
  %v273 = vunpack.c.h.b16 %v23
  %v274 = vunpack.c.l.b16 %v24
  %v275 = vunpack.c.h.b16 %v24
  %v276 = vunpack.c.l.b16 %v25
  %v277 = vunpack.c.h.b16 %v25
  %v278 = vunpack.c.l.b16 %v26
  %v279 = vunpack.c.h.b16 %v26
  %v280 = vunpack.c.l.b16 %v27
  %v281 = vunpack.c.h.b16 %v27
  %v282 = vunpack.c.l.b16 %v28
  %v283 = vunpack.c.h.b16 %v28
  %v284 = vunpack.c.l.b16 %v29
  %v285 = vunpack.c.h.b16 %v29
  %v286 = vunpack.c.l.b16 %v30
  %v287 = vunpack.c.h.b16 %v30
  %v288 = vunpack.c.l.b16 %v31
  %v289 = vunpack.c.h.b16 %v31
  %v290 = vpack.c.b16 %v276, %v262
  %v291 = vpack.c.b16 %v277, %v263
  %v292 = vpack.c.b16 %v278, %v264
  %v293 = vpack.c.b16 %v279, %v265
  %v294 = vpack.c.b16 %v280, %v266
  %v295 = vpack.c.b16 %v281, %v267
  %v296 = vpack.c.b16 %v282, %v268
  %v297 = vpack.c.b16 %v283, %v269
  %v298 = vpack.c.b16 %v284, %v270
  %v299 = vpack.c.b16 %v285, %v271
  %v300 = vpack.c.b16 %v286, %v272
  %v301 = vpack.c.b16 %v287, %v273
  %v302 = vpack.c.b16 %v288, %v274
  %v303 = vpack.c.b16 %v289, %v275
  %v533 = vunpack.c.l.b16 %v32
  %v534 = vunpack.c.l.b16 %v33
  %v535 = vunpack.c.l.b16 %v34
  %v536 = vunpack.c.l.b16 %v35
  %v537 = vunpack.c.l.b16 %v36
  %v538 = vunpack.c.l.b16 %v37
  %v539 = vunpack.c.l.b16 %v38
  %v540 = vunpack.c.l.b16 %v39
  %v541 = vunpack.c.l.b16 %v40
  %v542 = vunpack.c.l.b16 %v41
  %v543 = vunpack.c.l.b16 %v42
  %v544 = vunpack.c.l.b16 %v43
  %v545 = vunpack.c.l.b16 %v44
  %v546 = vunpack.c.l.b16 %v45
  %v547 = vunpack.c.l.b16 %v46
  %v548 = vunpack.c.l.b16 %v47
  %v549 = vunpack.c.l.b16 %v48
  %v550 = vunpack.c.l.b16 %v49
  %v551 = vunpack.c.l.b16 %v50
  %v552 = vunpack.c.l.b16 %v51
  %v553 = vunpack.c.l.b16 %v52
  %v554 = vunpack.c.l.b16 %v53
  %v555 = vunpack.c.l.b16 %v54
  %v556 = vunpack.c.l.b16 %v55
  %v557 = vunpack.c.l.b16 %v56
  %v558 = vunpack.c.l.b16 %v57
  %v559 = vunpack.c.l.b16 %v58
  %v560 = vunpack.c.l.b16 %v59
  %v561 = vunpack.c.l.b16 %v60
  %v562 = vunpack.c.l.b16 %v61
  %v563 = vunpack.c.l.b16 %v62
  %v564 = vunpack.c.l.b16 %v63
  %v565 = vunpack.c.l.b16 %v64
  %v566 = vunpack.c.l.b16 %v65
  %v567 = vunpack.c.l.b16 %v66
  %v568 = vunpack.c.l.b16 %v67
  %v569 = vunpack.c.l.b16 %v68
  %v570 = vunpack.c.l.b16 %v69
  %v571 = vunpack.c.l.b16 %v70
  %v572 = vunpack.c.l.b16 %v71
  %v573 = vunpack.c.l.b16 %v72
  %v574 = vunpack.c.l.b16 %v73
  %v575 = vunpack.c.l.b16 %v74
  %v576 = vunpack.c.l.b16 %v75
  %v577 = vunpack.c.l.b16 %v76
  %v578 = vunpack.c.l.b16 %v77
  %v579 = vunpack.c.l.b16 %v78
  %v580 = vunpack.c.l.b16 %v79
  %v581 = vunpack.c.l.b16 %v80
  %v582 = vunpack.c.l.b16 %v81
  %v583 = vunpack.c.l.b16 %v82
  %v584 = vunpack.c.l.b16 %v83
  %v585 = vunpack.c.l.b16 %v84
  %v586 = vunpack.c.l.b16 %v85
  %v587 = vunpack.c.l.b16 %v86
  %v588 = vunpack.c.l.b16 %v87
  %v589 = vunpack.c.l.b16 %v88
  %v590 = vunpack.c.l.b16 %v89
  %v591 = vunpack.c.l.b16 %v90
  %v592 = vunpack.c.l.b16 %v91
  %v593 = vunpack.c.l.b16 %v92
  %v594 = vunpack.c.l.b16 %v93
  %v595 = vunpack.c.l.b16 %v94
  %v596 = vunpack.c.l.b16 %v95
  %v597 = vunpack.c.l.b16 %v96
  %v598 = vunpack.c.l.b16 %v97
  %v599 = vunpack.c.l.b16 %v98
  %v600 = vunpack.c.l.b16 %v99
  %v601 = vunpack.c.l.b16 %v100
  %v602 = vunpack.c.l.b16 %v101
  %v603 = vunpack.c.l.b16 %v102
  %v604 = vunpack.c.l.b16 %v103
  %v605 = vunpack.c.l.b16 %v104
  %v606 = vunpack.c.l.b16 %v105
  %v607 = vunpack.c.l.b16 %v106
  %v608 = vunpack.c.l.b16 %v107
  %v609 = vunpack.c.l.b16 %v108
  %v610 = vunpack.c.l.b16 %v109
  %v611 = vunpack.c.l.b16 %v110
  %v612 = vunpack.c.l.b16 %v111
  %v613 = vunpack.c.l.b16 %v112
  %v614 = vunpack.c.l.b16 %v113
  %v615 = vunpack.c.l.b16 %v114
  %v616 = vunpack.c.l.b16 %v115
  %v617 = vunpack.c.l.b16 %v116
  %v618 = vunpack.c.l.b16 %v117
  %v619 = vunpack.c.l.b16 %v118
  %v620 = vunpack.c.l.b16 %v119
  %v621 = vunpack.c.l.b16 %v120
  %v622 = vunpack.c.l.b16 %v121
  %v623 = vunpack.c.l.b16 %v122
  %v624 = vunpack.c.l.b16 %v123
  %v625 = vunpack.c.l.b16 %v124
  %v626 = vunpack.c.l.b16 %v125
  %v627 = vunpack.c.l.b16 %v126
  %v628 = vunpack.c.l.b16 %v127
  %v629 = vunpack.c.l.b16 %v128
  %v630 = vunpack.c.l.b16 %v129
  %v631 = vunpack.c.l.b16 %v130
  %v632 = vunpack.c.l.b16 %v131
  %v633 = vunpack.c.l.b16 %v132
  %v634 = vunpack.c.l.b16 %v133
  %v635 = vunpack.c.l.b16 %v134
  %v636 = vunpack.c.l.b16 %v135
  %v637 = vunpack.c.l.b16 %v136
  %v638 = vunpack.c.l.b16 %v137
  %v639 = vunpack.c.l.b16 %v138
  %v640 = vunpack.c.l.b16 %v139
  %v641 = vunpack.c.l.b16 %v140
  %v642 = vunpack.c.l.b16 %v141
  %v643 = vunpack.c.l.b16 %v142
  %v644 = vunpack.c.l.b16 %v143
  %v645 = vunpack.c.l.b16 %v144
  %v646 = vunpack.c.l.b16 %v145
  %v647 = vunpack.c.l.b16 %v146
  %v648 = vunpack.c.l.b16 %v147
  %v649 = vunpack.c.l.b16 %v148
  %v650 = vunpack.c.l.b16 %v149
  %v651 = vunpack.c.l.b16 %v150
  %v652 = vunpack.c.l.b16 %v151
  %v653 = vunpack.c.l.b16 %v152
  %v654 = vunpack.c.l.b16 %v153
  %v655 = vunpack.c.l.b16 %v154
  %v656 = vunpack.c.l.b16 %v155
  %v657 = vunpack.c.l.b16 %v156
  %v658 = vunpack.c.l.b16 %v157
  %v659 = vunpack.c.l.b16 %v158
  %v660 = vunpack.c.l.b16 %v159
  %v661 = vunpack.c.l.b16 %v160
  %v662 = vunpack.c.l.b16 %v161
  %v663 = vunpack.c.l.b16 %v162
  %v664 = vunpack.c.l.b16 %v163
  %v665 = vunpack.c.l.b16 %v164
  %v666 = vunpack.c.l.b16 %v165
  %v667 = vunpack.c.l.b16 %v166
  %v668 = vunpack.c.l.b16 %v167
  %v669 = vunpack.c.l.b16 %v168
  %v670 = vunpack.c.l.b16 %v169
  %v671 = vunpack.c.l.b16 %v170
  %v672 = vunpack.c.l.b16 %v171
  %v673 = vunpack.c.l.b16 %v172
  %v674 = vunpack.c.l.b16 %v173
  %v675 = vunpack.c.l.b16 %v174
  %v676 = vunpack.c.l.b16 %v175
  %v677 = vunpack.c.l.b16 %v176
  %v678 = vunpack.c.l.b16 %v177
  %v679 = vunpack.c.l.b16 %v178
  %v680 = vunpack.c.l.b16 %v179
  %v681 = vunpack.c.l.b16 %v180
  %v682 = vunpack.c.l.b16 %v181
  %v683 = vunpack.c.l.b16 %v182
  %v684 = vunpack.c.l.b16 %v183
  %v685 = vunpack.c.l.b16 %v184
  %v686 = vunpack.c.l.b16 %v185
  %v687 = vunpack.c.l.b16 %v186
  %v688 = vunpack.c.l.b16 %v187
  %v689 = vunpack.c.l.b16 %v188
  %v690 = vunpack.c.l.b16 %v189
  %v691 = vunpack.c.l.b16 %v190
  %v692 = vunpack.c.l.b16 %v191
  %v693 = vunpack.c.l.b16 %v192
  %v694 = vunpack.c.l.b16 %v193
  %v695 = vunpack.c.l.b16 %v194
  %v696 = vunpack.c.l.b16 %v195
  %v697 = vunpack.c.l.b16 %v196
  %v698 = vunpack.c.l.b16 %v197
  %v699 = vunpack.c.l.b16 %v198
  %v700 = vunpack.c.l.b16 %v199
  %v701 = vunpack.c.l.b16 %v200
  %v702 = vunpack.c.l.b16 %v201
  %v703 = vunpack.c.l.b16 %v202
  %v704 = vunpack.c.l.b16 %v203
  %v705 = vunpack.c.l.b16 %v204
  %v706 = vunpack.c.l.b16 %v205
  %v707 = vunpack.c.l.b16 %v206
  %v708 = vunpack.c.l.b16 %v207
  %v709 = vunpack.c.l.b16 %v208
  %v710 = vunpack.c.l.b16 %v209
  %v711 = vunpack.c.l.b16 %v210
  %v712 = vunpack.c.l.b16 %v211
  %v713 = vunpack.c.l.b16 %v212
  %v714 = vunpack.c.l.b16 %v213
  %v715 = vunpack.c.l.b16 %v214
  %v716 = vunpack.c.l.b16 %v215
  %v717 = vunpack.c.l.b16 %v216
  %v718 = vunpack.c.l.b16 %v217
  %v719 = vunpack.c.l.b16 %v218
  %v720 = vunpack.c.l.b16 %v219
  %v721 = vunpack.c.l.b16 %v220
  %v722 = vunpack.c.l.b16 %v221
  %v723 = vunpack.c.l.b16 %v222
  %v724 = vunpack.c.l.b16 %v223
  %v725 = vunpack.c.l.b16 %v224
  %v726 = vunpack.c.l.b16 %v225
  %v727 = vunpack.c.l.b16 %v226
  %v728 = vunpack.c.l.b16 %v227
  %v729 = vunpack.c.l.b16 %v228
  %v730 = vunpack.c.l.b16 %v229
  %v731 = vunpack.c.l.b16 %v230
  %v732 = vunpack.c.l.b16 %v231
  %v733 = vunpack.c.l.b16 %v232
  %v734 = vunpack.c.l.b16 %v233
  %v735 = vunpack.c.l.b16 %v234
  %v736 = vunpack.c.l.b16 %v235
  %v737 = vunpack.c.l.b16 %v236
  %v738 = vunpack.c.l.b16 %v237
  %v739 = vunpack.c.l.b16 %v238
  %v740 = vunpack.c.l.b16 %v239
  %v741 = vunpack.c.l.b16 %v240
  %v742 = vunpack.c.l.b16 %v241
  %v743 = vunpack.c.l.b16 %v242
  %v744 = vunpack.c.l.b16 %v243
  %v745 = vunpack.c.l.b16 %v244
  %v746 = vunpack.c.l.b16 %v245
  %v747 = vunpack.c.l.b16 %v246
  %v748 = vunpack.c.l.b16 %v247
  %v749 = vpack.c.b16 %v534, %v533
  %v750 = vpack.c.b16 %v536, %v535
  %v751 = vpack.c.b16 %v538, %v537
  %v752 = vpack.c.b16 %v540, %v539
  %v753 = vpack.c.b16 %v542, %v541
  %v754 = vpack.c.b16 %v544, %v543
  %v755 = vpack.c.b16 %v546, %v545
  %v756 = vpack.c.b16 %v548, %v547
  %v757 = vpack.c.b16 %v550, %v549
  %v758 = vpack.c.b16 %v552, %v551
  %v759 = vpack.c.b16 %v554, %v553
  %v760 = vpack.c.b16 %v556, %v555
  %v761 = vpack.c.b16 %v558, %v557
  %v762 = vpack.c.b16 %v560, %v559
  %v763 = vpack.c.b16 %v562, %v561
  %v764 = vpack.c.b16 %v564, %v563
  %v765 = vpack.c.b16 %v566, %v565
  %v766 = vpack.c.b16 %v568, %v567
  %v767 = vpack.c.b16 %v570, %v569
  %v768 = vpack.c.b16 %v572, %v571
  %v769 = vpack.c.b16 %v574, %v573
  %v770 = vpack.c.b16 %v576, %v575
  %v771 = vpack.c.b16 %v578, %v577
  %v772 = vpack.c.b16 %v580, %v579
  %v773 = vpack.c.b16 %v582, %v581
  %v774 = vpack.c.b16 %v584, %v583
  %v775 = vpack.c.b16 %v586, %v585
  %v776 = vpack.c.b16 %v588, %v587
  %v777 = vpack.c.b16 %v590, %v589
  %v778 = vpack.c.b16 %v592, %v591
  %v779 = vpack.c.b16 %v594, %v593
  %v780 = vpack.c.b16 %v596, %v595
  %v781 = vpack.c.b16 %v598, %v597
  %v782 = vpack.c.b16 %v600, %v599
  %v783 = vpack.c.b16 %v602, %v601
  %v784 = vpack.c.b16 %v604, %v603
  %v785 = vpack.c.b16 %v606, %v605
  %v786 = vpack.c.b16 %v608, %v607
  %v787 = vpack.c.b16 %v610, %v609
  %v788 = vpack.c.b16 %v612, %v611
  %v789 = vpack.c.b16 %v614, %v613
  %v790 = vpack.c.b16 %v616, %v615
  %v791 = vpack.c.b16 %v618, %v617
  %v792 = vpack.c.b16 %v620, %v619
  %v793 = vpack.c.b16 %v622, %v621
  %v794 = vpack.c.b16 %v624, %v623
  %v795 = vpack.c.b16 %v626, %v625
  %v796 = vpack.c.b16 %v628, %v627
  %v797 = vpack.c.b16 %v630, %v629
  %v798 = vpack.c.b16 %v632, %v631
  %v799 = vpack.c.b16 %v634, %v633
  %v800 = vpack.c.b16 %v636, %v635
  %v801 = vpack.c.b16 %v638, %v637
  %v802 = vpack.c.b16 %v640, %v639
  %v803 = vpack.c.b16 %v642, %v641
  %v804 = vpack.c.b16 %v644, %v643
  %v805 = vpack.c.b16 %v646, %v645
  %v806 = vpack.c.b16 %v648, %v647
  %v807 = vpack.c.b16 %v650, %v649
  %v808 = vpack.c.b16 %v652, %v651
  %v809 = vpack.c.b16 %v654, %v653
  %v810 = vpack.c.b16 %v656, %v655
  %v811 = vpack.c.b16 %v658, %v657
  %v812 = vpack.c.b16 %v660, %v659
  %v813 = vpack.c.b16 %v662, %v661
  %v814 = vpack.c.b16 %v664, %v663
  %v815 = vpack.c.b16 %v666, %v665
  %v816 = vpack.c.b16 %v668, %v667
  %v817 = vpack.c.b16 %v670, %v669
  %v818 = vpack.c.b16 %v672, %v671
  %v819 = vpack.c.b16 %v674, %v673
  %v820 = vpack.c.b16 %v676, %v675
  %v821 = vpack.c.b16 %v678, %v677
  %v822 = vpack.c.b16 %v680, %v679
  %v823 = vpack.c.b16 %v682, %v681
  %v824 = vpack.c.b16 %v684, %v683
  %v825 = vpack.c.b16 %v686, %v685
  %v826 = vpack.c.b16 %v688, %v687
  %v827 = vpack.c.b16 %v690, %v689
  %v828 = vpack.c.b16 %v692, %v691
  %v829 = vpack.c.b16 %v694, %v693
  %v830 = vpack.c.b16 %v696, %v695
  %v831 = vpack.c.b16 %v698, %v697
  %v832 = vpack.c.b16 %v700, %v699
  %v833 = vpack.c.b16 %v702, %v701
  %v834 = vpack.c.b16 %v704, %v703
  %v835 = vpack.c.b16 %v706, %v705
  %v836 = vpack.c.b16 %v708, %v707
  %v837 = vpack.c.b16 %v710, %v709
  %v838 = vpack.c.b16 %v712, %v711
  %v839 = vpack.c.b16 %v714, %v713
  %v840 = vpack.c.b16 %v716, %v715
  %v841 = vpack.c.b16 %v718, %v717
  %v842 = vpack.c.b16 %v720, %v719
  %v843 = vpack.c.b16 %v722, %v721
  %v844 = vpack.c.b16 %v724, %v723
  %v845 = vpack.c.b16 %v726, %v725
  %v846 = vpack.c.b16 %v728, %v727
  %v847 = vpack.c.b16 %v730, %v729
  %v848 = vpack.c.b16 %v732, %v731
  %v849 = vpack.c.b16 %v734, %v733
  %v850 = vpack.c.b16 %v736, %v735
  %v851 = vpack.c.b16 %v738, %v737
  %v852 = vpack.c.b16 %v740, %v739
  %v853 = vpack.c.b16 %v742, %v741
  %v854 = vpack.c.b16 %v744, %v743
  %v855 = vpack.c.b16 %v746, %v745
  %v856 = vpack.c.b16 %v748, %v747
  %vm965 = vcmask 523264
  %v967 = vsel %vm965, %v303, 0
  %969 = vmatprep.subr.bf16.mxu0 0
  %970 = vmatpush1.bf16.msra.mxu0 %v756
  %971 = vmatprep.subr.bf16.mxu0 0
  %972 = vmatpush1.bf16.msra.mxu0 %v755
  %973 = vmatprep.subr.bf16.mxu0 0
  %974 = vmatpush1.bf16.msra.mxu0 %v754
  %975 = vmatprep.subr.bf16.mxu0 0
  %976 = vmatpush1.bf16.msra.mxu0 %v753
  %977 = vmatprep.subr.bf16.mxu0 0
  %978 = vmatpush1.bf16.msra.mxu0 %v752
  %979 = vmatprep.subr.bf16.mxu0 0
  %980 = vmatpush1.bf16.msra.mxu0 %v751
  %981 = vmatprep.subr.bf16.mxu0 0
  %982 = vmatpush1.bf16.msra.mxu0 %v750
  %983 = vmatprep.subr.bf16.mxu0 0
  %984 = vmatpush1.bf16.msra.mxu0 %v749
  %985 = vmatprep.subr.bf16.mxu0 0
  %986 = vmatpush2.bf16.msra.mxu0 %v764
  %987 = vmatprep.subr.bf16.mxu0 0
  %988 = vmatpush2.bf16.msra.mxu0 %v763
  %989 = vmatprep.subr.bf16.mxu0 0
  %990 = vmatpush2.bf16.msra.mxu0 %v762
  %991 = vmatprep.subr.bf16.mxu0 0
  %992 = vmatpush2.bf16.msra.mxu0 %v761
  %993 = vmatprep.subr.bf16.mxu0 0
  %994 = vmatpush2.bf16.msra.mxu0 %v760
  %995 = vmatprep.subr.bf16.mxu0 0
  %996 = vmatpush2.bf16.msra.mxu0 %v759
  %997 = vmatprep.subr.bf16.mxu0 0
  %998 = vmatpush2.bf16.msra.mxu0 %v758
  %999 = vmatprep.subr.bf16.mxu0 0
  %1000 = vmatpush2.bf16.msra.mxu0 %v757
  %1001 = vmatprep.mubr.bf16.mxu0 %v291
  %1002 = vmatmul.mubr.bf16.gmra.mxu0 %v290
  %v1003 = vpop.f32.mrf.mxu0
  %v1004 = vadd.f32 0.0, %v1003
  %v1005 = vpop.f32.mrf.mxu0
  %v1006 = vpop.f32.mrf.mxu0
  %v1007 = vadd.f32 0.0, %v1006
  %v1008 = vpop.f32.mrf.mxu0
  %1009 = vdwg.mxu0
  %1010 = vmatprep.subr.bf16.mxu0 0
  %1011 = vmatpush1.bf16.msra.mxu0 %v772
  %1012 = vmatprep.subr.bf16.mxu0 0
  %1013 = vmatpush1.bf16.msra.mxu0 %v771
  %1014 = vmatprep.subr.bf16.mxu0 0
  %1015 = vmatpush1.bf16.msra.mxu0 %v770
  %1016 = vmatprep.subr.bf16.mxu0 0
  %1017 = vmatpush1.bf16.msra.mxu0 %v769
  %1018 = vmatprep.subr.bf16.mxu0 0
  %1019 = vmatpush1.bf16.msra.mxu0 %v768
  %1020 = vmatprep.subr.bf16.mxu0 0
  %1021 = vmatpush1.bf16.msra.mxu0 %v767
  %1022 = vmatprep.subr.bf16.mxu0 0
  %1023 = vmatpush1.bf16.msra.mxu0 %v766
  %1024 = vmatprep.subr.bf16.mxu0 0
  %1025 = vmatpush1.bf16.msra.mxu0 %v765
  %1026 = vmatprep.subr.bf16.mxu0 0
  %1027 = vmatpush2.bf16.msra.mxu0 %v780
  %1028 = vmatprep.subr.bf16.mxu0 0
  %1029 = vmatpush2.bf16.msra.mxu0 %v779
  %1030 = vmatprep.subr.bf16.mxu0 0
  %1031 = vmatpush2.bf16.msra.mxu0 %v778
  %1032 = vmatprep.subr.bf16.mxu0 0
  %1033 = vmatpush2.bf16.msra.mxu0 %v777
  %1034 = vmatprep.subr.bf16.mxu0 0
  %1035 = vmatpush2.bf16.msra.mxu0 %v776
  %1036 = vmatprep.subr.bf16.mxu0 0
  %1037 = vmatpush2.bf16.msra.mxu0 %v775
  %1038 = vmatprep.subr.bf16.mxu0 0
  %1039 = vmatpush2.bf16.msra.mxu0 %v774
  %1040 = vmatprep.subr.bf16.mxu0 0
  %1041 = vmatpush2.bf16.msra.mxu0 %v773
  %1042 = vmatprep.mubr.bf16.mxu0 %v293
  %1043 = vmatmul.mubr.bf16.gmra.mxu0 %v292
  %v1044 = vpop.f32.mrf.mxu0
  %v1045 = vadd.f32 %v1004, %v1044
  %v1046 = vpop.f32.mrf.mxu0
  %v1047 = vpop.f32.mrf.mxu0
  %v1048 = vadd.f32 %v1007, %v1047
  %v1049 = vpop.f32.mrf.mxu0
  %1050 = vdwg.mxu0
  %1051 = vmatprep.subr.bf16.mxu0 0
  %1052 = vmatpush1.bf16.msra.mxu0 %v788
  %1053 = vmatprep.subr.bf16.mxu0 0
  %1054 = vmatpush1.bf16.msra.mxu0 %v787
  %1055 = vmatprep.subr.bf16.mxu0 0
  %1056 = vmatpush1.bf16.msra.mxu0 %v786
  %1057 = vmatprep.subr.bf16.mxu0 0
  %1058 = vmatpush1.bf16.msra.mxu0 %v785
  %1059 = vmatprep.subr.bf16.mxu0 0
  %1060 = vmatpush1.bf16.msra.mxu0 %v784
  %1061 = vmatprep.subr.bf16.mxu0 0
  %1062 = vmatpush1.bf16.msra.mxu0 %v783
  %1063 = vmatprep.subr.bf16.mxu0 0
  %1064 = vmatpush1.bf16.msra.mxu0 %v782
  %1065 = vmatprep.subr.bf16.mxu0 0
  %1066 = vmatpush1.bf16.msra.mxu0 %v781
  %1067 = vmatprep.subr.bf16.mxu0 0
  %1068 = vmatpush2.bf16.msra.mxu0 %v796
  %1069 = vmatprep.subr.bf16.mxu0 0
  %1070 = vmatpush2.bf16.msra.mxu0 %v795
  %1071 = vmatprep.subr.bf16.mxu0 0
  %1072 = vmatpush2.bf16.msra.mxu0 %v794
  %1073 = vmatprep.subr.bf16.mxu0 0
  %1074 = vmatpush2.bf16.msra.mxu0 %v793
  %1075 = vmatprep.subr.bf16.mxu0 0
  %1076 = vmatpush2.bf16.msra.mxu0 %v792
  %1077 = vmatprep.subr.bf16.mxu0 0
  %1078 = vmatpush2.bf16.msra.mxu0 %v791
  %1079 = vmatprep.subr.bf16.mxu0 0
  %1080 = vmatpush2.bf16.msra.mxu0 %v790
  %1081 = vmatprep.subr.bf16.mxu0 0
  %1082 = vmatpush2.bf16.msra.mxu0 %v789
  %1083 = vmatprep.mubr.bf16.mxu0 %v295
  %1084 = vmatmul.mubr.bf16.gmra.mxu0 %v294
  %v1085 = vpop.f32.mrf.mxu0
  %v1086 = vadd.f32 %v1045, %v1085
  %v1087 = vpop.f32.mrf.mxu0
  %v1088 = vpop.f32.mrf.mxu0
  %v1089 = vadd.f32 %v1048, %v1088
  %v1090 = vpop.f32.mrf.mxu0
  %1091 = vdwg.mxu0
  %1092 = vmatprep.subr.bf16.mxu0 0
  %1093 = vmatpush1.bf16.msra.mxu0 %v804
  %1094 = vmatprep.subr.bf16.mxu0 0
  %1095 = vmatpush1.bf16.msra.mxu0 %v803
  %1096 = vmatprep.subr.bf16.mxu0 0
  %1097 = vmatpush1.bf16.msra.mxu0 %v802
  %1098 = vmatprep.subr.bf16.mxu0 0
  %1099 = vmatpush1.bf16.msra.mxu0 %v801
  %1100 = vmatprep.subr.bf16.mxu0 0
  %1101 = vmatpush1.bf16.msra.mxu0 %v800
  %1102 = vmatprep.subr.bf16.mxu0 0
  %1103 = vmatpush1.bf16.msra.mxu0 %v799
  %1104 = vmatprep.subr.bf16.mxu0 0
  %1105 = vmatpush1.bf16.msra.mxu0 %v798
  %1106 = vmatprep.subr.bf16.mxu0 0
  %1107 = vmatpush1.bf16.msra.mxu0 %v797
  %1108 = vmatprep.subr.bf16.mxu0 0
  %1109 = vmatpush2.bf16.msra.mxu0 %v812
  %1110 = vmatprep.subr.bf16.mxu0 0
  %1111 = vmatpush2.bf16.msra.mxu0 %v811
  %1112 = vmatprep.subr.bf16.mxu0 0
  %1113 = vmatpush2.bf16.msra.mxu0 %v810
  %1114 = vmatprep.subr.bf16.mxu0 0
  %1115 = vmatpush2.bf16.msra.mxu0 %v809
  %1116 = vmatprep.subr.bf16.mxu0 0
  %1117 = vmatpush2.bf16.msra.mxu0 %v808
  %1118 = vmatprep.subr.bf16.mxu0 0
  %1119 = vmatpush2.bf16.msra.mxu0 %v807
  %1120 = vmatprep.subr.bf16.mxu0 0
  %1121 = vmatpush2.bf16.msra.mxu0 %v806
  %1122 = vmatprep.subr.bf16.mxu0 0
  %1123 = vmatpush2.bf16.msra.mxu0 %v805
  %1124 = vmatprep.mubr.bf16.mxu0 %v297
  %1125 = vmatmul.mubr.bf16.gmra.mxu0 %v296
  %v1126 = vpop.f32.mrf.mxu0
  %v1127 = vadd.f32 %v1086, %v1126
  %v1128 = vpop.f32.mrf.mxu0
  %v1129 = vpop.f32.mrf.mxu0
  %v1130 = vadd.f32 %v1089, %v1129
  %v1131 = vpop.f32.mrf.mxu0
  %1132 = vdwg.mxu0
  %1133 = vmatprep.subr.bf16.mxu0 0
  %1134 = vmatpush1.bf16.msra.mxu0 %v820
  %1135 = vmatprep.subr.bf16.mxu0 0
  %1136 = vmatpush1.bf16.msra.mxu0 %v819
  %1137 = vmatprep.subr.bf16.mxu0 0
  %1138 = vmatpush1.bf16.msra.mxu0 %v818
  %1139 = vmatprep.subr.bf16.mxu0 0
  %1140 = vmatpush1.bf16.msra.mxu0 %v817
  %1141 = vmatprep.subr.bf16.mxu0 0
  %1142 = vmatpush1.bf16.msra.mxu0 %v816
  %1143 = vmatprep.subr.bf16.mxu0 0
  %1144 = vmatpush1.bf16.msra.mxu0 %v815
  %1145 = vmatprep.subr.bf16.mxu0 0
  %1146 = vmatpush1.bf16.msra.mxu0 %v814
  %1147 = vmatprep.subr.bf16.mxu0 0
  %1148 = vmatpush1.bf16.msra.mxu0 %v813
  %1149 = vmatprep.subr.bf16.mxu0 0
  %1150 = vmatpush2.bf16.msra.mxu0 %v828
  %1151 = vmatprep.subr.bf16.mxu0 0
  %1152 = vmatpush2.bf16.msra.mxu0 %v827
  %1153 = vmatprep.subr.bf16.mxu0 0
  %1154 = vmatpush2.bf16.msra.mxu0 %v826
  %1155 = vmatprep.subr.bf16.mxu0 0
  %1156 = vmatpush2.bf16.msra.mxu0 %v825
  %1157 = vmatprep.subr.bf16.mxu0 0
  %1158 = vmatpush2.bf16.msra.mxu0 %v824
  %1159 = vmatprep.subr.bf16.mxu0 0
  %1160 = vmatpush2.bf16.msra.mxu0 %v823
  %1161 = vmatprep.subr.bf16.mxu0 0
  %1162 = vmatpush2.bf16.msra.mxu0 %v822
  %1163 = vmatprep.subr.bf16.mxu0 0
  %1164 = vmatpush2.bf16.msra.mxu0 %v821
  %1165 = vmatprep.mubr.bf16.mxu0 %v299
  %1166 = vmatmul.mubr.bf16.gmra.mxu0 %v298
  %v1167 = vpop.f32.mrf.mxu0
  %v1168 = vadd.f32 %v1127, %v1167
  %v1169 = vpop.f32.mrf.mxu0
  %v1170 = vpop.f32.mrf.mxu0
  %v1171 = vadd.f32 %v1130, %v1170
  %v1172 = vpop.f32.mrf.mxu0
  %1173 = vdwg.mxu0
  %1174 = vmatprep.subr.bf16.mxu0 0
  %1175 = vmatpush1.bf16.msra.mxu0 %v836
  %1176 = vmatprep.subr.bf16.mxu0 0
  %1177 = vmatpush1.bf16.msra.mxu0 %v835
  %1178 = vmatprep.subr.bf16.mxu0 0
  %1179 = vmatpush1.bf16.msra.mxu0 %v834
  %1180 = vmatprep.subr.bf16.mxu0 0
  %1181 = vmatpush1.bf16.msra.mxu0 %v833
  %1182 = vmatprep.subr.bf16.mxu0 0
  %1183 = vmatpush1.bf16.msra.mxu0 %v832
  %1184 = vmatprep.subr.bf16.mxu0 0
  %1185 = vmatpush1.bf16.msra.mxu0 %v831
  %1186 = vmatprep.subr.bf16.mxu0 0
  %1187 = vmatpush1.bf16.msra.mxu0 %v830
  %1188 = vmatprep.subr.bf16.mxu0 0
  %1189 = vmatpush1.bf16.msra.mxu0 %v829
  %1190 = vmatprep.subr.bf16.mxu0 0
  %1191 = vmatpush2.bf16.msra.mxu0 %v844
  %1192 = vmatprep.subr.bf16.mxu0 0
  %1193 = vmatpush2.bf16.msra.mxu0 %v843
  %1194 = vmatprep.subr.bf16.mxu0 0
  %1195 = vmatpush2.bf16.msra.mxu0 %v842
  %1196 = vmatprep.subr.bf16.mxu0 0
  %1197 = vmatpush2.bf16.msra.mxu0 %v841
  %1198 = vmatprep.subr.bf16.mxu0 0
  %1199 = vmatpush2.bf16.msra.mxu0 %v840
  %1200 = vmatprep.subr.bf16.mxu0 0
  %1201 = vmatpush2.bf16.msra.mxu0 %v839
  %1202 = vmatprep.subr.bf16.mxu0 0
  %1203 = vmatpush2.bf16.msra.mxu0 %v838
  %1204 = vmatprep.subr.bf16.mxu0 0
  %1205 = vmatpush2.bf16.msra.mxu0 %v837
  %1206 = vmatprep.mubr.bf16.mxu0 %v301
  %1207 = vmatmul.mubr.bf16.gmra.mxu0 %v300
  %v1208 = vpop.f32.mrf.mxu0
  %v1209 = vadd.f32 %v1168, %v1208
  %v1210 = vpop.f32.mrf.mxu0
  %v1211 = vpop.f32.mrf.mxu0
  %v1212 = vadd.f32 %v1171, %v1211
  %v1213 = vpop.f32.mrf.mxu0
  %1214 = vdwg.mxu0
  %1215 = vmatprep.subr.bf16.mxu0 0
  %1216 = vmatpush1.bf16.msra.mxu0 %v852
  %1217 = vmatprep.subr.bf16.mxu0 0
  %1218 = vmatpush1.bf16.msra.mxu0 %v851
  %1219 = vmatprep.subr.bf16.mxu0 0
  %1220 = vmatpush1.bf16.msra.mxu0 %v850
  %1221 = vmatprep.subr.bf16.mxu0 0
  %1222 = vmatpush1.bf16.msra.mxu0 %v849
  %1223 = vmatprep.subr.bf16.mxu0 0
  %1224 = vmatpush1.bf16.msra.mxu0 %v848
  %1225 = vmatprep.subr.bf16.mxu0 0
  %1226 = vmatpush1.bf16.msra.mxu0 %v847
  %1227 = vmatprep.subr.bf16.mxu0 0
  %1228 = vmatpush1.bf16.msra.mxu0 %v846
  %1229 = vmatprep.subr.bf16.mxu0 0
  %1230 = vmatpush1.bf16.msra.mxu0 %v845
  %1231 = vmatprep.subr.bf16.mxu0 0
  %1232 = vmatpush2.bf16.msra.mxu0 0
  %1233 = vmatprep.subr.bf16.mxu0 0
  %1234 = vmatpush2.bf16.msra.mxu0 0
  %1235 = vmatprep.subr.bf16.mxu0 0
  %1236 = vmatpush2.bf16.msra.mxu0 0
  %1237 = vmatprep.subr.bf16.mxu0 0
  %1238 = vmatpush2.bf16.msra.mxu0 0
  %1239 = vmatprep.subr.bf16.mxu0 0
  %1240 = vmatpush2.bf16.msra.mxu0 %v856
  %1241 = vmatprep.subr.bf16.mxu0 0
  %1242 = vmatpush2.bf16.msra.mxu0 %v855
  %1243 = vmatprep.subr.bf16.mxu0 0
  %1244 = vmatpush2.bf16.msra.mxu0 %v854
  %1245 = vmatprep.subr.bf16.mxu0 0
  %1246 = vmatpush2.bf16.msra.mxu0 %v853
  %1247 = vmatprep.mubr.bf16.mxu0 %v967
  %1248 = vmatmul.mubr.bf16.gmra.mxu0 %v302
  %v1249 = vpop.f32.mrf.mxu0
  %v1250 = vadd.f32 %v1209, %v1249
  %v1251 = vpop.f32.mrf.mxu0
  %v1252 = vpop.f32.mrf.mxu0
  %v1253 = vadd.f32 %v1212, %v1252
  %v1254 = vpop.f32.mrf.mxu0
  %1255 = vdwg.mxu0
  %v1256 = vadd.f32 %v1250, %v1253
  %v1257 = vrot.slane %v1256, 4
  %v1258 = vadd.f32 %v1256, %v1257
  %v1259 = vrot.slane %v1258, 2
  %v1260 = vadd.f32 %v1258, %v1259
  %v1261 = vrot.slane %v1260, 1
  %v1262 = vadd.f32 %v1260, %v1261
  %v1263 = vmul.f32 %v1262, 0.0625
  %v1264 = vmul.f32 %v1250, %v1250
  %v1265 = vmul.f32 %v1253, %v1253
  %v1266 = vadd.f32 %v1264, %v1265
  %v1267 = vrot.slane %v1266, 4
  %v1268 = vadd.f32 %v1266, %v1267
  %v1269 = vrot.slane %v1268, 2
  %v1270 = vadd.f32 %v1268, %v1269
  %v1271 = vrot.slane %v1270, 1
  %v1272 = vadd.f32 %v1270, %v1271
  %v1273 = vmul.f32 %v1272, 0.0625
  %v1274 = vmul.f32 %v1263, %v1263
  %v1275 = vsub.f32 %v1273, %v1274
  %v1276 = vmax.f32 %v1275, 0.0
  %v1277 = vld [vmem:[%s2] sm:$0x1]
  %v1278 = vadd.f32 %v1276, 1e-05
  %v1279 = vrsqrt.pop %v1278
  %v1280 = vmul.f32 %v1277, %v1279
  %v1281 = vld [vmem:[%s3] sm:$0x1]
  %v1282 = vmul.f32 %v1263, %v1280
  %v1283 = vsub.f32 %v1281, %v1282
  %v1285 = vlaneseq
  %v1286 = vshrl.u32 %v1285, 7
  %v1287 = vsub.s32 0, %v1286
  %v1288 = vrot.slane %v1280, %v1287
  %v1290 = vmul.f32 %v1250, %v1288
  %v1291 = vmul.f32 %v1253, %v1288
  %v1293 = vlaneseq
  %v1294 = vshrl.u32 %v1293, 7
  %v1295 = vsub.s32 0, %v1294
  %v1296 = vrot.slane %v1283, %v1295
  %v1298 = vadd.f32 %v1290, %v1296
  %v1299 = vadd.f32 %v1291, %v1296
  %vm1300 = vcmp.ge.f32.partialorder %v1298, 0.0
  %vm1301 = vcmp.ge.f32.partialorder %v1299, 0.0
  %v1302 = vmul.f32 %v1298, 0.2
  %v1303 = vmul.f32 %v1299, 0.2
  %v1304 = vsel %vm1300, %v1298, %v1302
  %v1305 = vsel %vm1301, %v1299, %v1303
  %v1306 = vpack.c.bf16 %v1305, %v1304
  %v1308 = vunpack.c.l.b16 %v1306
  %v1309 = vunpack.c.h.b16 %v1306
  %v1310 = vpack.c.b16 %v1308, %v1308
  %v1311 = vpack.c.b16 %v1309, %v1309
  %1314 = vst [vmem:[%s4] sm:$0xf] %v1310
  %1315 = vst [vmem:[%s4 + $0x4] sm:$0xf] %v1311
  // Predicated region
  $region18: #{discriminator_forward.8} parent=0 // pred_check
    _
  $region19: #{discriminator_forward.8} parent=0 // pred_check_branch
    %1317 = sbr.rel (0) target = $region21
  $region20: #{discriminator_forward.8} parent=0 // pred_region
    _
  $region21: #{discriminator_forward.8} parent=0 // pred_fallthru
    _
  // Predicated region
  $region22: #{discriminator_forward.8} parent=0 // pred_check
    _
  $region23: #{discriminator_forward.8} parent=0 // pred_check_branch
    %1319 = sbr.rel (0) target = $region25
  $region24: #{discriminator_forward.8} parent=0 // pred_region
    _
  $region25: #{discriminator_forward.8} parent=0 // pred_fallthru
    _

// kernel: discriminator_forward.9
$region0: #{discriminator_forward.9}
  #allocation0 [shape = 'u32[]', space=smem, size = 0x4, offset = 0x4, fixed_abs, tag = 'smem constant byte address 0x4 - core index']
  #allocation1 [shape = 'u32[144,128]{1,0:T(1,128)}', space=vmem, size = 0x12000, scoped, tag = 'internal scratch']
  #allocation2 [shape = 'f32[1,1]{1,0:T(1,128)S(1)}', space=vmem, size = 0x200, scoped, tag = 'scoped memory for discriminator_forward.9']
  %s0 = inlined_call_operand.vmem [shape: bf16[4,3456], index: 0, kind: input, shape index: {}]
  %s1 = inlined_call_operand.vmem [shape: bf16[1,3456], index: 1, kind: input, shape index: {}]
  %s2 = inlined_call_operand.<no memory space> [shape: f32[1,1], index: 2, kind: input, shape index: {}]
  %s3 = inlined_call_operand.vmem [shape: f32[4,1], index: 3, kind: output, shape index: {}]
  %s4 = sld [smem:[#allocation0]]
  $region22: #{discriminator_forward.9} parent=0
    _
  %s6 = ssub.s32 1, %s4
  %s7 = scalar_select 0, %s6, %s4
  %v8 = vstv %s2
  %9 = vst [vmem:[#allocation2] sm:$0x1] %v8
  // Predicated region
  $region2: #{discriminator_forward.9} parent=0 // pred_check
    _
  $region3: #{discriminator_forward.9} parent=0 // pred_check_branch
    %11 = sbr.rel (0) target = $region5
  $region4: #{discriminator_forward.9} parent=0 // pred_region
    _
  $region5: #{discriminator_forward.9} parent=0 // pred_fallthru
    _
  // Predicated region
  $region6: #{discriminator_forward.9} parent=0 // pred_check
    _
  $region7: #{discriminator_forward.9} parent=0 // pred_check_branch
    %13 = sbr.rel (0) target = $region9
  $region8: #{discriminator_forward.9} parent=0 // pred_region
    _
  $region9: #{discriminator_forward.9} parent=0 // pred_fallthru
    _
  // Predicated region
  $region10: #{discriminator_forward.9} parent=0 // pred_check
    _
  $region11: #{discriminator_forward.9} parent=0 // pred_check_branch
    %15 = sbr.rel (0) target = $region13
  $region12: #{discriminator_forward.9} parent=0 // pred_region
    _
  $region13: #{discriminator_forward.9} parent=0 // pred_fallthru
    _
  %v16 = vld [vmem:[%s0] sm:$0xff]
  %v17 = vld [vmem:[%s0 + $0x8] sm:$0xff]
  %v18 = vld [vmem:[%s0 + $0x10] sm:$0xff]
  %v19 = vld [vmem:[%s0 + $0x18] sm:$0xff]
  %v20 = vld [vmem:[%s0 + $0x20] sm:$0xff]
  %v21 = vld [vmem:[%s0 + $0x28] sm:$0xff]
  %v22 = vld [vmem:[%s0 + $0x30] sm:$0x3f]
  %v23 = vunpack.c.l.bf16 %v16
  %v24 = vunpack.c.h.bf16 %v16
  %v25 = vunpack.c.l.bf16 %v17
  %v26 = vunpack.c.h.bf16 %v17
  %v27 = vunpack.c.l.bf16 %v18
  %v28 = vunpack.c.h.bf16 %v18
  %v29 = vunpack.c.l.bf16 %v19
  %v30 = vunpack.c.h.bf16 %v19
  %v31 = vunpack.c.l.bf16 %v20
  %v32 = vunpack.c.h.bf16 %v20
  %v33 = vunpack.c.l.bf16 %v21
  %v34 = vunpack.c.h.bf16 %v21
  %v35 = vunpack.c.l.bf16 %v22
  %v36 = vunpack.c.h.bf16 %v22
  %v37 = vld [vmem:[%s1] sm:$0xff]
  %v38 = vld [vmem:[%s1 + $0x8] sm:$0xff]
  %v39 = vld [vmem:[%s1 + $0x10] sm:$0xff]
  %v40 = vld [vmem:[%s1 + $0x18] sm:$0x7]
  %v41 = vunpack.c.l.bf16 %v37
  %v42 = vunpack.c.h.bf16 %v37
  %v43 = vunpack.c.l.bf16 %v38
  %v44 = vunpack.c.h.bf16 %v38
  %v45 = vunpack.c.l.bf16 %v39
  %v46 = vunpack.c.h.bf16 %v39
  %v47 = vunpack.c.l.bf16 %v40
  %v55 = vlaneseq
  %v56 = vshrl.u32 %v55, 7
  %v57 = vsub.s32 0, %v56
  %v58 = vrot.slane %v41, %v57
  %v59 = vlaneseq
  %v60 = vshrl.u32 %v59, 7
  %v61 = vsub.s32 2, %v60
  %v62 = vrot.slane %v41, %v61
  %v63 = vlaneseq
  %v64 = vshrl.u32 %v63, 7
  %v65 = vsub.s32 4, %v64
  %v66 = vrot.slane %v41, %v65
  %v67 = vlaneseq
  %v68 = vshrl.u32 %v67, 7
  %v69 = vsub.s32 6, %v68
  %v70 = vrot.slane %v41, %v69
  %v71 = vlaneseq
  %v72 = vshrl.u32 %v71, 7
  %v73 = vsub.s32 0, %v72
  %v74 = vrot.slane %v42, %v73
  %v75 = vlaneseq
  %v76 = vshrl.u32 %v75, 7
  %v77 = vsub.s32 2, %v76
  %v78 = vrot.slane %v42, %v77
  %v79 = vlaneseq
  %v80 = vshrl.u32 %v79, 7
  %v81 = vsub.s32 4, %v80
  %v82 = vrot.slane %v42, %v81
  %v83 = vlaneseq
  %v84 = vshrl.u32 %v83, 7
  %v85 = vsub.s32 6, %v84
  %v86 = vrot.slane %v42, %v85
  %v87 = vlaneseq
  %v88 = vshrl.u32 %v87, 7
  %v89 = vsub.s32 0, %v88
  %v90 = vrot.slane %v43, %v89
  %v91 = vlaneseq
  %v92 = vshrl.u32 %v91, 7
  %v93 = vsub.s32 2, %v92
  %v94 = vrot.slane %v43, %v93
  %v95 = vlaneseq
  %v96 = vshrl.u32 %v95, 7
  %v97 = vsub.s32 4, %v96
  %v98 = vrot.slane %v43, %v97
  %v99 = vlaneseq
  %v100 = vshrl.u32 %v99, 7
  %v101 = vsub.s32 6, %v100
  %v102 = vrot.slane %v43, %v101
  %v103 = vlaneseq
  %v104 = vshrl.u32 %v103, 7
  %v105 = vsub.s32 0, %v104
  %v106 = vrot.slane %v44, %v105
  %v107 = vlaneseq
  %v108 = vshrl.u32 %v107, 7
  %v109 = vsub.s32 2, %v108
  %v110 = vrot.slane %v44, %v109
  %v111 = vlaneseq
  %v112 = vshrl.u32 %v111, 7
  %v113 = vsub.s32 4, %v112
  %v114 = vrot.slane %v44, %v113
  %v115 = vlaneseq
  %v116 = vshrl.u32 %v115, 7
  %v117 = vsub.s32 6, %v116
  %v118 = vrot.slane %v44, %v117
  %v119 = vlaneseq
  %v120 = vshrl.u32 %v119, 7
  %v121 = vsub.s32 0, %v120
  %v122 = vrot.slane %v45, %v121
  %v123 = vlaneseq
  %v124 = vshrl.u32 %v123, 7
  %v125 = vsub.s32 2, %v124
  %v126 = vrot.slane %v45, %v125
  %v127 = vlaneseq
  %v128 = vshrl.u32 %v127, 7
  %v129 = vsub.s32 4, %v128
  %v130 = vrot.slane %v45, %v129
  %v131 = vlaneseq
  %v132 = vshrl.u32 %v131, 7
  %v133 = vsub.s32 6, %v132
  %v134 = vrot.slane %v45, %v133
  %v135 = vlaneseq
  %v136 = vshrl.u32 %v135, 7
  %v137 = vsub.s32 0, %v136
  %v138 = vrot.slane %v46, %v137
  %v139 = vlaneseq
  %v140 = vshrl.u32 %v139, 7
  %v141 = vsub.s32 2, %v140
  %v142 = vrot.slane %v46, %v141
  %v143 = vlaneseq
  %v144 = vshrl.u32 %v143, 7
  %v145 = vsub.s32 4, %v144
  %v146 = vrot.slane %v46, %v145
  %v147 = vlaneseq
  %v148 = vshrl.u32 %v147, 7
  %v149 = vsub.s32 6, %v148
  %v150 = vrot.slane %v46, %v149
  %v151 = vlaneseq
  %v152 = vshrl.u32 %v151, 7
  %v153 = vsub.s32 0, %v152
  %v154 = vrot.slane %v47, %v153
  %v155 = vlaneseq
  %v156 = vshrl.u32 %v155, 7
  %v157 = vsub.s32 2, %v156
  %v158 = vrot.slane %v47, %v157
  %v159 = vlaneseq
  %v160 = vshrl.u32 %v159, 7
  %v161 = vsub.s32 4, %v160
  %v162 = vrot.slane %v47, %v161
  %v190 = vlaneseq
  %v191 = vshrl.u32 %v190, 7
  %v192 = vsub.s32 0, %v191
  %v193 = vrot.slane %v58, %v192
  %v194 = vlaneseq
  %v195 = vshrl.u32 %v194, 7
  %v196 = vsub.s32 0, %v195
  %v197 = vrot.slane %v62, %v196
  %v198 = vlaneseq
  %v199 = vshrl.u32 %v198, 7
  %v200 = vsub.s32 0, %v199
  %v201 = vrot.slane %v66, %v200
  %v202 = vlaneseq
  %v203 = vshrl.u32 %v202, 7
  %v204 = vsub.s32 0, %v203
  %v205 = vrot.slane %v70, %v204
  %v206 = vlaneseq
  %v207 = vshrl.u32 %v206, 7
  %v208 = vsub.s32 0, %v207
  %v209 = vrot.slane %v74, %v208
  %v210 = vlaneseq
  %v211 = vshrl.u32 %v210, 7
  %v212 = vsub.s32 0, %v211
  %v213 = vrot.slane %v78, %v212
  %v214 = vlaneseq
  %v215 = vshrl.u32 %v214, 7
  %v216 = vsub.s32 0, %v215
  %v217 = vrot.slane %v82, %v216
  %v218 = vlaneseq
  %v219 = vshrl.u32 %v218, 7
  %v220 = vsub.s32 0, %v219
  %v221 = vrot.slane %v86, %v220
  %v222 = vlaneseq
  %v223 = vshrl.u32 %v222, 7
  %v224 = vsub.s32 0, %v223
  %v225 = vrot.slane %v90, %v224
  %v226 = vlaneseq
  %v227 = vshrl.u32 %v226, 7
  %v228 = vsub.s32 0, %v227
  %v229 = vrot.slane %v94, %v228
  %v230 = vlaneseq
  %v231 = vshrl.u32 %v230, 7
  %v232 = vsub.s32 0, %v231
  %v233 = vrot.slane %v98, %v232
  %v234 = vlaneseq
  %v235 = vshrl.u32 %v234, 7
  %v236 = vsub.s32 0, %v235
  %v237 = vrot.slane %v102, %v236
  %v238 = vlaneseq
  %v239 = vshrl.u32 %v238, 7
  %v240 = vsub.s32 0, %v239
  %v241 = vrot.slane %v106, %v240
  %v242 = vlaneseq
  %v243 = vshrl.u32 %v242, 7
  %v244 = vsub.s32 0, %v243
  %v245 = vrot.slane %v110, %v244
  %v246 = vlaneseq
  %v247 = vshrl.u32 %v246, 7
  %v248 = vsub.s32 0, %v247
  %v249 = vrot.slane %v114, %v248
  %v250 = vlaneseq
  %v251 = vshrl.u32 %v250, 7
  %v252 = vsub.s32 0, %v251
  %v253 = vrot.slane %v118, %v252
  %v254 = vlaneseq
  %v255 = vshrl.u32 %v254, 7
  %v256 = vsub.s32 0, %v255
  %v257 = vrot.slane %v122, %v256
  %v258 = vlaneseq
  %v259 = vshrl.u32 %v258, 7
  %v260 = vsub.s32 0, %v259
  %v261 = vrot.slane %v126, %v260
  %v262 = vlaneseq
  %v263 = vshrl.u32 %v262, 7
  %v264 = vsub.s32 0, %v263
  %v265 = vrot.slane %v130, %v264
  %v266 = vlaneseq
  %v267 = vshrl.u32 %v266, 7
  %v268 = vsub.s32 0, %v267
  %v269 = vrot.slane %v134, %v268
  %v270 = vlaneseq
  %v271 = vshrl.u32 %v270, 7
  %v272 = vsub.s32 0, %v271
  %v273 = vrot.slane %v138, %v272
  %v274 = vlaneseq
  %v275 = vshrl.u32 %v274, 7
  %v276 = vsub.s32 0, %v275
  %v277 = vrot.slane %v142, %v276
  %v278 = vlaneseq
  %v279 = vshrl.u32 %v278, 7
  %v280 = vsub.s32 0, %v279
  %v281 = vrot.slane %v146, %v280
  %v282 = vlaneseq
  %v283 = vshrl.u32 %v282, 7
  %v284 = vsub.s32 0, %v283
  %v285 = vrot.slane %v150, %v284
  %v286 = vlaneseq
  %v287 = vshrl.u32 %v286, 7
  %v288 = vsub.s32 0, %v287
  %v289 = vrot.slane %v154, %v288
  %v290 = vlaneseq
  %v291 = vshrl.u32 %v290, 7
  %v292 = vsub.s32 0, %v291
  %v293 = vrot.slane %v158, %v292
  %v294 = vlaneseq
  %v295 = vshrl.u32 %v294, 7
  %v296 = vsub.s32 0, %v295
  %v297 = vrot.slane %v162, %v296
  %v324 = vcombine.low %v193, %v197
  %v325 = vcombine.low %v201, %v205
  %v326 = vcombine.low %v209, %v213
  %v327 = vcombine.low %v217, %v221
  %v328 = vcombine.low %v225, %v229
  %v329 = vcombine.low %v233, %v237
  %v330 = vcombine.low %v241, %v245
  %v331 = vcombine.low %v249, %v253
  %v332 = vcombine.low %v257, %v261
  %v333 = vcombine.low %v265, %v269
  %v334 = vcombine.low %v273, %v277
  %v335 = vcombine.low %v281, %v285
  %v336 = vcombine.low %v289, %v293
  %v350 = vmul.f32 %v23, %v324
  %v351 = vmul.f32 %v24, %v325
  %v352 = vmul.f32 %v25, %v326
  %v353 = vmul.f32 %v26, %v327
  %v354 = vmul.f32 %v27, %v328
  %v355 = vmul.f32 %v28, %v329
  %v356 = vmul.f32 %v29, %v330
  %v357 = vmul.f32 %v30, %v331
  %v358 = vmul.f32 %v31, %v332
  %v359 = vmul.f32 %v32, %v333
  %v360 = vmul.f32 %v33, %v334
  %v361 = vmul.f32 %v34, %v335
  %v362 = vmul.f32 %v35, %v336
  %v363 = vmul.f32 %v36, %v297
  %v377 = vcombine.high %v350, %v350
  %v378 = vcombine.high %v351, %v351
  %v379 = vcombine.high %v352, %v352
  %v380 = vcombine.high %v353, %v353
  %v381 = vcombine.high %v354, %v354
  %v382 = vcombine.high %v355, %v355
  %v383 = vcombine.high %v356, %v356
  %v384 = vcombine.high %v357, %v357
  %v385 = vcombine.high %v358, %v358
  %v386 = vcombine.high %v359, %v359
  %v387 = vcombine.high %v360, %v360
  %v388 = vcombine.high %v361, %v361
  %v389 = vcombine.high %v362, %v362
  %vm403 = vcmask 1043456
  %v404 = vsel %vm403, %v350, 0.0
  %v405 = vsel %vm403, %v377, 0.0
  %v406 = vadd.f32 %v404, %v405
  %v407 = vsel %vm403, %v351, 0.0
  %v408 = vadd.f32 %v406, %v407
  %v409 = vsel %vm403, %v378, 0.0
  %v410 = vadd.f32 %v408, %v409
  %v411 = vsel %vm403, %v352, 0.0
  %v412 = vadd.f32 %v410, %v411
  %v413 = vsel %vm403, %v379, 0.0
  %v414 = vadd.f32 %v412, %v413
  %v415 = vsel %vm403, %v353, 0.0
  %v416 = vadd.f32 %v414, %v415
  %v417 = vsel %vm403, %v380, 0.0
  %v418 = vadd.f32 %v416, %v417
  %v419 = vsel %vm403, %v354, 0.0
  %v420 = vadd.f32 %v418, %v419
  %v421 = vsel %vm403, %v381, 0.0
  %v422 = vadd.f32 %v420, %v421
  %v423 = vsel %vm403, %v355, 0.0
  %v424 = vadd.f32 %v422, %v423
  %v425 = vsel %vm403, %v382, 0.0
  %v426 = vadd.f32 %v424, %v425
  %v427 = vsel %vm403, %v356, 0.0
  %v428 = vadd.f32 %v426, %v427
  %v429 = vsel %vm403, %v383, 0.0
  %v430 = vadd.f32 %v428, %v429
  %v431 = vsel %vm403, %v357, 0.0
  %v432 = vadd.f32 %v430, %v431
  %v433 = vsel %vm403, %v384, 0.0
  %v434 = vadd.f32 %v432, %v433
  %v435 = vsel %vm403, %v358, 0.0
  %v436 = vadd.f32 %v434, %v435
  %v437 = vsel %vm403, %v385, 0.0
  %v438 = vadd.f32 %v436, %v437
  %v439 = vsel %vm403, %v359, 0.0
  %v440 = vadd.f32 %v438, %v439
  %v441 = vsel %vm403, %v386, 0.0
  %v442 = vadd.f32 %v440, %v441
  %v443 = vsel %vm403, %v360, 0.0
  %v444 = vadd.f32 %v442, %v443
  %v445 = vsel %vm403, %v387, 0.0
  %v446 = vadd.f32 %v444, %v445
  %v447 = vsel %vm403, %v361, 0.0
  %v448 = vadd.f32 %v446, %v447
  %v449 = vsel %vm403, %v388, 0.0
  %v450 = vadd.f32 %v448, %v449
  %v451 = vsel %vm403, %v362, 0.0
  %v452 = vadd.f32 %v450, %v451
  %v453 = vsel %vm403, %v389, 0.0
  %v454 = vadd.f32 %v452, %v453
  %v455 = vsel %vm403, %v363, 0.0
  %v456 = vadd.f32 %v454, %v455
  %457 = vadd.xlane.f32.xlu0 %v456
  %v458 = vpop.xlane.xlu0 %457
  %v459 = vld [vmem:[#allocation2] sm:$0x1]
  %v461 = vlaneseq
  %v462 = vshrl.u32 %v461, 7
  %v463 = vsub.s32 0, %v462
  %v464 = vrot.slane %v459, %v463
  %v466 = vadd.f32 %v458, %v464
  %vm467 = vcmask 3072
  %468 = vst.msk [vmem:[%s3] sm:$0xf] %vm467, %v466
  // Predicated region
  $region14: #{discriminator_forward.9} parent=0 // pred_check
    _
  $region15: #{discriminator_forward.9} parent=0 // pred_check_branch
    %470 = sbr.rel (0) target = $region17
  $region16: #{discriminator_forward.9} parent=0 // pred_region
    _
  $region17: #{discriminator_forward.9} parent=0 // pred_fallthru
    _
  // Predicated region
  $region18: #{discriminator_forward.9} parent=0 // pred_check
    _
  $region19: #{discriminator_forward.9} parent=0 // pred_check_branch
    %472 = sbr.rel (0) target = $region21
  $region20: #{discriminator_forward.9} parent=0 // pred_region
    _
  $region21: #{discriminator_forward.9} parent=0 // pred_fallthru
    _

</llo_original>
